<compile_context>
chip_gen: v5e
topology: v5e:2x2
jax: 0.10.0
libtpu: 0.0.40
codegen_flags: <defaults>
</compile_context>

<pallas_src>
import functools
import numpy as np
import jax
import jax.numpy as jnp
from jax.experimental import pallas as pl
from jax.experimental.pallas import tpu as pltpu

# ----------------------- synthetic flow configuration -----------------------
B = 256            # batch (demo); module default train batch is 128
BATCH_TILE = 128   # rows per grid step (parallel axis -> both TCs on v7x)
Z = 10             # scVI latent dim (in_channels), x is (B, Z, 1, 1)
Z2 = Z // 2
COND = 196         # standardized ChemicalVAE latent dim (conditioning_dim)
EMB = 10           # embedding_dim fed to every coupling block
CH = 32            # embedder hidden width (conditioning_hidden_dim)
COND_DEPTH = 2     # embedder hidden depth
H = 32             # coupling MLP hidden_dim
H2 = 2 * H         # fused (scale||translation) hidden width
HIDDEN_DEPTH = 2   # coupling MLP hidden depth
N_FLOWS = 4        # number of flow blocks
NCPL = 2 * N_FLOWS # number of fused coupling nets (2 per block)
LRELU_SLOPE = 0.01 # nn.LeakyReLU default inside the MLPs
INV_ALPHA = 0.9    # InvLeakyRelu between ActNorm and coupling (logdet ignored)
IN0 = Z2 + EMB     # original coupling-MLP input width


# --------------------------------- kernel -----------------------------------
def _flow_kernel(x_ref, c_ref, ew0_ref, ewh_ref, eb_ref,
                 w0e_ref, b0e_ref, cw0x_ref, cwm_ref, cb_ref, cw2_ref,
                 foldw_ref, foldb_ref, an0_ref, ldc_ref,
                 zz_ref, logdet_ref):
    lrelu = lambda v: jnp.where(v >= 0, v, LRELU_SLOPE * v)
    dot = lambda u, v: jnp.dot(u, v, preferred_element_type=jnp.float32)
    bm = x_ref.shape[0]

    # ---- conditioning embedder: BasicFullyConnectedNet(COND -> CH.. -> EMB)
    # (final layer is zero-padded to CH lanes so its output feeds W0E directly)
    e = lrelu(dot(c_ref[...], ew0_ref[...]) + eb_ref[0])
    for d in range(COND_DEPTH):
        e = lrelu(dot(e, ewh_ref[d]) + eb_ref[d + 1])
    emb_ext = dot(e, ewh_ref[COND_DEPTH]) + eb_ref[COND_DEPTH + 1]   # (bm, CH)

    # loop-invariant first-layer contribution of emb for ALL fused coupling nets
    # (first-layer bias cb0 folded in): ONE matmul instead of 16.
    emb_contrib = dot(emb_ext, w0e_ref[...]) + b0e_ref[...]          # (bm, NCPL*H2)

    # block-0 ActNorm (scale / scale*loc pre-folded); later blocks' ActNorms are
    # folded into the FOLD matmuls below.
    h = x_ref[...] * an0_ref[0] + an0_ref[1]

    # all ActNorm log-determinants are data independent -> one precomputed constant
    logdet = jnp.zeros((bm, 1), jnp.float32) + ldc_ref[...]

    for f in range(N_FLOWS):
        # InvLeakyRelu between ActNorm and coupling (its logdet is ignored upstream)
        h = jnp.where(h >= 0, h, INV_ALPHA * h)
        a = h[:, :Z2]                       # first half
        b = h[:, Z2:]                       # second half
        for i in range(2):
            n = 2 * f + i
            x1 = a if i == 0 else b
            # fused scale+translation MLP: one chain of 4 matmuls (was 8)
            z = lrelu(dot(x1, cw0x_ref[n]) + emb_contrib[:, n * H2:(n + 1) * H2])
            for d in range(HIDDEN_DEPTH):
                z = lrelu(dot(z, cwm_ref[n * HIDDEN_DEPTH + d])
                          + cb_ref[n * (HIDDEN_DEPTH + 1) + d])
            o = dot(z, cw2_ref[n]) + cb_ref[n * (HIDDEN_DEPTH + 1) + HIDDEN_DEPTH]
            s = jnp.tanh(o[:, :Z2])         # scale-net output (tanh)
            t = o[:, Z2:2 * Z2]             # translation-net output
            if i == 0:
                b = b * jnp.exp(s) + t
            else:
                a = a * jnp.exp(s) + t
            logdet = logdet + jnp.sum(s, axis=1, keepdims=True)
        # half-swap + Shuffle permutation + next block's ActNorm, pre-folded
        # offline into a single (Z, Z) matmul + bias (last block: shuffle only).
        h = dot(jnp.concatenate([a, b], axis=1), foldw_ref[f]) + foldb_ref[f]

    zz_ref[...] = h
    logdet_ref[...] = logdet


@functools.lru_cache(maxsize=None)
def _build_flow_fn(batch, bm):
    def tiled(shape):
        nd = len(shape)
        return pl.BlockSpec(shape, lambda i, _n=nd: (i,) + (0,) * (_n - 1))

    def resident(shape):
        nd = len(shape)
        return pl.BlockSpec(shape, lambda i, _n=nd: (0,) * _n)

    param_shapes = [
        (COND, CH),                              # ew0
        (COND_DEPTH + 1, CH, CH),                # ewh (hidden + padded final)
        (COND_DEPTH + 2, 1, CH),                 # eb
        (CH, NCPL * H2),                         # w0e (emb part of fused first layers)
        (1, NCPL * H2),                          # b0e
        (NCPL, Z2, H2),                          # cw0x (x part of fused first layers)
        (NCPL * HIDDEN_DEPTH, H2, H2),           # cwm (block-diagonal hidden)
        (NCPL * (HIDDEN_DEPTH + 1), 1, H2),      # cb  (hidden + output biases)
        (NCPL, H2, H2),                          # cw2 (block output layer, lane-padded)
        (N_FLOWS, Z, Z),                         # foldw
        (N_FLOWS, 1, Z),                         # foldb
        (2, 1, Z),                               # an0
        (1, 1),                                  # ldc
    ]
    in_specs = [tiled((bm, Z)), tiled((bm, COND))] + [resident(s) for s in param_shapes]
    out_specs = (tiled((bm, Z)), tiled((bm, 1)))
    return pl.pallas_call(
        _flow_kernel,
        grid=(batch // bm,),
        in_specs=in_specs,
        out_specs=out_specs,
        out_shape=(jax.ShapeDtypeStruct((batch, Z), jnp.float32),
                   jax.ShapeDtypeStruct((batch, 1), jnp.float32)),
        compiler_params=pltpu.CompilerParams(dimension_semantics=("parallel",)),
    )


def net2net_flow_forward(x_nchw, c, packed, *, batch_tile=BATCH_TILE):
    """forward(x, c) -> (zz, logdet); x is NCHW (B, Z, 1, 1), c is (B, COND)."""
    Bn, Zc, Hh, Ww = x_nchw.shape
    assert (Zc, Hh, Ww) == (Z, 1, 1)
    bm = min(batch_tile, Bn)
    assert Bn % bm == 0, "batch must be a multiple of the batch tile"
    zz2d, logdet = _build_flow_fn(Bn, bm)(x_nchw.reshape(Bn, Zc), c, *packed)
    return zz2d.reshape(Bn, Zc, 1, 1), logdet.reshape(Bn)


# ---------------------- deterministic parameter setup -----------------------
def init_params(key):
    keys = iter(jax.random.split(key, 64))

    def w(shape, fan_in):
        return (jax.random.normal(next(keys), shape, jnp.float32)
                / np.float32(np.sqrt(fan_in)))

    # embedder (BasicFullyConnectedNet: COND -> CH -> ... -> EMB)
    eW0 = w((COND, CH), COND)
    eb0 = 0.01 * jax.random.normal(next(keys), (1, CH), jnp.float32)
    eWm = w((COND_DEPTH, CH, CH), CH)
    ebm = 0.01 * jax.random.normal(next(keys), (COND_DEPTH, 1, CH), jnp.float32)
    eW2 = w((CH, EMB), CH)
    eb2 = 0.01 * jax.random.normal(next(keys), (1, EMB), jnp.float32)

    # ActNorm per flow block
    an_loc = 0.1 * jax.random.normal(next(keys), (N_FLOWS, 1, Z), jnp.float32)
    an_scale = 1.0 + 0.1 * jax.random.normal(next(keys), (N_FLOWS, 1, Z), jnp.float32)

    # coupling MLPs: 4 nets per flow block [s0, s1, t0, t1], stacked & flattened
    NNETS = N_FLOWS * 4
    cW0 = w((NNETS, IN0, H), IN0)
    cb0 = 0.01 * jax.random.normal(next(keys), (NNETS, 1, H), jnp.float32)
    cWm = w((NNETS * HIDDEN_DEPTH, H, H), H)
    cbm = 0.01 * jax.random.normal(next(keys), (NNETS * HIDDEN_DEPTH, 1, H), jnp.float32)
    cW2 = w((NNETS, H, Z2), H)
    cb2 = 0.01 * jax.random.normal(next(keys), (NNETS, 1, Z2), jnp.float32)

    # Shuffle permutations as one-hot matmul matrices: out[:, j] = h[:, perm[j]]
    perms = []
    for _ in range(N_FLOWS):
        p = jax.random.permutation(next(keys), Z)
        perms.append(jax.nn.one_hot(p, Z, dtype=jnp.float32).T)
    perm = jnp.stack(perms)

    return (eW0, eb0, eWm, ebm, eW2, eb2, an_loc, an_scale,
            cW0, cb0, cWm, cbm, cW2, cb2, perm)


# ------------------ offline packing / folding of parameters -----------------
def pack_params(params):
    p = [np.asarray(q, np.float32) for q in params]
    (eW0, eb0, eWm, ebm, eW2, eb2, an_loc, an_scale,
     cW0, cb0, cWm, cbm, cW2, cb2, perm) = p

    # embedder: zero-pad the final (CH, EMB) layer to (CH, CH) so emb_ext feeds
    # the fused first layers without a lane slice.
    ew2p = np.zeros((1, CH, CH), np.float32); ew2p[0, :, :EMB] = eW2
    ewh = np.concatenate([eWm, ew2p], axis=0)                        # (COND_DEPTH+1, CH, CH)
    eb2p = np.zeros((1, 1, CH), np.float32); eb2p[0, :, :EMB] = eb2
    eb = np.concatenate([eb0[None], ebm, eb2p], axis=0)              # (COND_DEPTH+2, 1, CH)

    # fused scale||translation coupling nets
    cw0x = np.zeros((NCPL, Z2, H2), np.float32)
    w0e = np.zeros((CH, NCPL * H2), np.float32)
    b0e = np.zeros((1, NCPL * H2), np.float32)
    cwm = np.zeros((NCPL * HIDDEN_DEPTH, H2, H2), np.float32)
    cb = np.zeros((NCPL * (HIDDEN_DEPTH + 1), 1, H2), np.float32)
    cw2 = np.zeros((NCPL, H2, H2), np.float32)
    for f in range(N_FLOWS):
        for i in range(2):
            n = 2 * f + i
            si, ti = f * 4 + i, f * 4 + 2 + i                        # s-net / t-net indices
            w0f = np.concatenate([cW0[si], cW0[ti]], axis=1)         # (IN0, H2)
            cw0x[n] = w0f[:Z2]
            w0e[:EMB, n * H2:(n + 1) * H2] = w0f[Z2:]
            b0e[:, n * H2:(n + 1) * H2] = np.concatenate([cb0[si], cb0[ti]], axis=1)
            for d in range(HIDDEN_DEPTH):
                cwm[n * HIDDEN_DEPTH + d, :H, :H] = cWm[si * HIDDEN_DEPTH + d]
                cwm[n * HIDDEN_DEPTH + d, H:, H:] = cWm[ti * HIDDEN_DEPTH + d]
                cb[n * (HIDDEN_DEPTH + 1) + d] = np.concatenate(
                    [cbm[si * HIDDEN_DEPTH + d], cbm[ti * HIDDEN_DEPTH + d]], axis=1)
            cw2[n, :H, :Z2] = cW2[si]
            cw2[n, H:, Z2:2 * Z2] = cW2[ti]
            cb[n * (HIDDEN_DEPTH + 1) + HIDDEN_DEPTH, :, :Z2] = cb2[si]
            cb[n * (HIDDEN_DEPTH + 1) + HIDDEN_DEPTH, :, Z2:2 * Z2] = cb2[ti]

    # fold: half-swap + Shuffle + next block's ActNorm into one (Z, Z) matmul/bias
    S = np.zeros((Z, Z), np.float32)
    S[:Z2, Z2:] = np.eye(Z2); S[Z2:, :Z2] = np.eye(Z2)
    foldw = np.zeros((N_FLOWS, Z, Z), np.float32)
    foldb = np.zeros((N_FLOWS, 1, Z), np.float32)
    for f in range(N_FLOWS):
        M = S @ perm[f]
        if f < N_FLOWS - 1:
            M = M * an_scale[f + 1]                 # scale output columns
            foldb[f] = an_scale[f + 1] * an_loc[f + 1]
        foldw[f] = M

    an0 = np.stack([an_scale[0], an_scale[0] * an_loc[0]])           # (2, 1, Z)
    ldc = np.full((1, 1), np.sum(np.log(np.abs(an_scale))), np.float32)

    packed = (eW0, ewh, eb, w0e, b0e, cw0x, cwm, cb, cw2, foldw, foldb, an0, ldc)
    return tuple(jnp.asarray(a) for a in packed)


# --------------------------- pure-JAX reference ------------------------------
def ref_forward(x2d, c, params):
    (eW0, eb0, eWm, ebm, eW2, eb2, an_loc, an_scale,
     cW0, cb0, cWm, cbm, cW2, cb2, perm) = params
    lrelu = lambda a: jnp.where(a >= 0, a, LRELU_SLOPE * a)

    e = lrelu(c @ eW0 + eb0)
    for d in range(COND_DEPTH):
        e = lrelu(e @ eWm[d] + ebm[d])
    emb = e @ eW2 + eb2

    def mlp(inp, idx, use_tanh):
        a = lrelu(inp @ cW0[idx] + cb0[idx])
        for d in range(HIDDEN_DEPTH):
            j = idx * HIDDEN_DEPTH + d
            a = lrelu(a @ cWm[j] + cbm[j])
        o = a @ cW2[idx] + cb2[idx]
        return jnp.tanh(o) if use_tanh else o

    h = x2d
    logdet = jnp.zeros((x2d.shape[0],), jnp.float32)
    for f in range(N_FLOWS):
        scale, loc = an_scale[f], an_loc[f]
        h = scale * (h + loc)
        logdet = logdet + jnp.sum(jnp.log(jnp.abs(scale)))
        h = jnp.where(h >= 0, h, INV_ALPHA * h)
        for i in range(2):
            if i == 1:
                h = jnp.concatenate([h[:, Z2:], h[:, :Z2]], axis=1)
            x1, x2 = h[:, :Z2], h[:, Z2:]
            cin = jnp.concatenate([x1, emb], axis=1)
            s = mlp(cin, f * 4 + i, True)
            t = mlp(cin, f * 4 + 2 + i, False)
            h = jnp.concatenate([x1, x2 * jnp.exp(s) + t], axis=1)
            logdet = logdet + jnp.sum(s, axis=1)
        h = h @ perm[f]
    return h, logdet


# ----------------------------------- main ------------------------------------
if __name__ == "__main__":
    # TODO(synk): training loop, Adam optimizers, NLL bookkeeping and the scVI /
    # ChemicalVAE / standardization encoders are host-side orchestration, not kernels.
    key = jax.random.PRNGKey(0)
    kp, kx, kc = jax.random.split(key, 3)
    params = init_params(kp)
    packed = pack_params(params)

    x = jax.random.normal(kx, (B, Z, 1, 1), jnp.float32)   # scVI latents, NCHW
    c = jax.random.normal(kc, (B, COND), jnp.float32)      # standardized chem latents

    zz, logdet = net2net_flow_forward(x, c, packed)
    zz = jax.block_until_ready(zz)
    logdet = jax.block_until_ready(logdet)

    zz_ref, ld_ref = ref_forward(x.reshape(B, Z), c, params)
    np.testing.assert_allclose(np.asarray(zz).reshape(B, Z), np.asarray(zz_ref),
                               rtol=5e-2, atol=5e-2)
    np.testing.assert_allclose(np.asarray(logdet), np.asarray(ld_ref),
                               rtol=5e-2, atol=5e-2)
    assert zz.shape == (B, Z, 1, 1) and logdet.shape == (B,)
    assert np.all(np.isfinite(np.asarray(zz))) and np.all(np.isfinite(np.asarray(logdet)))
    print("KERNEL_OK")
</pallas_src>

<mosaic_0001>
module attributes {stable_mosaic.version = 11 : i64} {
  func.func @_flow_kernel(%arg0: i32, %arg1: memref<128x10xf32, #tpu.memory_space<vmem>>, %arg2: memref<128x196xf32, #tpu.memory_space<vmem>>, %arg3: memref<196x32xf32, #tpu.memory_space<vmem>>, %arg4: memref<3x32x32xf32, #tpu.memory_space<vmem>>, %arg5: memref<4x1x32xf32, #tpu.memory_space<vmem>>, %arg6: memref<32x512xf32, #tpu.memory_space<vmem>>, %arg7: memref<1x512xf32, #tpu.memory_space<vmem>>, %arg8: memref<8x5x64xf32, #tpu.memory_space<vmem>>, %arg9: memref<16x64x64xf32, #tpu.memory_space<vmem>>, %arg10: memref<24x1x64xf32, #tpu.memory_space<vmem>>, %arg11: memref<8x64x64xf32, #tpu.memory_space<vmem>>, %arg12: memref<4x10x10xf32, #tpu.memory_space<vmem>>, %arg13: memref<4x1x10xf32, #tpu.memory_space<vmem>>, %arg14: memref<2x1x10xf32, #tpu.memory_space<vmem>>, %arg15: memref<1x1xf32, #tpu.memory_space<vmem>>, %arg16: memref<128x10xf32, #tpu.memory_space<vmem>>, %arg17: memref<128x1xf32, #tpu.memory_space<vmem>>) attributes {dimension_semantics = [#tpu.dimension_semantics<parallel>], iteration_bounds = array<i64: 2>, scalar_prefetch = 0 : i64, scratch_operands = 0 : i64, tpu.core_type = #tpu.core_type<tc>, window_params = [{transform_indices = @transform_0, window_bounds = array<i64: 128, 10>}, {transform_indices = @transform_1, window_bounds = array<i64: 128, 196>}, {pipeline_mode = #tpu.pipeline_mode<synchronous>, transform_indices = @transform_2, window_bounds = array<i64: 196, 32>}, {pipeline_mode = #tpu.pipeline_mode<synchronous>, transform_indices = @transform_3, window_bounds = array<i64: 3, 32, 32>}, {pipeline_mode = #tpu.pipeline_mode<synchronous>, transform_indices = @transform_4, window_bounds = array<i64: 4, 1, 32>}, {pipeline_mode = #tpu.pipeline_mode<synchronous>, transform_indices = @transform_5, window_bounds = array<i64: 32, 512>}, {pipeline_mode = #tpu.pipeline_mode<synchronous>, transform_indices = @transform_6, window_bounds = array<i64: 1, 512>}, {pipeline_mode = #tpu.pipeline_mode<synchronous>, transform_indices = @transform_7, window_bounds = array<i64: 8, 5, 64>}, {pipeline_mode = #tpu.pipeline_mode<synchronous>, transform_indices = @transform_8, window_bounds = array<i64: 16, 64, 64>}, {pipeline_mode = #tpu.pipeline_mode<synchronous>, transform_indices = @transform_9, window_bounds = array<i64: 24, 1, 64>}, {pipeline_mode = #tpu.pipeline_mode<synchronous>, transform_indices = @transform_10, window_bounds = array<i64: 8, 64, 64>}, {pipeline_mode = #tpu.pipeline_mode<synchronous>, transform_indices = @transform_11, window_bounds = array<i64: 4, 10, 10>}, {pipeline_mode = #tpu.pipeline_mode<synchronous>, transform_indices = @transform_12, window_bounds = array<i64: 4, 1, 10>}, {pipeline_mode = #tpu.pipeline_mode<synchronous>, transform_indices = @transform_13, window_bounds = array<i64: 2, 1, 10>}, {pipeline_mode = #tpu.pipeline_mode<synchronous>, transform_indices = @transform_14, window_bounds = array<i64: 1, 1>}, {transform_indices = @transform_15, window_bounds = array<i64: 128, 10>}, {transform_indices = @transform_16, window_bounds = array<i64: 128, 1>}]} {
    %c0 = arith.constant 0 : index
    %c0_0 = arith.constant 0 : index
    %0 = vector.load %arg2[%c0, %c0_0] : memref<128x196xf32, #tpu.memory_space<vmem>>, vector<128x196xf32>
    %c0_1 = arith.constant 0 : index
    %c0_2 = arith.constant 0 : index
    %1 = vector.load %arg3[%c0_1, %c0_2] : memref<196x32xf32, #tpu.memory_space<vmem>>, vector<196x32xf32>
    %cst = arith.constant dense<0.000000e+00> : vector<128x32xf32>
    %2 = tpu.matmul %0, %1, %cst {dimension_numbers = #tpu.dot_dimension_numbers<[1], [0], [0], [1], [0, 0, 1, 1], [], []>} : vector<128x196xf32>, vector<196x32xf32>, vector<128x32xf32> -> vector<128x32xf32>
    %c0_3 = arith.constant 0 : index
    %c0_4 = arith.constant 0 : index
    %c0_5 = arith.constant 0 : index
    %3 = vector.load %arg5[%c0_3, %c0_4, %c0_5] : memref<4x1x32xf32, #tpu.memory_space<vmem>>, vector<1x1x32xf32>
    %4 = vector.shape_cast %3 : vector<1x1x32xf32> to vector<1x32xf32>
    %5 = vector.broadcast %4 : vector<1x32xf32> to vector<128x32xf32>
    %6 = arith.addf %2, %5 : vector<128x32xf32>
    %cst_6 = arith.constant 0.000000e+00 : f32
    %7 = vector.broadcast %cst_6 : f32 to vector<128x32xf32>
    %8 = arith.cmpf oge, %6, %7 : vector<128x32xf32>
    %cst_7 = arith.constant 0.00999999977 : f32
    %9 = vector.broadcast %cst_7 : f32 to vector<128x32xf32>
    %10 = arith.mulf %9, %6 : vector<128x32xf32>
    %11 = arith.select %8, %6, %10 : vector<128x32xi1>, vector<128x32xf32>
    %c0_8 = arith.constant 0 : index
    %c0_9 = arith.constant 0 : index
    %c0_10 = arith.constant 0 : index
    %12 = vector.load %arg4[%c0_8, %c0_9, %c0_10] : memref<3x32x32xf32, #tpu.memory_space<vmem>>, vector<1x32x32xf32>
    %13 = vector.shape_cast %12 : vector<1x32x32xf32> to vector<32x32xf32>
    %cst_11 = arith.constant dense<0.000000e+00> : vector<128x32xf32>
    %14 = tpu.matmul %11, %13, %cst_11 {dimension_numbers = #tpu.dot_dimension_numbers<[1], [0], [0], [1], [0, 0, 1, 1], [], []>} : vector<128x32xf32>, vector<32x32xf32>, vector<128x32xf32> -> vector<128x32xf32>
    %c1 = arith.constant 1 : index
    %c0_12 = arith.constant 0 : index
    %c0_13 = arith.constant 0 : index
    %15 = vector.load %arg5[%c1, %c0_12, %c0_13] : memref<4x1x32xf32, #tpu.memory_space<vmem>>, vector<1x1x32xf32>
    %16 = vector.shape_cast %15 : vector<1x1x32xf32> to vector<1x32xf32>
    %17 = vector.broadcast %16 : vector<1x32xf32> to vector<128x32xf32>
    %18 = arith.addf %14, %17 : vector<128x32xf32>
    %cst_14 = arith.constant 0.000000e+00 : f32
    %19 = vector.broadcast %cst_14 : f32 to vector<128x32xf32>
    %20 = arith.cmpf oge, %18, %19 : vector<128x32xf32>
    %cst_15 = arith.constant 0.00999999977 : f32
    %21 = vector.broadcast %cst_15 : f32 to vector<128x32xf32>
    %22 = arith.mulf %21, %18 : vector<128x32xf32>
    %23 = arith.select %20, %18, %22 : vector<128x32xi1>, vector<128x32xf32>
    %c1_16 = arith.constant 1 : index
    %c0_17 = arith.constant 0 : index
    %c0_18 = arith.constant 0 : index
    %24 = vector.load %arg4[%c1_16, %c0_17, %c0_18] : memref<3x32x32xf32, #tpu.memory_space<vmem>>, vector<1x32x32xf32>
    %25 = vector.shape_cast %24 : vector<1x32x32xf32> to vector<32x32xf32>
    %cst_19 = arith.constant dense<0.000000e+00> : vector<128x32xf32>
    %26 = tpu.matmul %23, %25, %cst_19 {dimension_numbers = #tpu.dot_dimension_numbers<[1], [0], [0], [1], [0, 0, 1, 1], [], []>} : vector<128x32xf32>, vector<32x32xf32>, vector<128x32xf32> -> vector<128x32xf32>
    %c2 = arith.constant 2 : index
    %c0_20 = arith.constant 0 : index
    %c0_21 = arith.constant 0 : index
    %27 = vector.load %arg5[%c2, %c0_20, %c0_21] : memref<4x1x32xf32, #tpu.memory_space<vmem>>, vector<1x1x32xf32>
    %28 = vector.shape_cast %27 : vector<1x1x32xf32> to vector<1x32xf32>
    %29 = vector.broadcast %28 : vector<1x32xf32> to vector<128x32xf32>
    %30 = arith.addf %26, %29 : vector<128x32xf32>
    %cst_22 = arith.constant 0.000000e+00 : f32
    %31 = vector.broadcast %cst_22 : f32 to vector<128x32xf32>
    %32 = arith.cmpf oge, %30, %31 : vector<128x32xf32>
    %cst_23 = arith.constant 0.00999999977 : f32
    %33 = vector.broadcast %cst_23 : f32 to vector<128x32xf32>
    %34 = arith.mulf %33, %30 : vector<128x32xf32>
    %35 = arith.select %32, %30, %34 : vector<128x32xi1>, vector<128x32xf32>
    %c2_24 = arith.constant 2 : index
    %c0_25 = arith.constant 0 : index
    %c0_26 = arith.constant 0 : index
    %36 = vector.load %arg4[%c2_24, %c0_25, %c0_26] : memref<3x32x32xf32, #tpu.memory_space<vmem>>, vector<1x32x32xf32>
    %37 = vector.shape_cast %36 : vector<1x32x32xf32> to vector<32x32xf32>
    %cst_27 = arith.constant dense<0.000000e+00> : vector<128x32xf32>
    %38 = tpu.matmul %35, %37, %cst_27 {dimension_numbers = #tpu.dot_dimension_numbers<[1], [0], [0], [1], [0, 0, 1, 1], [], []>} : vector<128x32xf32>, vector<32x32xf32>, vector<128x32xf32> -> vector<128x32xf32>
    %c3 = arith.constant 3 : index
    %c0_28 = arith.constant 0 : index
    %c0_29 = arith.constant 0 : index
    %39 = vector.load %arg5[%c3, %c0_28, %c0_29] : memref<4x1x32xf32, #tpu.memory_space<vmem>>, vector<1x1x32xf32>
    %40 = vector.shape_cast %39 : vector<1x1x32xf32> to vector<1x32xf32>
    %41 = vector.broadcast %40 : vector<1x32xf32> to vector<128x32xf32>
    %42 = arith.addf %38, %41 : vector<128x32xf32>
    %c0_30 = arith.constant 0 : index
    %c0_31 = arith.constant 0 : index
    %43 = vector.load %arg6[%c0_30, %c0_31] : memref<32x512xf32, #tpu.memory_space<vmem>>, vector<32x512xf32>
    %cst_32 = arith.constant dense<0.000000e+00> : vector<128x512xf32>
    %44 = tpu.matmul %42, %43, %cst_32 {dimension_numbers = #tpu.dot_dimension_numbers<[1], [0], [0], [1], [0, 0, 1, 1], [], []>} : vector<128x32xf32>, vector<32x512xf32>, vector<128x512xf32> -> vector<128x512xf32>
    %c0_33 = arith.constant 0 : index
    %c0_34 = arith.constant 0 : index
    %45 = vector.load %arg7[%c0_33, %c0_34] : memref<1x512xf32, #tpu.memory_space<vmem>>, vector<1x512xf32>
    %46 = vector.broadcast %45 : vector<1x512xf32> to vector<128x512xf32>
    %47 = arith.addf %44, %46 : vector<128x512xf32>
    %c0_35 = arith.constant 0 : index
    %c0_36 = arith.constant 0 : index
    %48 = vector.load %arg1[%c0_35, %c0_36] : memref<128x10xf32, #tpu.memory_space<vmem>>, vector<128x10xf32>
    %c0_37 = arith.constant 0 : index
    %c0_38 = arith.constant 0 : index
    %c0_39 = arith.constant 0 : index
    %49 = vector.load %arg14[%c0_37, %c0_38, %c0_39] : memref<2x1x10xf32, #tpu.memory_space<vmem>>, vector<1x1x10xf32>
    %50 = vector.shape_cast %49 : vector<1x1x10xf32> to vector<1x10xf32>
    %51 = vector.broadcast %50 : vector<1x10xf32> to vector<128x10xf32>
    %52 = arith.mulf %48, %51 : vector<128x10xf32>
    %c1_40 = arith.constant 1 : index
    %c0_41 = arith.constant 0 : index
    %c0_42 = arith.constant 0 : index
    %53 = vector.load %arg14[%c1_40, %c0_41, %c0_42] : memref<2x1x10xf32, #tpu.memory_space<vmem>>, vector<1x1x10xf32>
    %54 = vector.shape_cast %53 : vector<1x1x10xf32> to vector<1x10xf32>
    %55 = vector.broadcast %54 : vector<1x10xf32> to vector<128x10xf32>
    %56 = arith.addf %52, %55 : vector<128x10xf32>
    %cst_43 = arith.constant 0.000000e+00 : f32
    %57 = vector.broadcast %cst_43 : f32 to vector<128x1xf32>
    %c0_44 = arith.constant 0 : index
    %c0_45 = arith.constant 0 : index
    %58 = vector.load %arg15[%c0_44, %c0_45] : memref<1x1xf32, #tpu.memory_space<vmem>>, vector<1x1xf32>
    %59 = vector.broadcast %58 : vector<1x1xf32> to vector<128x1xf32>
    %60 = arith.addf %57, %59 : vector<128x1xf32>
    %cst_46 = arith.constant 0.000000e+00 : f32
    %61 = vector.broadcast %cst_46 : f32 to vector<128x10xf32>
    %62 = arith.cmpf oge, %56, %61 : vector<128x10xf32>
    %cst_47 = arith.constant 0.899999976 : f32
    %63 = vector.broadcast %cst_47 : f32 to vector<128x10xf32>
    %64 = arith.mulf %63, %56 : vector<128x10xf32>
    %65 = arith.select %62, %56, %64 : vector<128x10xi1>, vector<128x10xf32>
    %66 = vector.extract_strided_slice %65 {offsets = [0, 0], sizes = [128, 5], strides = [1, 1]} : vector<128x10xf32> to vector<128x5xf32>
    %67 = vector.extract_strided_slice %65 {offsets = [0, 5], sizes = [128, 5], strides = [1, 1]} : vector<128x10xf32> to vector<128x5xf32>
    %c0_48 = arith.constant 0 : index
    %c0_49 = arith.constant 0 : index
    %c0_50 = arith.constant 0 : index
    %68 = vector.load %arg8[%c0_48, %c0_49, %c0_50] : memref<8x5x64xf32, #tpu.memory_space<vmem>>, vector<1x5x64xf32>
    %69 = vector.shape_cast %68 : vector<1x5x64xf32> to vector<5x64xf32>
    %cst_51 = arith.constant dense<0.000000e+00> : vector<128x64xf32>
    %70 = tpu.matmul %66, %69, %cst_51 {dimension_numbers = #tpu.dot_dimension_numbers<[1], [0], [0], [1], [0, 0, 1, 1], [], []>} : vector<128x5xf32>, vector<5x64xf32>, vector<128x64xf32> -> vector<128x64xf32>
    %71 = vector.extract_strided_slice %47 {offsets = [0, 0], sizes = [128, 64], strides = [1, 1]} : vector<128x512xf32> to vector<128x64xf32>
    %72 = arith.addf %70, %71 : vector<128x64xf32>
    %cst_52 = arith.constant 0.000000e+00 : f32
    %73 = vector.broadcast %cst_52 : f32 to vector<128x64xf32>
    %74 = arith.cmpf oge, %72, %73 : vector<128x64xf32>
    %cst_53 = arith.constant 0.00999999977 : f32
    %75 = vector.broadcast %cst_53 : f32 to vector<128x64xf32>
    %76 = arith.mulf %75, %72 : vector<128x64xf32>
    %77 = arith.select %74, %72, %76 : vector<128x64xi1>, vector<128x64xf32>
    %c0_54 = arith.constant 0 : index
    %c0_55 = arith.constant 0 : index
    %c0_56 = arith.constant 0 : index
    %78 = vector.load %arg9[%c0_54, %c0_55, %c0_56] : memref<16x64x64xf32, #tpu.memory_space<vmem>>, vector<1x64x64xf32>
    %79 = vector.shape_cast %78 : vector<1x64x64xf32> to vector<64x64xf32>
    %cst_57 = arith.constant dense<0.000000e+00> : vector<128x64xf32>
    %80 = tpu.matmul %77, %79, %cst_57 {dimension_numbers = #tpu.dot_dimension_numbers<[1], [0], [0], [1], [0, 0, 1, 1], [], []>} : vector<128x64xf32>, vector<64x64xf32>, vector<128x64xf32> -> vector<128x64xf32>
    %c0_58 = arith.constant 0 : index
    %c0_59 = arith.constant 0 : index
    %c0_60 = arith.constant 0 : index
    %81 = vector.load %arg10[%c0_58, %c0_59, %c0_60] : memref<24x1x64xf32, #tpu.memory_space<vmem>>, vector<1x1x64xf32>
    %82 = vector.shape_cast %81 : vector<1x1x64xf32> to vector<1x64xf32>
    %83 = vector.broadcast %82 : vector<1x64xf32> to vector<128x64xf32>
    %84 = arith.addf %80, %83 : vector<128x64xf32>
    %cst_61 = arith.constant 0.000000e+00 : f32
    %85 = vector.broadcast %cst_61 : f32 to vector<128x64xf32>
    %86 = arith.cmpf oge, %84, %85 : vector<128x64xf32>
    %cst_62 = arith.constant 0.00999999977 : f32
    %87 = vector.broadcast %cst_62 : f32 to vector<128x64xf32>
    %88 = arith.mulf %87, %84 : vector<128x64xf32>
    %89 = arith.select %86, %84, %88 : vector<128x64xi1>, vector<128x64xf32>
    %c1_63 = arith.constant 1 : index
    %c0_64 = arith.constant 0 : index
    %c0_65 = arith.constant 0 : index
    %90 = vector.load %arg9[%c1_63, %c0_64, %c0_65] : memref<16x64x64xf32, #tpu.memory_space<vmem>>, vector<1x64x64xf32>
    %91 = vector.shape_cast %90 : vector<1x64x64xf32> to vector<64x64xf32>
    %cst_66 = arith.constant dense<0.000000e+00> : vector<128x64xf32>
    %92 = tpu.matmul %89, %91, %cst_66 {dimension_numbers = #tpu.dot_dimension_numbers<[1], [0], [0], [1], [0, 0, 1, 1], [], []>} : vector<128x64xf32>, vector<64x64xf32>, vector<128x64xf32> -> vector<128x64xf32>
    %c1_67 = arith.constant 1 : index
    %c0_68 = arith.constant 0 : index
    %c0_69 = arith.constant 0 : index
    %93 = vector.load %arg10[%c1_67, %c0_68, %c0_69] : memref<24x1x64xf32, #tpu.memory_space<vmem>>, vector<1x1x64xf32>
    %94 = vector.shape_cast %93 : vector<1x1x64xf32> to vector<1x64xf32>
    %95 = vector.broadcast %94 : vector<1x64xf32> to vector<128x64xf32>
    %96 = arith.addf %92, %95 : vector<128x64xf32>
    %cst_70 = arith.constant 0.000000e+00 : f32
    %97 = vector.broadcast %cst_70 : f32 to vector<128x64xf32>
    %98 = arith.cmpf oge, %96, %97 : vector<128x64xf32>
    %cst_71 = arith.constant 0.00999999977 : f32
    %99 = vector.broadcast %cst_71 : f32 to vector<128x64xf32>
    %100 = arith.mulf %99, %96 : vector<128x64xf32>
    %101 = arith.select %98, %96, %100 : vector<128x64xi1>, vector<128x64xf32>
    %c0_72 = arith.constant 0 : index
    %c0_73 = arith.constant 0 : index
    %c0_74 = arith.constant 0 : index
    %102 = vector.load %arg11[%c0_72, %c0_73, %c0_74] : memref<8x64x64xf32, #tpu.memory_space<vmem>>, vector<1x64x64xf32>
    %103 = vector.shape_cast %102 : vector<1x64x64xf32> to vector<64x64xf32>
    %cst_75 = arith.constant dense<0.000000e+00> : vector<128x64xf32>
    %104 = tpu.matmul %101, %103, %cst_75 {dimension_numbers = #tpu.dot_dimension_numbers<[1], [0], [0], [1], [0, 0, 1, 1], [], []>} : vector<128x64xf32>, vector<64x64xf32>, vector<128x64xf32> -> vector<128x64xf32>
    %c2_76 = arith.constant 2 : index
    %c0_77 = arith.constant 0 : index
    %c0_78 = arith.constant 0 : index
    %105 = vector.load %arg10[%c2_76, %c0_77, %c0_78] : memref<24x1x64xf32, #tpu.memory_space<vmem>>, vector<1x1x64xf32>
    %106 = vector.shape_cast %105 : vector<1x1x64xf32> to vector<1x64xf32>
    %107 = vector.broadcast %106 : vector<1x64xf32> to vector<128x64xf32>
    %108 = arith.addf %104, %107 : vector<128x64xf32>
    %109 = vector.extract_strided_slice %108 {offsets = [0, 0], sizes = [128, 5], strides = [1, 1]} : vector<128x64xf32> to vector<128x5xf32>
    %110 = math.tanh %109 : vector<128x5xf32>
    %111 = vector.extract_strided_slice %108 {offsets = [0, 5], sizes = [128, 5], strides = [1, 1]} : vector<128x64xf32> to vector<128x5xf32>
    %112 = math.exp %110 : vector<128x5xf32>
    %113 = arith.mulf %67, %112 : vector<128x5xf32>
    %114 = arith.addf %113, %111 : vector<128x5xf32>
    %cst_79 = arith.constant dense<0.000000e+00> : vector<128xf32>
    %115 = vector.multi_reduction <add>, %110, %cst_79 [1] : vector<128x5xf32> to vector<128xf32>
    %116 = vector.shape_cast %115 : vector<128xf32> to vector<128x1xf32>
    %117 = arith.addf %60, %116 : vector<128x1xf32>
    %c1_80 = arith.constant 1 : index
    %c0_81 = arith.constant 0 : index
    %c0_82 = arith.constant 0 : index
    %118 = vector.load %arg8[%c1_80, %c0_81, %c0_82] : memref<8x5x64xf32, #tpu.memory_space<vmem>>, vector<1x5x64xf32>
    %119 = vector.shape_cast %118 : vector<1x5x64xf32> to vector<5x64xf32>
    %cst_83 = arith.constant dense<0.000000e+00> : vector<128x64xf32>
    %120 = tpu.matmul %114, %119, %cst_83 {dimension_numbers = #tpu.dot_dimension_numbers<[1], [0], [0], [1], [0, 0, 1, 1], [], []>} : vector<128x5xf32>, vector<5x64xf32>, vector<128x64xf32> -> vector<128x64xf32>
    %121 = vector.extract_strided_slice %47 {offsets = [0, 64], sizes = [128, 64], strides = [1, 1]} : vector<128x512xf32> to vector<128x64xf32>
    %122 = arith.addf %120, %121 : vector<128x64xf32>
    %cst_84 = arith.constant 0.000000e+00 : f32
    %123 = vector.broadcast %cst_84 : f32 to vector<128x64xf32>
    %124 = arith.cmpf oge, %122, %123 : vector<128x64xf32>
    %cst_85 = arith.constant 0.00999999977 : f32
    %125 = vector.broadcast %cst_85 : f32 to vector<128x64xf32>
    %126 = arith.mulf %125, %122 : vector<128x64xf32>
    %127 = arith.select %124, %122, %126 : vector<128x64xi1>, vector<128x64xf32>
    %c2_86 = arith.constant 2 : index
    %c0_87 = arith.constant 0 : index
    %c0_88 = arith.constant 0 : index
    %128 = vector.load %arg9[%c2_86, %c0_87, %c0_88] : memref<16x64x64xf32, #tpu.memory_space<vmem>>, vector<1x64x64xf32>
    %129 = vector.shape_cast %128 : vector<1x64x64xf32> to vector<64x64xf32>
    %cst_89 = arith.constant dense<0.000000e+00> : vector<128x64xf32>
    %130 = tpu.matmul %127, %129, %cst_89 {dimension_numbers = #tpu.dot_dimension_numbers<[1], [0], [0], [1], [0, 0, 1, 1], [], []>} : vector<128x64xf32>, vector<64x64xf32>, vector<128x64xf32> -> vector<128x64xf32>
    %c3_90 = arith.constant 3 : index
    %c0_91 = arith.constant 0 : index
    %c0_92 = arith.constant 0 : index
    %131 = vector.load %arg10[%c3_90, %c0_91, %c0_92] : memref<24x1x64xf32, #tpu.memory_space<vmem>>, vector<1x1x64xf32>
    %132 = vector.shape_cast %131 : vector<1x1x64xf32> to vector<1x64xf32>
    %133 = vector.broadcast %132 : vector<1x64xf32> to vector<128x64xf32>
    %134 = arith.addf %130, %133 : vector<128x64xf32>
    %cst_93 = arith.constant 0.000000e+00 : f32
    %135 = vector.broadcast %cst_93 : f32 to vector<128x64xf32>
    %136 = arith.cmpf oge, %134, %135 : vector<128x64xf32>
    %cst_94 = arith.constant 0.00999999977 : f32
    %137 = vector.broadcast %cst_94 : f32 to vector<128x64xf32>
    %138 = arith.mulf %137, %134 : vector<128x64xf32>
    %139 = arith.select %136, %134, %138 : vector<128x64xi1>, vector<128x64xf32>
    %c3_95 = arith.constant 3 : index
    %c0_96 = arith.constant 0 : index
    %c0_97 = arith.constant 0 : index
    %140 = vector.load %arg9[%c3_95, %c0_96, %c0_97] : memref<16x64x64xf32, #tpu.memory_space<vmem>>, vector<1x64x64xf32>
    %141 = vector.shape_cast %140 : vector<1x64x64xf32> to vector<64x64xf32>
    %cst_98 = arith.constant dense<0.000000e+00> : vector<128x64xf32>
    %142 = tpu.matmul %139, %141, %cst_98 {dimension_numbers = #tpu.dot_dimension_numbers<[1], [0], [0], [1], [0, 0, 1, 1], [], []>} : vector<128x64xf32>, vector<64x64xf32>, vector<128x64xf32> -> vector<128x64xf32>
    %c4 = arith.constant 4 : index
    %c0_99 = arith.constant 0 : index
    %c0_100 = arith.constant 0 : index
    %143 = vector.load %arg10[%c4, %c0_99, %c0_100] : memref<24x1x64xf32, #tpu.memory_space<vmem>>, vector<1x1x64xf32>
    %144 = vector.shape_cast %143 : vector<1x1x64xf32> to vector<1x64xf32>
    %145 = vector.broadcast %144 : vector<1x64xf32> to vector<128x64xf32>
    %146 = arith.addf %142, %145 : vector<128x64xf32>
    %cst_101 = arith.constant 0.000000e+00 : f32
    %147 = vector.broadcast %cst_101 : f32 to vector<128x64xf32>
    %148 = arith.cmpf oge, %146, %147 : vector<128x64xf32>
    %cst_102 = arith.constant 0.00999999977 : f32
    %149 = vector.broadcast %cst_102 : f32 to vector<128x64xf32>
    %150 = arith.mulf %149, %146 : vector<128x64xf32>
    %151 = arith.select %148, %146, %150 : vector<128x64xi1>, vector<128x64xf32>
    %c1_103 = arith.constant 1 : index
    %c0_104 = arith.constant 0 : index
    %c0_105 = arith.constant 0 : index
    %152 = vector.load %arg11[%c1_103, %c0_104, %c0_105] : memref<8x64x64xf32, #tpu.memory_space<vmem>>, vector<1x64x64xf32>
    %153 = vector.shape_cast %152 : vector<1x64x64xf32> to vector<64x64xf32>
    %cst_106 = arith.constant dense<0.000000e+00> : vector<128x64xf32>
    %154 = tpu.matmul %151, %153, %cst_106 {dimension_numbers = #tpu.dot_dimension_numbers<[1], [0], [0], [1], [0, 0, 1, 1], [], []>} : vector<128x64xf32>, vector<64x64xf32>, vector<128x64xf32> -> vector<128x64xf32>
    %c5 = arith.constant 5 : index
    %c0_107 = arith.constant 0 : index
    %c0_108 = arith.constant 0 : index
    %155 = vector.load %arg10[%c5, %c0_107, %c0_108] : memref<24x1x64xf32, #tpu.memory_space<vmem>>, vector<1x1x64xf32>
    %156 = vector.shape_cast %155 : vector<1x1x64xf32> to vector<1x64xf32>
    %157 = vector.broadcast %156 : vector<1x64xf32> to vector<128x64xf32>
    %158 = arith.addf %154, %157 : vector<128x64xf32>
    %159 = vector.extract_strided_slice %158 {offsets = [0, 0], sizes = [128, 5], strides = [1, 1]} : vector<128x64xf32> to vector<128x5xf32>
    %160 = math.tanh %159 : vector<128x5xf32>
    %161 = vector.extract_strided_slice %158 {offsets = [0, 5], sizes = [128, 5], strides = [1, 1]} : vector<128x64xf32> to vector<128x5xf32>
    %162 = math.exp %160 : vector<128x5xf32>
    %163 = arith.mulf %66, %162 : vector<128x5xf32>
    %164 = arith.addf %163, %161 : vector<128x5xf32>
    %cst_109 = arith.constant dense<0.000000e+00> : vector<128xf32>
    %165 = vector.multi_reduction <add>, %160, %cst_109 [1] : vector<128x5xf32> to vector<128xf32>
    %166 = vector.shape_cast %165 : vector<128xf32> to vector<128x1xf32>
    %167 = arith.addf %117, %166 : vector<128x1xf32>
    %168 = tpu.concatenate %164, %114 in 1 : vector<128x5xf32>, vector<128x5xf32> -> vector<128x10xf32>
    %c0_110 = arith.constant 0 : index
    %c0_111 = arith.constant 0 : index
    %c0_112 = arith.constant 0 : index
    %169 = vector.load %arg12[%c0_110, %c0_111, %c0_112] : memref<4x10x10xf32, #tpu.memory_space<vmem>>, vector<1x10x10xf32>
    %170 = vector.shape_cast %169 : vector<1x10x10xf32> to vector<10x10xf32>
    %cst_113 = arith.constant dense<0.000000e+00> : vector<128x10xf32>
    %171 = tpu.matmul %168, %170, %cst_113 {dimension_numbers = #tpu.dot_dimension_numbers<[1], [0], [0], [1], [0, 0, 1, 1], [], []>} : vector<128x10xf32>, vector<10x10xf32>, vector<128x10xf32> -> vector<128x10xf32>
    %c0_114 = arith.constant 0 : index
    %c0_115 = arith.constant 0 : index
    %c0_116 = arith.constant 0 : index
    %172 = vector.load %arg13[%c0_114, %c0_115, %c0_116] : memref<4x1x10xf32, #tpu.memory_space<vmem>>, vector<1x1x10xf32>
    %173 = vector.shape_cast %172 : vector<1x1x10xf32> to vector<1x10xf32>
    %174 = vector.broadcast %173 : vector<1x10xf32> to vector<128x10xf32>
    %175 = arith.addf %171, %174 : vector<128x10xf32>
    %cst_117 = arith.constant 0.000000e+00 : f32
    %176 = vector.broadcast %cst_117 : f32 to vector<128x10xf32>
    %177 = arith.cmpf oge, %175, %176 : vector<128x10xf32>
    %cst_118 = arith.constant 0.899999976 : f32
    %178 = vector.broadcast %cst_118 : f32 to vector<128x10xf32>
    %179 = arith.mulf %178, %175 : vector<128x10xf32>
    %180 = arith.select %177, %175, %179 : vector<128x10xi1>, vector<128x10xf32>
    %181 = vector.extract_strided_slice %180 {offsets = [0, 0], sizes = [128, 5], strides = [1, 1]} : vector<128x10xf32> to vector<128x5xf32>
    %182 = vector.extract_strided_slice %180 {offsets = [0, 5], sizes = [128, 5], strides = [1, 1]} : vector<128x10xf32> to vector<128x5xf32>
    %c2_119 = arith.constant 2 : index
    %c0_120 = arith.constant 0 : index
    %c0_121 = arith.constant 0 : index
    %183 = vector.load %arg8[%c2_119, %c0_120, %c0_121] : memref<8x5x64xf32, #tpu.memory_space<vmem>>, vector<1x5x64xf32>
    %184 = vector.shape_cast %183 : vector<1x5x64xf32> to vector<5x64xf32>
    %cst_122 = arith.constant dense<0.000000e+00> : vector<128x64xf32>
    %185 = tpu.matmul %181, %184, %cst_122 {dimension_numbers = #tpu.dot_dimension_numbers<[1], [0], [0], [1], [0, 0, 1, 1], [], []>} : vector<128x5xf32>, vector<5x64xf32>, vector<128x64xf32> -> vector<128x64xf32>
    %186 = vector.extract_strided_slice %47 {offsets = [0, 128], sizes = [128, 64], strides = [1, 1]} : vector<128x512xf32> to vector<128x64xf32>
    %187 = arith.addf %185, %186 : vector<128x64xf32>
    %cst_123 = arith.constant 0.000000e+00 : f32
    %188 = vector.broadcast %cst_123 : f32 to vector<128x64xf32>
    %189 = arith.cmpf oge, %187, %188 : vector<128x64xf32>
    %cst_124 = arith.constant 0.00999999977 : f32
    %190 = vector.broadcast %cst_124 : f32 to vector<128x64xf32>
    %191 = arith.mulf %190, %187 : vector<128x64xf32>
    %192 = arith.select %189, %187, %191 : vector<128x64xi1>, vector<128x64xf32>
    %c4_125 = arith.constant 4 : index
    %c0_126 = arith.constant 0 : index
    %c0_127 = arith.constant 0 : index
    %193 = vector.load %arg9[%c4_125, %c0_126, %c0_127] : memref<16x64x64xf32, #tpu.memory_space<vmem>>, vector<1x64x64xf32>
    %194 = vector.shape_cast %193 : vector<1x64x64xf32> to vector<64x64xf32>
    %cst_128 = arith.constant dense<0.000000e+00> : vector<128x64xf32>
    %195 = tpu.matmul %192, %194, %cst_128 {dimension_numbers = #tpu.dot_dimension_numbers<[1], [0], [0], [1], [0, 0, 1, 1], [], []>} : vector<128x64xf32>, vector<64x64xf32>, vector<128x64xf32> -> vector<128x64xf32>
    %c6 = arith.constant 6 : index
    %c0_129 = arith.constant 0 : index
    %c0_130 = arith.constant 0 : index
    %196 = vector.load %arg10[%c6, %c0_129, %c0_130] : memref<24x1x64xf32, #tpu.memory_space<vmem>>, vector<1x1x64xf32>
    %197 = vector.shape_cast %196 : vector<1x1x64xf32> to vector<1x64xf32>
    %198 = vector.broadcast %197 : vector<1x64xf32> to vector<128x64xf32>
    %199 = arith.addf %195, %198 : vector<128x64xf32>
    %cst_131 = arith.constant 0.000000e+00 : f32
    %200 = vector.broadcast %cst_131 : f32 to vector<128x64xf32>
    %201 = arith.cmpf oge, %199, %200 : vector<128x64xf32>
    %cst_132 = arith.constant 0.00999999977 : f32
    %202 = vector.broadcast %cst_132 : f32 to vector<128x64xf32>
    %203 = arith.mulf %202, %199 : vector<128x64xf32>
    %204 = arith.select %201, %199, %203 : vector<128x64xi1>, vector<128x64xf32>
    %c5_133 = arith.constant 5 : index
    %c0_134 = arith.constant 0 : index
    %c0_135 = arith.constant 0 : index
    %205 = vector.load %arg9[%c5_133, %c0_134, %c0_135] : memref<16x64x64xf32, #tpu.memory_space<vmem>>, vector<1x64x64xf32>
    %206 = vector.shape_cast %205 : vector<1x64x64xf32> to vector<64x64xf32>
    %cst_136 = arith.constant dense<0.000000e+00> : vector<128x64xf32>
    %207 = tpu.matmul %204, %206, %cst_136 {dimension_numbers = #tpu.dot_dimension_numbers<[1], [0], [0], [1], [0, 0, 1, 1], [], []>} : vector<128x64xf32>, vector<64x64xf32>, vector<128x64xf32> -> vector<128x64xf32>
    %c7 = arith.constant 7 : index
    %c0_137 = arith.constant 0 : index
    %c0_138 = arith.constant 0 : index
    %208 = vector.load %arg10[%c7, %c0_137, %c0_138] : memref<24x1x64xf32, #tpu.memory_space<vmem>>, vector<1x1x64xf32>
    %209 = vector.shape_cast %208 : vector<1x1x64xf32> to vector<1x64xf32>
    %210 = vector.broadcast %209 : vector<1x64xf32> to vector<128x64xf32>
    %211 = arith.addf %207, %210 : vector<128x64xf32>
    %cst_139 = arith.constant 0.000000e+00 : f32
    %212 = vector.broadcast %cst_139 : f32 to vector<128x64xf32>
    %213 = arith.cmpf oge, %211, %212 : vector<128x64xf32>
    %cst_140 = arith.constant 0.00999999977 : f32
    %214 = vector.broadcast %cst_140 : f32 to vector<128x64xf32>
    %215 = arith.mulf %214, %211 : vector<128x64xf32>
    %216 = arith.select %213, %211, %215 : vector<128x64xi1>, vector<128x64xf32>
    %c2_141 = arith.constant 2 : index
    %c0_142 = arith.constant 0 : index
    %c0_143 = arith.constant 0 : index
    %217 = vector.load %arg11[%c2_141, %c0_142, %c0_143] : memref<8x64x64xf32, #tpu.memory_space<vmem>>, vector<1x64x64xf32>
    %218 = vector.shape_cast %217 : vector<1x64x64xf32> to vector<64x64xf32>
    %cst_144 = arith.constant dense<0.000000e+00> : vector<128x64xf32>
    %219 = tpu.matmul %216, %218, %cst_144 {dimension_numbers = #tpu.dot_dimension_numbers<[1], [0], [0], [1], [0, 0, 1, 1], [], []>} : vector<128x64xf32>, vector<64x64xf32>, vector<128x64xf32> -> vector<128x64xf32>
    %c8 = arith.constant 8 : index
    %c0_145 = arith.constant 0 : index
    %c0_146 = arith.constant 0 : index
    %220 = vector.load %arg10[%c8, %c0_145, %c0_146] : memref<24x1x64xf32, #tpu.memory_space<vmem>>, vector<1x1x64xf32>
    %221 = vector.shape_cast %220 : vector<1x1x64xf32> to vector<1x64xf32>
    %222 = vector.broadcast %221 : vector<1x64xf32> to vector<128x64xf32>
    %223 = arith.addf %219, %222 : vector<128x64xf32>
    %224 = vector.extract_strided_slice %223 {offsets = [0, 0], sizes = [128, 5], strides = [1, 1]} : vector<128x64xf32> to vector<128x5xf32>
    %225 = math.tanh %224 : vector<128x5xf32>
    %226 = vector.extract_strided_slice %223 {offsets = [0, 5], sizes = [128, 5], strides = [1, 1]} : vector<128x64xf32> to vector<128x5xf32>
    %227 = math.exp %225 : vector<128x5xf32>
    %228 = arith.mulf %182, %227 : vector<128x5xf32>
    %229 = arith.addf %228, %226 : vector<128x5xf32>
    %cst_147 = arith.constant dense<0.000000e+00> : vector<128xf32>
    %230 = vector.multi_reduction <add>, %225, %cst_147 [1] : vector<128x5xf32> to vector<128xf32>
    %231 = vector.shape_cast %230 : vector<128xf32> to vector<128x1xf32>
    %232 = arith.addf %167, %231 : vector<128x1xf32>
    %c3_148 = arith.constant 3 : index
    %c0_149 = arith.constant 0 : index
    %c0_150 = arith.constant 0 : index
    %233 = vector.load %arg8[%c3_148, %c0_149, %c0_150] : memref<8x5x64xf32, #tpu.memory_space<vmem>>, vector<1x5x64xf32>
    %234 = vector.shape_cast %233 : vector<1x5x64xf32> to vector<5x64xf32>
    %cst_151 = arith.constant dense<0.000000e+00> : vector<128x64xf32>
    %235 = tpu.matmul %229, %234, %cst_151 {dimension_numbers = #tpu.dot_dimension_numbers<[1], [0], [0], [1], [0, 0, 1, 1], [], []>} : vector<128x5xf32>, vector<5x64xf32>, vector<128x64xf32> -> vector<128x64xf32>
    %236 = vector.extract_strided_slice %47 {offsets = [0, 192], sizes = [128, 64], strides = [1, 1]} : vector<128x512xf32> to vector<128x64xf32>
    %237 = arith.addf %235, %236 : vector<128x64xf32>
    %cst_152 = arith.constant 0.000000e+00 : f32
    %238 = vector.broadcast %cst_152 : f32 to vector<128x64xf32>
    %239 = arith.cmpf oge, %237, %238 : vector<128x64xf32>
    %cst_153 = arith.constant 0.00999999977 : f32
    %240 = vector.broadcast %cst_153 : f32 to vector<128x64xf32>
    %241 = arith.mulf %240, %237 : vector<128x64xf32>
    %242 = arith.select %239, %237, %241 : vector<128x64xi1>, vector<128x64xf32>
    %c6_154 = arith.constant 6 : index
    %c0_155 = arith.constant 0 : index
    %c0_156 = arith.constant 0 : index
    %243 = vector.load %arg9[%c6_154, %c0_155, %c0_156] : memref<16x64x64xf32, #tpu.memory_space<vmem>>, vector<1x64x64xf32>
    %244 = vector.shape_cast %243 : vector<1x64x64xf32> to vector<64x64xf32>
    %cst_157 = arith.constant dense<0.000000e+00> : vector<128x64xf32>
    %245 = tpu.matmul %242, %244, %cst_157 {dimension_numbers = #tpu.dot_dimension_numbers<[1], [0], [0], [1], [0, 0, 1, 1], [], []>} : vector<128x64xf32>, vector<64x64xf32>, vector<128x64xf32> -> vector<128x64xf32>
    %c9 = arith.constant 9 : index
    %c0_158 = arith.constant 0 : index
    %c0_159 = arith.constant 0 : index
    %246 = vector.load %arg10[%c9, %c0_158, %c0_159] : memref<24x1x64xf32, #tpu.memory_space<vmem>>, vector<1x1x64xf32>
    %247 = vector.shape_cast %246 : vector<1x1x64xf32> to vector<1x64xf32>
    %248 = vector.broadcast %247 : vector<1x64xf32> to vector<128x64xf32>
    %249 = arith.addf %245, %248 : vector<128x64xf32>
    %cst_160 = arith.constant 0.000000e+00 : f32
    %250 = vector.broadcast %cst_160 : f32 to vector<128x64xf32>
    %251 = arith.cmpf oge, %249, %250 : vector<128x64xf32>
    %cst_161 = arith.constant 0.00999999977 : f32
    %252 = vector.broadcast %cst_161 : f32 to vector<128x64xf32>
    %253 = arith.mulf %252, %249 : vector<128x64xf32>
    %254 = arith.select %251, %249, %253 : vector<128x64xi1>, vector<128x64xf32>
    %c7_162 = arith.constant 7 : index
    %c0_163 = arith.constant 0 : index
    %c0_164 = arith.constant 0 : index
    %255 = vector.load %arg9[%c7_162, %c0_163, %c0_164] : memref<16x64x64xf32, #tpu.memory_space<vmem>>, vector<1x64x64xf32>
    %256 = vector.shape_cast %255 : vector<1x64x64xf32> to vector<64x64xf32>
    %cst_165 = arith.constant dense<0.000000e+00> : vector<128x64xf32>
    %257 = tpu.matmul %254, %256, %cst_165 {dimension_numbers = #tpu.dot_dimension_numbers<[1], [0], [0], [1], [0, 0, 1, 1], [], []>} : vector<128x64xf32>, vector<64x64xf32>, vector<128x64xf32> -> vector<128x64xf32>
    %c10 = arith.constant 10 : index
    %c0_166 = arith.constant 0 : index
    %c0_167 = arith.constant 0 : index
    %258 = vector.load %arg10[%c10, %c0_166, %c0_167] : memref<24x1x64xf32, #tpu.memory_space<vmem>>, vector<1x1x64xf32>
    %259 = vector.shape_cast %258 : vector<1x1x64xf32> to vector<1x64xf32>
    %260 = vector.broadcast %259 : vector<1x64xf32> to vector<128x64xf32>
    %261 = arith.addf %257, %260 : vector<128x64xf32>
    %cst_168 = arith.constant 0.000000e+00 : f32
    %262 = vector.broadcast %cst_168 : f32 to vector<128x64xf32>
    %263 = arith.cmpf oge, %261, %262 : vector<128x64xf32>
    %cst_169 = arith.constant 0.00999999977 : f32
    %264 = vector.broadcast %cst_169 : f32 to vector<128x64xf32>
    %265 = arith.mulf %264, %261 : vector<128x64xf32>
    %266 = arith.select %263, %261, %265 : vector<128x64xi1>, vector<128x64xf32>
    %c3_170 = arith.constant 3 : index
    %c0_171 = arith.constant 0 : index
    %c0_172 = arith.constant 0 : index
    %267 = vector.load %arg11[%c3_170, %c0_171, %c0_172] : memref<8x64x64xf32, #tpu.memory_space<vmem>>, vector<1x64x64xf32>
    %268 = vector.shape_cast %267 : vector<1x64x64xf32> to vector<64x64xf32>
    %cst_173 = arith.constant dense<0.000000e+00> : vector<128x64xf32>
    %269 = tpu.matmul %266, %268, %cst_173 {dimension_numbers = #tpu.dot_dimension_numbers<[1], [0], [0], [1], [0, 0, 1, 1], [], []>} : vector<128x64xf32>, vector<64x64xf32>, vector<128x64xf32> -> vector<128x64xf32>
    %c11 = arith.constant 11 : index
    %c0_174 = arith.constant 0 : index
    %c0_175 = arith.constant 0 : index
    %270 = vector.load %arg10[%c11, %c0_174, %c0_175] : memref<24x1x64xf32, #tpu.memory_space<vmem>>, vector<1x1x64xf32>
    %271 = vector.shape_cast %270 : vector<1x1x64xf32> to vector<1x64xf32>
    %272 = vector.broadcast %271 : vector<1x64xf32> to vector<128x64xf32>
    %273 = arith.addf %269, %272 : vector<128x64xf32>
    %274 = vector.extract_strided_slice %273 {offsets = [0, 0], sizes = [128, 5], strides = [1, 1]} : vector<128x64xf32> to vector<128x5xf32>
    %275 = math.tanh %274 : vector<128x5xf32>
    %276 = vector.extract_strided_slice %273 {offsets = [0, 5], sizes = [128, 5], strides = [1, 1]} : vector<128x64xf32> to vector<128x5xf32>
    %277 = math.exp %275 : vector<128x5xf32>
    %278 = arith.mulf %181, %277 : vector<128x5xf32>
    %279 = arith.addf %278, %276 : vector<128x5xf32>
    %cst_176 = arith.constant dense<0.000000e+00> : vector<128xf32>
    %280 = vector.multi_reduction <add>, %275, %cst_176 [1] : vector<128x5xf32> to vector<128xf32>
    %281 = vector.shape_cast %280 : vector<128xf32> to vector<128x1xf32>
    %282 = arith.addf %232, %281 : vector<128x1xf32>
    %283 = tpu.concatenate %279, %229 in 1 : vector<128x5xf32>, vector<128x5xf32> -> vector<128x10xf32>
    %c1_177 = arith.constant 1 : index
    %c0_178 = arith.constant 0 : index
    %c0_179 = arith.constant 0 : index
    %284 = vector.load %arg12[%c1_177, %c0_178, %c0_179] : memref<4x10x10xf32, #tpu.memory_space<vmem>>, vector<1x10x10xf32>
    %285 = vector.shape_cast %284 : vector<1x10x10xf32> to vector<10x10xf32>
    %cst_180 = arith.constant dense<0.000000e+00> : vector<128x10xf32>
    %286 = tpu.matmul %283, %285, %cst_180 {dimension_numbers = #tpu.dot_dimension_numbers<[1], [0], [0], [1], [0, 0, 1, 1], [], []>} : vector<128x10xf32>, vector<10x10xf32>, vector<128x10xf32> -> vector<128x10xf32>
    %c1_181 = arith.constant 1 : index
    %c0_182 = arith.constant 0 : index
    %c0_183 = arith.constant 0 : index
    %287 = vector.load %arg13[%c1_181, %c0_182, %c0_183] : memref<4x1x10xf32, #tpu.memory_space<vmem>>, vector<1x1x10xf32>
    %288 = vector.shape_cast %287 : vector<1x1x10xf32> to vector<1x10xf32>
    %289 = vector.broadcast %288 : vector<1x10xf32> to vector<128x10xf32>
    %290 = arith.addf %286, %289 : vector<128x10xf32>
    %cst_184 = arith.constant 0.000000e+00 : f32
    %291 = vector.broadcast %cst_184 : f32 to vector<128x10xf32>
    %292 = arith.cmpf oge, %290, %291 : vector<128x10xf32>
    %cst_185 = arith.constant 0.899999976 : f32
    %293 = vector.broadcast %cst_185 : f32 to vector<128x10xf32>
    %294 = arith.mulf %293, %290 : vector<128x10xf32>
    %295 = arith.select %292, %290, %294 : vector<128x10xi1>, vector<128x10xf32>
    %296 = vector.extract_strided_slice %295 {offsets = [0, 0], sizes = [128, 5], strides = [1, 1]} : vector<128x10xf32> to vector<128x5xf32>
    %297 = vector.extract_strided_slice %295 {offsets = [0, 5], sizes = [128, 5], strides = [1, 1]} : vector<128x10xf32> to vector<128x5xf32>
    %c4_186 = arith.constant 4 : index
    %c0_187 = arith.constant 0 : index
    %c0_188 = arith.constant 0 : index
    %298 = vector.load %arg8[%c4_186, %c0_187, %c0_188] : memref<8x5x64xf32, #tpu.memory_space<vmem>>, vector<1x5x64xf32>
    %299 = vector.shape_cast %298 : vector<1x5x64xf32> to vector<5x64xf32>
    %cst_189 = arith.constant dense<0.000000e+00> : vector<128x64xf32>
    %300 = tpu.matmul %296, %299, %cst_189 {dimension_numbers = #tpu.dot_dimension_numbers<[1], [0], [0], [1], [0, 0, 1, 1], [], []>} : vector<128x5xf32>, vector<5x64xf32>, vector<128x64xf32> -> vector<128x64xf32>
    %301 = vector.extract_strided_slice %47 {offsets = [0, 256], sizes = [128, 64], strides = [1, 1]} : vector<128x512xf32> to vector<128x64xf32>
    %302 = arith.addf %300, %301 : vector<128x64xf32>
    %cst_190 = arith.constant 0.000000e+00 : f32
    %303 = vector.broadcast %cst_190 : f32 to vector<128x64xf32>
    %304 = arith.cmpf oge, %302, %303 : vector<128x64xf32>
    %cst_191 = arith.constant 0.00999999977 : f32
    %305 = vector.broadcast %cst_191 : f32 to vector<128x64xf32>
    %306 = arith.mulf %305, %302 : vector<128x64xf32>
    %307 = arith.select %304, %302, %306 : vector<128x64xi1>, vector<128x64xf32>
    %c8_192 = arith.constant 8 : index
    %c0_193 = arith.constant 0 : index
    %c0_194 = arith.constant 0 : index
    %308 = vector.load %arg9[%c8_192, %c0_193, %c0_194] : memref<16x64x64xf32, #tpu.memory_space<vmem>>, vector<1x64x64xf32>
    %309 = vector.shape_cast %308 : vector<1x64x64xf32> to vector<64x64xf32>
    %cst_195 = arith.constant dense<0.000000e+00> : vector<128x64xf32>
    %310 = tpu.matmul %307, %309, %cst_195 {dimension_numbers = #tpu.dot_dimension_numbers<[1], [0], [0], [1], [0, 0, 1, 1], [], []>} : vector<128x64xf32>, vector<64x64xf32>, vector<128x64xf32> -> vector<128x64xf32>
    %c12 = arith.constant 12 : index
    %c0_196 = arith.constant 0 : index
    %c0_197 = arith.constant 0 : index
    %311 = vector.load %arg10[%c12, %c0_196, %c0_197] : memref<24x1x64xf32, #tpu.memory_space<vmem>>, vector<1x1x64xf32>
    %312 = vector.shape_cast %311 : vector<1x1x64xf32> to vector<1x64xf32>
    %313 = vector.broadcast %312 : vector<1x64xf32> to vector<128x64xf32>
    %314 = arith.addf %310, %313 : vector<128x64xf32>
    %cst_198 = arith.constant 0.000000e+00 : f32
    %315 = vector.broadcast %cst_198 : f32 to vector<128x64xf32>
    %316 = arith.cmpf oge, %314, %315 : vector<128x64xf32>
    %cst_199 = arith.constant 0.00999999977 : f32
    %317 = vector.broadcast %cst_199 : f32 to vector<128x64xf32>
    %318 = arith.mulf %317, %314 : vector<128x64xf32>
    %319 = arith.select %316, %314, %318 : vector<128x64xi1>, vector<128x64xf32>
    %c9_200 = arith.constant 9 : index
    %c0_201 = arith.constant 0 : index
    %c0_202 = arith.constant 0 : index
    %320 = vector.load %arg9[%c9_200, %c0_201, %c0_202] : memref<16x64x64xf32, #tpu.memory_space<vmem>>, vector<1x64x64xf32>
    %321 = vector.shape_cast %320 : vector<1x64x64xf32> to vector<64x64xf32>
    %cst_203 = arith.constant dense<0.000000e+00> : vector<128x64xf32>
    %322 = tpu.matmul %319, %321, %cst_203 {dimension_numbers = #tpu.dot_dimension_numbers<[1], [0], [0], [1], [0, 0, 1, 1], [], []>} : vector<128x64xf32>, vector<64x64xf32>, vector<128x64xf32> -> vector<128x64xf32>
    %c13 = arith.constant 13 : index
    %c0_204 = arith.constant 0 : index
    %c0_205 = arith.constant 0 : index
    %323 = vector.load %arg10[%c13, %c0_204, %c0_205] : memref<24x1x64xf32, #tpu.memory_space<vmem>>, vector<1x1x64xf32>
    %324 = vector.shape_cast %323 : vector<1x1x64xf32> to vector<1x64xf32>
    %325 = vector.broadcast %324 : vector<1x64xf32> to vector<128x64xf32>
    %326 = arith.addf %322, %325 : vector<128x64xf32>
    %cst_206 = arith.constant 0.000000e+00 : f32
    %327 = vector.broadcast %cst_206 : f32 to vector<128x64xf32>
    %328 = arith.cmpf oge, %326, %327 : vector<128x64xf32>
    %cst_207 = arith.constant 0.00999999977 : f32
    %329 = vector.broadcast %cst_207 : f32 to vector<128x64xf32>
    %330 = arith.mulf %329, %326 : vector<128x64xf32>
    %331 = arith.select %328, %326, %330 : vector<128x64xi1>, vector<128x64xf32>
    %c4_208 = arith.constant 4 : index
    %c0_209 = arith.constant 0 : index
    %c0_210 = arith.constant 0 : index
    %332 = vector.load %arg11[%c4_208, %c0_209, %c0_210] : memref<8x64x64xf32, #tpu.memory_space<vmem>>, vector<1x64x64xf32>
    %333 = vector.shape_cast %332 : vector<1x64x64xf32> to vector<64x64xf32>
    %cst_211 = arith.constant dense<0.000000e+00> : vector<128x64xf32>
    %334 = tpu.matmul %331, %333, %cst_211 {dimension_numbers = #tpu.dot_dimension_numbers<[1], [0], [0], [1], [0, 0, 1, 1], [], []>} : vector<128x64xf32>, vector<64x64xf32>, vector<128x64xf32> -> vector<128x64xf32>
    %c14 = arith.constant 14 : index
    %c0_212 = arith.constant 0 : index
    %c0_213 = arith.constant 0 : index
    %335 = vector.load %arg10[%c14, %c0_212, %c0_213] : memref<24x1x64xf32, #tpu.memory_space<vmem>>, vector<1x1x64xf32>
    %336 = vector.shape_cast %335 : vector<1x1x64xf32> to vector<1x64xf32>
    %337 = vector.broadcast %336 : vector<1x64xf32> to vector<128x64xf32>
    %338 = arith.addf %334, %337 : vector<128x64xf32>
    %339 = vector.extract_strided_slice %338 {offsets = [0, 0], sizes = [128, 5], strides = [1, 1]} : vector<128x64xf32> to vector<128x5xf32>
    %340 = math.tanh %339 : vector<128x5xf32>
    %341 = vector.extract_strided_slice %338 {offsets = [0, 5], sizes = [128, 5], strides = [1, 1]} : vector<128x64xf32> to vector<128x5xf32>
    %342 = math.exp %340 : vector<128x5xf32>
    %343 = arith.mulf %297, %342 : vector<128x5xf32>
    %344 = arith.addf %343, %341 : vector<128x5xf32>
    %cst_214 = arith.constant dense<0.000000e+00> : vector<128xf32>
    %345 = vector.multi_reduction <add>, %340, %cst_214 [1] : vector<128x5xf32> to vector<128xf32>
    %346 = vector.shape_cast %345 : vector<128xf32> to vector<128x1xf32>
    %347 = arith.addf %282, %346 : vector<128x1xf32>
    %c5_215 = arith.constant 5 : index
    %c0_216 = arith.constant 0 : index
    %c0_217 = arith.constant 0 : index
    %348 = vector.load %arg8[%c5_215, %c0_216, %c0_217] : memref<8x5x64xf32, #tpu.memory_space<vmem>>, vector<1x5x64xf32>
    %349 = vector.shape_cast %348 : vector<1x5x64xf32> to vector<5x64xf32>
    %cst_218 = arith.constant dense<0.000000e+00> : vector<128x64xf32>
    %350 = tpu.matmul %344, %349, %cst_218 {dimension_numbers = #tpu.dot_dimension_numbers<[1], [0], [0], [1], [0, 0, 1, 1], [], []>} : vector<128x5xf32>, vector<5x64xf32>, vector<128x64xf32> -> vector<128x64xf32>
    %351 = vector.extract_strided_slice %47 {offsets = [0, 320], sizes = [128, 64], strides = [1, 1]} : vector<128x512xf32> to vector<128x64xf32>
    %352 = arith.addf %350, %351 : vector<128x64xf32>
    %cst_219 = arith.constant 0.000000e+00 : f32
    %353 = vector.broadcast %cst_219 : f32 to vector<128x64xf32>
    %354 = arith.cmpf oge, %352, %353 : vector<128x64xf32>
    %cst_220 = arith.constant 0.00999999977 : f32
    %355 = vector.broadcast %cst_220 : f32 to vector<128x64xf32>
    %356 = arith.mulf %355, %352 : vector<128x64xf32>
    %357 = arith.select %354, %352, %356 : vector<128x64xi1>, vector<128x64xf32>
    %c10_221 = arith.constant 10 : index
    %c0_222 = arith.constant 0 : index
    %c0_223 = arith.constant 0 : index
    %358 = vector.load %arg9[%c10_221, %c0_222, %c0_223] : memref<16x64x64xf32, #tpu.memory_space<vmem>>, vector<1x64x64xf32>
    %359 = vector.shape_cast %358 : vector<1x64x64xf32> to vector<64x64xf32>
    %cst_224 = arith.constant dense<0.000000e+00> : vector<128x64xf32>
    %360 = tpu.matmul %357, %359, %cst_224 {dimension_numbers = #tpu.dot_dimension_numbers<[1], [0], [0], [1], [0, 0, 1, 1], [], []>} : vector<128x64xf32>, vector<64x64xf32>, vector<128x64xf32> -> vector<128x64xf32>
    %c15 = arith.constant 15 : index
    %c0_225 = arith.constant 0 : index
    %c0_226 = arith.constant 0 : index
    %361 = vector.load %arg10[%c15, %c0_225, %c0_226] : memref<24x1x64xf32, #tpu.memory_space<vmem>>, vector<1x1x64xf32>
    %362 = vector.shape_cast %361 : vector<1x1x64xf32> to vector<1x64xf32>
    %363 = vector.broadcast %362 : vector<1x64xf32> to vector<128x64xf32>
    %364 = arith.addf %360, %363 : vector<128x64xf32>
    %cst_227 = arith.constant 0.000000e+00 : f32
    %365 = vector.broadcast %cst_227 : f32 to vector<128x64xf32>
    %366 = arith.cmpf oge, %364, %365 : vector<128x64xf32>
    %cst_228 = arith.constant 0.00999999977 : f32
    %367 = vector.broadcast %cst_228 : f32 to vector<128x64xf32>
    %368 = arith.mulf %367, %364 : vector<128x64xf32>
    %369 = arith.select %366, %364, %368 : vector<128x64xi1>, vector<128x64xf32>
    %c11_229 = arith.constant 11 : index
    %c0_230 = arith.constant 0 : index
    %c0_231 = arith.constant 0 : index
    %370 = vector.load %arg9[%c11_229, %c0_230, %c0_231] : memref<16x64x64xf32, #tpu.memory_space<vmem>>, vector<1x64x64xf32>
    %371 = vector.shape_cast %370 : vector<1x64x64xf32> to vector<64x64xf32>
    %cst_232 = arith.constant dense<0.000000e+00> : vector<128x64xf32>
    %372 = tpu.matmul %369, %371, %cst_232 {dimension_numbers = #tpu.dot_dimension_numbers<[1], [0], [0], [1], [0, 0, 1, 1], [], []>} : vector<128x64xf32>, vector<64x64xf32>, vector<128x64xf32> -> vector<128x64xf32>
    %c16 = arith.constant 16 : index
    %c0_233 = arith.constant 0 : index
    %c0_234 = arith.constant 0 : index
    %373 = vector.load %arg10[%c16, %c0_233, %c0_234] : memref<24x1x64xf32, #tpu.memory_space<vmem>>, vector<1x1x64xf32>
    %374 = vector.shape_cast %373 : vector<1x1x64xf32> to vector<1x64xf32>
    %375 = vector.broadcast %374 : vector<1x64xf32> to vector<128x64xf32>
    %376 = arith.addf %372, %375 : vector<128x64xf32>
    %cst_235 = arith.constant 0.000000e+00 : f32
    %377 = vector.broadcast %cst_235 : f32 to vector<128x64xf32>
    %378 = arith.cmpf oge, %376, %377 : vector<128x64xf32>
    %cst_236 = arith.constant 0.00999999977 : f32
    %379 = vector.broadcast %cst_236 : f32 to vector<128x64xf32>
    %380 = arith.mulf %379, %376 : vector<128x64xf32>
    %381 = arith.select %378, %376, %380 : vector<128x64xi1>, vector<128x64xf32>
    %c5_237 = arith.constant 5 : index
    %c0_238 = arith.constant 0 : index
    %c0_239 = arith.constant 0 : index
    %382 = vector.load %arg11[%c5_237, %c0_238, %c0_239] : memref<8x64x64xf32, #tpu.memory_space<vmem>>, vector<1x64x64xf32>
    %383 = vector.shape_cast %382 : vector<1x64x64xf32> to vector<64x64xf32>
    %cst_240 = arith.constant dense<0.000000e+00> : vector<128x64xf32>
    %384 = tpu.matmul %381, %383, %cst_240 {dimension_numbers = #tpu.dot_dimension_numbers<[1], [0], [0], [1], [0, 0, 1, 1], [], []>} : vector<128x64xf32>, vector<64x64xf32>, vector<128x64xf32> -> vector<128x64xf32>
    %c17 = arith.constant 17 : index
    %c0_241 = arith.constant 0 : index
    %c0_242 = arith.constant 0 : index
    %385 = vector.load %arg10[%c17, %c0_241, %c0_242] : memref<24x1x64xf32, #tpu.memory_space<vmem>>, vector<1x1x64xf32>
    %386 = vector.shape_cast %385 : vector<1x1x64xf32> to vector<1x64xf32>
    %387 = vector.broadcast %386 : vector<1x64xf32> to vector<128x64xf32>
    %388 = arith.addf %384, %387 : vector<128x64xf32>
    %389 = vector.extract_strided_slice %388 {offsets = [0, 0], sizes = [128, 5], strides = [1, 1]} : vector<128x64xf32> to vector<128x5xf32>
    %390 = math.tanh %389 : vector<128x5xf32>
    %391 = vector.extract_strided_slice %388 {offsets = [0, 5], sizes = [128, 5], strides = [1, 1]} : vector<128x64xf32> to vector<128x5xf32>
    %392 = math.exp %390 : vector<128x5xf32>
    %393 = arith.mulf %296, %392 : vector<128x5xf32>
    %394 = arith.addf %393, %391 : vector<128x5xf32>
    %cst_243 = arith.constant dense<0.000000e+00> : vector<128xf32>
    %395 = vector.multi_reduction <add>, %390, %cst_243 [1] : vector<128x5xf32> to vector<128xf32>
    %396 = vector.shape_cast %395 : vector<128xf32> to vector<128x1xf32>
    %397 = arith.addf %347, %396 : vector<128x1xf32>
    %398 = tpu.concatenate %394, %344 in 1 : vector<128x5xf32>, vector<128x5xf32> -> vector<128x10xf32>
    %c2_244 = arith.constant 2 : index
    %c0_245 = arith.constant 0 : index
    %c0_246 = arith.constant 0 : index
    %399 = vector.load %arg12[%c2_244, %c0_245, %c0_246] : memref<4x10x10xf32, #tpu.memory_space<vmem>>, vector<1x10x10xf32>
    %400 = vector.shape_cast %399 : vector<1x10x10xf32> to vector<10x10xf32>
    %cst_247 = arith.constant dense<0.000000e+00> : vector<128x10xf32>
    %401 = tpu.matmul %398, %400, %cst_247 {dimension_numbers = #tpu.dot_dimension_numbers<[1], [0], [0], [1], [0, 0, 1, 1], [], []>} : vector<128x10xf32>, vector<10x10xf32>, vector<128x10xf32> -> vector<128x10xf32>
    %c2_248 = arith.constant 2 : index
    %c0_249 = arith.constant 0 : index
    %c0_250 = arith.constant 0 : index
    %402 = vector.load %arg13[%c2_248, %c0_249, %c0_250] : memref<4x1x10xf32, #tpu.memory_space<vmem>>, vector<1x1x10xf32>
    %403 = vector.shape_cast %402 : vector<1x1x10xf32> to vector<1x10xf32>
    %404 = vector.broadcast %403 : vector<1x10xf32> to vector<128x10xf32>
    %405 = arith.addf %401, %404 : vector<128x10xf32>
    %cst_251 = arith.constant 0.000000e+00 : f32
    %406 = vector.broadcast %cst_251 : f32 to vector<128x10xf32>
    %407 = arith.cmpf oge, %405, %406 : vector<128x10xf32>
    %cst_252 = arith.constant 0.899999976 : f32
    %408 = vector.broadcast %cst_252 : f32 to vector<128x10xf32>
    %409 = arith.mulf %408, %405 : vector<128x10xf32>
    %410 = arith.select %407, %405, %409 : vector<128x10xi1>, vector<128x10xf32>
    %411 = vector.extract_strided_slice %410 {offsets = [0, 0], sizes = [128, 5], strides = [1, 1]} : vector<128x10xf32> to vector<128x5xf32>
    %412 = vector.extract_strided_slice %410 {offsets = [0, 5], sizes = [128, 5], strides = [1, 1]} : vector<128x10xf32> to vector<128x5xf32>
    %c6_253 = arith.constant 6 : index
    %c0_254 = arith.constant 0 : index
    %c0_255 = arith.constant 0 : index
    %413 = vector.load %arg8[%c6_253, %c0_254, %c0_255] : memref<8x5x64xf32, #tpu.memory_space<vmem>>, vector<1x5x64xf32>
    %414 = vector.shape_cast %413 : vector<1x5x64xf32> to vector<5x64xf32>
    %cst_256 = arith.constant dense<0.000000e+00> : vector<128x64xf32>
    %415 = tpu.matmul %411, %414, %cst_256 {dimension_numbers = #tpu.dot_dimension_numbers<[1], [0], [0], [1], [0, 0, 1, 1], [], []>} : vector<128x5xf32>, vector<5x64xf32>, vector<128x64xf32> -> vector<128x64xf32>
    %416 = vector.extract_strided_slice %47 {offsets = [0, 384], sizes = [128, 64], strides = [1, 1]} : vector<128x512xf32> to vector<128x64xf32>
    %417 = arith.addf %415, %416 : vector<128x64xf32>
    %cst_257 = arith.constant 0.000000e+00 : f32
    %418 = vector.broadcast %cst_257 : f32 to vector<128x64xf32>
    %419 = arith.cmpf oge, %417, %418 : vector<128x64xf32>
    %cst_258 = arith.constant 0.00999999977 : f32
    %420 = vector.broadcast %cst_258 : f32 to vector<128x64xf32>
    %421 = arith.mulf %420, %417 : vector<128x64xf32>
    %422 = arith.select %419, %417, %421 : vector<128x64xi1>, vector<128x64xf32>
    %c12_259 = arith.constant 12 : index
    %c0_260 = arith.constant 0 : index
    %c0_261 = arith.constant 0 : index
    %423 = vector.load %arg9[%c12_259, %c0_260, %c0_261] : memref<16x64x64xf32, #tpu.memory_space<vmem>>, vector<1x64x64xf32>
    %424 = vector.shape_cast %423 : vector<1x64x64xf32> to vector<64x64xf32>
    %cst_262 = arith.constant dense<0.000000e+00> : vector<128x64xf32>
    %425 = tpu.matmul %422, %424, %cst_262 {dimension_numbers = #tpu.dot_dimension_numbers<[1], [0], [0], [1], [0, 0, 1, 1], [], []>} : vector<128x64xf32>, vector<64x64xf32>, vector<128x64xf32> -> vector<128x64xf32>
    %c18 = arith.constant 18 : index
    %c0_263 = arith.constant 0 : index
    %c0_264 = arith.constant 0 : index
    %426 = vector.load %arg10[%c18, %c0_263, %c0_264] : memref<24x1x64xf32, #tpu.memory_space<vmem>>, vector<1x1x64xf32>
    %427 = vector.shape_cast %426 : vector<1x1x64xf32> to vector<1x64xf32>
    %428 = vector.broadcast %427 : vector<1x64xf32> to vector<128x64xf32>
    %429 = arith.addf %425, %428 : vector<128x64xf32>
    %cst_265 = arith.constant 0.000000e+00 : f32
    %430 = vector.broadcast %cst_265 : f32 to vector<128x64xf32>
    %431 = arith.cmpf oge, %429, %430 : vector<128x64xf32>
    %cst_266 = arith.constant 0.00999999977 : f32
    %432 = vector.broadcast %cst_266 : f32 to vector<128x64xf32>
    %433 = arith.mulf %432, %429 : vector<128x64xf32>
    %434 = arith.select %431, %429, %433 : vector<128x64xi1>, vector<128x64xf32>
    %c13_267 = arith.constant 13 : index
    %c0_268 = arith.constant 0 : index
    %c0_269 = arith.constant 0 : index
    %435 = vector.load %arg9[%c13_267, %c0_268, %c0_269] : memref<16x64x64xf32, #tpu.memory_space<vmem>>, vector<1x64x64xf32>
    %436 = vector.shape_cast %435 : vector<1x64x64xf32> to vector<64x64xf32>
    %cst_270 = arith.constant dense<0.000000e+00> : vector<128x64xf32>
    %437 = tpu.matmul %434, %436, %cst_270 {dimension_numbers = #tpu.dot_dimension_numbers<[1], [0], [0], [1], [0, 0, 1, 1], [], []>} : vector<128x64xf32>, vector<64x64xf32>, vector<128x64xf32> -> vector<128x64xf32>
    %c19 = arith.constant 19 : index
    %c0_271 = arith.constant 0 : index
    %c0_272 = arith.constant 0 : index
    %438 = vector.load %arg10[%c19, %c0_271, %c0_272] : memref<24x1x64xf32, #tpu.memory_space<vmem>>, vector<1x1x64xf32>
    %439 = vector.shape_cast %438 : vector<1x1x64xf32> to vector<1x64xf32>
    %440 = vector.broadcast %439 : vector<1x64xf32> to vector<128x64xf32>
    %441 = arith.addf %437, %440 : vector<128x64xf32>
    %cst_273 = arith.constant 0.000000e+00 : f32
    %442 = vector.broadcast %cst_273 : f32 to vector<128x64xf32>
    %443 = arith.cmpf oge, %441, %442 : vector<128x64xf32>
    %cst_274 = arith.constant 0.00999999977 : f32
    %444 = vector.broadcast %cst_274 : f32 to vector<128x64xf32>
    %445 = arith.mulf %444, %441 : vector<128x64xf32>
    %446 = arith.select %443, %441, %445 : vector<128x64xi1>, vector<128x64xf32>
    %c6_275 = arith.constant 6 : index
    %c0_276 = arith.constant 0 : index
    %c0_277 = arith.constant 0 : index
    %447 = vector.load %arg11[%c6_275, %c0_276, %c0_277] : memref<8x64x64xf32, #tpu.memory_space<vmem>>, vector<1x64x64xf32>
    %448 = vector.shape_cast %447 : vector<1x64x64xf32> to vector<64x64xf32>
    %cst_278 = arith.constant dense<0.000000e+00> : vector<128x64xf32>
    %449 = tpu.matmul %446, %448, %cst_278 {dimension_numbers = #tpu.dot_dimension_numbers<[1], [0], [0], [1], [0, 0, 1, 1], [], []>} : vector<128x64xf32>, vector<64x64xf32>, vector<128x64xf32> -> vector<128x64xf32>
    %c20 = arith.constant 20 : index
    %c0_279 = arith.constant 0 : index
    %c0_280 = arith.constant 0 : index
    %450 = vector.load %arg10[%c20, %c0_279, %c0_280] : memref<24x1x64xf32, #tpu.memory_space<vmem>>, vector<1x1x64xf32>
    %451 = vector.shape_cast %450 : vector<1x1x64xf32> to vector<1x64xf32>
    %452 = vector.broadcast %451 : vector<1x64xf32> to vector<128x64xf32>
    %453 = arith.addf %449, %452 : vector<128x64xf32>
    %454 = vector.extract_strided_slice %453 {offsets = [0, 0], sizes = [128, 5], strides = [1, 1]} : vector<128x64xf32> to vector<128x5xf32>
    %455 = math.tanh %454 : vector<128x5xf32>
    %456 = vector.extract_strided_slice %453 {offsets = [0, 5], sizes = [128, 5], strides = [1, 1]} : vector<128x64xf32> to vector<128x5xf32>
    %457 = math.exp %455 : vector<128x5xf32>
    %458 = arith.mulf %412, %457 : vector<128x5xf32>
    %459 = arith.addf %458, %456 : vector<128x5xf32>
    %cst_281 = arith.constant dense<0.000000e+00> : vector<128xf32>
    %460 = vector.multi_reduction <add>, %455, %cst_281 [1] : vector<128x5xf32> to vector<128xf32>
    %461 = vector.shape_cast %460 : vector<128xf32> to vector<128x1xf32>
    %462 = arith.addf %397, %461 : vector<128x1xf32>
    %c7_282 = arith.constant 7 : index
    %c0_283 = arith.constant 0 : index
    %c0_284 = arith.constant 0 : index
    %463 = vector.load %arg8[%c7_282, %c0_283, %c0_284] : memref<8x5x64xf32, #tpu.memory_space<vmem>>, vector<1x5x64xf32>
    %464 = vector.shape_cast %463 : vector<1x5x64xf32> to vector<5x64xf32>
    %cst_285 = arith.constant dense<0.000000e+00> : vector<128x64xf32>
    %465 = tpu.matmul %459, %464, %cst_285 {dimension_numbers = #tpu.dot_dimension_numbers<[1], [0], [0], [1], [0, 0, 1, 1], [], []>} : vector<128x5xf32>, vector<5x64xf32>, vector<128x64xf32> -> vector<128x64xf32>
    %466 = vector.extract_strided_slice %47 {offsets = [0, 448], sizes = [128, 64], strides = [1, 1]} : vector<128x512xf32> to vector<128x64xf32>
    %467 = arith.addf %465, %466 : vector<128x64xf32>
    %cst_286 = arith.constant 0.000000e+00 : f32
    %468 = vector.broadcast %cst_286 : f32 to vector<128x64xf32>
    %469 = arith.cmpf oge, %467, %468 : vector<128x64xf32>
    %cst_287 = arith.constant 0.00999999977 : f32
    %470 = vector.broadcast %cst_287 : f32 to vector<128x64xf32>
    %471 = arith.mulf %470, %467 : vector<128x64xf32>
    %472 = arith.select %469, %467, %471 : vector<128x64xi1>, vector<128x64xf32>
    %c14_288 = arith.constant 14 : index
    %c0_289 = arith.constant 0 : index
    %c0_290 = arith.constant 0 : index
    %473 = vector.load %arg9[%c14_288, %c0_289, %c0_290] : memref<16x64x64xf32, #tpu.memory_space<vmem>>, vector<1x64x64xf32>
    %474 = vector.shape_cast %473 : vector<1x64x64xf32> to vector<64x64xf32>
    %cst_291 = arith.constant dense<0.000000e+00> : vector<128x64xf32>
    %475 = tpu.matmul %472, %474, %cst_291 {dimension_numbers = #tpu.dot_dimension_numbers<[1], [0], [0], [1], [0, 0, 1, 1], [], []>} : vector<128x64xf32>, vector<64x64xf32>, vector<128x64xf32> -> vector<128x64xf32>
    %c21 = arith.constant 21 : index
    %c0_292 = arith.constant 0 : index
    %c0_293 = arith.constant 0 : index
    %476 = vector.load %arg10[%c21, %c0_292, %c0_293] : memref<24x1x64xf32, #tpu.memory_space<vmem>>, vector<1x1x64xf32>
    %477 = vector.shape_cast %476 : vector<1x1x64xf32> to vector<1x64xf32>
    %478 = vector.broadcast %477 : vector<1x64xf32> to vector<128x64xf32>
    %479 = arith.addf %475, %478 : vector<128x64xf32>
    %cst_294 = arith.constant 0.000000e+00 : f32
    %480 = vector.broadcast %cst_294 : f32 to vector<128x64xf32>
    %481 = arith.cmpf oge, %479, %480 : vector<128x64xf32>
    %cst_295 = arith.constant 0.00999999977 : f32
    %482 = vector.broadcast %cst_295 : f32 to vector<128x64xf32>
    %483 = arith.mulf %482, %479 : vector<128x64xf32>
    %484 = arith.select %481, %479, %483 : vector<128x64xi1>, vector<128x64xf32>
    %c15_296 = arith.constant 15 : index
    %c0_297 = arith.constant 0 : index
    %c0_298 = arith.constant 0 : index
    %485 = vector.load %arg9[%c15_296, %c0_297, %c0_298] : memref<16x64x64xf32, #tpu.memory_space<vmem>>, vector<1x64x64xf32>
    %486 = vector.shape_cast %485 : vector<1x64x64xf32> to vector<64x64xf32>
    %cst_299 = arith.constant dense<0.000000e+00> : vector<128x64xf32>
    %487 = tpu.matmul %484, %486, %cst_299 {dimension_numbers = #tpu.dot_dimension_numbers<[1], [0], [0], [1], [0, 0, 1, 1], [], []>} : vector<128x64xf32>, vector<64x64xf32>, vector<128x64xf32> -> vector<128x64xf32>
    %c22 = arith.constant 22 : index
    %c0_300 = arith.constant 0 : index
    %c0_301 = arith.constant 0 : index
    %488 = vector.load %arg10[%c22, %c0_300, %c0_301] : memref<24x1x64xf32, #tpu.memory_space<vmem>>, vector<1x1x64xf32>
    %489 = vector.shape_cast %488 : vector<1x1x64xf32> to vector<1x64xf32>
    %490 = vector.broadcast %489 : vector<1x64xf32> to vector<128x64xf32>
    %491 = arith.addf %487, %490 : vector<128x64xf32>
    %cst_302 = arith.constant 0.000000e+00 : f32
    %492 = vector.broadcast %cst_302 : f32 to vector<128x64xf32>
    %493 = arith.cmpf oge, %491, %492 : vector<128x64xf32>
    %cst_303 = arith.constant 0.00999999977 : f32
    %494 = vector.broadcast %cst_303 : f32 to vector<128x64xf32>
    %495 = arith.mulf %494, %491 : vector<128x64xf32>
    %496 = arith.select %493, %491, %495 : vector<128x64xi1>, vector<128x64xf32>
    %c7_304 = arith.constant 7 : index
    %c0_305 = arith.constant 0 : index
    %c0_306 = arith.constant 0 : index
    %497 = vector.load %arg11[%c7_304, %c0_305, %c0_306] : memref<8x64x64xf32, #tpu.memory_space<vmem>>, vector<1x64x64xf32>
    %498 = vector.shape_cast %497 : vector<1x64x64xf32> to vector<64x64xf32>
    %cst_307 = arith.constant dense<0.000000e+00> : vector<128x64xf32>
    %499 = tpu.matmul %496, %498, %cst_307 {dimension_numbers = #tpu.dot_dimension_numbers<[1], [0], [0], [1], [0, 0, 1, 1], [], []>} : vector<128x64xf32>, vector<64x64xf32>, vector<128x64xf32> -> vector<128x64xf32>
    %c23 = arith.constant 23 : index
    %c0_308 = arith.constant 0 : index
    %c0_309 = arith.constant 0 : index
    %500 = vector.load %arg10[%c23, %c0_308, %c0_309] : memref<24x1x64xf32, #tpu.memory_space<vmem>>, vector<1x1x64xf32>
    %501 = vector.shape_cast %500 : vector<1x1x64xf32> to vector<1x64xf32>
    %502 = vector.broadcast %501 : vector<1x64xf32> to vector<128x64xf32>
    %503 = arith.addf %499, %502 : vector<128x64xf32>
    %504 = vector.extract_strided_slice %503 {offsets = [0, 0], sizes = [128, 5], strides = [1, 1]} : vector<128x64xf32> to vector<128x5xf32>
    %505 = math.tanh %504 : vector<128x5xf32>
    %506 = vector.extract_strided_slice %503 {offsets = [0, 5], sizes = [128, 5], strides = [1, 1]} : vector<128x64xf32> to vector<128x5xf32>
    %507 = math.exp %505 : vector<128x5xf32>
    %508 = arith.mulf %411, %507 : vector<128x5xf32>
    %509 = arith.addf %508, %506 : vector<128x5xf32>
    %cst_310 = arith.constant dense<0.000000e+00> : vector<128xf32>
    %510 = vector.multi_reduction <add>, %505, %cst_310 [1] : vector<128x5xf32> to vector<128xf32>
    %511 = vector.shape_cast %510 : vector<128xf32> to vector<128x1xf32>
    %512 = arith.addf %462, %511 : vector<128x1xf32>
    %513 = tpu.concatenate %509, %459 in 1 : vector<128x5xf32>, vector<128x5xf32> -> vector<128x10xf32>
    %c3_311 = arith.constant 3 : index
    %c0_312 = arith.constant 0 : index
    %c0_313 = arith.constant 0 : index
    %514 = vector.load %arg12[%c3_311, %c0_312, %c0_313] : memref<4x10x10xf32, #tpu.memory_space<vmem>>, vector<1x10x10xf32>
    %515 = vector.shape_cast %514 : vector<1x10x10xf32> to vector<10x10xf32>
    %cst_314 = arith.constant dense<0.000000e+00> : vector<128x10xf32>
    %516 = tpu.matmul %513, %515, %cst_314 {dimension_numbers = #tpu.dot_dimension_numbers<[1], [0], [0], [1], [0, 0, 1, 1], [], []>} : vector<128x10xf32>, vector<10x10xf32>, vector<128x10xf32> -> vector<128x10xf32>
    %c3_315 = arith.constant 3 : index
    %c0_316 = arith.constant 0 : index
    %c0_317 = arith.constant 0 : index
    %517 = vector.load %arg13[%c3_315, %c0_316, %c0_317] : memref<4x1x10xf32, #tpu.memory_space<vmem>>, vector<1x1x10xf32>
    %518 = vector.shape_cast %517 : vector<1x1x10xf32> to vector<1x10xf32>
    %519 = vector.broadcast %518 : vector<1x10xf32> to vector<128x10xf32>
    %520 = arith.addf %516, %519 : vector<128x10xf32>
    %c0_318 = arith.constant 0 : index
    %c0_319 = arith.constant 0 : index
    %521 = vector.load %arg16[%c0_318, %c0_319] : memref<128x10xf32, #tpu.memory_space<vmem>>, vector<128x10xf32>
    tpu.vector_store %arg16[%c0_318, %c0_319], %520 {strides = array<i32>} : memref<128x10xf32, #tpu.memory_space<vmem>>, vector<128x10xf32>,
    %c0_320 = arith.constant 0 : index
    %c0_321 = arith.constant 0 : index
    %522 = vector.load %arg17[%c0_320, %c0_321] : memref<128x1xf32, #tpu.memory_space<vmem>>, vector<128x1xf32>
    tpu.vector_store %arg17[%c0_320, %c0_321], %512 {strides = array<i32>} : memref<128x1xf32, #tpu.memory_space<vmem>>, vector<128x1xf32>,
    return
  }
  func.func @transform_0(%arg0: i32) -> (i32, i32) {
    %c0_i32 = arith.constant 0 : i32
    %c0_i32_0 = arith.constant 0 : i32
    return %arg0, %c0_i32 : i32, i32
  }
  func.func @transform_1(%arg0: i32) -> (i32, i32) {
    %c0_i32 = arith.constant 0 : i32
    %c0_i32_0 = arith.constant 0 : i32
    return %arg0, %c0_i32 : i32, i32
  }
  func.func @transform_2(%arg0: i32) -> (i32, i32) {
    %c0_i32 = arith.constant 0 : i32
    %c0_i32_0 = arith.constant 0 : i32
    %c0_i32_1 = arith.constant 0 : i32
    return %c0_i32, %c0_i32_0 : i32, i32
  }
  func.func @transform_3(%arg0: i32) -> (i32, i32, i32) {
    %c0_i32 = arith.constant 0 : i32
    %c0_i32_0 = arith.constant 0 : i32
    %c0_i32_1 = arith.constant 0 : i32
    %c0_i32_2 = arith.constant 0 : i32
    return %c0_i32, %c0_i32_0, %c0_i32_1 : i32, i32, i32
  }
  func.func @transform_4(%arg0: i32) -> (i32, i32, i32) {
    %c0_i32 = arith.constant 0 : i32
    %c0_i32_0 = arith.constant 0 : i32
    %c0_i32_1 = arith.constant 0 : i32
    %c0_i32_2 = arith.constant 0 : i32
    return %c0_i32, %c0_i32_0, %c0_i32_1 : i32, i32, i32
  }
  func.func @transform_5(%arg0: i32) -> (i32, i32) {
    %c0_i32 = arith.constant 0 : i32
    %c0_i32_0 = arith.constant 0 : i32
    %c0_i32_1 = arith.constant 0 : i32
    return %c0_i32, %c0_i32_0 : i32, i32
  }
  func.func @transform_6(%arg0: i32) -> (i32, i32) {
    %c0_i32 = arith.constant 0 : i32
    %c0_i32_0 = arith.constant 0 : i32
    %c0_i32_1 = arith.constant 0 : i32
    return %c0_i32, %c0_i32_0 : i32, i32
  }
  func.func @transform_7(%arg0: i32) -> (i32, i32, i32) {
    %c0_i32 = arith.constant 0 : i32
    %c0_i32_0 = arith.constant 0 : i32
    %c0_i32_1 = arith.constant 0 : i32
    %c0_i32_2 = arith.constant 0 : i32
    return %c0_i32, %c0_i32_0, %c0_i32_1 : i32, i32, i32
  }
  func.func @transform_8(%arg0: i32) -> (i32, i32, i32) {
    %c0_i32 = arith.constant 0 : i32
    %c0_i32_0 = arith.constant 0 : i32
    %c0_i32_1 = arith.constant 0 : i32
    %c0_i32_2 = arith.constant 0 : i32
    return %c0_i32, %c0_i32_0, %c0_i32_1 : i32, i32, i32
  }
  func.func @transform_9(%arg0: i32) -> (i32, i32, i32) {
    %c0_i32 = arith.constant 0 : i32
    %c0_i32_0 = arith.constant 0 : i32
    %c0_i32_1 = arith.constant 0 : i32
    %c0_i32_2 = arith.constant 0 : i32
    return %c0_i32, %c0_i32_0, %c0_i32_1 : i32, i32, i32
  }
  func.func @transform_10(%arg0: i32) -> (i32, i32, i32) {
    %c0_i32 = arith.constant 0 : i32
    %c0_i32_0 = arith.constant 0 : i32
    %c0_i32_1 = arith.constant 0 : i32
    %c0_i32_2 = arith.constant 0 : i32
    return %c0_i32, %c0_i32_0, %c0_i32_1 : i32, i32, i32
  }
  func.func @transform_11(%arg0: i32) -> (i32, i32, i32) {
    %c0_i32 = arith.constant 0 : i32
    %c0_i32_0 = arith.constant 0 : i32
    %c0_i32_1 = arith.constant 0 : i32
    %c0_i32_2 = arith.constant 0 : i32
    return %c0_i32, %c0_i32_0, %c0_i32_1 : i32, i32, i32
  }
  func.func @transform_12(%arg0: i32) -> (i32, i32, i32) {
    %c0_i32 = arith.constant 0 : i32
    %c0_i32_0 = arith.constant 0 : i32
    %c0_i32_1 = arith.constant 0 : i32
    %c0_i32_2 = arith.constant 0 : i32
    return %c0_i32, %c0_i32_0, %c0_i32_1 : i32, i32, i32
  }
  func.func @transform_13(%arg0: i32) -> (i32, i32, i32) {
    %c0_i32 = arith.constant 0 : i32
    %c0_i32_0 = arith.constant 0 : i32
    %c0_i32_1 = arith.constant 0 : i32
    %c0_i32_2 = arith.constant 0 : i32
    return %c0_i32, %c0_i32_0, %c0_i32_1 : i32, i32, i32
  }
  func.func @transform_14(%arg0: i32) -> (i32, i32) {
    %c0_i32 = arith.constant 0 : i32
    %c0_i32_0 = arith.constant 0 : i32
    %c0_i32_1 = arith.constant 0 : i32
    return %c0_i32, %c0_i32_0 : i32, i32
  }
  func.func @transform_15(%arg0: i32) -> (i32, i32) {
    %c0_i32 = arith.constant 0 : i32
    %c0_i32_0 = arith.constant 0 : i32
    return %arg0, %c0_i32 : i32, i32
  }
  func.func @transform_16(%arg0: i32) -> (i32, i32) {
    %c0_i32 = arith.constant 0 : i32
    %c0_i32_0 = arith.constant 0 : i32
    return %arg0, %c0_i32 : i32, i32
  }
}

</mosaic_0001>

<llo_original>
// kernel: tpu_custom_call.1
$region0: #{tpu_custom_call.1}
  #allocation0 [shape = 'u32[]', space=smem, size = 0x4, offset = 0x4, fixed_abs, tag = 'smem constant byte address 0x4 - core index']
  #allocation1 [shape = 'u32[72,128]{1,0:T(1,128)}', space=vmem, size = 0x9000, scoped, tag = 'internal scratch']
  #allocation2 [shape = 'f32[1,1]{1,0:T(1,128)S(1)}', space=vmem, size = 0x200, scoped, tag = 'scoped memory for tpu_custom_call.1']
  %s0 = inlined_call_operand.vmem [shape: f32[256,10], index: 0, kind: input, shape index: {}]
  %s1 = inlined_call_operand.vmem [shape: f32[256,196], index: 1, kind: input, shape index: {}]
  %s2 = inlined_call_operand.vmem [shape: f32[196,32], index: 2, kind: input, shape index: {}]
  %s3 = inlined_call_operand.hbm [shape: f32[3,32,32], index: 3, kind: input, shape index: {}]
  %s4 = inlined_call_operand.vmem [shape: f32[4,1,32], index: 4, kind: input, shape index: {}]
  %s5 = inlined_call_operand.vmem [shape: f32[32,512], index: 5, kind: input, shape index: {}]
  %s6 = inlined_call_operand.vmem [shape: f32[1,512], index: 6, kind: input, shape index: {}]
  %s7 = inlined_call_operand.vmem [shape: f32[8,5,64], index: 7, kind: input, shape index: {}]
  %s8 = inlined_call_operand.vmem [shape: f32[16,64,64], index: 8, kind: input, shape index: {}]
  %s9 = inlined_call_operand.vmem [shape: f32[24,1,64], index: 9, kind: input, shape index: {}]
  %s10 = inlined_call_operand.hbm [shape: f32[8,64,64], index: 10, kind: input, shape index: {}]
  %s11 = inlined_call_operand.vmem [shape: f32[4,10,10], index: 11, kind: input, shape index: {}]
  %s12 = inlined_call_operand.vmem [shape: f32[4,1,10], index: 12, kind: input, shape index: {}]
  %s13 = inlined_call_operand.vmem [shape: f32[2,1,10], index: 13, kind: input, shape index: {}]
  %s14 = inlined_call_operand.<no memory space> [shape: f32[1,1], index: 14, kind: input, shape index: {}]
  %s15 = inlined_call_operand.vmem [shape: f32[256,10], index: 15, kind: output, shape index: {0}]
  %s16 = inlined_call_operand.vmem [shape: f32[256,1], index: 16, kind: output, shape index: {1}]
  %17 = xla_tuple %s15, %s16
  %s18 = sld [smem:[#allocation0]]
  $region109: #{tpu_custom_call.1} parent=0
    _
  %s20 = ssub.s32 1, %s18
  %s21 = scalar_select 0, %s20, %s18
  %v22 = vstv %s14
  %23 = vst [vmem:[#allocation2] sm:$0x1] %v22
  $region1: #{tpu_custom_call.1} parent=0
    #allocation3 [shape = 'u8[49152]{0}', space=vmem, size = 0xc000, scoped, tag = 'input window, operand 3, single buffered']
    #allocation4 [shape = 's32[2]{0}', space=sflag, size = 0x8, scoped, tag = 'scoped memory for tpu_custom_call.1']
    #allocation5 [shape = 'u8[262144]{0}', space=vmem, size = 0x40000, scoped, tag = 'input window, operand 10, single buffered']
    #allocation6 [shape = 's32[1]{0}', space=sflag, size = 0x4, scoped, tag = 'scoped memory for tpu_custom_call.1']
    %24 = vsyncpa [#allocation4], 0
    %25 = vsyncpa [#allocation6], 0
    loop: start=0, step=1, limit=4
    $region2: #{tpu_custom_call.1} parent=1 // loop_pre_header
      _
    $region3: #{tpu_custom_call.1} parent=1 // loop_header
      %s27 = sphi 0, %s31
      %p28 = scmp.ge.s32.totalorder %s27, 4
      %s37 = sphi 0, %s39
      %s40 = sphi 0, %s37
      %s41 = sphi 0, %s40
      %s57 = sphi 0, %s41
      %s63 = sphi 0, %s65
      %s66 = sphi 0, %s63
      %s67 = sphi 0, %s66
      %s83 = sphi 0, %s67
      %s87 = sphi 0, %s87
      %s89 = sphi 0, %s87
      %s90 = sphi 0, %s89
      %s104 = sphi 0, %s90
      %s108 = sphi 0, %s108
      %s110 = sphi 0, %s108
      %s111 = sphi 0, %s110
      %s125 = sphi 0, %s111
      %s129 = sphi 0, %s129
      %s131 = sphi 0, %s129
      %s132 = sphi 0, %s131
      %s146 = sphi 0, %s132
      %s150 = sphi 0, %s150
      %s152 = sphi 0, %s150
      %s153 = sphi 0, %s152
      %s167 = sphi 0, %s153
      %s171 = sphi 0, %s171
      %s173 = sphi 0, %s171
      %s174 = sphi 0, %s173
      %s188 = sphi 0, %s174
      %s192 = sphi 0, %s192
      %s194 = sphi 0, %s192
      %s195 = sphi 0, %s194
      %s209 = sphi 0, %s195
      %s213 = sphi 0, %s213
      %s215 = sphi 0, %s213
      %s216 = sphi 0, %s215
      %s230 = sphi 0, %s216
      %s234 = sphi 0, %s234
      %s236 = sphi 0, %s234
      %s237 = sphi 0, %s236
      %s251 = sphi 0, %s237
      %s255 = sphi 0, %s255
      %s257 = sphi 0, %s255
      %s258 = sphi 0, %s257
      %s272 = sphi 0, %s258
      %s276 = sphi 0, %s276
      %s278 = sphi 0, %s276
      %s279 = sphi 0, %s278
      %s293 = sphi 0, %s279
      %s297 = sphi 0, %s297
      %s299 = sphi 0, %s297
      %s300 = sphi 0, %s299
      %s314 = sphi 0, %s300
      %s318 = sphi 0, %s318
      %s320 = sphi 0, %s318
      %s321 = sphi 0, %s320
      %s335 = sphi 0, %s321
      %s339 = sphi 0, %s339
      %s341 = sphi 0, %s339
      %s342 = sphi 0, %s341
      %s356 = sphi 0, %s342
      %s362 = sphi 0, %s364
      %s365 = sphi 0, %s362
      %s366 = sphi 0, %s365
      %s382 = sphi 0, %s366
      %s388 = sphi 0, %s390
      %s391 = sphi 0, %s388
      %s392 = sphi 0, %s391
      %s408 = sphi 0, %s392
    $region4: #{tpu_custom_call.1} parent=1 // loop_header_branch
      %30 = sbr.rel (%p28) target = $region8
    $region5: #{tpu_custom_call.1} parent=1 // loop_body
      %s32 = ssub.s32 %s27, 1
      %s33 = ssub.s32 %s27, 2
      %s34 = sadd.s32 %s27, 1
      %s35 = ssub.s32 %s27, %s34
      %p36 = scmp.eq.s32.totalorder %s35, 0
      %s38 = sadd.s32 %s37, 1
      %s39 = scalar_select %p36, %s37, %s38
      %p42 = pneg %p36
      %p43 = scmp.eq.s32.totalorder %s27, 1
      %p44 = por %p42, %p43
      %p45 = scmp.ne.s32.totalorder %s37, %s40
      %p46 = scmp.eq.s32.totalorder %s27, 0
      %p47 = por %p45, %p46
      %p48 = scmp.ne.s32.totalorder %s37, %s40
      %p49 = scmp.eq.s32.totalorder %s32, 1
      %p50 = por %p48, %p49
      %p51 = scmp.ne.s32.totalorder %s40, %s41
      %p52 = scmp.eq.s32.totalorder %s32, 0
      %p53 = por %p51, %p52
      %p54 = scmp.ne.s32.totalorder %s40, %s41
      %p55 = scmp.eq.s32.totalorder %s33, 1
      %p56 = por %p54, %p55
      %p58 = scmp.ne.s32.totalorder %s41, %s57
      %p59 = scmp.eq.s32.totalorder %s33, 0
      %p60 = por %p58, %p59
      %s61 = ssub.s32 %s27, %s34
      %p62 = scmp.eq.s32.totalorder %s61, 0
      %s64 = sadd.s32 %s63, 1
      %s65 = scalar_select %p62, %s63, %s64
      %p68 = pneg %p62
      %p69 = scmp.eq.s32.totalorder %s27, 1
      %p70 = por %p68, %p69
      %p71 = scmp.ne.s32.totalorder %s63, %s66
      %p72 = scmp.eq.s32.totalorder %s27, 0
      %p73 = por %p71, %p72
      %p74 = scmp.ne.s32.totalorder %s63, %s66
      %p75 = scmp.eq.s32.totalorder %s32, 1
      %p76 = por %p74, %p75
      %p77 = scmp.ne.s32.totalorder %s66, %s67
      %p78 = scmp.eq.s32.totalorder %s32, 0
      %p79 = por %p77, %p78
      %p80 = scmp.ne.s32.totalorder %s66, %s67
      %p81 = scmp.eq.s32.totalorder %s33, 1
      %p82 = por %p80, %p81
      %p84 = scmp.ne.s32.totalorder %s67, %s83
      %p85 = scmp.eq.s32.totalorder %s33, 0
      %p86 = por %p84, %p85
      %s88 = sadd.s32 %s87, 1
      %p91 = scmp.eq.s32.totalorder %s27, 1
      %p92 = scmp.ne.s32.totalorder %s87, %s89
      %p93 = scmp.eq.s32.totalorder %s27, 0
      %p94 = por %p92, %p93
      %p95 = scmp.ne.s32.totalorder %s87, %s89
      %p96 = scmp.eq.s32.totalorder %s32, 1
      %p97 = por %p95, %p96
      %p98 = scmp.ne.s32.totalorder %s89, %s90
      %p99 = scmp.eq.s32.totalorder %s32, 0
      %p100 = por %p98, %p99
      %p101 = scmp.ne.s32.totalorder %s89, %s90
      %p102 = scmp.eq.s32.totalorder %s33, 1
      %p103 = por %p101, %p102
      %p105 = scmp.ne.s32.totalorder %s90, %s104
      %p106 = scmp.eq.s32.totalorder %s33, 0
      %p107 = por %p105, %p106
      %s109 = sadd.s32 %s108, 1
      %p112 = scmp.eq.s32.totalorder %s27, 1
      %p113 = scmp.ne.s32.totalorder %s108, %s110
      %p114 = scmp.eq.s32.totalorder %s27, 0
      %p115 = por %p113, %p114
      %p116 = scmp.ne.s32.totalorder %s108, %s110
      %p117 = scmp.eq.s32.totalorder %s32, 1
      %p118 = por %p116, %p117
      %p119 = scmp.ne.s32.totalorder %s110, %s111
      %p120 = scmp.eq.s32.totalorder %s32, 0
      %p121 = por %p119, %p120
      %p122 = scmp.ne.s32.totalorder %s110, %s111
      %p123 = scmp.eq.s32.totalorder %s33, 1
      %p124 = por %p122, %p123
      %p126 = scmp.ne.s32.totalorder %s111, %s125
      %p127 = scmp.eq.s32.totalorder %s33, 0
      %p128 = por %p126, %p127
      %s130 = sadd.s32 %s129, 1
      %p133 = scmp.eq.s32.totalorder %s27, 1
      %p134 = scmp.ne.s32.totalorder %s129, %s131
      %p135 = scmp.eq.s32.totalorder %s27, 0
      %p136 = por %p134, %p135
      %p137 = scmp.ne.s32.totalorder %s129, %s131
      %p138 = scmp.eq.s32.totalorder %s32, 1
      %p139 = por %p137, %p138
      %p140 = scmp.ne.s32.totalorder %s131, %s132
      %p141 = scmp.eq.s32.totalorder %s32, 0
      %p142 = por %p140, %p141
      %p143 = scmp.ne.s32.totalorder %s131, %s132
      %p144 = scmp.eq.s32.totalorder %s33, 1
      %p145 = por %p143, %p144
      %p147 = scmp.ne.s32.totalorder %s132, %s146
      %p148 = scmp.eq.s32.totalorder %s33, 0
      %p149 = por %p147, %p148
      %s151 = sadd.s32 %s150, 1
      %p154 = scmp.eq.s32.totalorder %s27, 1
      %p155 = scmp.ne.s32.totalorder %s150, %s152
      %p156 = scmp.eq.s32.totalorder %s27, 0
      %p157 = por %p155, %p156
      %p158 = scmp.ne.s32.totalorder %s150, %s152
      %p159 = scmp.eq.s32.totalorder %s32, 1
      %p160 = por %p158, %p159
      %p161 = scmp.ne.s32.totalorder %s152, %s153
      %p162 = scmp.eq.s32.totalorder %s32, 0
      %p163 = por %p161, %p162
      %p164 = scmp.ne.s32.totalorder %s152, %s153
      %p165 = scmp.eq.s32.totalorder %s33, 1
      %p166 = por %p164, %p165
      %p168 = scmp.ne.s32.totalorder %s153, %s167
      %p169 = scmp.eq.s32.totalorder %s33, 0
      %p170 = por %p168, %p169
      %s172 = sadd.s32 %s171, 1
      %p175 = scmp.eq.s32.totalorder %s27, 1
      %p176 = scmp.ne.s32.totalorder %s171, %s173
      %p177 = scmp.eq.s32.totalorder %s27, 0
      %p178 = por %p176, %p177
      %p179 = scmp.ne.s32.totalorder %s171, %s173
      %p180 = scmp.eq.s32.totalorder %s32, 1
      %p181 = por %p179, %p180
      %p182 = scmp.ne.s32.totalorder %s173, %s174
      %p183 = scmp.eq.s32.totalorder %s32, 0
      %p184 = por %p182, %p183
      %p185 = scmp.ne.s32.totalorder %s173, %s174
      %p186 = scmp.eq.s32.totalorder %s33, 1
      %p187 = por %p185, %p186
      %p189 = scmp.ne.s32.totalorder %s174, %s188
      %p190 = scmp.eq.s32.totalorder %s33, 0
      %p191 = por %p189, %p190
      %s193 = sadd.s32 %s192, 1
      %p196 = scmp.eq.s32.totalorder %s27, 1
      %p197 = scmp.ne.s32.totalorder %s192, %s194
      %p198 = scmp.eq.s32.totalorder %s27, 0
      %p199 = por %p197, %p198
      %p200 = scmp.ne.s32.totalorder %s192, %s194
      %p201 = scmp.eq.s32.totalorder %s32, 1
      %p202 = por %p200, %p201
      %p203 = scmp.ne.s32.totalorder %s194, %s195
      %p204 = scmp.eq.s32.totalorder %s32, 0
      %p205 = por %p203, %p204
      %p206 = scmp.ne.s32.totalorder %s194, %s195
      %p207 = scmp.eq.s32.totalorder %s33, 1
      %p208 = por %p206, %p207
      %p210 = scmp.ne.s32.totalorder %s195, %s209
      %p211 = scmp.eq.s32.totalorder %s33, 0
      %p212 = por %p210, %p211
      %s214 = sadd.s32 %s213, 1
      %p217 = scmp.eq.s32.totalorder %s27, 1
      %p218 = scmp.ne.s32.totalorder %s213, %s215
      %p219 = scmp.eq.s32.totalorder %s27, 0
      %p220 = por %p218, %p219
      %p221 = scmp.ne.s32.totalorder %s213, %s215
      %p222 = scmp.eq.s32.totalorder %s32, 1
      %p223 = por %p221, %p222
      %p224 = scmp.ne.s32.totalorder %s215, %s216
      %p225 = scmp.eq.s32.totalorder %s32, 0
      %p226 = por %p224, %p225
      %p227 = scmp.ne.s32.totalorder %s215, %s216
      %p228 = scmp.eq.s32.totalorder %s33, 1
      %p229 = por %p227, %p228
      %p231 = scmp.ne.s32.totalorder %s216, %s230
      %p232 = scmp.eq.s32.totalorder %s33, 0
      %p233 = por %p231, %p232
      %s235 = sadd.s32 %s234, 1
      %p238 = scmp.eq.s32.totalorder %s27, 1
      %p239 = scmp.ne.s32.totalorder %s234, %s236
      %p240 = scmp.eq.s32.totalorder %s27, 0
      %p241 = por %p239, %p240
      %p242 = scmp.ne.s32.totalorder %s234, %s236
      %p243 = scmp.eq.s32.totalorder %s32, 1
      %p244 = por %p242, %p243
      %p245 = scmp.ne.s32.totalorder %s236, %s237
      %p246 = scmp.eq.s32.totalorder %s32, 0
      %p247 = por %p245, %p246
      %p248 = scmp.ne.s32.totalorder %s236, %s237
      %p249 = scmp.eq.s32.totalorder %s33, 1
      %p250 = por %p248, %p249
      %p252 = scmp.ne.s32.totalorder %s237, %s251
      %p253 = scmp.eq.s32.totalorder %s33, 0
      %p254 = por %p252, %p253
      %s256 = sadd.s32 %s255, 1
      %p259 = scmp.eq.s32.totalorder %s27, 1
      %p260 = scmp.ne.s32.totalorder %s255, %s257
      %p261 = scmp.eq.s32.totalorder %s27, 0
      %p262 = por %p260, %p261
      %p263 = scmp.ne.s32.totalorder %s255, %s257
      %p264 = scmp.eq.s32.totalorder %s32, 1
      %p265 = por %p263, %p264
      %p266 = scmp.ne.s32.totalorder %s257, %s258
      %p267 = scmp.eq.s32.totalorder %s32, 0
      %p268 = por %p266, %p267
      %p269 = scmp.ne.s32.totalorder %s257, %s258
      %p270 = scmp.eq.s32.totalorder %s33, 1
      %p271 = por %p269, %p270
      %p273 = scmp.ne.s32.totalorder %s258, %s272
      %p274 = scmp.eq.s32.totalorder %s33, 0
      %p275 = por %p273, %p274
      %s277 = sadd.s32 %s276, 1
      %p280 = scmp.eq.s32.totalorder %s27, 1
      %p281 = scmp.ne.s32.totalorder %s276, %s278
      %p282 = scmp.eq.s32.totalorder %s27, 0
      %p283 = por %p281, %p282
      %p284 = scmp.ne.s32.totalorder %s276, %s278
      %p285 = scmp.eq.s32.totalorder %s32, 1
      %p286 = por %p284, %p285
      %p287 = scmp.ne.s32.totalorder %s278, %s279
      %p288 = scmp.eq.s32.totalorder %s32, 0
      %p289 = por %p287, %p288
      %p290 = scmp.ne.s32.totalorder %s278, %s279
      %p291 = scmp.eq.s32.totalorder %s33, 1
      %p292 = por %p290, %p291
      %p294 = scmp.ne.s32.totalorder %s279, %s293
      %p295 = scmp.eq.s32.totalorder %s33, 0
      %p296 = por %p294, %p295
      %s298 = sadd.s32 %s297, 1
      %p301 = scmp.eq.s32.totalorder %s27, 1
      %p302 = scmp.ne.s32.totalorder %s297, %s299
      %p303 = scmp.eq.s32.totalorder %s27, 0
      %p304 = por %p302, %p303
      %p305 = scmp.ne.s32.totalorder %s297, %s299
      %p306 = scmp.eq.s32.totalorder %s32, 1
      %p307 = por %p305, %p306
      %p308 = scmp.ne.s32.totalorder %s299, %s300
      %p309 = scmp.eq.s32.totalorder %s32, 0
      %p310 = por %p308, %p309
      %p311 = scmp.ne.s32.totalorder %s299, %s300
      %p312 = scmp.eq.s32.totalorder %s33, 1
      %p313 = por %p311, %p312
      %p315 = scmp.ne.s32.totalorder %s300, %s314
      %p316 = scmp.eq.s32.totalorder %s33, 0
      %p317 = por %p315, %p316
      %s319 = sadd.s32 %s318, 1
      %p322 = scmp.eq.s32.totalorder %s27, 1
      %p323 = scmp.ne.s32.totalorder %s318, %s320
      %p324 = scmp.eq.s32.totalorder %s27, 0
      %p325 = por %p323, %p324
      %p326 = scmp.ne.s32.totalorder %s318, %s320
      %p327 = scmp.eq.s32.totalorder %s32, 1
      %p328 = por %p326, %p327
      %p329 = scmp.ne.s32.totalorder %s320, %s321
      %p330 = scmp.eq.s32.totalorder %s32, 0
      %p331 = por %p329, %p330
      %p332 = scmp.ne.s32.totalorder %s320, %s321
      %p333 = scmp.eq.s32.totalorder %s33, 1
      %p334 = por %p332, %p333
      %p336 = scmp.ne.s32.totalorder %s321, %s335
      %p337 = scmp.eq.s32.totalorder %s33, 0
      %p338 = por %p336, %p337
      %s340 = sadd.s32 %s339, 1
      %p343 = scmp.eq.s32.totalorder %s27, 1
      %p344 = scmp.ne.s32.totalorder %s339, %s341
      %p345 = scmp.eq.s32.totalorder %s27, 0
      %p346 = por %p344, %p345
      %p347 = scmp.ne.s32.totalorder %s339, %s341
      %p348 = scmp.eq.s32.totalorder %s32, 1
      %p349 = por %p347, %p348
      %p350 = scmp.ne.s32.totalorder %s341, %s342
      %p351 = scmp.eq.s32.totalorder %s32, 0
      %p352 = por %p350, %p351
      %p353 = scmp.ne.s32.totalorder %s341, %s342
      %p354 = scmp.eq.s32.totalorder %s33, 1
      %p355 = por %p353, %p354
      %p357 = scmp.ne.s32.totalorder %s342, %s356
      %p358 = scmp.eq.s32.totalorder %s33, 0
      %p359 = por %p357, %p358
      %s360 = ssub.s32 %s27, %s34
      %p361 = scmp.eq.s32.totalorder %s360, 0
      %s363 = sadd.s32 %s362, 1
      %s364 = scalar_select %p361, %s362, %s363
      %p367 = pneg %p361
      %p368 = scmp.eq.s32.totalorder %s27, 1
      %p369 = por %p367, %p368
      %p370 = scmp.ne.s32.totalorder %s362, %s365
      %p371 = scmp.eq.s32.totalorder %s27, 0
      %p372 = por %p370, %p371
      %p373 = scmp.ne.s32.totalorder %s362, %s365
      %p374 = scmp.eq.s32.totalorder %s32, 1
      %p375 = por %p373, %p374
      %p376 = scmp.ne.s32.totalorder %s365, %s366
      %p377 = scmp.eq.s32.totalorder %s32, 0
      %p378 = por %p376, %p377
      %p379 = scmp.ne.s32.totalorder %s365, %s366
      %p380 = scmp.eq.s32.totalorder %s33, 1
      %p381 = por %p379, %p380
      %p383 = scmp.ne.s32.totalorder %s366, %s382
      %p384 = scmp.eq.s32.totalorder %s33, 0
      %p385 = por %p383, %p384
      %s386 = ssub.s32 %s27, %s34
      %p387 = scmp.eq.s32.totalorder %s386, 0
      %s389 = sadd.s32 %s388, 1
      %s390 = scalar_select %p387, %s388, %s389
      %p393 = pneg %p387
      %p394 = scmp.eq.s32.totalorder %s27, 1
      %p395 = por %p393, %p394
      %p396 = scmp.ne.s32.totalorder %s388, %s391
      %p397 = scmp.eq.s32.totalorder %s27, 0
      %p398 = por %p396, %p397
      %p399 = scmp.ne.s32.totalorder %s388, %s391
      %p400 = scmp.eq.s32.totalorder %s32, 1
      %p401 = por %p399, %p400
      %p402 = scmp.ne.s32.totalorder %s391, %s392
      %p403 = scmp.eq.s32.totalorder %s32, 0
      %p404 = por %p402, %p403
      %p405 = scmp.ne.s32.totalorder %s391, %s392
      %p406 = scmp.eq.s32.totalorder %s33, 1
      %p407 = por %p405, %p406
      %p409 = scmp.ne.s32.totalorder %s392, %s408
      %p410 = scmp.eq.s32.totalorder %s33, 0
      %p411 = por %p409, %p410
      %p412 = scmp.le.s32.totalorder 1, %s27
      %p413 = scmp.lt.s32.totalorder %s27, 3
      %p414 = pnand %p412, %p413
      %p415 = pneg %p414
      // Predicated region
      $region9: #{tpu_custom_call.1} parent=5 // pred_check
        _
      $region10: #{tpu_custom_call.1} parent=5 // pred_check_branch
        %417 = sbr.rel (%p414) target = $region12
      $region11: #{tpu_custom_call.1} parent=5 // pred_region
        %s418 = ssub.s32 %s27, 1
        // Predicated region
        $region13: #{tpu_custom_call.1} parent=11 // pred_check
          %p419 = pneg %p100
        $region14: #{tpu_custom_call.1} parent=11 // pred_check_branch
          %421 = sbr.rel (%p419) target = $region16
        $region15: #{tpu_custom_call.1} parent=11 // pred_region
          _
        $region16: #{tpu_custom_call.1} parent=11 // pred_fallthru
          _
        // Predicated region
        $region17: #{tpu_custom_call.1} parent=11 // pred_check
          %p422 = pneg %p121
        $region18: #{tpu_custom_call.1} parent=11 // pred_check_branch
          %424 = sbr.rel (%p422) target = $region20
        $region19: #{tpu_custom_call.1} parent=11 // pred_region
          %426 = vsyncadd [#allocation4], 0
          %s427 = sshll.u32 %s3, 4
          %s428 = int_to_ptr.hbm [resolvable:$true] %s427
          %s429 = sshll.u32 [#allocation3], 4
          %s430 = int_to_ptr.vmem [resolvable:$true] %s429
          %435 = dma.hbm_to_vmem [thread:$0]  %s428, 1536, %s430, [#allocation4], 128, 128, 8
        $region20: #{tpu_custom_call.1} parent=11 // pred_fallthru
          _
        // Predicated region
        $region21: #{tpu_custom_call.1} parent=11 // pred_check
          %p436 = pneg %p142
        $region22: #{tpu_custom_call.1} parent=11 // pred_check_branch
          %438 = sbr.rel (%p436) target = $region24
        $region23: #{tpu_custom_call.1} parent=11 // pred_region
          _
        $region24: #{tpu_custom_call.1} parent=11 // pred_fallthru
          _
        // Predicated region
        $region25: #{tpu_custom_call.1} parent=11 // pred_check
          %p439 = pneg %p163
        $region26: #{tpu_custom_call.1} parent=11 // pred_check_branch
          %441 = sbr.rel (%p439) target = $region28
        $region27: #{tpu_custom_call.1} parent=11 // pred_region
          _
        $region28: #{tpu_custom_call.1} parent=11 // pred_fallthru
          _
        // Predicated region
        $region29: #{tpu_custom_call.1} parent=11 // pred_check
          %p442 = pneg %p184
        $region30: #{tpu_custom_call.1} parent=11 // pred_check_branch
          %444 = sbr.rel (%p442) target = $region32
        $region31: #{tpu_custom_call.1} parent=11 // pred_region
          _
        $region32: #{tpu_custom_call.1} parent=11 // pred_fallthru
          _
        // Predicated region
        $region33: #{tpu_custom_call.1} parent=11 // pred_check
          %p445 = pneg %p205
        $region34: #{tpu_custom_call.1} parent=11 // pred_check_branch
          %447 = sbr.rel (%p445) target = $region36
        $region35: #{tpu_custom_call.1} parent=11 // pred_region
          _
        $region36: #{tpu_custom_call.1} parent=11 // pred_fallthru
          _
        // Predicated region
        $region37: #{tpu_custom_call.1} parent=11 // pred_check
          %p448 = pneg %p226
        $region38: #{tpu_custom_call.1} parent=11 // pred_check_branch
          %450 = sbr.rel (%p448) target = $region40
        $region39: #{tpu_custom_call.1} parent=11 // pred_region
          _
        $region40: #{tpu_custom_call.1} parent=11 // pred_fallthru
          _
        // Predicated region
        $region41: #{tpu_custom_call.1} parent=11 // pred_check
          %p451 = pneg %p247
        $region42: #{tpu_custom_call.1} parent=11 // pred_check_branch
          %453 = sbr.rel (%p451) target = $region44
        $region43: #{tpu_custom_call.1} parent=11 // pred_region
          _
        $region44: #{tpu_custom_call.1} parent=11 // pred_fallthru
          _
        // Predicated region
        $region45: #{tpu_custom_call.1} parent=11 // pred_check
          %p454 = pneg %p268
        $region46: #{tpu_custom_call.1} parent=11 // pred_check_branch
          %456 = sbr.rel (%p454) target = $region48
        $region47: #{tpu_custom_call.1} parent=11 // pred_region
          %458 = vsyncadd [#allocation6], 0
          %s459 = sshll.u32 %s10, 4
          %s460 = int_to_ptr.hbm [resolvable:$true] %s459
          %s461 = sshll.u32 [#allocation5], 4
          %s462 = int_to_ptr.vmem [resolvable:$true] %s461
          %467 = dma.hbm_to_vmem [thread:$0]  %s460, 8192, %s462, [#allocation6], 128, 128, 8
        $region48: #{tpu_custom_call.1} parent=11 // pred_fallthru
          _
        // Predicated region
        $region49: #{tpu_custom_call.1} parent=11 // pred_check
          %p468 = pneg %p289
        $region50: #{tpu_custom_call.1} parent=11 // pred_check_branch
          %470 = sbr.rel (%p468) target = $region52
        $region51: #{tpu_custom_call.1} parent=11 // pred_region
          _
        $region52: #{tpu_custom_call.1} parent=11 // pred_fallthru
          _
        // Predicated region
        $region53: #{tpu_custom_call.1} parent=11 // pred_check
          %p471 = pneg %p310
        $region54: #{tpu_custom_call.1} parent=11 // pred_check_branch
          %473 = sbr.rel (%p471) target = $region56
        $region55: #{tpu_custom_call.1} parent=11 // pred_region
          _
        $region56: #{tpu_custom_call.1} parent=11 // pred_fallthru
          _
        // Predicated region
        $region57: #{tpu_custom_call.1} parent=11 // pred_check
          %p474 = pneg %p331
        $region58: #{tpu_custom_call.1} parent=11 // pred_check_branch
          %476 = sbr.rel (%p474) target = $region60
        $region59: #{tpu_custom_call.1} parent=11 // pred_region
          _
        $region60: #{tpu_custom_call.1} parent=11 // pred_fallthru
          _
        // Predicated region
        $region61: #{tpu_custom_call.1} parent=11 // pred_check
          %p477 = pneg %p352
        $region62: #{tpu_custom_call.1} parent=11 // pred_check_branch
          %479 = sbr.rel (%p477) target = $region64
        $region63: #{tpu_custom_call.1} parent=11 // pred_region
          _
        $region64: #{tpu_custom_call.1} parent=11 // pred_fallthru
          _
      $region12: #{tpu_custom_call.1} parent=5 // pred_fallthru
        _
      %p480 = scmp.lt.s32.totalorder %s27, 2
      // Predicated region
      $region65: #{tpu_custom_call.1} parent=5 // pred_check
        %p481 = pneg %p480
      $region66: #{tpu_custom_call.1} parent=5 // pred_check_branch
        %483 = sbr.rel (%p481) target = $region68
      $region67: #{tpu_custom_call.1} parent=5 // pred_region
        // Predicated region
        $region69: #{tpu_custom_call.1} parent=67 // pred_check
          %p484 = pneg %p47
        $region70: #{tpu_custom_call.1} parent=67 // pred_check_branch
          %486 = sbr.rel (%p484) target = $region72
        $region71: #{tpu_custom_call.1} parent=67 // pred_region
          %s487 = smul.u32 16, %s27
          %p488 = scmp.lt.s32.totalorder %s487, 31
          %s489 = scalar_select %p488, %s487, 31
          %s490 = smul.addr %s489, 8
          %s491 = scalar_lea.vmem %s0, %s490
          %s492 = smul.u32 16, %s27
        $region72: #{tpu_custom_call.1} parent=67 // pred_fallthru
          _
        // Predicated region
        $region73: #{tpu_custom_call.1} parent=67 // pred_check
          %p493 = pneg %p73
        $region74: #{tpu_custom_call.1} parent=67 // pred_check_branch
          %495 = sbr.rel (%p493) target = $region76
        $region75: #{tpu_custom_call.1} parent=67 // pred_region
          %s496 = smul.u32 16, %s27
          %p497 = scmp.lt.s32.totalorder %s496, 31
          %s498 = scalar_select %p497, %s496, 31
          %s499 = smul.addr %s498, 2
          %s500 = smul.addr %s499, 8
          %s501 = scalar_lea.vmem %s1, %s500
          %s502 = smul.u32 16, %s27
        $region76: #{tpu_custom_call.1} parent=67 // pred_fallthru
          _
      $region68: #{tpu_custom_call.1} parent=5 // pred_fallthru
        _
      %p503 = scmp.le.s32.totalorder 1, %s27
      %p504 = scmp.lt.s32.totalorder %s27, 3
      %p505 = pnand %p503, %p504
      %p506 = pneg %p505
      // Predicated region
      $region77: #{tpu_custom_call.1} parent=5 // pred_check
        _
      $region78: #{tpu_custom_call.1} parent=5 // pred_check_branch
        %508 = sbr.rel (%p505) target = $region80
      $region79: #{tpu_custom_call.1} parent=5 // pred_region
        %s509 = ssub.s32 %s27, 1
        // Predicated region
        $region81: #{tpu_custom_call.1} parent=79 // pred_check
          %p510 = pneg %p121
        $region82: #{tpu_custom_call.1} parent=79 // pred_check_branch
          %512 = sbr.rel (%p510) target = $region84
        $region83: #{tpu_custom_call.1} parent=79 // pred_region
          %514 = dma.done [#allocation4], 1536
        $region84: #{tpu_custom_call.1} parent=79 // pred_fallthru
          _
        // Predicated region
        $region85: #{tpu_custom_call.1} parent=79 // pred_check
          %p515 = pneg %p268
        $region86: #{tpu_custom_call.1} parent=79 // pred_check_branch
          %517 = sbr.rel (%p515) target = $region88
        $region87: #{tpu_custom_call.1} parent=79 // pred_region
          %519 = dma.done [#allocation6], 8192
        $region88: #{tpu_custom_call.1} parent=79 // pred_fallthru
          _
        %s520 = smul.u32 16, %s32
        %p521 = scmp.lt.s32.totalorder %s520, 31
        %s522 = scalar_select %p521, %s520, 31
        %s523 = smul.addr %s522, 8
        %s524 = scalar_lea.vmem %s0, %s523
        %p525 = pneg %p53
        %p526 = pneg %p50
        %s527 = smul.u32 16, %s32
        %p528 = scmp.lt.s32.totalorder %s527, 31
        %s529 = scalar_select %p528, %s527, 31
        %s530 = smul.addr %s529, 2
        %s531 = smul.addr %s530, 8
        %s532 = scalar_lea.vmem %s1, %s531
        %p533 = pneg %p79
        %p534 = pneg %p76
        %p535 = pneg %p100
        %p536 = pneg %p97
        %p537 = pneg %p121
        %p538 = pneg %p118
        %p539 = pneg %p142
        %p540 = pneg %p139
        %p541 = pneg %p163
        %p542 = pneg %p160
        %p543 = pneg %p184
        %p544 = pneg %p181
        %p545 = pneg %p205
        %p546 = pneg %p202
        %p547 = pneg %p226
        %p548 = pneg %p223
        %p549 = pneg %p247
        %p550 = pneg %p244
        %p551 = pneg %p268
        %p552 = pneg %p265
        %p553 = pneg %p289
        %p554 = pneg %p286
        %p555 = pneg %p310
        %p556 = pneg %p307
        %p557 = pneg %p331
        %p558 = pneg %p328
        %p559 = pneg %p352
        %p560 = pneg %p349
        %p561 = pneg %p378
        %p562 = pneg %p375
        %s563 = smul.u32 16, %s32
        %p564 = scmp.lt.s32.totalorder %s563, 31
        %s565 = scalar_select %p564, %s563, 31
        %s566 = smul.addr %s565, 8
        %s567 = scalar_lea.vmem %s15, %s566
        %p568 = pneg %p404
        %p569 = pneg %p401
        %s570 = smul.u32 16, %s32
        %p571 = scmp.lt.s32.totalorder %s570, 31
        %s572 = scalar_select %p571, %s570, 31
        %s573 = smul.addr %s572, 8
        %s574 = scalar_lea.vmem %s16, %s573
        %s575 = smul.u32 16, %s32
        %p576 = scmp.lt.s32.totalorder %s575, 31
        %s577 = scalar_select %p576, %s575, 31
        %s578 = smul.addr %s577, 8
        %s579 = scalar_lea.vmem %s0, %s578
        %s580 = smul.u32 16, %s32
        %s581 = smul.u32 16, %s32
        %p582 = scmp.lt.s32.totalorder %s581, 31
        %s583 = scalar_select %p582, %s581, 31
        %s584 = smul.addr %s583, 2
        %s585 = smul.addr %s584, 8
        %s586 = scalar_lea.vmem %s1, %s585
        %s587 = smul.u32 16, %s32
        %s588 = smul.u32 16, %s32
        %p589 = scmp.lt.s32.totalorder %s588, 31
        %s590 = scalar_select %p589, %s588, 31
        %s591 = smul.addr %s590, 8
        %s592 = scalar_lea.vmem %s15, %s591
        %s593 = smul.u32 16, %s32
        %s594 = smul.u32 16, %s32
        %p595 = scmp.lt.s32.totalorder %s594, 31
        %s596 = scalar_select %p595, %s594, 31
        %s597 = smul.addr %s596, 8
        %s598 = scalar_lea.vmem %s16, %s597
        %s599 = smul.u32 16, %s32
        %v600 = vld [vmem:[%s586] sm:$0xff]
        %v601 = vld [vmem:[%s586 + $0x8] sm:$0xff]
        %v602 = vld [vmem:[%s586 + $0x10] sm:$0xff]
        %v603 = vld [vmem:[%s586 + $0x18] sm:$0xff]
        %v604 = vld [vmem:[%s586 + $0x20] sm:$0xff]
        %v605 = vld [vmem:[%s586 + $0x28] sm:$0xff]
        %v606 = vld [vmem:[%s586 + $0x30] sm:$0xff]
        %v607 = vld [vmem:[%s586 + $0x38] sm:$0xff]
        %v608 = vld [vmem:[%s586 + $0x40] sm:$0xff]
        %v609 = vld [vmem:[%s586 + $0x48] sm:$0xff]
        %v610 = vld [vmem:[%s586 + $0x50] sm:$0xff]
        %v611 = vld [vmem:[%s586 + $0x58] sm:$0xff]
        %v612 = vld [vmem:[%s586 + $0x60] sm:$0xff]
        %v613 = vld [vmem:[%s586 + $0x68] sm:$0xff]
        %v614 = vld [vmem:[%s586 + $0x70] sm:$0xff]
        %v615 = vld [vmem:[%s586 + $0x78] sm:$0xff]
        %v616 = vld [vmem:[%s586 + $0x80] sm:$0xff]
        %v617 = vld [vmem:[%s586 + $0x88] sm:$0xff]
        %v618 = vld [vmem:[%s586 + $0x90] sm:$0xff]
        %v619 = vld [vmem:[%s586 + $0x98] sm:$0xff]
        %v620 = vld [vmem:[%s586 + $0xa0] sm:$0xff]
        %v621 = vld [vmem:[%s586 + $0xa8] sm:$0xff]
        %v622 = vld [vmem:[%s586 + $0xb0] sm:$0xff]
        %v623 = vld [vmem:[%s586 + $0xb8] sm:$0xff]
        %v624 = vld [vmem:[%s586 + $0xc0] sm:$0xff]
        %v625 = vld [vmem:[%s586 + $0xc8] sm:$0xff]
        %v626 = vld [vmem:[%s586 + $0xd0] sm:$0xff]
        %v627 = vld [vmem:[%s586 + $0xd8] sm:$0xff]
        %v628 = vld [vmem:[%s586 + $0xe0] sm:$0xff]
        %v629 = vld [vmem:[%s586 + $0xe8] sm:$0xff]
        %v630 = vld [vmem:[%s586 + $0xf0] sm:$0xff]
        %v631 = vld [vmem:[%s586 + $0xf8] sm:$0xff]
        %v632 = vld [vmem:[%s2] sm:$0xff]
        %v633 = vld [vmem:[%s2 + $0x8] sm:$0xff]
        %v634 = vld [vmem:[%s2 + $0x10] sm:$0xff]
        %v635 = vld [vmem:[%s2 + $0x18] sm:$0xff]
        %v636 = vld [vmem:[%s2 + $0x20] sm:$0xff]
        %v637 = vld [vmem:[%s2 + $0x28] sm:$0xff]
        %v638 = vld [vmem:[%s2 + $0x30] sm:$0xff]
        %v639 = vld [vmem:[%s2 + $0x38] sm:$0xff]
        %v640 = vld [vmem:[%s2 + $0x40] sm:$0xff]
        %v641 = vld [vmem:[%s2 + $0x48] sm:$0xff]
        %v642 = vld [vmem:[%s2 + $0x50] sm:$0xff]
        %v643 = vld [vmem:[%s2 + $0x58] sm:$0xff]
        %v644 = vld [vmem:[%s2 + $0x60] sm:$0xff]
        %v645 = vld [vmem:[%s2 + $0x68] sm:$0xff]
        %v646 = vld [vmem:[%s2 + $0x70] sm:$0xff]
        %v647 = vld [vmem:[%s2 + $0x78] sm:$0xff]
        %v648 = vld [vmem:[%s2 + $0x80] sm:$0xff]
        %v649 = vld [vmem:[%s2 + $0x88] sm:$0xff]
        %v650 = vld [vmem:[%s2 + $0x90] sm:$0xff]
        %v651 = vld [vmem:[%s2 + $0x98] sm:$0xff]
        %v652 = vld [vmem:[%s2 + $0xa0] sm:$0xff]
        %v653 = vld [vmem:[%s2 + $0xa8] sm:$0xff]
        %v654 = vld [vmem:[%s2 + $0xb0] sm:$0xff]
        %v655 = vld [vmem:[%s2 + $0xb8] sm:$0xff]
        %v656 = vld [vmem:[%s2 + $0xc0] sm:$0xf]
        %v657 = vld [vmem:[%s4] sm:$0x1]
        %v659 = vperm.slane %v657, 0
        %vm661 = vcmask 556032
        %v663 = vsel %vm661, %v601, 0
        %v666 = vsel %vm661, %v603, 0
        %v669 = vsel %vm661, %v605, 0
        %v672 = vsel %vm661, %v607, 0
        %v675 = vsel %vm661, %v609, 0
        %v678 = vsel %vm661, %v611, 0
        %v681 = vsel %vm661, %v613, 0
        %v684 = vsel %vm661, %v615, 0
        %v687 = vsel %vm661, %v617, 0
        %v690 = vsel %vm661, %v619, 0
        %v693 = vsel %vm661, %v621, 0
        %v696 = vsel %vm661, %v623, 0
        %v699 = vsel %vm661, %v625, 0
        %v702 = vsel %vm661, %v627, 0
        %v705 = vsel %vm661, %v629, 0
        %v708 = vsel %vm661, %v631, 0
        %vm710 = vcmask 1043456
        %v712 = vsel %vm710, %v656, 0
        %714 = vmatpush.msra.mxu0 %v647
        %715 = vmatpush.msra.mxu0 %v646
        %716 = vmatpush.msra.mxu0 %v645
        %717 = vmatpush.msra.mxu0 %v644
        %718 = vmatpush.msra.mxu0 %v643
        %719 = vmatpush.msra.mxu0 %v642
        %720 = vmatpush.msra.mxu0 %v641
        %721 = vmatpush.msra.mxu0 %v640
        %722 = vmatpush.msra.mxu0 %v639
        %723 = vmatpush.msra.mxu0 %v638
        %724 = vmatpush.msra.mxu0 %v637
        %725 = vmatpush.msra.mxu0 %v636
        %726 = vmatpush.msra.mxu0 %v635
        %727 = vmatpush.msra.mxu0 %v634
        %728 = vmatpush.msra.mxu0 %v633
        %729 = vmatpush.msra.mxu0 %v632
        %730 = vmatmul.f32.gmra.mxu0 %v600
        %v731 = vpop.f32.mrf.mxu0
        %v732 = vadd.f32 %v659, %v731
        %733 = vmatmul.f32.gmra.mxu0 %v602
        %v734 = vpop.f32.mrf.mxu0
        %v735 = vadd.f32 %v659, %v734
        %736 = vmatmul.f32.gmra.mxu0 %v604
        %v737 = vpop.f32.mrf.mxu0
        %v738 = vadd.f32 %v659, %v737
        %739 = vmatmul.f32.gmra.mxu0 %v606
        %v740 = vpop.f32.mrf.mxu0
        %v741 = vadd.f32 %v659, %v740
        %742 = vmatmul.f32.gmra.mxu0 %v608
        %v743 = vpop.f32.mrf.mxu0
        %v744 = vadd.f32 %v659, %v743
        %745 = vmatmul.f32.gmra.mxu0 %v610
        %v746 = vpop.f32.mrf.mxu0
        %v747 = vadd.f32 %v659, %v746
        %748 = vmatmul.f32.gmra.mxu0 %v612
        %v749 = vpop.f32.mrf.mxu0
        %v750 = vadd.f32 %v659, %v749
        %751 = vmatmul.f32.gmra.mxu0 %v614
        %v752 = vpop.f32.mrf.mxu0
        %v753 = vadd.f32 %v659, %v752
        %754 = vmatmul.f32.gmra.mxu0 %v616
        %v755 = vpop.f32.mrf.mxu0
        %v756 = vadd.f32 %v659, %v755
        %757 = vmatmul.f32.gmra.mxu0 %v618
        %v758 = vpop.f32.mrf.mxu0
        %v759 = vadd.f32 %v659, %v758
        %760 = vmatmul.f32.gmra.mxu0 %v620
        %v761 = vpop.f32.mrf.mxu0
        %v762 = vadd.f32 %v659, %v761
        %763 = vmatmul.f32.gmra.mxu0 %v622
        %v764 = vpop.f32.mrf.mxu0
        %v765 = vadd.f32 %v659, %v764
        %766 = vmatmul.f32.gmra.mxu0 %v624
        %v767 = vpop.f32.mrf.mxu0
        %v768 = vadd.f32 %v659, %v767
        %769 = vmatmul.f32.gmra.mxu0 %v626
        %v770 = vpop.f32.mrf.mxu0
        %v771 = vadd.f32 %v659, %v770
        %772 = vmatmul.f32.gmra.mxu0 %v628
        %v773 = vpop.f32.mrf.mxu0
        %v774 = vadd.f32 %v659, %v773
        %775 = vmatmul.f32.gmra.mxu0 %v630
        %v776 = vpop.f32.mrf.mxu0
        %v777 = vadd.f32 %v659, %v776
        %778 = vdwg.mxu0
        %779 = vmatpush.msra.mxu0 0.0
        %780 = vmatpush.msra.mxu0 0.0
        %781 = vmatpush.msra.mxu0 0.0
        %782 = vmatpush.msra.mxu0 0.0
        %783 = vmatpush.msra.mxu0 0.0
        %784 = vmatpush.msra.mxu0 0.0
        %785 = vmatpush.msra.mxu0 0.0
        %786 = vmatpush.msra.mxu0 %v712
        %787 = vmatpush.msra.mxu0 %v655
        %788 = vmatpush.msra.mxu0 %v654
        %789 = vmatpush.msra.mxu0 %v653
        %790 = vmatpush.msra.mxu0 %v652
        %791 = vmatpush.msra.mxu0 %v651
        %792 = vmatpush.msra.mxu0 %v650
        %793 = vmatpush.msra.mxu0 %v649
        %794 = vmatpush.msra.mxu0 %v648
        %795 = vmatmul.f32.gmra.mxu0 %v663
        %v796 = vpop.f32.mrf.mxu0
        %v797 = vadd.f32 %v732, %v796
        %798 = vmatmul.f32.gmra.mxu0 %v666
        %v799 = vpop.f32.mrf.mxu0
        %v800 = vadd.f32 %v735, %v799
        %801 = vmatmul.f32.gmra.mxu0 %v669
        %v802 = vpop.f32.mrf.mxu0
        %v803 = vadd.f32 %v738, %v802
        %804 = vmatmul.f32.gmra.mxu0 %v672
        %v805 = vpop.f32.mrf.mxu0
        %v806 = vadd.f32 %v741, %v805
        %807 = vmatmul.f32.gmra.mxu0 %v675
        %v808 = vpop.f32.mrf.mxu0
        %v809 = vadd.f32 %v744, %v808
        %810 = vmatmul.f32.gmra.mxu0 %v678
        %v811 = vpop.f32.mrf.mxu0
        %v812 = vadd.f32 %v747, %v811
        %813 = vmatmul.f32.gmra.mxu0 %v681
        %v814 = vpop.f32.mrf.mxu0
        %v815 = vadd.f32 %v750, %v814
        %816 = vmatmul.f32.gmra.mxu0 %v684
        %v817 = vpop.f32.mrf.mxu0
        %v818 = vadd.f32 %v753, %v817
        %819 = vmatmul.f32.gmra.mxu0 %v687
        %v820 = vpop.f32.mrf.mxu0
        %v821 = vadd.f32 %v756, %v820
        %822 = vmatmul.f32.gmra.mxu0 %v690
        %v823 = vpop.f32.mrf.mxu0
        %v824 = vadd.f32 %v759, %v823
        %825 = vmatmul.f32.gmra.mxu0 %v693
        %v826 = vpop.f32.mrf.mxu0
        %v827 = vadd.f32 %v762, %v826
        %828 = vmatmul.f32.gmra.mxu0 %v696
        %v829 = vpop.f32.mrf.mxu0
        %v830 = vadd.f32 %v765, %v829
        %831 = vmatmul.f32.gmra.mxu0 %v699
        %v832 = vpop.f32.mrf.mxu0
        %v833 = vadd.f32 %v768, %v832
        %834 = vmatmul.f32.gmra.mxu0 %v702
        %v835 = vpop.f32.mrf.mxu0
        %v836 = vadd.f32 %v771, %v835
        %837 = vmatmul.f32.gmra.mxu0 %v705
        %v838 = vpop.f32.mrf.mxu0
        %v839 = vadd.f32 %v774, %v838
        %840 = vmatmul.f32.gmra.mxu0 %v708
        %v841 = vpop.f32.mrf.mxu0
        %v842 = vadd.f32 %v777, %v841
        %843 = vdwg.mxu0
        %vm844 = vcmp.ge.f32.partialorder %v797, 0.0
        %vm845 = vcmp.ge.f32.partialorder %v800, 0.0
        %vm846 = vcmp.ge.f32.partialorder %v803, 0.0
        %vm847 = vcmp.ge.f32.partialorder %v806, 0.0
        %vm848 = vcmp.ge.f32.partialorder %v809, 0.0
        %vm849 = vcmp.ge.f32.partialorder %v812, 0.0
        %vm850 = vcmp.ge.f32.partialorder %v815, 0.0
        %vm851 = vcmp.ge.f32.partialorder %v818, 0.0
        %vm852 = vcmp.ge.f32.partialorder %v821, 0.0
        %vm853 = vcmp.ge.f32.partialorder %v824, 0.0
        %vm854 = vcmp.ge.f32.partialorder %v827, 0.0
        %vm855 = vcmp.ge.f32.partialorder %v830, 0.0
        %vm856 = vcmp.ge.f32.partialorder %v833, 0.0
        %vm857 = vcmp.ge.f32.partialorder %v836, 0.0
        %vm858 = vcmp.ge.f32.partialorder %v839, 0.0
        %vm859 = vcmp.ge.f32.partialorder %v842, 0.0
        %v860 = vmul.f32 %v797, 0.01
        %v861 = vmul.f32 %v800, 0.01
        %v862 = vmul.f32 %v803, 0.01
        %v863 = vmul.f32 %v806, 0.01
        %v864 = vmul.f32 %v809, 0.01
        %v865 = vmul.f32 %v812, 0.01
        %v866 = vmul.f32 %v815, 0.01
        %v867 = vmul.f32 %v818, 0.01
        %v868 = vmul.f32 %v821, 0.01
        %v869 = vmul.f32 %v824, 0.01
        %v870 = vmul.f32 %v827, 0.01
        %v871 = vmul.f32 %v830, 0.01
        %v872 = vmul.f32 %v833, 0.01
        %v873 = vmul.f32 %v836, 0.01
        %v874 = vmul.f32 %v839, 0.01
        %v875 = vmul.f32 %v842, 0.01
        %v876 = vsel %vm844, %v797, %v860
        %v877 = vsel %vm845, %v800, %v861
        %v878 = vsel %vm846, %v803, %v862
        %v879 = vsel %vm847, %v806, %v863
        %v880 = vsel %vm848, %v809, %v864
        %v881 = vsel %vm849, %v812, %v865
        %v882 = vsel %vm850, %v815, %v866
        %v883 = vsel %vm851, %v818, %v867
        %v884 = vsel %vm852, %v821, %v868
        %v885 = vsel %vm853, %v824, %v869
        %v886 = vsel %vm854, %v827, %v870
        %v887 = vsel %vm855, %v830, %v871
        %v888 = vsel %vm856, %v833, %v872
        %v889 = vsel %vm857, %v836, %v873
        %v890 = vsel %vm858, %v839, %v874
        %v891 = vsel %vm859, %v842, %v875
        %v892 = vld [vmem:[#allocation3] sm:$0xff]
        %v893 = vld [vmem:[#allocation3 + $0x8] sm:$0xff]
        %v894 = vld [vmem:[#allocation3 + $0x10] sm:$0xff]
        %v895 = vld [vmem:[#allocation3 + $0x18] sm:$0xff]
        %s896 = scalar_lea.vmem %s4, 1
        %v897 = vld [vmem:[%s896] sm:$0x1]
        %v899 = vperm.slane %v897, 0
        %vm901 = vcmask 261120
        %v903 = vsel %vm901, %v876, 0
        %v906 = vsel %vm901, %v877, 0
        %v909 = vsel %vm901, %v878, 0
        %v912 = vsel %vm901, %v879, 0
        %v915 = vsel %vm901, %v880, 0
        %v918 = vsel %vm901, %v881, 0
        %v921 = vsel %vm901, %v882, 0
        %v924 = vsel %vm901, %v883, 0
        %v927 = vsel %vm901, %v884, 0
        %v930 = vsel %vm901, %v885, 0
        %v933 = vsel %vm901, %v886, 0
        %v936 = vsel %vm901, %v887, 0
        %v939 = vsel %vm901, %v888, 0
        %v942 = vsel %vm901, %v889, 0
        %v945 = vsel %vm901, %v890, 0
        %v948 = vsel %vm901, %v891, 0
        %950 = vmatpush.msra.mxu0 0.0
        %951 = vmatpush.msra.mxu0 0.0
        %952 = vmatpush.msra.mxu0 0.0
        %953 = vmatpush.msra.mxu0 0.0
        %954 = vmatpush.msra.mxu0 0.0
        %955 = vmatpush.msra.mxu0 0.0
        %956 = vmatpush.msra.mxu0 0.0
        %957 = vmatpush.msra.mxu0 0.0
        %958 = vmatpush.msra.mxu0 0.0
        %959 = vmatpush.msra.mxu0 0.0
        %960 = vmatpush.msra.mxu0 0.0
        %961 = vmatpush.msra.mxu0 0.0
        %962 = vmatpush.msra.mxu0 %v895
        %963 = vmatpush.msra.mxu0 %v894
        %964 = vmatpush.msra.mxu0 %v893
        %965 = vmatpush.msra.mxu0 %v892
        %966 = vmatmul.f32.gmra.mxu0 %v903
        %v967 = vpop.f32.mrf.mxu0
        %v968 = vadd.f32 %v899, %v967
        %969 = vmatmul.f32.gmra.mxu0 %v906
        %v970 = vpop.f32.mrf.mxu0
        %v971 = vadd.f32 %v899, %v970
        %972 = vmatmul.f32.gmra.mxu0 %v909
        %v973 = vpop.f32.mrf.mxu0
        %v974 = vadd.f32 %v899, %v973
        %975 = vmatmul.f32.gmra.mxu0 %v912
        %v976 = vpop.f32.mrf.mxu0
        %v977 = vadd.f32 %v899, %v976
        %978 = vmatmul.f32.gmra.mxu0 %v915
        %v979 = vpop.f32.mrf.mxu0
        %v980 = vadd.f32 %v899, %v979
        %981 = vmatmul.f32.gmra.mxu0 %v918
        %v982 = vpop.f32.mrf.mxu0
        %v983 = vadd.f32 %v899, %v982
        %984 = vmatmul.f32.gmra.mxu0 %v921
        %v985 = vpop.f32.mrf.mxu0
        %v986 = vadd.f32 %v899, %v985
        %987 = vmatmul.f32.gmra.mxu0 %v924
        %v988 = vpop.f32.mrf.mxu0
        %v989 = vadd.f32 %v899, %v988
        %990 = vmatmul.f32.gmra.mxu0 %v927
        %v991 = vpop.f32.mrf.mxu0
        %v992 = vadd.f32 %v899, %v991
        %993 = vmatmul.f32.gmra.mxu0 %v930
        %v994 = vpop.f32.mrf.mxu0
        %v995 = vadd.f32 %v899, %v994
        %996 = vmatmul.f32.gmra.mxu0 %v933
        %v997 = vpop.f32.mrf.mxu0
        %v998 = vadd.f32 %v899, %v997
        %999 = vmatmul.f32.gmra.mxu0 %v936
        %v1000 = vpop.f32.mrf.mxu0
        %v1001 = vadd.f32 %v899, %v1000
        %1002 = vmatmul.f32.gmra.mxu0 %v939
        %v1003 = vpop.f32.mrf.mxu0
        %v1004 = vadd.f32 %v899, %v1003
        %1005 = vmatmul.f32.gmra.mxu0 %v942
        %v1006 = vpop.f32.mrf.mxu0
        %v1007 = vadd.f32 %v899, %v1006
        %1008 = vmatmul.f32.gmra.mxu0 %v945
        %v1009 = vpop.f32.mrf.mxu0
        %v1010 = vadd.f32 %v899, %v1009
        %1011 = vmatmul.f32.gmra.mxu0 %v948
        %v1012 = vpop.f32.mrf.mxu0
        %v1013 = vadd.f32 %v899, %v1012
        %1014 = vdwg.mxu0
        %vm1015 = vcmp.ge.f32.partialorder %v968, 0.0
        %vm1016 = vcmp.ge.f32.partialorder %v971, 0.0
        %vm1017 = vcmp.ge.f32.partialorder %v974, 0.0
        %vm1018 = vcmp.ge.f32.partialorder %v977, 0.0
        %vm1019 = vcmp.ge.f32.partialorder %v980, 0.0
        %vm1020 = vcmp.ge.f32.partialorder %v983, 0.0
        %vm1021 = vcmp.ge.f32.partialorder %v986, 0.0
        %vm1022 = vcmp.ge.f32.partialorder %v989, 0.0
        %vm1023 = vcmp.ge.f32.partialorder %v992, 0.0
        %vm1024 = vcmp.ge.f32.partialorder %v995, 0.0
        %vm1025 = vcmp.ge.f32.partialorder %v998, 0.0
        %vm1026 = vcmp.ge.f32.partialorder %v1001, 0.0
        %vm1027 = vcmp.ge.f32.partialorder %v1004, 0.0
        %vm1028 = vcmp.ge.f32.partialorder %v1007, 0.0
        %vm1029 = vcmp.ge.f32.partialorder %v1010, 0.0
        %vm1030 = vcmp.ge.f32.partialorder %v1013, 0.0
        %v1031 = vmul.f32 %v968, 0.01
        %v1032 = vmul.f32 %v971, 0.01
        %v1033 = vmul.f32 %v974, 0.01
        %v1034 = vmul.f32 %v977, 0.01
        %v1035 = vmul.f32 %v980, 0.01
        %v1036 = vmul.f32 %v983, 0.01
        %v1037 = vmul.f32 %v986, 0.01
        %v1038 = vmul.f32 %v989, 0.01
        %v1039 = vmul.f32 %v992, 0.01
        %v1040 = vmul.f32 %v995, 0.01
        %v1041 = vmul.f32 %v998, 0.01
        %v1042 = vmul.f32 %v1001, 0.01
        %v1043 = vmul.f32 %v1004, 0.01
        %v1044 = vmul.f32 %v1007, 0.01
        %v1045 = vmul.f32 %v1010, 0.01
        %v1046 = vmul.f32 %v1013, 0.01
        %v1047 = vsel %vm1015, %v968, %v1031
        %v1048 = vsel %vm1016, %v971, %v1032
        %v1049 = vsel %vm1017, %v974, %v1033
        %v1050 = vsel %vm1018, %v977, %v1034
        %v1051 = vsel %vm1019, %v980, %v1035
        %v1052 = vsel %vm1020, %v983, %v1036
        %v1053 = vsel %vm1021, %v986, %v1037
        %v1054 = vsel %vm1022, %v989, %v1038
        %v1055 = vsel %vm1023, %v992, %v1039
        %v1056 = vsel %vm1024, %v995, %v1040
        %v1057 = vsel %vm1025, %v998, %v1041
        %v1058 = vsel %vm1026, %v1001, %v1042
        %v1059 = vsel %vm1027, %v1004, %v1043
        %v1060 = vsel %vm1028, %v1007, %v1044
        %v1061 = vsel %vm1029, %v1010, %v1045
        %v1062 = vsel %vm1030, %v1013, %v1046
        %s1063 = scalar_lea.vmem [#allocation3], 32
        %v1064 = vld [vmem:[%s1063] sm:$0xff]
        %v1065 = vld [vmem:[%s1063 + $0x8] sm:$0xff]
        %v1066 = vld [vmem:[%s1063 + $0x10] sm:$0xff]
        %v1067 = vld [vmem:[%s1063 + $0x18] sm:$0xff]
        %s1068 = scalar_lea.vmem %s4, 2
        %v1069 = vld [vmem:[%s1068] sm:$0x1]
        %v1071 = vperm.slane %v1069, 0
        %v1074 = vsel %vm901, %v1047, 0
        %v1077 = vsel %vm901, %v1048, 0
        %v1080 = vsel %vm901, %v1049, 0
        %v1083 = vsel %vm901, %v1050, 0
        %v1086 = vsel %vm901, %v1051, 0
        %v1089 = vsel %vm901, %v1052, 0
        %v1092 = vsel %vm901, %v1053, 0
        %v1095 = vsel %vm901, %v1054, 0
        %v1098 = vsel %vm901, %v1055, 0
        %v1101 = vsel %vm901, %v1056, 0
        %v1104 = vsel %vm901, %v1057, 0
        %v1107 = vsel %vm901, %v1058, 0
        %v1110 = vsel %vm901, %v1059, 0
        %v1113 = vsel %vm901, %v1060, 0
        %v1116 = vsel %vm901, %v1061, 0
        %v1119 = vsel %vm901, %v1062, 0
        %1121 = vmatpush.msra.mxu0 0.0
        %1122 = vmatpush.msra.mxu0 0.0
        %1123 = vmatpush.msra.mxu0 0.0
        %1124 = vmatpush.msra.mxu0 0.0
        %1125 = vmatpush.msra.mxu0 0.0
        %1126 = vmatpush.msra.mxu0 0.0
        %1127 = vmatpush.msra.mxu0 0.0
        %1128 = vmatpush.msra.mxu0 0.0
        %1129 = vmatpush.msra.mxu0 0.0
        %1130 = vmatpush.msra.mxu0 0.0
        %1131 = vmatpush.msra.mxu0 0.0
        %1132 = vmatpush.msra.mxu0 0.0
        %1133 = vmatpush.msra.mxu0 %v1067
        %1134 = vmatpush.msra.mxu0 %v1066
        %1135 = vmatpush.msra.mxu0 %v1065
        %1136 = vmatpush.msra.mxu0 %v1064
        %1137 = vmatmul.f32.gmra.mxu0 %v1074
        %v1138 = vpop.f32.mrf.mxu0
        %v1139 = vadd.f32 %v1071, %v1138
        %1140 = vmatmul.f32.gmra.mxu0 %v1077
        %v1141 = vpop.f32.mrf.mxu0
        %v1142 = vadd.f32 %v1071, %v1141
        %1143 = vmatmul.f32.gmra.mxu0 %v1080
        %v1144 = vpop.f32.mrf.mxu0
        %v1145 = vadd.f32 %v1071, %v1144
        %1146 = vmatmul.f32.gmra.mxu0 %v1083
        %v1147 = vpop.f32.mrf.mxu0
        %v1148 = vadd.f32 %v1071, %v1147
        %1149 = vmatmul.f32.gmra.mxu0 %v1086
        %v1150 = vpop.f32.mrf.mxu0
        %v1151 = vadd.f32 %v1071, %v1150
        %1152 = vmatmul.f32.gmra.mxu0 %v1089
        %v1153 = vpop.f32.mrf.mxu0
        %v1154 = vadd.f32 %v1071, %v1153
        %1155 = vmatmul.f32.gmra.mxu0 %v1092
        %v1156 = vpop.f32.mrf.mxu0
        %v1157 = vadd.f32 %v1071, %v1156
        %1158 = vmatmul.f32.gmra.mxu0 %v1095
        %v1159 = vpop.f32.mrf.mxu0
        %v1160 = vadd.f32 %v1071, %v1159
        %1161 = vmatmul.f32.gmra.mxu0 %v1098
        %v1162 = vpop.f32.mrf.mxu0
        %v1163 = vadd.f32 %v1071, %v1162
        %1164 = vmatmul.f32.gmra.mxu0 %v1101
        %v1165 = vpop.f32.mrf.mxu0
        %v1166 = vadd.f32 %v1071, %v1165
        %1167 = vmatmul.f32.gmra.mxu0 %v1104
        %v1168 = vpop.f32.mrf.mxu0
        %v1169 = vadd.f32 %v1071, %v1168
        %1170 = vmatmul.f32.gmra.mxu0 %v1107
        %v1171 = vpop.f32.mrf.mxu0
        %v1172 = vadd.f32 %v1071, %v1171
        %1173 = vmatmul.f32.gmra.mxu0 %v1110
        %v1174 = vpop.f32.mrf.mxu0
        %v1175 = vadd.f32 %v1071, %v1174
        %1176 = vmatmul.f32.gmra.mxu0 %v1113
        %v1177 = vpop.f32.mrf.mxu0
        %v1178 = vadd.f32 %v1071, %v1177
        %1179 = vmatmul.f32.gmra.mxu0 %v1116
        %v1180 = vpop.f32.mrf.mxu0
        %v1181 = vadd.f32 %v1071, %v1180
        %1182 = vmatmul.f32.gmra.mxu0 %v1119
        %v1183 = vpop.f32.mrf.mxu0
        %v1184 = vadd.f32 %v1071, %v1183
        %1185 = vdwg.mxu0
        %vm1186 = vcmp.ge.f32.partialorder %v1139, 0.0
        %vm1187 = vcmp.ge.f32.partialorder %v1142, 0.0
        %vm1188 = vcmp.ge.f32.partialorder %v1145, 0.0
        %vm1189 = vcmp.ge.f32.partialorder %v1148, 0.0
        %vm1190 = vcmp.ge.f32.partialorder %v1151, 0.0
        %vm1191 = vcmp.ge.f32.partialorder %v1154, 0.0
        %vm1192 = vcmp.ge.f32.partialorder %v1157, 0.0
        %vm1193 = vcmp.ge.f32.partialorder %v1160, 0.0
        %vm1194 = vcmp.ge.f32.partialorder %v1163, 0.0
        %vm1195 = vcmp.ge.f32.partialorder %v1166, 0.0
        %vm1196 = vcmp.ge.f32.partialorder %v1169, 0.0
        %vm1197 = vcmp.ge.f32.partialorder %v1172, 0.0
        %vm1198 = vcmp.ge.f32.partialorder %v1175, 0.0
        %vm1199 = vcmp.ge.f32.partialorder %v1178, 0.0
        %vm1200 = vcmp.ge.f32.partialorder %v1181, 0.0
        %vm1201 = vcmp.ge.f32.partialorder %v1184, 0.0
        %v1202 = vmul.f32 %v1139, 0.01
        %v1203 = vmul.f32 %v1142, 0.01
        %v1204 = vmul.f32 %v1145, 0.01
        %v1205 = vmul.f32 %v1148, 0.01
        %v1206 = vmul.f32 %v1151, 0.01
        %v1207 = vmul.f32 %v1154, 0.01
        %v1208 = vmul.f32 %v1157, 0.01
        %v1209 = vmul.f32 %v1160, 0.01
        %v1210 = vmul.f32 %v1163, 0.01
        %v1211 = vmul.f32 %v1166, 0.01
        %v1212 = vmul.f32 %v1169, 0.01
        %v1213 = vmul.f32 %v1172, 0.01
        %v1214 = vmul.f32 %v1175, 0.01
        %v1215 = vmul.f32 %v1178, 0.01
        %v1216 = vmul.f32 %v1181, 0.01
        %v1217 = vmul.f32 %v1184, 0.01
        %v1218 = vsel %vm1186, %v1139, %v1202
        %v1219 = vsel %vm1187, %v1142, %v1203
        %v1220 = vsel %vm1188, %v1145, %v1204
        %v1221 = vsel %vm1189, %v1148, %v1205
        %v1222 = vsel %vm1190, %v1151, %v1206
        %v1223 = vsel %vm1191, %v1154, %v1207
        %v1224 = vsel %vm1192, %v1157, %v1208
        %v1225 = vsel %vm1193, %v1160, %v1209
        %v1226 = vsel %vm1194, %v1163, %v1210
        %v1227 = vsel %vm1195, %v1166, %v1211
        %v1228 = vsel %vm1196, %v1169, %v1212
        %v1229 = vsel %vm1197, %v1172, %v1213
        %v1230 = vsel %vm1198, %v1175, %v1214
        %v1231 = vsel %vm1199, %v1178, %v1215
        %v1232 = vsel %vm1200, %v1181, %v1216
        %v1233 = vsel %vm1201, %v1184, %v1217
        %s1234 = scalar_lea.vmem [#allocation3], 64
        %v1235 = vld [vmem:[%s1234] sm:$0xff]
        %v1236 = vld [vmem:[%s1234 + $0x8] sm:$0xff]
        %v1237 = vld [vmem:[%s1234 + $0x10] sm:$0xff]
        %v1238 = vld [vmem:[%s1234 + $0x18] sm:$0xff]
        %s1239 = scalar_lea.vmem %s4, 3
        %v1240 = vld [vmem:[%s1239] sm:$0x1]
        %v1242 = vperm.slane %v1240, 0
        %v1245 = vsel %vm901, %v1218, 0
        %v1248 = vsel %vm901, %v1219, 0
        %v1251 = vsel %vm901, %v1220, 0
        %v1254 = vsel %vm901, %v1221, 0
        %v1257 = vsel %vm901, %v1222, 0
        %v1260 = vsel %vm901, %v1223, 0
        %v1263 = vsel %vm901, %v1224, 0
        %v1266 = vsel %vm901, %v1225, 0
        %v1269 = vsel %vm901, %v1226, 0
        %v1272 = vsel %vm901, %v1227, 0
        %v1275 = vsel %vm901, %v1228, 0
        %v1278 = vsel %vm901, %v1229, 0
        %v1281 = vsel %vm901, %v1230, 0
        %v1284 = vsel %vm901, %v1231, 0
        %v1287 = vsel %vm901, %v1232, 0
        %v1290 = vsel %vm901, %v1233, 0
        %1292 = vmatpush.msra.mxu0 0.0
        %1293 = vmatpush.msra.mxu0 0.0
        %1294 = vmatpush.msra.mxu0 0.0
        %1295 = vmatpush.msra.mxu0 0.0
        %1296 = vmatpush.msra.mxu0 0.0
        %1297 = vmatpush.msra.mxu0 0.0
        %1298 = vmatpush.msra.mxu0 0.0
        %1299 = vmatpush.msra.mxu0 0.0
        %1300 = vmatpush.msra.mxu0 0.0
        %1301 = vmatpush.msra.mxu0 0.0
        %1302 = vmatpush.msra.mxu0 0.0
        %1303 = vmatpush.msra.mxu0 0.0
        %1304 = vmatpush.msra.mxu0 %v1238
        %1305 = vmatpush.msra.mxu0 %v1237
        %1306 = vmatpush.msra.mxu0 %v1236
        %1307 = vmatpush.msra.mxu0 %v1235
        %1308 = vmatmul.f32.gmra.mxu0 %v1245
        %v1309 = vpop.f32.mrf.mxu0
        %v1310 = vadd.f32 %v1242, %v1309
        %1311 = vmatmul.f32.gmra.mxu0 %v1248
        %v1312 = vpop.f32.mrf.mxu0
        %v1313 = vadd.f32 %v1242, %v1312
        %1314 = vmatmul.f32.gmra.mxu0 %v1251
        %v1315 = vpop.f32.mrf.mxu0
        %v1316 = vadd.f32 %v1242, %v1315
        %1317 = vmatmul.f32.gmra.mxu0 %v1254
        %v1318 = vpop.f32.mrf.mxu0
        %v1319 = vadd.f32 %v1242, %v1318
        %1320 = vmatmul.f32.gmra.mxu0 %v1257
        %v1321 = vpop.f32.mrf.mxu0
        %v1322 = vadd.f32 %v1242, %v1321
        %1323 = vmatmul.f32.gmra.mxu0 %v1260
        %v1324 = vpop.f32.mrf.mxu0
        %v1325 = vadd.f32 %v1242, %v1324
        %1326 = vmatmul.f32.gmra.mxu0 %v1263
        %v1327 = vpop.f32.mrf.mxu0
        %v1328 = vadd.f32 %v1242, %v1327
        %1329 = vmatmul.f32.gmra.mxu0 %v1266
        %v1330 = vpop.f32.mrf.mxu0
        %v1331 = vadd.f32 %v1242, %v1330
        %1332 = vmatmul.f32.gmra.mxu0 %v1269
        %v1333 = vpop.f32.mrf.mxu0
        %v1334 = vadd.f32 %v1242, %v1333
        %1335 = vmatmul.f32.gmra.mxu0 %v1272
        %v1336 = vpop.f32.mrf.mxu0
        %v1337 = vadd.f32 %v1242, %v1336
        %1338 = vmatmul.f32.gmra.mxu0 %v1275
        %v1339 = vpop.f32.mrf.mxu0
        %v1340 = vadd.f32 %v1242, %v1339
        %1341 = vmatmul.f32.gmra.mxu0 %v1278
        %v1342 = vpop.f32.mrf.mxu0
        %v1343 = vadd.f32 %v1242, %v1342
        %1344 = vmatmul.f32.gmra.mxu0 %v1281
        %v1345 = vpop.f32.mrf.mxu0
        %v1346 = vadd.f32 %v1242, %v1345
        %1347 = vmatmul.f32.gmra.mxu0 %v1284
        %v1348 = vpop.f32.mrf.mxu0
        %v1349 = vadd.f32 %v1242, %v1348
        %1350 = vmatmul.f32.gmra.mxu0 %v1287
        %v1351 = vpop.f32.mrf.mxu0
        %v1352 = vadd.f32 %v1242, %v1351
        %1353 = vmatmul.f32.gmra.mxu0 %v1290
        %v1354 = vpop.f32.mrf.mxu0
        %v1355 = vadd.f32 %v1242, %v1354
        %1356 = vdwg.mxu0
        %v1357 = vld [vmem:[%s5] sm:$0xff]
        %v1358 = vld [vmem:[%s5 + $0x8] sm:$0xff]
        %v1359 = vld [vmem:[%s5 + $0x10] sm:$0xff]
        %v1360 = vld [vmem:[%s5 + $0x18] sm:$0xff]
        %v1361 = vld [vmem:[%s5 + $0x20] sm:$0xff]
        %v1362 = vld [vmem:[%s5 + $0x28] sm:$0xff]
        %v1363 = vld [vmem:[%s5 + $0x30] sm:$0xff]
        %v1364 = vld [vmem:[%s5 + $0x38] sm:$0xff]
        %v1365 = vld [vmem:[%s5 + $0x40] sm:$0xff]
        %v1366 = vld [vmem:[%s5 + $0x48] sm:$0xff]
        %v1367 = vld [vmem:[%s5 + $0x50] sm:$0xff]
        %v1368 = vld [vmem:[%s5 + $0x58] sm:$0xff]
        %v1369 = vld [vmem:[%s5 + $0x60] sm:$0xff]
        %v1370 = vld [vmem:[%s5 + $0x68] sm:$0xff]
        %v1371 = vld [vmem:[%s5 + $0x70] sm:$0xff]
        %v1372 = vld [vmem:[%s5 + $0x78] sm:$0xff]
        %v1373 = vld [vmem:[%s6] sm:$0xf]
        %v1375 = vperm.slane %v1373, 0
        %v1376 = vperm.slane %v1373, 1
        %v1377 = vperm.slane %v1373, 2
        %v1378 = vperm.slane %v1373, 3
        %v1384 = vsel %vm901, %v1310, 0
        %v1387 = vsel %vm901, %v1313, 0
        %v1390 = vsel %vm901, %v1316, 0
        %v1393 = vsel %vm901, %v1319, 0
        %v1396 = vsel %vm901, %v1322, 0
        %v1399 = vsel %vm901, %v1325, 0
        %v1402 = vsel %vm901, %v1328, 0
        %v1405 = vsel %vm901, %v1331, 0
        %v1408 = vsel %vm901, %v1334, 0
        %v1411 = vsel %vm901, %v1337, 0
        %v1414 = vsel %vm901, %v1340, 0
        %v1417 = vsel %vm901, %v1343, 0
        %v1420 = vsel %vm901, %v1346, 0
        %v1423 = vsel %vm901, %v1349, 0
        %v1426 = vsel %vm901, %v1352, 0
        %v1429 = vsel %vm901, %v1355, 0
        %1431 = vmatpush.msra.mxu0 0.0
        %1432 = vmatpush.msra.mxu0 0.0
        %1433 = vmatpush.msra.mxu0 0.0
        %1434 = vmatpush.msra.mxu0 0.0
        %1435 = vmatpush.msra.mxu0 0.0
        %1436 = vmatpush.msra.mxu0 0.0
        %1437 = vmatpush.msra.mxu0 0.0
        %1438 = vmatpush.msra.mxu0 0.0
        %1439 = vmatpush.msra.mxu0 0.0
        %1440 = vmatpush.msra.mxu0 0.0
        %1441 = vmatpush.msra.mxu0 0.0
        %1442 = vmatpush.msra.mxu0 0.0
        %1443 = vmatpush.msra.mxu0 %v1369
        %1444 = vmatpush.msra.mxu0 %v1365
        %1445 = vmatpush.msra.mxu0 %v1361
        %1446 = vmatpush.msra.mxu0 %v1357
        %1447 = vmatmul.f32.gmra.mxu0 %v1384
        %v1448 = vpop.f32.mrf.mxu0
        %v1449 = vadd.f32 %v1375, %v1448
        %1450 = vmatmul.f32.gmra.mxu0 %v1387
        %v1451 = vpop.f32.mrf.mxu0
        %v1452 = vadd.f32 %v1375, %v1451
        %1453 = vmatmul.f32.gmra.mxu0 %v1390
        %v1454 = vpop.f32.mrf.mxu0
        %v1455 = vadd.f32 %v1375, %v1454
        %1456 = vmatmul.f32.gmra.mxu0 %v1393
        %v1457 = vpop.f32.mrf.mxu0
        %v1458 = vadd.f32 %v1375, %v1457
        %1459 = vmatmul.f32.gmra.mxu0 %v1396
        %v1460 = vpop.f32.mrf.mxu0
        %v1461 = vadd.f32 %v1375, %v1460
        %1462 = vmatmul.f32.gmra.mxu0 %v1399
        %v1463 = vpop.f32.mrf.mxu0
        %v1464 = vadd.f32 %v1375, %v1463
        %1465 = vmatmul.f32.gmra.mxu0 %v1402
        %v1466 = vpop.f32.mrf.mxu0
        %v1467 = vadd.f32 %v1375, %v1466
        %1468 = vmatmul.f32.gmra.mxu0 %v1405
        %v1469 = vpop.f32.mrf.mxu0
        %v1470 = vadd.f32 %v1375, %v1469
        %1471 = vmatmul.f32.gmra.mxu0 %v1408
        %v1472 = vpop.f32.mrf.mxu0
        %v1473 = vadd.f32 %v1375, %v1472
        %1474 = vmatmul.f32.gmra.mxu0 %v1411
        %v1475 = vpop.f32.mrf.mxu0
        %v1476 = vadd.f32 %v1375, %v1475
        %1477 = vmatmul.f32.gmra.mxu0 %v1414
        %v1478 = vpop.f32.mrf.mxu0
        %v1479 = vadd.f32 %v1375, %v1478
        %1480 = vmatmul.f32.gmra.mxu0 %v1417
        %v1481 = vpop.f32.mrf.mxu0
        %v1482 = vadd.f32 %v1375, %v1481
        %1483 = vmatmul.f32.gmra.mxu0 %v1420
        %v1484 = vpop.f32.mrf.mxu0
        %v1485 = vadd.f32 %v1375, %v1484
        %1486 = vmatmul.f32.gmra.mxu0 %v1423
        %v1487 = vpop.f32.mrf.mxu0
        %v1488 = vadd.f32 %v1375, %v1487
        %1489 = vmatmul.f32.gmra.mxu0 %v1426
        %v1490 = vpop.f32.mrf.mxu0
        %v1491 = vadd.f32 %v1375, %v1490
        %1492 = vmatmul.f32.gmra.mxu0 %v1429
        %v1493 = vpop.f32.mrf.mxu0
        %v1494 = vadd.f32 %v1375, %v1493
        %1495 = vdwg.mxu0
        %1496 = vmatpush.msra.mxu0 0.0
        %1497 = vmatpush.msra.mxu0 0.0
        %1498 = vmatpush.msra.mxu0 0.0
        %1499 = vmatpush.msra.mxu0 0.0
        %1500 = vmatpush.msra.mxu0 0.0
        %1501 = vmatpush.msra.mxu0 0.0
        %1502 = vmatpush.msra.mxu0 0.0
        %1503 = vmatpush.msra.mxu0 0.0
        %1504 = vmatpush.msra.mxu0 0.0
        %1505 = vmatpush.msra.mxu0 0.0
        %1506 = vmatpush.msra.mxu0 0.0
        %1507 = vmatpush.msra.mxu0 0.0
        %1508 = vmatpush.msra.mxu0 %v1370
        %1509 = vmatpush.msra.mxu0 %v1366
        %1510 = vmatpush.msra.mxu0 %v1362
        %1511 = vmatpush.msra.mxu0 %v1358
        %1512 = vmatmul.f32.gmra.mxu0 %v1384
        %v1513 = vpop.f32.mrf.mxu0
        %v1514 = vadd.f32 %v1376, %v1513
        %1515 = vmatmul.f32.gmra.mxu0 %v1387
        %v1516 = vpop.f32.mrf.mxu0
        %v1517 = vadd.f32 %v1376, %v1516
        %1518 = vmatmul.f32.gmra.mxu0 %v1390
        %v1519 = vpop.f32.mrf.mxu0
        %v1520 = vadd.f32 %v1376, %v1519
        %1521 = vmatmul.f32.gmra.mxu0 %v1393
        %v1522 = vpop.f32.mrf.mxu0
        %v1523 = vadd.f32 %v1376, %v1522
        %1524 = vmatmul.f32.gmra.mxu0 %v1396
        %v1525 = vpop.f32.mrf.mxu0
        %v1526 = vadd.f32 %v1376, %v1525
        %1527 = vmatmul.f32.gmra.mxu0 %v1399
        %v1528 = vpop.f32.mrf.mxu0
        %v1529 = vadd.f32 %v1376, %v1528
        %1530 = vmatmul.f32.gmra.mxu0 %v1402
        %v1531 = vpop.f32.mrf.mxu0
        %v1532 = vadd.f32 %v1376, %v1531
        %1533 = vmatmul.f32.gmra.mxu0 %v1405
        %v1534 = vpop.f32.mrf.mxu0
        %v1535 = vadd.f32 %v1376, %v1534
        %1536 = vmatmul.f32.gmra.mxu0 %v1408
        %v1537 = vpop.f32.mrf.mxu0
        %v1538 = vadd.f32 %v1376, %v1537
        %1539 = vmatmul.f32.gmra.mxu0 %v1411
        %v1540 = vpop.f32.mrf.mxu0
        %v1541 = vadd.f32 %v1376, %v1540
        %1542 = vmatmul.f32.gmra.mxu0 %v1414
        %v1543 = vpop.f32.mrf.mxu0
        %v1544 = vadd.f32 %v1376, %v1543
        %1545 = vmatmul.f32.gmra.mxu0 %v1417
        %v1546 = vpop.f32.mrf.mxu0
        %v1547 = vadd.f32 %v1376, %v1546
        %1548 = vmatmul.f32.gmra.mxu0 %v1420
        %v1549 = vpop.f32.mrf.mxu0
        %v1550 = vadd.f32 %v1376, %v1549
        %1551 = vmatmul.f32.gmra.mxu0 %v1423
        %v1552 = vpop.f32.mrf.mxu0
        %v1553 = vadd.f32 %v1376, %v1552
        %1554 = vmatmul.f32.gmra.mxu0 %v1426
        %v1555 = vpop.f32.mrf.mxu0
        %v1556 = vadd.f32 %v1376, %v1555
        %1557 = vmatmul.f32.gmra.mxu0 %v1429
        %v1558 = vpop.f32.mrf.mxu0
        %v1559 = vadd.f32 %v1376, %v1558
        %1560 = vdwg.mxu0
        %1561 = vmatpush.msra.mxu0 0.0
        %1562 = vmatpush.msra.mxu0 0.0
        %1563 = vmatpush.msra.mxu0 0.0
        %1564 = vmatpush.msra.mxu0 0.0
        %1565 = vmatpush.msra.mxu0 0.0
        %1566 = vmatpush.msra.mxu0 0.0
        %1567 = vmatpush.msra.mxu0 0.0
        %1568 = vmatpush.msra.mxu0 0.0
        %1569 = vmatpush.msra.mxu0 0.0
        %1570 = vmatpush.msra.mxu0 0.0
        %1571 = vmatpush.msra.mxu0 0.0
        %1572 = vmatpush.msra.mxu0 0.0
        %1573 = vmatpush.msra.mxu0 %v1371
        %1574 = vmatpush.msra.mxu0 %v1367
        %1575 = vmatpush.msra.mxu0 %v1363
        %1576 = vmatpush.msra.mxu0 %v1359
        %1577 = vmatmul.f32.gmra.mxu0 %v1384
        %v1578 = vpop.f32.mrf.mxu0
        %v1579 = vadd.f32 %v1377, %v1578
        %1580 = vmatmul.f32.gmra.mxu0 %v1387
        %v1581 = vpop.f32.mrf.mxu0
        %v1582 = vadd.f32 %v1377, %v1581
        %1583 = vmatmul.f32.gmra.mxu0 %v1390
        %v1584 = vpop.f32.mrf.mxu0
        %v1585 = vadd.f32 %v1377, %v1584
        %1586 = vmatmul.f32.gmra.mxu0 %v1393
        %v1587 = vpop.f32.mrf.mxu0
        %v1588 = vadd.f32 %v1377, %v1587
        %1589 = vmatmul.f32.gmra.mxu0 %v1396
        %v1590 = vpop.f32.mrf.mxu0
        %v1591 = vadd.f32 %v1377, %v1590
        %1592 = vmatmul.f32.gmra.mxu0 %v1399
        %v1593 = vpop.f32.mrf.mxu0
        %v1594 = vadd.f32 %v1377, %v1593
        %1595 = vmatmul.f32.gmra.mxu0 %v1402
        %v1596 = vpop.f32.mrf.mxu0
        %v1597 = vadd.f32 %v1377, %v1596
        %1598 = vmatmul.f32.gmra.mxu0 %v1405
        %v1599 = vpop.f32.mrf.mxu0
        %v1600 = vadd.f32 %v1377, %v1599
        %1601 = vmatmul.f32.gmra.mxu0 %v1408
        %v1602 = vpop.f32.mrf.mxu0
        %v1603 = vadd.f32 %v1377, %v1602
        %1604 = vmatmul.f32.gmra.mxu0 %v1411
        %v1605 = vpop.f32.mrf.mxu0
        %v1606 = vadd.f32 %v1377, %v1605
        %1607 = vmatmul.f32.gmra.mxu0 %v1414
        %v1608 = vpop.f32.mrf.mxu0
        %v1609 = vadd.f32 %v1377, %v1608
        %1610 = vmatmul.f32.gmra.mxu0 %v1417
        %v1611 = vpop.f32.mrf.mxu0
        %v1612 = vadd.f32 %v1377, %v1611
        %1613 = vmatmul.f32.gmra.mxu0 %v1420
        %v1614 = vpop.f32.mrf.mxu0
        %v1615 = vadd.f32 %v1377, %v1614
        %1616 = vmatmul.f32.gmra.mxu0 %v1423
        %v1617 = vpop.f32.mrf.mxu0
        %v1618 = vadd.f32 %v1377, %v1617
        %1619 = vmatmul.f32.gmra.mxu0 %v1426
        %v1620 = vpop.f32.mrf.mxu0
        %v1621 = vadd.f32 %v1377, %v1620
        %1622 = vmatmul.f32.gmra.mxu0 %v1429
        %v1623 = vpop.f32.mrf.mxu0
        %v1624 = vadd.f32 %v1377, %v1623
        %1625 = vdwg.mxu0
        %1626 = vmatpush.msra.mxu0 0.0
        %1627 = vmatpush.msra.mxu0 0.0
        %1628 = vmatpush.msra.mxu0 0.0
        %1629 = vmatpush.msra.mxu0 0.0
        %1630 = vmatpush.msra.mxu0 0.0
        %1631 = vmatpush.msra.mxu0 0.0
        %1632 = vmatpush.msra.mxu0 0.0
        %1633 = vmatpush.msra.mxu0 0.0
        %1634 = vmatpush.msra.mxu0 0.0
        %1635 = vmatpush.msra.mxu0 0.0
        %1636 = vmatpush.msra.mxu0 0.0
        %1637 = vmatpush.msra.mxu0 0.0
        %1638 = vmatpush.msra.mxu0 %v1372
        %1639 = vmatpush.msra.mxu0 %v1368
        %1640 = vmatpush.msra.mxu0 %v1364
        %1641 = vmatpush.msra.mxu0 %v1360
        %1642 = vmatmul.f32.gmra.mxu0 %v1384
        %v1643 = vpop.f32.mrf.mxu0
        %v1644 = vadd.f32 %v1378, %v1643
        %1645 = vmatmul.f32.gmra.mxu0 %v1387
        %v1646 = vpop.f32.mrf.mxu0
        %v1647 = vadd.f32 %v1378, %v1646
        %1648 = vmatmul.f32.gmra.mxu0 %v1390
        %v1649 = vpop.f32.mrf.mxu0
        %v1650 = vadd.f32 %v1378, %v1649
        %1651 = vmatmul.f32.gmra.mxu0 %v1393
        %v1652 = vpop.f32.mrf.mxu0
        %v1653 = vadd.f32 %v1378, %v1652
        %1654 = vmatmul.f32.gmra.mxu0 %v1396
        %v1655 = vpop.f32.mrf.mxu0
        %v1656 = vadd.f32 %v1378, %v1655
        %1657 = vmatmul.f32.gmra.mxu0 %v1399
        %v1658 = vpop.f32.mrf.mxu0
        %v1659 = vadd.f32 %v1378, %v1658
        %1660 = vmatmul.f32.gmra.mxu0 %v1402
        %v1661 = vpop.f32.mrf.mxu0
        %v1662 = vadd.f32 %v1378, %v1661
        %1663 = vmatmul.f32.gmra.mxu0 %v1405
        %v1664 = vpop.f32.mrf.mxu0
        %v1665 = vadd.f32 %v1378, %v1664
        %1666 = vmatmul.f32.gmra.mxu0 %v1408
        %v1667 = vpop.f32.mrf.mxu0
        %v1668 = vadd.f32 %v1378, %v1667
        %1669 = vmatmul.f32.gmra.mxu0 %v1411
        %v1670 = vpop.f32.mrf.mxu0
        %v1671 = vadd.f32 %v1378, %v1670
        %1672 = vmatmul.f32.gmra.mxu0 %v1414
        %v1673 = vpop.f32.mrf.mxu0
        %v1674 = vadd.f32 %v1378, %v1673
        %1675 = vmatmul.f32.gmra.mxu0 %v1417
        %v1676 = vpop.f32.mrf.mxu0
        %v1677 = vadd.f32 %v1378, %v1676
        %1678 = vmatmul.f32.gmra.mxu0 %v1420
        %v1679 = vpop.f32.mrf.mxu0
        %v1680 = vadd.f32 %v1378, %v1679
        %1681 = vmatmul.f32.gmra.mxu0 %v1423
        %v1682 = vpop.f32.mrf.mxu0
        %v1683 = vadd.f32 %v1378, %v1682
        %1684 = vmatmul.f32.gmra.mxu0 %v1426
        %v1685 = vpop.f32.mrf.mxu0
        %v1686 = vadd.f32 %v1378, %v1685
        %1687 = vmatmul.f32.gmra.mxu0 %v1429
        %v1688 = vpop.f32.mrf.mxu0
        %v1689 = vadd.f32 %v1378, %v1688
        %1690 = vdwg.mxu0
        %v1691 = vld [vmem:[%s579] sm:$0xff]
        %v1692 = vld [vmem:[%s579 + $0x8] sm:$0xff]
        %v1693 = vld [vmem:[%s579 + $0x10] sm:$0xff]
        %v1694 = vld [vmem:[%s579 + $0x18] sm:$0xff]
        %v1695 = vld [vmem:[%s579 + $0x20] sm:$0xff]
        %v1696 = vld [vmem:[%s579 + $0x28] sm:$0xff]
        %v1697 = vld [vmem:[%s579 + $0x30] sm:$0xff]
        %v1698 = vld [vmem:[%s579 + $0x38] sm:$0xff]
        %v1699 = vld [vmem:[%s579 + $0x40] sm:$0xff]
        %v1700 = vld [vmem:[%s579 + $0x48] sm:$0xff]
        %v1701 = vld [vmem:[%s579 + $0x50] sm:$0xff]
        %v1702 = vld [vmem:[%s579 + $0x58] sm:$0xff]
        %v1703 = vld [vmem:[%s579 + $0x60] sm:$0xff]
        %v1704 = vld [vmem:[%s579 + $0x68] sm:$0xff]
        %v1705 = vld [vmem:[%s579 + $0x70] sm:$0xff]
        %v1706 = vld [vmem:[%s579 + $0x78] sm:$0xff]
        %v1707 = vld [vmem:[%s13] sm:$0x1]
        %v1709 = vperm.slane %v1707, 0
        %v1711 = vmul.f32 %v1691, %v1709
        %v1712 = vmul.f32 %v1692, %v1709
        %v1713 = vmul.f32 %v1693, %v1709
        %v1714 = vmul.f32 %v1694, %v1709
        %v1715 = vmul.f32 %v1695, %v1709
        %v1716 = vmul.f32 %v1696, %v1709
        %v1717 = vmul.f32 %v1697, %v1709
        %v1718 = vmul.f32 %v1698, %v1709
        %v1719 = vmul.f32 %v1699, %v1709
        %v1720 = vmul.f32 %v1700, %v1709
        %v1721 = vmul.f32 %v1701, %v1709
        %v1722 = vmul.f32 %v1702, %v1709
        %v1723 = vmul.f32 %v1703, %v1709
        %v1724 = vmul.f32 %v1704, %v1709
        %v1725 = vmul.f32 %v1705, %v1709
        %v1726 = vmul.f32 %v1706, %v1709
        %s1727 = scalar_lea.vmem %s13, 1
        %v1728 = vld [vmem:[%s1727] sm:$0x1]
        %v1730 = vperm.slane %v1728, 0
        %v1732 = vadd.f32 %v1711, %v1730
        %v1733 = vadd.f32 %v1712, %v1730
        %v1734 = vadd.f32 %v1713, %v1730
        %v1735 = vadd.f32 %v1714, %v1730
        %v1736 = vadd.f32 %v1715, %v1730
        %v1737 = vadd.f32 %v1716, %v1730
        %v1738 = vadd.f32 %v1717, %v1730
        %v1739 = vadd.f32 %v1718, %v1730
        %v1740 = vadd.f32 %v1719, %v1730
        %v1741 = vadd.f32 %v1720, %v1730
        %v1742 = vadd.f32 %v1721, %v1730
        %v1743 = vadd.f32 %v1722, %v1730
        %v1744 = vadd.f32 %v1723, %v1730
        %v1745 = vadd.f32 %v1724, %v1730
        %v1746 = vadd.f32 %v1725, %v1730
        %v1747 = vadd.f32 %v1726, %v1730
        %v1748 = vld [vmem:[#allocation2] sm:$0x1]
        %v1750 = vperm.slane %v1748, 0
        %v1752 = vadd.f32 %v1750, 0.0
        %vm1753 = vcmp.ge.f32.partialorder %v1732, 0.0
        %vm1754 = vcmp.ge.f32.partialorder %v1733, 0.0
        %vm1755 = vcmp.ge.f32.partialorder %v1734, 0.0
        %vm1756 = vcmp.ge.f32.partialorder %v1735, 0.0
        %vm1757 = vcmp.ge.f32.partialorder %v1736, 0.0
        %vm1758 = vcmp.ge.f32.partialorder %v1737, 0.0
        %vm1759 = vcmp.ge.f32.partialorder %v1738, 0.0
        %vm1760 = vcmp.ge.f32.partialorder %v1739, 0.0
        %vm1761 = vcmp.ge.f32.partialorder %v1740, 0.0
        %vm1762 = vcmp.ge.f32.partialorder %v1741, 0.0
        %vm1763 = vcmp.ge.f32.partialorder %v1742, 0.0
        %vm1764 = vcmp.ge.f32.partialorder %v1743, 0.0
        %vm1765 = vcmp.ge.f32.partialorder %v1744, 0.0
        %vm1766 = vcmp.ge.f32.partialorder %v1745, 0.0
        %vm1767 = vcmp.ge.f32.partialorder %v1746, 0.0
        %vm1768 = vcmp.ge.f32.partialorder %v1747, 0.0
        %v1769 = vmul.f32 %v1732, 0.9
        %v1770 = vmul.f32 %v1733, 0.9
        %v1771 = vmul.f32 %v1734, 0.9
        %v1772 = vmul.f32 %v1735, 0.9
        %v1773 = vmul.f32 %v1736, 0.9
        %v1774 = vmul.f32 %v1737, 0.9
        %v1775 = vmul.f32 %v1738, 0.9
        %v1776 = vmul.f32 %v1739, 0.9
        %v1777 = vmul.f32 %v1740, 0.9
        %v1778 = vmul.f32 %v1741, 0.9
        %v1779 = vmul.f32 %v1742, 0.9
        %v1780 = vmul.f32 %v1743, 0.9
        %v1781 = vmul.f32 %v1744, 0.9
        %v1782 = vmul.f32 %v1745, 0.9
        %v1783 = vmul.f32 %v1746, 0.9
        %v1784 = vmul.f32 %v1747, 0.9
        %v1785 = vsel %vm1753, %v1732, %v1769
        %v1786 = vsel %vm1754, %v1733, %v1770
        %v1787 = vsel %vm1755, %v1734, %v1771
        %v1788 = vsel %vm1756, %v1735, %v1772
        %v1789 = vsel %vm1757, %v1736, %v1773
        %v1790 = vsel %vm1758, %v1737, %v1774
        %v1791 = vsel %vm1759, %v1738, %v1775
        %v1792 = vsel %vm1760, %v1739, %v1776
        %v1793 = vsel %vm1761, %v1740, %v1777
        %v1794 = vsel %vm1762, %v1741, %v1778
        %v1795 = vsel %vm1763, %v1742, %v1779
        %v1796 = vsel %vm1764, %v1743, %v1780
        %v1797 = vsel %vm1765, %v1744, %v1781
        %v1798 = vsel %vm1766, %v1745, %v1782
        %v1799 = vsel %vm1767, %v1746, %v1783
        %v1800 = vsel %vm1768, %v1747, %v1784
        %v1801 = vld [vmem:[%s7] sm:$0x1f]
        %vm1802 = vcmask 39936
        %v1804 = vsel %vm1802, %v1785, 0
        %v1807 = vsel %vm1802, %v1786, 0
        %v1810 = vsel %vm1802, %v1787, 0
        %v1813 = vsel %vm1802, %v1788, 0
        %v1816 = vsel %vm1802, %v1789, 0
        %v1819 = vsel %vm1802, %v1790, 0
        %v1822 = vsel %vm1802, %v1791, 0
        %v1825 = vsel %vm1802, %v1792, 0
        %v1828 = vsel %vm1802, %v1793, 0
        %v1831 = vsel %vm1802, %v1794, 0
        %v1834 = vsel %vm1802, %v1795, 0
        %v1837 = vsel %vm1802, %v1796, 0
        %v1840 = vsel %vm1802, %v1797, 0
        %v1843 = vsel %vm1802, %v1798, 0
        %v1846 = vsel %vm1802, %v1799, 0
        %v1849 = vsel %vm1802, %v1800, 0
        %vm1851 = vcmask 1044480
        %v1853 = vsel %vm1851, %v1801, 0
        %1855 = vmatpush.msra.mxu0 0.0
        %1856 = vmatpush.msra.mxu0 0.0
        %1857 = vmatpush.msra.mxu0 0.0
        %1858 = vmatpush.msra.mxu0 0.0
        %1859 = vmatpush.msra.mxu0 0.0
        %1860 = vmatpush.msra.mxu0 0.0
        %1861 = vmatpush.msra.mxu0 0.0
        %1862 = vmatpush.msra.mxu0 0.0
        %1863 = vmatpush.msra.mxu0 0.0
        %1864 = vmatpush.msra.mxu0 0.0
        %1865 = vmatpush.msra.mxu0 0.0
        %1866 = vmatpush.msra.mxu0 0.0
        %1867 = vmatpush.msra.mxu0 0.0
        %1868 = vmatpush.msra.mxu0 0.0
        %1869 = vmatpush.msra.mxu0 0.0
        %1870 = vmatpush.msra.mxu0 %v1853
        %1871 = vmatmul.f32.gmra.mxu0 %v1804
        %v1872 = vpop.f32.mrf.mxu0
        %v1873 = vadd.f32 %v1449, %v1872
        %1874 = vmatmul.f32.gmra.mxu0 %v1807
        %v1875 = vpop.f32.mrf.mxu0
        %v1876 = vadd.f32 %v1452, %v1875
        %1877 = vmatmul.f32.gmra.mxu0 %v1810
        %v1878 = vpop.f32.mrf.mxu0
        %v1879 = vadd.f32 %v1455, %v1878
        %1880 = vmatmul.f32.gmra.mxu0 %v1813
        %v1881 = vpop.f32.mrf.mxu0
        %v1882 = vadd.f32 %v1458, %v1881
        %1883 = vmatmul.f32.gmra.mxu0 %v1816
        %v1884 = vpop.f32.mrf.mxu0
        %v1885 = vadd.f32 %v1461, %v1884
        %1886 = vmatmul.f32.gmra.mxu0 %v1819
        %v1887 = vpop.f32.mrf.mxu0
        %v1888 = vadd.f32 %v1464, %v1887
        %1889 = vmatmul.f32.gmra.mxu0 %v1822
        %v1890 = vpop.f32.mrf.mxu0
        %v1891 = vadd.f32 %v1467, %v1890
        %1892 = vmatmul.f32.gmra.mxu0 %v1825
        %v1893 = vpop.f32.mrf.mxu0
        %v1894 = vadd.f32 %v1470, %v1893
        %1895 = vmatmul.f32.gmra.mxu0 %v1828
        %v1896 = vpop.f32.mrf.mxu0
        %v1897 = vadd.f32 %v1473, %v1896
        %1898 = vmatmul.f32.gmra.mxu0 %v1831
        %v1899 = vpop.f32.mrf.mxu0
        %v1900 = vadd.f32 %v1476, %v1899
        %1901 = vmatmul.f32.gmra.mxu0 %v1834
        %v1902 = vpop.f32.mrf.mxu0
        %v1903 = vadd.f32 %v1479, %v1902
        %1904 = vmatmul.f32.gmra.mxu0 %v1837
        %v1905 = vpop.f32.mrf.mxu0
        %v1906 = vadd.f32 %v1482, %v1905
        %1907 = vmatmul.f32.gmra.mxu0 %v1840
        %v1908 = vpop.f32.mrf.mxu0
        %v1909 = vadd.f32 %v1485, %v1908
        %1910 = vmatmul.f32.gmra.mxu0 %v1843
        %v1911 = vpop.f32.mrf.mxu0
        %v1912 = vadd.f32 %v1488, %v1911
        %1913 = vmatmul.f32.gmra.mxu0 %v1846
        %v1914 = vpop.f32.mrf.mxu0
        %v1915 = vadd.f32 %v1491, %v1914
        %1916 = vmatmul.f32.gmra.mxu0 %v1849
        %v1917 = vpop.f32.mrf.mxu0
        %v1918 = vadd.f32 %v1494, %v1917
        %1919 = vdwg.mxu0
        %vm1920 = vcmp.ge.f32.partialorder %v1873, 0.0
        %vm1921 = vcmp.ge.f32.partialorder %v1876, 0.0
        %vm1922 = vcmp.ge.f32.partialorder %v1879, 0.0
        %vm1923 = vcmp.ge.f32.partialorder %v1882, 0.0
        %vm1924 = vcmp.ge.f32.partialorder %v1885, 0.0
        %vm1925 = vcmp.ge.f32.partialorder %v1888, 0.0
        %vm1926 = vcmp.ge.f32.partialorder %v1891, 0.0
        %vm1927 = vcmp.ge.f32.partialorder %v1894, 0.0
        %vm1928 = vcmp.ge.f32.partialorder %v1897, 0.0
        %vm1929 = vcmp.ge.f32.partialorder %v1900, 0.0
        %vm1930 = vcmp.ge.f32.partialorder %v1903, 0.0
        %vm1931 = vcmp.ge.f32.partialorder %v1906, 0.0
        %vm1932 = vcmp.ge.f32.partialorder %v1909, 0.0
        %vm1933 = vcmp.ge.f32.partialorder %v1912, 0.0
        %vm1934 = vcmp.ge.f32.partialorder %v1915, 0.0
        %vm1935 = vcmp.ge.f32.partialorder %v1918, 0.0
        %v1936 = vmul.f32 %v1873, 0.01
        %v1937 = vmul.f32 %v1876, 0.01
        %v1938 = vmul.f32 %v1879, 0.01
        %v1939 = vmul.f32 %v1882, 0.01
        %v1940 = vmul.f32 %v1885, 0.01
        %v1941 = vmul.f32 %v1888, 0.01
        %v1942 = vmul.f32 %v1891, 0.01
        %v1943 = vmul.f32 %v1894, 0.01
        %v1944 = vmul.f32 %v1897, 0.01
        %v1945 = vmul.f32 %v1900, 0.01
        %v1946 = vmul.f32 %v1903, 0.01
        %v1947 = vmul.f32 %v1906, 0.01
        %v1948 = vmul.f32 %v1909, 0.01
        %v1949 = vmul.f32 %v1912, 0.01
        %v1950 = vmul.f32 %v1915, 0.01
        %v1951 = vmul.f32 %v1918, 0.01
        %v1952 = vsel %vm1920, %v1873, %v1936
        %v1953 = vsel %vm1921, %v1876, %v1937
        %v1954 = vsel %vm1922, %v1879, %v1938
        %v1955 = vsel %vm1923, %v1882, %v1939
        %v1956 = vsel %vm1924, %v1885, %v1940
        %v1957 = vsel %vm1925, %v1888, %v1941
        %v1958 = vsel %vm1926, %v1891, %v1942
        %v1959 = vsel %vm1927, %v1894, %v1943
        %v1960 = vsel %vm1928, %v1897, %v1944
        %v1961 = vsel %vm1929, %v1900, %v1945
        %v1962 = vsel %vm1930, %v1903, %v1946
        %v1963 = vsel %vm1931, %v1906, %v1947
        %v1964 = vsel %vm1932, %v1909, %v1948
        %v1965 = vsel %vm1933, %v1912, %v1949
        %v1966 = vsel %vm1934, %v1915, %v1950
        %v1967 = vsel %vm1935, %v1918, %v1951
        %v1968 = vld [vmem:[%s8] sm:$0xff]
        %v1969 = vld [vmem:[%s8 + $0x8] sm:$0xff]
        %v1970 = vld [vmem:[%s8 + $0x10] sm:$0xff]
        %v1971 = vld [vmem:[%s8 + $0x18] sm:$0xff]
        %v1972 = vld [vmem:[%s8 + $0x20] sm:$0xff]
        %v1973 = vld [vmem:[%s8 + $0x28] sm:$0xff]
        %v1974 = vld [vmem:[%s8 + $0x30] sm:$0xff]
        %v1975 = vld [vmem:[%s8 + $0x38] sm:$0xff]
        %v1976 = vld [vmem:[%s9] sm:$0x1]
        %v1978 = vperm.slane %v1976, 0
        %vm1980 = vcmask 523264
        %v1982 = vsel %vm1980, %v1952, 0
        %v1985 = vsel %vm1980, %v1953, 0
        %v1988 = vsel %vm1980, %v1954, 0
        %v1991 = vsel %vm1980, %v1955, 0
        %v1994 = vsel %vm1980, %v1956, 0
        %v1997 = vsel %vm1980, %v1957, 0
        %v2000 = vsel %vm1980, %v1958, 0
        %v2003 = vsel %vm1980, %v1959, 0
        %v2006 = vsel %vm1980, %v1960, 0
        %v2009 = vsel %vm1980, %v1961, 0
        %v2012 = vsel %vm1980, %v1962, 0
        %v2015 = vsel %vm1980, %v1963, 0
        %v2018 = vsel %vm1980, %v1964, 0
        %v2021 = vsel %vm1980, %v1965, 0
        %v2024 = vsel %vm1980, %v1966, 0
        %v2027 = vsel %vm1980, %v1967, 0
        %2029 = vmatpush.msra.mxu0 0.0
        %2030 = vmatpush.msra.mxu0 0.0
        %2031 = vmatpush.msra.mxu0 0.0
        %2032 = vmatpush.msra.mxu0 0.0
        %2033 = vmatpush.msra.mxu0 0.0
        %2034 = vmatpush.msra.mxu0 0.0
        %2035 = vmatpush.msra.mxu0 0.0
        %2036 = vmatpush.msra.mxu0 0.0
        %2037 = vmatpush.msra.mxu0 %v1975
        %2038 = vmatpush.msra.mxu0 %v1974
        %2039 = vmatpush.msra.mxu0 %v1973
        %2040 = vmatpush.msra.mxu0 %v1972
        %2041 = vmatpush.msra.mxu0 %v1971
        %2042 = vmatpush.msra.mxu0 %v1970
        %2043 = vmatpush.msra.mxu0 %v1969
        %2044 = vmatpush.msra.mxu0 %v1968
        %2045 = vmatmul.f32.gmra.mxu0 %v1982
        %v2046 = vpop.f32.mrf.mxu0
        %v2047 = vadd.f32 %v1978, %v2046
        %2048 = vmatmul.f32.gmra.mxu0 %v1985
        %v2049 = vpop.f32.mrf.mxu0
        %v2050 = vadd.f32 %v1978, %v2049
        %2051 = vmatmul.f32.gmra.mxu0 %v1988
        %v2052 = vpop.f32.mrf.mxu0
        %v2053 = vadd.f32 %v1978, %v2052
        %2054 = vmatmul.f32.gmra.mxu0 %v1991
        %v2055 = vpop.f32.mrf.mxu0
        %v2056 = vadd.f32 %v1978, %v2055
        %2057 = vmatmul.f32.gmra.mxu0 %v1994
        %v2058 = vpop.f32.mrf.mxu0
        %v2059 = vadd.f32 %v1978, %v2058
        %2060 = vmatmul.f32.gmra.mxu0 %v1997
        %v2061 = vpop.f32.mrf.mxu0
        %v2062 = vadd.f32 %v1978, %v2061
        %2063 = vmatmul.f32.gmra.mxu0 %v2000
        %v2064 = vpop.f32.mrf.mxu0
        %v2065 = vadd.f32 %v1978, %v2064
        %2066 = vmatmul.f32.gmra.mxu0 %v2003
        %v2067 = vpop.f32.mrf.mxu0
        %v2068 = vadd.f32 %v1978, %v2067
        %2069 = vmatmul.f32.gmra.mxu0 %v2006
        %v2070 = vpop.f32.mrf.mxu0
        %v2071 = vadd.f32 %v1978, %v2070
        %2072 = vmatmul.f32.gmra.mxu0 %v2009
        %v2073 = vpop.f32.mrf.mxu0
        %v2074 = vadd.f32 %v1978, %v2073
        %2075 = vmatmul.f32.gmra.mxu0 %v2012
        %v2076 = vpop.f32.mrf.mxu0
        %v2077 = vadd.f32 %v1978, %v2076
        %2078 = vmatmul.f32.gmra.mxu0 %v2015
        %v2079 = vpop.f32.mrf.mxu0
        %v2080 = vadd.f32 %v1978, %v2079
        %2081 = vmatmul.f32.gmra.mxu0 %v2018
        %v2082 = vpop.f32.mrf.mxu0
        %v2083 = vadd.f32 %v1978, %v2082
        %2084 = vmatmul.f32.gmra.mxu0 %v2021
        %v2085 = vpop.f32.mrf.mxu0
        %v2086 = vadd.f32 %v1978, %v2085
        %2087 = vmatmul.f32.gmra.mxu0 %v2024
        %v2088 = vpop.f32.mrf.mxu0
        %v2089 = vadd.f32 %v1978, %v2088
        %2090 = vmatmul.f32.gmra.mxu0 %v2027
        %v2091 = vpop.f32.mrf.mxu0
        %v2092 = vadd.f32 %v1978, %v2091
        %2093 = vdwg.mxu0
        %vm2094 = vcmp.ge.f32.partialorder %v2047, 0.0
        %vm2095 = vcmp.ge.f32.partialorder %v2050, 0.0
        %vm2096 = vcmp.ge.f32.partialorder %v2053, 0.0
        %vm2097 = vcmp.ge.f32.partialorder %v2056, 0.0
        %vm2098 = vcmp.ge.f32.partialorder %v2059, 0.0
        %vm2099 = vcmp.ge.f32.partialorder %v2062, 0.0
        %vm2100 = vcmp.ge.f32.partialorder %v2065, 0.0
        %vm2101 = vcmp.ge.f32.partialorder %v2068, 0.0
        %vm2102 = vcmp.ge.f32.partialorder %v2071, 0.0
        %vm2103 = vcmp.ge.f32.partialorder %v2074, 0.0
        %vm2104 = vcmp.ge.f32.partialorder %v2077, 0.0
        %vm2105 = vcmp.ge.f32.partialorder %v2080, 0.0
        %vm2106 = vcmp.ge.f32.partialorder %v2083, 0.0
        %vm2107 = vcmp.ge.f32.partialorder %v2086, 0.0
        %vm2108 = vcmp.ge.f32.partialorder %v2089, 0.0
        %vm2109 = vcmp.ge.f32.partialorder %v2092, 0.0
        %v2110 = vmul.f32 %v2047, 0.01
        %v2111 = vmul.f32 %v2050, 0.01
        %v2112 = vmul.f32 %v2053, 0.01
        %v2113 = vmul.f32 %v2056, 0.01
        %v2114 = vmul.f32 %v2059, 0.01
        %v2115 = vmul.f32 %v2062, 0.01
        %v2116 = vmul.f32 %v2065, 0.01
        %v2117 = vmul.f32 %v2068, 0.01
        %v2118 = vmul.f32 %v2071, 0.01
        %v2119 = vmul.f32 %v2074, 0.01
        %v2120 = vmul.f32 %v2077, 0.01
        %v2121 = vmul.f32 %v2080, 0.01
        %v2122 = vmul.f32 %v2083, 0.01
        %v2123 = vmul.f32 %v2086, 0.01
        %v2124 = vmul.f32 %v2089, 0.01
        %v2125 = vmul.f32 %v2092, 0.01
        %v2126 = vsel %vm2094, %v2047, %v2110
        %v2127 = vsel %vm2095, %v2050, %v2111
        %v2128 = vsel %vm2096, %v2053, %v2112
        %v2129 = vsel %vm2097, %v2056, %v2113
        %v2130 = vsel %vm2098, %v2059, %v2114
        %v2131 = vsel %vm2099, %v2062, %v2115
        %v2132 = vsel %vm2100, %v2065, %v2116
        %v2133 = vsel %vm2101, %v2068, %v2117
        %v2134 = vsel %vm2102, %v2071, %v2118
        %v2135 = vsel %vm2103, %v2074, %v2119
        %v2136 = vsel %vm2104, %v2077, %v2120
        %v2137 = vsel %vm2105, %v2080, %v2121
        %v2138 = vsel %vm2106, %v2083, %v2122
        %v2139 = vsel %vm2107, %v2086, %v2123
        %v2140 = vsel %vm2108, %v2089, %v2124
        %v2141 = vsel %vm2109, %v2092, %v2125
        %s2142 = scalar_lea.vmem %s8, 64
        %v2143 = vld [vmem:[%s2142] sm:$0xff]
        %v2144 = vld [vmem:[%s2142 + $0x8] sm:$0xff]
        %v2145 = vld [vmem:[%s2142 + $0x10] sm:$0xff]
        %v2146 = vld [vmem:[%s2142 + $0x18] sm:$0xff]
        %v2147 = vld [vmem:[%s2142 + $0x20] sm:$0xff]
        %v2148 = vld [vmem:[%s2142 + $0x28] sm:$0xff]
        %v2149 = vld [vmem:[%s2142 + $0x30] sm:$0xff]
        %v2150 = vld [vmem:[%s2142 + $0x38] sm:$0xff]
        %s2151 = scalar_lea.vmem %s9, 1
        %v2152 = vld [vmem:[%s2151] sm:$0x1]
        %v2154 = vperm.slane %v2152, 0
        %v2157 = vsel %vm1980, %v2126, 0
        %v2160 = vsel %vm1980, %v2127, 0
        %v2163 = vsel %vm1980, %v2128, 0
        %v2166 = vsel %vm1980, %v2129, 0
        %v2169 = vsel %vm1980, %v2130, 0
        %v2172 = vsel %vm1980, %v2131, 0
        %v2175 = vsel %vm1980, %v2132, 0
        %v2178 = vsel %vm1980, %v2133, 0
        %v2181 = vsel %vm1980, %v2134, 0
        %v2184 = vsel %vm1980, %v2135, 0
        %v2187 = vsel %vm1980, %v2136, 0
        %v2190 = vsel %vm1980, %v2137, 0
        %v2193 = vsel %vm1980, %v2138, 0
        %v2196 = vsel %vm1980, %v2139, 0
        %v2199 = vsel %vm1980, %v2140, 0
        %v2202 = vsel %vm1980, %v2141, 0
        %2204 = vmatpush.msra.mxu0 0.0
        %2205 = vmatpush.msra.mxu0 0.0
        %2206 = vmatpush.msra.mxu0 0.0
        %2207 = vmatpush.msra.mxu0 0.0
        %2208 = vmatpush.msra.mxu0 0.0
        %2209 = vmatpush.msra.mxu0 0.0
        %2210 = vmatpush.msra.mxu0 0.0
        %2211 = vmatpush.msra.mxu0 0.0
        %2212 = vmatpush.msra.mxu0 %v2150
        %2213 = vmatpush.msra.mxu0 %v2149
        %2214 = vmatpush.msra.mxu0 %v2148
        %2215 = vmatpush.msra.mxu0 %v2147
        %2216 = vmatpush.msra.mxu0 %v2146
        %2217 = vmatpush.msra.mxu0 %v2145
        %2218 = vmatpush.msra.mxu0 %v2144
        %2219 = vmatpush.msra.mxu0 %v2143
        %2220 = vmatmul.f32.gmra.mxu0 %v2157
        %v2221 = vpop.f32.mrf.mxu0
        %v2222 = vadd.f32 %v2154, %v2221
        %2223 = vmatmul.f32.gmra.mxu0 %v2160
        %v2224 = vpop.f32.mrf.mxu0
        %v2225 = vadd.f32 %v2154, %v2224
        %2226 = vmatmul.f32.gmra.mxu0 %v2163
        %v2227 = vpop.f32.mrf.mxu0
        %v2228 = vadd.f32 %v2154, %v2227
        %2229 = vmatmul.f32.gmra.mxu0 %v2166
        %v2230 = vpop.f32.mrf.mxu0
        %v2231 = vadd.f32 %v2154, %v2230
        %2232 = vmatmul.f32.gmra.mxu0 %v2169
        %v2233 = vpop.f32.mrf.mxu0
        %v2234 = vadd.f32 %v2154, %v2233
        %2235 = vmatmul.f32.gmra.mxu0 %v2172
        %v2236 = vpop.f32.mrf.mxu0
        %v2237 = vadd.f32 %v2154, %v2236
        %2238 = vmatmul.f32.gmra.mxu0 %v2175
        %v2239 = vpop.f32.mrf.mxu0
        %v2240 = vadd.f32 %v2154, %v2239
        %2241 = vmatmul.f32.gmra.mxu0 %v2178
        %v2242 = vpop.f32.mrf.mxu0
        %v2243 = vadd.f32 %v2154, %v2242
        %2244 = vmatmul.f32.gmra.mxu0 %v2181
        %v2245 = vpop.f32.mrf.mxu0
        %v2246 = vadd.f32 %v2154, %v2245
        %2247 = vmatmul.f32.gmra.mxu0 %v2184
        %v2248 = vpop.f32.mrf.mxu0
        %v2249 = vadd.f32 %v2154, %v2248
        %2250 = vmatmul.f32.gmra.mxu0 %v2187
        %v2251 = vpop.f32.mrf.mxu0
        %v2252 = vadd.f32 %v2154, %v2251
        %2253 = vmatmul.f32.gmra.mxu0 %v2190
        %v2254 = vpop.f32.mrf.mxu0
        %v2255 = vadd.f32 %v2154, %v2254
        %2256 = vmatmul.f32.gmra.mxu0 %v2193
        %v2257 = vpop.f32.mrf.mxu0
        %v2258 = vadd.f32 %v2154, %v2257
        %2259 = vmatmul.f32.gmra.mxu0 %v2196
        %v2260 = vpop.f32.mrf.mxu0
        %v2261 = vadd.f32 %v2154, %v2260
        %2262 = vmatmul.f32.gmra.mxu0 %v2199
        %v2263 = vpop.f32.mrf.mxu0
        %v2264 = vadd.f32 %v2154, %v2263
        %2265 = vmatmul.f32.gmra.mxu0 %v2202
        %v2266 = vpop.f32.mrf.mxu0
        %v2267 = vadd.f32 %v2154, %v2266
        %2268 = vdwg.mxu0
        %vm2269 = vcmp.ge.f32.partialorder %v2222, 0.0
        %vm2270 = vcmp.ge.f32.partialorder %v2225, 0.0
        %vm2271 = vcmp.ge.f32.partialorder %v2228, 0.0
        %vm2272 = vcmp.ge.f32.partialorder %v2231, 0.0
        %vm2273 = vcmp.ge.f32.partialorder %v2234, 0.0
        %vm2274 = vcmp.ge.f32.partialorder %v2237, 0.0
        %vm2275 = vcmp.ge.f32.partialorder %v2240, 0.0
        %vm2276 = vcmp.ge.f32.partialorder %v2243, 0.0
        %vm2277 = vcmp.ge.f32.partialorder %v2246, 0.0
        %vm2278 = vcmp.ge.f32.partialorder %v2249, 0.0
        %vm2279 = vcmp.ge.f32.partialorder %v2252, 0.0
        %vm2280 = vcmp.ge.f32.partialorder %v2255, 0.0
        %vm2281 = vcmp.ge.f32.partialorder %v2258, 0.0
        %vm2282 = vcmp.ge.f32.partialorder %v2261, 0.0
        %vm2283 = vcmp.ge.f32.partialorder %v2264, 0.0
        %vm2284 = vcmp.ge.f32.partialorder %v2267, 0.0
        %v2285 = vmul.f32 %v2222, 0.01
        %v2286 = vmul.f32 %v2225, 0.01
        %v2287 = vmul.f32 %v2228, 0.01
        %v2288 = vmul.f32 %v2231, 0.01
        %v2289 = vmul.f32 %v2234, 0.01
        %v2290 = vmul.f32 %v2237, 0.01
        %v2291 = vmul.f32 %v2240, 0.01
        %v2292 = vmul.f32 %v2243, 0.01
        %v2293 = vmul.f32 %v2246, 0.01
        %v2294 = vmul.f32 %v2249, 0.01
        %v2295 = vmul.f32 %v2252, 0.01
        %v2296 = vmul.f32 %v2255, 0.01
        %v2297 = vmul.f32 %v2258, 0.01
        %v2298 = vmul.f32 %v2261, 0.01
        %v2299 = vmul.f32 %v2264, 0.01
        %v2300 = vmul.f32 %v2267, 0.01
        %v2301 = vsel %vm2269, %v2222, %v2285
        %v2302 = vsel %vm2270, %v2225, %v2286
        %v2303 = vsel %vm2271, %v2228, %v2287
        %v2304 = vsel %vm2272, %v2231, %v2288
        %v2305 = vsel %vm2273, %v2234, %v2289
        %v2306 = vsel %vm2274, %v2237, %v2290
        %v2307 = vsel %vm2275, %v2240, %v2291
        %v2308 = vsel %vm2276, %v2243, %v2292
        %v2309 = vsel %vm2277, %v2246, %v2293
        %v2310 = vsel %vm2278, %v2249, %v2294
        %v2311 = vsel %vm2279, %v2252, %v2295
        %v2312 = vsel %vm2280, %v2255, %v2296
        %v2313 = vsel %vm2281, %v2258, %v2297
        %v2314 = vsel %vm2282, %v2261, %v2298
        %v2315 = vsel %vm2283, %v2264, %v2299
        %v2316 = vsel %vm2284, %v2267, %v2300
        %v2317 = vld [vmem:[#allocation5] sm:$0xff]
        %v2318 = vld [vmem:[#allocation5 + $0x8] sm:$0xff]
        %v2319 = vld [vmem:[#allocation5 + $0x10] sm:$0xff]
        %v2320 = vld [vmem:[#allocation5 + $0x18] sm:$0xff]
        %v2321 = vld [vmem:[#allocation5 + $0x20] sm:$0xff]
        %v2322 = vld [vmem:[#allocation5 + $0x28] sm:$0xff]
        %v2323 = vld [vmem:[#allocation5 + $0x30] sm:$0xff]
        %v2324 = vld [vmem:[#allocation5 + $0x38] sm:$0xff]
        %s2325 = scalar_lea.vmem %s9, 2
        %v2326 = vld [vmem:[%s2325] sm:$0x1]
        %v2328 = vperm.slane %v2326, 0
        %v2331 = vsel %vm1980, %v2301, 0
        %v2334 = vsel %vm1980, %v2302, 0
        %v2337 = vsel %vm1980, %v2303, 0
        %v2340 = vsel %vm1980, %v2304, 0
        %v2343 = vsel %vm1980, %v2305, 0
        %v2346 = vsel %vm1980, %v2306, 0
        %v2349 = vsel %vm1980, %v2307, 0
        %v2352 = vsel %vm1980, %v2308, 0
        %v2355 = vsel %vm1980, %v2309, 0
        %v2358 = vsel %vm1980, %v2310, 0
        %v2361 = vsel %vm1980, %v2311, 0
        %v2364 = vsel %vm1980, %v2312, 0
        %v2367 = vsel %vm1980, %v2313, 0
        %v2370 = vsel %vm1980, %v2314, 0
        %v2373 = vsel %vm1980, %v2315, 0
        %v2376 = vsel %vm1980, %v2316, 0
        %2378 = vmatpush.msra.mxu0 0.0
        %2379 = vmatpush.msra.mxu0 0.0
        %2380 = vmatpush.msra.mxu0 0.0
        %2381 = vmatpush.msra.mxu0 0.0
        %2382 = vmatpush.msra.mxu0 0.0
        %2383 = vmatpush.msra.mxu0 0.0
        %2384 = vmatpush.msra.mxu0 0.0
        %2385 = vmatpush.msra.mxu0 0.0
        %2386 = vmatpush.msra.mxu0 %v2324
        %2387 = vmatpush.msra.mxu0 %v2323
        %2388 = vmatpush.msra.mxu0 %v2322
        %2389 = vmatpush.msra.mxu0 %v2321
        %2390 = vmatpush.msra.mxu0 %v2320
        %2391 = vmatpush.msra.mxu0 %v2319
        %2392 = vmatpush.msra.mxu0 %v2318
        %2393 = vmatpush.msra.mxu0 %v2317
        %2394 = vmatmul.f32.gmra.mxu0 %v2331
        %v2395 = vpop.f32.mrf.mxu0
        %v2396 = vadd.f32 %v2328, %v2395
        %2397 = vmatmul.f32.gmra.mxu0 %v2334
        %v2398 = vpop.f32.mrf.mxu0
        %v2399 = vadd.f32 %v2328, %v2398
        %2400 = vmatmul.f32.gmra.mxu0 %v2337
        %v2401 = vpop.f32.mrf.mxu0
        %v2402 = vadd.f32 %v2328, %v2401
        %2403 = vmatmul.f32.gmra.mxu0 %v2340
        %v2404 = vpop.f32.mrf.mxu0
        %v2405 = vadd.f32 %v2328, %v2404
        %2406 = vmatmul.f32.gmra.mxu0 %v2343
        %v2407 = vpop.f32.mrf.mxu0
        %v2408 = vadd.f32 %v2328, %v2407
        %2409 = vmatmul.f32.gmra.mxu0 %v2346
        %v2410 = vpop.f32.mrf.mxu0
        %v2411 = vadd.f32 %v2328, %v2410
        %2412 = vmatmul.f32.gmra.mxu0 %v2349
        %v2413 = vpop.f32.mrf.mxu0
        %v2414 = vadd.f32 %v2328, %v2413
        %2415 = vmatmul.f32.gmra.mxu0 %v2352
        %v2416 = vpop.f32.mrf.mxu0
        %v2417 = vadd.f32 %v2328, %v2416
        %2418 = vmatmul.f32.gmra.mxu0 %v2355
        %v2419 = vpop.f32.mrf.mxu0
        %v2420 = vadd.f32 %v2328, %v2419
        %2421 = vmatmul.f32.gmra.mxu0 %v2358
        %v2422 = vpop.f32.mrf.mxu0
        %v2423 = vadd.f32 %v2328, %v2422
        %2424 = vmatmul.f32.gmra.mxu0 %v2361
        %v2425 = vpop.f32.mrf.mxu0
        %v2426 = vadd.f32 %v2328, %v2425
        %2427 = vmatmul.f32.gmra.mxu0 %v2364
        %v2428 = vpop.f32.mrf.mxu0
        %v2429 = vadd.f32 %v2328, %v2428
        %2430 = vmatmul.f32.gmra.mxu0 %v2367
        %v2431 = vpop.f32.mrf.mxu0
        %v2432 = vadd.f32 %v2328, %v2431
        %2433 = vmatmul.f32.gmra.mxu0 %v2370
        %v2434 = vpop.f32.mrf.mxu0
        %v2435 = vadd.f32 %v2328, %v2434
        %2436 = vmatmul.f32.gmra.mxu0 %v2373
        %v2437 = vpop.f32.mrf.mxu0
        %v2438 = vadd.f32 %v2328, %v2437
        %2439 = vmatmul.f32.gmra.mxu0 %v2376
        %v2440 = vpop.f32.mrf.mxu0
        %v2441 = vadd.f32 %v2328, %v2440
        %2442 = vdwg.mxu0
        %v2443 = vtanh.pop %v2396
        %v2444 = vtanh.pop %v2399
        %v2445 = vtanh.pop %v2402
        %v2446 = vtanh.pop %v2405
        %v2447 = vtanh.pop %v2408
        %v2448 = vtanh.pop %v2411
        %v2449 = vtanh.pop %v2414
        %v2450 = vtanh.pop %v2417
        %v2451 = vtanh.pop %v2420
        %v2452 = vtanh.pop %v2423
        %v2453 = vtanh.pop %v2426
        %v2454 = vtanh.pop %v2429
        %v2455 = vtanh.pop %v2432
        %v2456 = vtanh.pop %v2435
        %v2457 = vtanh.pop %v2438
        %v2458 = vtanh.pop %v2441
        %v2459 = vmul.f32 %v2443, 1.442695
        %v2460 = vpow.pop %v2459
        %v2461 = vmul.f32 %v2444, 1.442695
        %v2462 = vpow.pop %v2461
        %v2463 = vmul.f32 %v2445, 1.442695
        %v2464 = vpow.pop %v2463
        %v2465 = vmul.f32 %v2446, 1.442695
        %v2466 = vpow.pop %v2465
        %v2467 = vmul.f32 %v2447, 1.442695
        %v2468 = vpow.pop %v2467
        %v2469 = vmul.f32 %v2448, 1.442695
        %v2470 = vpow.pop %v2469
        %v2471 = vmul.f32 %v2449, 1.442695
        %v2472 = vpow.pop %v2471
        %v2473 = vmul.f32 %v2450, 1.442695
        %v2474 = vpow.pop %v2473
        %v2475 = vmul.f32 %v2451, 1.442695
        %v2476 = vpow.pop %v2475
        %v2477 = vmul.f32 %v2452, 1.442695
        %v2478 = vpow.pop %v2477
        %v2479 = vmul.f32 %v2453, 1.442695
        %v2480 = vpow.pop %v2479
        %v2481 = vmul.f32 %v2454, 1.442695
        %v2482 = vpow.pop %v2481
        %v2483 = vmul.f32 %v2455, 1.442695
        %v2484 = vpow.pop %v2483
        %v2485 = vmul.f32 %v2456, 1.442695
        %v2486 = vpow.pop %v2485
        %v2487 = vmul.f32 %v2457, 1.442695
        %v2488 = vpow.pop %v2487
        %v2489 = vmul.f32 %v2458, 1.442695
        %v2490 = vpow.pop %v2489
        %2507 = vrot.lane.b32.xlu0 %v2460, 5
        %v2508 = vpop.permute.xlu0 %2507
        %2509 = vrot.lane.b32.xlu0 %v2462, 5
        %v2510 = vpop.permute.xlu0 %2509
        %2511 = vrot.lane.b32.xlu0 %v2464, 5
        %v2512 = vpop.permute.xlu0 %2511
        %2513 = vrot.lane.b32.xlu0 %v2466, 5
        %v2514 = vpop.permute.xlu0 %2513
        %2515 = vrot.lane.b32.xlu0 %v2468, 5
        %v2516 = vpop.permute.xlu0 %2515
        %2517 = vrot.lane.b32.xlu0 %v2470, 5
        %v2518 = vpop.permute.xlu0 %2517
        %2519 = vrot.lane.b32.xlu0 %v2472, 5
        %v2520 = vpop.permute.xlu0 %2519
        %2521 = vrot.lane.b32.xlu0 %v2474, 5
        %v2522 = vpop.permute.xlu0 %2521
        %2523 = vrot.lane.b32.xlu0 %v2476, 5
        %v2524 = vpop.permute.xlu0 %2523
        %2525 = vrot.lane.b32.xlu0 %v2478, 5
        %v2526 = vpop.permute.xlu0 %2525
        %2527 = vrot.lane.b32.xlu0 %v2480, 5
        %v2528 = vpop.permute.xlu0 %2527
        %2529 = vrot.lane.b32.xlu0 %v2482, 5
        %v2530 = vpop.permute.xlu0 %2529
        %2531 = vrot.lane.b32.xlu0 %v2484, 5
        %v2532 = vpop.permute.xlu0 %2531
        %2533 = vrot.lane.b32.xlu0 %v2486, 5
        %v2534 = vpop.permute.xlu0 %2533
        %2535 = vrot.lane.b32.xlu0 %v2488, 5
        %v2536 = vpop.permute.xlu0 %2535
        %2537 = vrot.lane.b32.xlu0 %v2490, 5
        %v2538 = vpop.permute.xlu0 %2537
        %v2555 = vmul.f32 %v1785, %v2508
        %v2556 = vmul.f32 %v1786, %v2510
        %v2557 = vmul.f32 %v1787, %v2512
        %v2558 = vmul.f32 %v1788, %v2514
        %v2559 = vmul.f32 %v1789, %v2516
        %v2560 = vmul.f32 %v1790, %v2518
        %v2561 = vmul.f32 %v1791, %v2520
        %v2562 = vmul.f32 %v1792, %v2522
        %v2563 = vmul.f32 %v1793, %v2524
        %v2564 = vmul.f32 %v1794, %v2526
        %v2565 = vmul.f32 %v1795, %v2528
        %v2566 = vmul.f32 %v1796, %v2530
        %v2567 = vmul.f32 %v1797, %v2532
        %v2568 = vmul.f32 %v1798, %v2534
        %v2569 = vmul.f32 %v1799, %v2536
        %v2570 = vmul.f32 %v1800, %v2538
        %v2571 = vadd.f32 %v2555, %v2396
        %v2572 = vadd.f32 %v2556, %v2399
        %v2573 = vadd.f32 %v2557, %v2402
        %v2574 = vadd.f32 %v2558, %v2405
        %v2575 = vadd.f32 %v2559, %v2408
        %v2576 = vadd.f32 %v2560, %v2411
        %v2577 = vadd.f32 %v2561, %v2414
        %v2578 = vadd.f32 %v2562, %v2417
        %v2579 = vadd.f32 %v2563, %v2420
        %v2580 = vadd.f32 %v2564, %v2423
        %v2581 = vadd.f32 %v2565, %v2426
        %v2582 = vadd.f32 %v2566, %v2429
        %v2583 = vadd.f32 %v2567, %v2432
        %v2584 = vadd.f32 %v2568, %v2435
        %v2585 = vadd.f32 %v2569, %v2438
        %v2586 = vadd.f32 %v2570, %v2441
        %v2587 = vsel %vm1802, %v2443, 0.0
        %2588 = vadd.xlane.f32.xlu0 %v2587
        %v2589 = vpop.xlane.xlu0 %2588
        %v2590 = vsel %vm1802, %v2444, 0.0
        %2591 = vadd.xlane.f32.xlu0 %v2590
        %v2592 = vpop.xlane.xlu0 %2591
        %v2593 = vsel %vm1802, %v2445, 0.0
        %2594 = vadd.xlane.f32.xlu0 %v2593
        %v2595 = vpop.xlane.xlu0 %2594
        %v2596 = vsel %vm1802, %v2446, 0.0
        %2597 = vadd.xlane.f32.xlu0 %v2596
        %v2598 = vpop.xlane.xlu0 %2597
        %v2599 = vsel %vm1802, %v2447, 0.0
        %2600 = vadd.xlane.f32.xlu0 %v2599
        %v2601 = vpop.xlane.xlu0 %2600
        %v2602 = vsel %vm1802, %v2448, 0.0
        %2603 = vadd.xlane.f32.xlu0 %v2602
        %v2604 = vpop.xlane.xlu0 %2603
        %v2605 = vsel %vm1802, %v2449, 0.0
        %2606 = vadd.xlane.f32.xlu0 %v2605
        %v2607 = vpop.xlane.xlu0 %2606
        %v2608 = vsel %vm1802, %v2450, 0.0
        %2609 = vadd.xlane.f32.xlu0 %v2608
        %v2610 = vpop.xlane.xlu0 %2609
        %v2611 = vsel %vm1802, %v2451, 0.0
        %2612 = vadd.xlane.f32.xlu0 %v2611
        %v2613 = vpop.xlane.xlu0 %2612
        %v2614 = vsel %vm1802, %v2452, 0.0
        %2615 = vadd.xlane.f32.xlu0 %v2614
        %v2616 = vpop.xlane.xlu0 %2615
        %v2617 = vsel %vm1802, %v2453, 0.0
        %2618 = vadd.xlane.f32.xlu0 %v2617
        %v2619 = vpop.xlane.xlu0 %2618
        %v2620 = vsel %vm1802, %v2454, 0.0
        %2621 = vadd.xlane.f32.xlu0 %v2620
        %v2622 = vpop.xlane.xlu0 %2621
        %v2623 = vsel %vm1802, %v2455, 0.0
        %2624 = vadd.xlane.f32.xlu0 %v2623
        %v2625 = vpop.xlane.xlu0 %2624
        %v2626 = vsel %vm1802, %v2456, 0.0
        %2627 = vadd.xlane.f32.xlu0 %v2626
        %v2628 = vpop.xlane.xlu0 %2627
        %v2629 = vsel %vm1802, %v2457, 0.0
        %2630 = vadd.xlane.f32.xlu0 %v2629
        %v2631 = vpop.xlane.xlu0 %2630
        %v2632 = vsel %vm1802, %v2458, 0.0
        %2633 = vadd.xlane.f32.xlu0 %v2632
        %v2634 = vpop.xlane.xlu0 %2633
        %v2635 = vadd.f32 %v1752, %v2589
        %v2636 = vadd.f32 %v1752, %v2592
        %v2637 = vadd.f32 %v1752, %v2595
        %v2638 = vadd.f32 %v1752, %v2598
        %v2639 = vadd.f32 %v1752, %v2601
        %v2640 = vadd.f32 %v1752, %v2604
        %v2641 = vadd.f32 %v1752, %v2607
        %v2642 = vadd.f32 %v1752, %v2610
        %v2643 = vadd.f32 %v1752, %v2613
        %v2644 = vadd.f32 %v1752, %v2616
        %v2645 = vadd.f32 %v1752, %v2619
        %v2646 = vadd.f32 %v1752, %v2622
        %v2647 = vadd.f32 %v1752, %v2625
        %v2648 = vadd.f32 %v1752, %v2628
        %v2649 = vadd.f32 %v1752, %v2631
        %v2650 = vadd.f32 %v1752, %v2634
        %s2651 = scalar_lea.vmem %s7, 8
        %v2652 = vld [vmem:[%s2651] sm:$0x1f]
        %2669 = vrot.lane.b32.xlu0 %v2571, 123
        %v2670 = vpop.permute.xlu0 %2669
        %2671 = vrot.lane.b32.xlu0 %v2572, 123
        %v2672 = vpop.permute.xlu0 %2671
        %2673 = vrot.lane.b32.xlu0 %v2573, 123
        %v2674 = vpop.permute.xlu0 %2673
        %2675 = vrot.lane.b32.xlu0 %v2574, 123
        %v2676 = vpop.permute.xlu0 %2675
        %2677 = vrot.lane.b32.xlu0 %v2575, 123
        %v2678 = vpop.permute.xlu0 %2677
        %2679 = vrot.lane.b32.xlu0 %v2576, 123
        %v2680 = vpop.permute.xlu0 %2679
        %2681 = vrot.lane.b32.xlu0 %v2577, 123
        %v2682 = vpop.permute.xlu0 %2681
        %2683 = vrot.lane.b32.xlu0 %v2578, 123
        %v2684 = vpop.permute.xlu0 %2683
        %2685 = vrot.lane.b32.xlu0 %v2579, 123
        %v2686 = vpop.permute.xlu0 %2685
        %2687 = vrot.lane.b32.xlu0 %v2580, 123
        %v2688 = vpop.permute.xlu0 %2687
        %2689 = vrot.lane.b32.xlu0 %v2581, 123
        %v2690 = vpop.permute.xlu0 %2689
        %2691 = vrot.lane.b32.xlu0 %v2582, 123
        %v2692 = vpop.permute.xlu0 %2691
        %2693 = vrot.lane.b32.xlu0 %v2583, 123
        %v2694 = vpop.permute.xlu0 %2693
        %2695 = vrot.lane.b32.xlu0 %v2584, 123
        %v2696 = vpop.permute.xlu0 %2695
        %2697 = vrot.lane.b32.xlu0 %v2585, 123
        %v2698 = vpop.permute.xlu0 %2697
        %2699 = vrot.lane.b32.xlu0 %v2586, 123
        %v2700 = vpop.permute.xlu0 %2699
        %2717 = vrot.lane.b32.xlu0 %v1449, 64
        %v2718 = vpop.permute.xlu0 %2717
        %2719 = vrot.lane.b32.xlu0 %v1452, 64
        %v2720 = vpop.permute.xlu0 %2719
        %2721 = vrot.lane.b32.xlu0 %v1455, 64
        %v2722 = vpop.permute.xlu0 %2721
        %2723 = vrot.lane.b32.xlu0 %v1458, 64
        %v2724 = vpop.permute.xlu0 %2723
        %2725 = vrot.lane.b32.xlu0 %v1461, 64
        %v2726 = vpop.permute.xlu0 %2725
        %2727 = vrot.lane.b32.xlu0 %v1464, 64
        %v2728 = vpop.permute.xlu0 %2727
        %2729 = vrot.lane.b32.xlu0 %v1467, 64
        %v2730 = vpop.permute.xlu0 %2729
        %2731 = vrot.lane.b32.xlu0 %v1470, 64
        %v2732 = vpop.permute.xlu0 %2731
        %2733 = vrot.lane.b32.xlu0 %v1473, 64
        %v2734 = vpop.permute.xlu0 %2733
        %2735 = vrot.lane.b32.xlu0 %v1476, 64
        %v2736 = vpop.permute.xlu0 %2735
        %2737 = vrot.lane.b32.xlu0 %v1479, 64
        %v2738 = vpop.permute.xlu0 %2737
        %2739 = vrot.lane.b32.xlu0 %v1482, 64
        %v2740 = vpop.permute.xlu0 %2739
        %2741 = vrot.lane.b32.xlu0 %v1485, 64
        %v2742 = vpop.permute.xlu0 %2741
        %2743 = vrot.lane.b32.xlu0 %v1488, 64
        %v2744 = vpop.permute.xlu0 %2743
        %2745 = vrot.lane.b32.xlu0 %v1491, 64
        %v2746 = vpop.permute.xlu0 %2745
        %2747 = vrot.lane.b32.xlu0 %v1494, 64
        %v2748 = vpop.permute.xlu0 %2747
        %v2765 = vsel %vm1802, %v2670, 0
        %v2767 = vsel %vm1802, %v2672, 0
        %v2769 = vsel %vm1802, %v2674, 0
        %v2771 = vsel %vm1802, %v2676, 0
        %v2773 = vsel %vm1802, %v2678, 0
        %v2775 = vsel %vm1802, %v2680, 0
        %v2777 = vsel %vm1802, %v2682, 0
        %v2779 = vsel %vm1802, %v2684, 0
        %v2781 = vsel %vm1802, %v2686, 0
        %v2783 = vsel %vm1802, %v2688, 0
        %v2785 = vsel %vm1802, %v2690, 0
        %v2787 = vsel %vm1802, %v2692, 0
        %v2789 = vsel %vm1802, %v2694, 0
        %v2791 = vsel %vm1802, %v2696, 0
        %v2793 = vsel %vm1802, %v2698, 0
        %v2795 = vsel %vm1802, %v2700, 0
        %v2798 = vsel %vm1851, %v2652, 0
        %2800 = vmatpush.msra.mxu0 0.0
        %2801 = vmatpush.msra.mxu0 0.0
        %2802 = vmatpush.msra.mxu0 0.0
        %2803 = vmatpush.msra.mxu0 0.0
        %2804 = vmatpush.msra.mxu0 0.0
        %2805 = vmatpush.msra.mxu0 0.0
        %2806 = vmatpush.msra.mxu0 0.0
        %2807 = vmatpush.msra.mxu0 0.0
        %2808 = vmatpush.msra.mxu0 0.0
        %2809 = vmatpush.msra.mxu0 0.0
        %2810 = vmatpush.msra.mxu0 0.0
        %2811 = vmatpush.msra.mxu0 0.0
        %2812 = vmatpush.msra.mxu0 0.0
        %2813 = vmatpush.msra.mxu0 0.0
        %2814 = vmatpush.msra.mxu0 0.0
        %2815 = vmatpush.msra.mxu0 %v2798
        %2816 = vmatmul.f32.gmra.mxu0 %v2765
        %v2817 = vpop.f32.mrf.mxu0
        %v2818 = vadd.f32 %v2718, %v2817
        %2819 = vmatmul.f32.gmra.mxu0 %v2767
        %v2820 = vpop.f32.mrf.mxu0
        %v2821 = vadd.f32 %v2720, %v2820
        %2822 = vmatmul.f32.gmra.mxu0 %v2769
        %v2823 = vpop.f32.mrf.mxu0
        %v2824 = vadd.f32 %v2722, %v2823
        %2825 = vmatmul.f32.gmra.mxu0 %v2771
        %v2826 = vpop.f32.mrf.mxu0
        %v2827 = vadd.f32 %v2724, %v2826
        %2828 = vmatmul.f32.gmra.mxu0 %v2773
        %v2829 = vpop.f32.mrf.mxu0
        %v2830 = vadd.f32 %v2726, %v2829
        %2831 = vmatmul.f32.gmra.mxu0 %v2775
        %v2832 = vpop.f32.mrf.mxu0
        %v2833 = vadd.f32 %v2728, %v2832
        %2834 = vmatmul.f32.gmra.mxu0 %v2777
        %v2835 = vpop.f32.mrf.mxu0
        %v2836 = vadd.f32 %v2730, %v2835
        %2837 = vmatmul.f32.gmra.mxu0 %v2779
        %v2838 = vpop.f32.mrf.mxu0
        %v2839 = vadd.f32 %v2732, %v2838
        %2840 = vmatmul.f32.gmra.mxu0 %v2781
        %v2841 = vpop.f32.mrf.mxu0
        %v2842 = vadd.f32 %v2734, %v2841
        %2843 = vmatmul.f32.gmra.mxu0 %v2783
        %v2844 = vpop.f32.mrf.mxu0
        %v2845 = vadd.f32 %v2736, %v2844
        %2846 = vmatmul.f32.gmra.mxu0 %v2785
        %v2847 = vpop.f32.mrf.mxu0
        %v2848 = vadd.f32 %v2738, %v2847
        %2849 = vmatmul.f32.gmra.mxu0 %v2787
        %v2850 = vpop.f32.mrf.mxu0
        %v2851 = vadd.f32 %v2740, %v2850
        %2852 = vmatmul.f32.gmra.mxu0 %v2789
        %v2853 = vpop.f32.mrf.mxu0
        %v2854 = vadd.f32 %v2742, %v2853
        %2855 = vmatmul.f32.gmra.mxu0 %v2791
        %v2856 = vpop.f32.mrf.mxu0
        %v2857 = vadd.f32 %v2744, %v2856
        %2858 = vmatmul.f32.gmra.mxu0 %v2793
        %v2859 = vpop.f32.mrf.mxu0
        %v2860 = vadd.f32 %v2746, %v2859
        %2861 = vmatmul.f32.gmra.mxu0 %v2795
        %v2862 = vpop.f32.mrf.mxu0
        %v2863 = vadd.f32 %v2748, %v2862
        %2864 = vdwg.mxu0
        %vm2865 = vcmp.ge.f32.partialorder %v2818, 0.0
        %vm2866 = vcmp.ge.f32.partialorder %v2821, 0.0
        %vm2867 = vcmp.ge.f32.partialorder %v2824, 0.0
        %vm2868 = vcmp.ge.f32.partialorder %v2827, 0.0
        %vm2869 = vcmp.ge.f32.partialorder %v2830, 0.0
        %vm2870 = vcmp.ge.f32.partialorder %v2833, 0.0
        %vm2871 = vcmp.ge.f32.partialorder %v2836, 0.0
        %vm2872 = vcmp.ge.f32.partialorder %v2839, 0.0
        %vm2873 = vcmp.ge.f32.partialorder %v2842, 0.0
        %vm2874 = vcmp.ge.f32.partialorder %v2845, 0.0
        %vm2875 = vcmp.ge.f32.partialorder %v2848, 0.0
        %vm2876 = vcmp.ge.f32.partialorder %v2851, 0.0
        %vm2877 = vcmp.ge.f32.partialorder %v2854, 0.0
        %vm2878 = vcmp.ge.f32.partialorder %v2857, 0.0
        %vm2879 = vcmp.ge.f32.partialorder %v2860, 0.0
        %vm2880 = vcmp.ge.f32.partialorder %v2863, 0.0
        %v2881 = vmul.f32 %v2818, 0.01
        %v2882 = vmul.f32 %v2821, 0.01
        %v2883 = vmul.f32 %v2824, 0.01
        %v2884 = vmul.f32 %v2827, 0.01
        %v2885 = vmul.f32 %v2830, 0.01
        %v2886 = vmul.f32 %v2833, 0.01
        %v2887 = vmul.f32 %v2836, 0.01
        %v2888 = vmul.f32 %v2839, 0.01
        %v2889 = vmul.f32 %v2842, 0.01
        %v2890 = vmul.f32 %v2845, 0.01
        %v2891 = vmul.f32 %v2848, 0.01
        %v2892 = vmul.f32 %v2851, 0.01
        %v2893 = vmul.f32 %v2854, 0.01
        %v2894 = vmul.f32 %v2857, 0.01
        %v2895 = vmul.f32 %v2860, 0.01
        %v2896 = vmul.f32 %v2863, 0.01
        %v2897 = vsel %vm2865, %v2818, %v2881
        %v2898 = vsel %vm2866, %v2821, %v2882
        %v2899 = vsel %vm2867, %v2824, %v2883
        %v2900 = vsel %vm2868, %v2827, %v2884
        %v2901 = vsel %vm2869, %v2830, %v2885
        %v2902 = vsel %vm2870, %v2833, %v2886
        %v2903 = vsel %vm2871, %v2836, %v2887
        %v2904 = vsel %vm2872, %v2839, %v2888
        %v2905 = vsel %vm2873, %v2842, %v2889
        %v2906 = vsel %vm2874, %v2845, %v2890
        %v2907 = vsel %vm2875, %v2848, %v2891
        %v2908 = vsel %vm2876, %v2851, %v2892
        %v2909 = vsel %vm2877, %v2854, %v2893
        %v2910 = vsel %vm2878, %v2857, %v2894
        %v2911 = vsel %vm2879, %v2860, %v2895
        %v2912 = vsel %vm2880, %v2863, %v2896
        %s2913 = scalar_lea.vmem %s8, 128
        %v2914 = vld [vmem:[%s2913] sm:$0xff]
        %v2915 = vld [vmem:[%s2913 + $0x8] sm:$0xff]
        %v2916 = vld [vmem:[%s2913 + $0x10] sm:$0xff]
        %v2917 = vld [vmem:[%s2913 + $0x18] sm:$0xff]
        %v2918 = vld [vmem:[%s2913 + $0x20] sm:$0xff]
        %v2919 = vld [vmem:[%s2913 + $0x28] sm:$0xff]
        %v2920 = vld [vmem:[%s2913 + $0x30] sm:$0xff]
        %v2921 = vld [vmem:[%s2913 + $0x38] sm:$0xff]
        %s2922 = scalar_lea.vmem %s9, 3
        %v2923 = vld [vmem:[%s2922] sm:$0x1]
        %v2925 = vperm.slane %v2923, 0
        %v2928 = vsel %vm1980, %v2897, 0
        %v2931 = vsel %vm1980, %v2898, 0
        %v2934 = vsel %vm1980, %v2899, 0
        %v2937 = vsel %vm1980, %v2900, 0
        %v2940 = vsel %vm1980, %v2901, 0
        %v2943 = vsel %vm1980, %v2902, 0
        %v2946 = vsel %vm1980, %v2903, 0
        %v2949 = vsel %vm1980, %v2904, 0
        %v2952 = vsel %vm1980, %v2905, 0
        %v2955 = vsel %vm1980, %v2906, 0
        %v2958 = vsel %vm1980, %v2907, 0
        %v2961 = vsel %vm1980, %v2908, 0
        %v2964 = vsel %vm1980, %v2909, 0
        %v2967 = vsel %vm1980, %v2910, 0
        %v2970 = vsel %vm1980, %v2911, 0
        %v2973 = vsel %vm1980, %v2912, 0
        %2975 = vmatpush.msra.mxu0 0.0
        %2976 = vmatpush.msra.mxu0 0.0
        %2977 = vmatpush.msra.mxu0 0.0
        %2978 = vmatpush.msra.mxu0 0.0
        %2979 = vmatpush.msra.mxu0 0.0
        %2980 = vmatpush.msra.mxu0 0.0
        %2981 = vmatpush.msra.mxu0 0.0
        %2982 = vmatpush.msra.mxu0 0.0
        %2983 = vmatpush.msra.mxu0 %v2921
        %2984 = vmatpush.msra.mxu0 %v2920
        %2985 = vmatpush.msra.mxu0 %v2919
        %2986 = vmatpush.msra.mxu0 %v2918
        %2987 = vmatpush.msra.mxu0 %v2917
        %2988 = vmatpush.msra.mxu0 %v2916
        %2989 = vmatpush.msra.mxu0 %v2915
        %2990 = vmatpush.msra.mxu0 %v2914
        %2991 = vmatmul.f32.gmra.mxu0 %v2928
        %v2992 = vpop.f32.mrf.mxu0
        %v2993 = vadd.f32 %v2925, %v2992
        %2994 = vmatmul.f32.gmra.mxu0 %v2931
        %v2995 = vpop.f32.mrf.mxu0
        %v2996 = vadd.f32 %v2925, %v2995
        %2997 = vmatmul.f32.gmra.mxu0 %v2934
        %v2998 = vpop.f32.mrf.mxu0
        %v2999 = vadd.f32 %v2925, %v2998
        %3000 = vmatmul.f32.gmra.mxu0 %v2937
        %v3001 = vpop.f32.mrf.mxu0
        %v3002 = vadd.f32 %v2925, %v3001
        %3003 = vmatmul.f32.gmra.mxu0 %v2940
        %v3004 = vpop.f32.mrf.mxu0
        %v3005 = vadd.f32 %v2925, %v3004
        %3006 = vmatmul.f32.gmra.mxu0 %v2943
        %v3007 = vpop.f32.mrf.mxu0
        %v3008 = vadd.f32 %v2925, %v3007
        %3009 = vmatmul.f32.gmra.mxu0 %v2946
        %v3010 = vpop.f32.mrf.mxu0
        %v3011 = vadd.f32 %v2925, %v3010
        %3012 = vmatmul.f32.gmra.mxu0 %v2949
        %v3013 = vpop.f32.mrf.mxu0
        %v3014 = vadd.f32 %v2925, %v3013
        %3015 = vmatmul.f32.gmra.mxu0 %v2952
        %v3016 = vpop.f32.mrf.mxu0
        %v3017 = vadd.f32 %v2925, %v3016
        %3018 = vmatmul.f32.gmra.mxu0 %v2955
        %v3019 = vpop.f32.mrf.mxu0
        %v3020 = vadd.f32 %v2925, %v3019
        %3021 = vmatmul.f32.gmra.mxu0 %v2958
        %v3022 = vpop.f32.mrf.mxu0
        %v3023 = vadd.f32 %v2925, %v3022
        %3024 = vmatmul.f32.gmra.mxu0 %v2961
        %v3025 = vpop.f32.mrf.mxu0
        %v3026 = vadd.f32 %v2925, %v3025
        %3027 = vmatmul.f32.gmra.mxu0 %v2964
        %v3028 = vpop.f32.mrf.mxu0
        %v3029 = vadd.f32 %v2925, %v3028
        %3030 = vmatmul.f32.gmra.mxu0 %v2967
        %v3031 = vpop.f32.mrf.mxu0
        %v3032 = vadd.f32 %v2925, %v3031
        %3033 = vmatmul.f32.gmra.mxu0 %v2970
        %v3034 = vpop.f32.mrf.mxu0
        %v3035 = vadd.f32 %v2925, %v3034
        %3036 = vmatmul.f32.gmra.mxu0 %v2973
        %v3037 = vpop.f32.mrf.mxu0
        %v3038 = vadd.f32 %v2925, %v3037
        %3039 = vdwg.mxu0
        %vm3040 = vcmp.ge.f32.partialorder %v2993, 0.0
        %vm3041 = vcmp.ge.f32.partialorder %v2996, 0.0
        %vm3042 = vcmp.ge.f32.partialorder %v2999, 0.0
        %vm3043 = vcmp.ge.f32.partialorder %v3002, 0.0
        %vm3044 = vcmp.ge.f32.partialorder %v3005, 0.0
        %vm3045 = vcmp.ge.f32.partialorder %v3008, 0.0
        %vm3046 = vcmp.ge.f32.partialorder %v3011, 0.0
        %vm3047 = vcmp.ge.f32.partialorder %v3014, 0.0
        %vm3048 = vcmp.ge.f32.partialorder %v3017, 0.0
        %vm3049 = vcmp.ge.f32.partialorder %v3020, 0.0
        %vm3050 = vcmp.ge.f32.partialorder %v3023, 0.0
        %vm3051 = vcmp.ge.f32.partialorder %v3026, 0.0
        %vm3052 = vcmp.ge.f32.partialorder %v3029, 0.0
        %vm3053 = vcmp.ge.f32.partialorder %v3032, 0.0
        %vm3054 = vcmp.ge.f32.partialorder %v3035, 0.0
        %vm3055 = vcmp.ge.f32.partialorder %v3038, 0.0
        %v3056 = vmul.f32 %v2993, 0.01
        %v3057 = vmul.f32 %v2996, 0.01
        %v3058 = vmul.f32 %v2999, 0.01
        %v3059 = vmul.f32 %v3002, 0.01
        %v3060 = vmul.f32 %v3005, 0.01
        %v3061 = vmul.f32 %v3008, 0.01
        %v3062 = vmul.f32 %v3011, 0.01
        %v3063 = vmul.f32 %v3014, 0.01
        %v3064 = vmul.f32 %v3017, 0.01
        %v3065 = vmul.f32 %v3020, 0.01
        %v3066 = vmul.f32 %v3023, 0.01
        %v3067 = vmul.f32 %v3026, 0.01
        %v3068 = vmul.f32 %v3029, 0.01
        %v3069 = vmul.f32 %v3032, 0.01
        %v3070 = vmul.f32 %v3035, 0.01
        %v3071 = vmul.f32 %v3038, 0.01
        %v3072 = vsel %vm3040, %v2993, %v3056
        %v3073 = vsel %vm3041, %v2996, %v3057
        %v3074 = vsel %vm3042, %v2999, %v3058
        %v3075 = vsel %vm3043, %v3002, %v3059
        %v3076 = vsel %vm3044, %v3005, %v3060
        %v3077 = vsel %vm3045, %v3008, %v3061
        %v3078 = vsel %vm3046, %v3011, %v3062
        %v3079 = vsel %vm3047, %v3014, %v3063
        %v3080 = vsel %vm3048, %v3017, %v3064
        %v3081 = vsel %vm3049, %v3020, %v3065
        %v3082 = vsel %vm3050, %v3023, %v3066
        %v3083 = vsel %vm3051, %v3026, %v3067
        %v3084 = vsel %vm3052, %v3029, %v3068
        %v3085 = vsel %vm3053, %v3032, %v3069
        %v3086 = vsel %vm3054, %v3035, %v3070
        %v3087 = vsel %vm3055, %v3038, %v3071
        %s3088 = scalar_lea.vmem %s8, 192
        %v3089 = vld [vmem:[%s3088] sm:$0xff]
        %v3090 = vld [vmem:[%s3088 + $0x8] sm:$0xff]
        %v3091 = vld [vmem:[%s3088 + $0x10] sm:$0xff]
        %v3092 = vld [vmem:[%s3088 + $0x18] sm:$0xff]
        %v3093 = vld [vmem:[%s3088 + $0x20] sm:$0xff]
        %v3094 = vld [vmem:[%s3088 + $0x28] sm:$0xff]
        %v3095 = vld [vmem:[%s3088 + $0x30] sm:$0xff]
        %v3096 = vld [vmem:[%s3088 + $0x38] sm:$0xff]
        %s3097 = scalar_lea.vmem %s9, 4
        %v3098 = vld [vmem:[%s3097] sm:$0x1]
        %v3100 = vperm.slane %v3098, 0
        %v3103 = vsel %vm1980, %v3072, 0
        %v3106 = vsel %vm1980, %v3073, 0
        %v3109 = vsel %vm1980, %v3074, 0
        %v3112 = vsel %vm1980, %v3075, 0
        %v3115 = vsel %vm1980, %v3076, 0
        %v3118 = vsel %vm1980, %v3077, 0
        %v3121 = vsel %vm1980, %v3078, 0
        %v3124 = vsel %vm1980, %v3079, 0
        %v3127 = vsel %vm1980, %v3080, 0
        %v3130 = vsel %vm1980, %v3081, 0
        %v3133 = vsel %vm1980, %v3082, 0
        %v3136 = vsel %vm1980, %v3083, 0
        %v3139 = vsel %vm1980, %v3084, 0
        %v3142 = vsel %vm1980, %v3085, 0
        %v3145 = vsel %vm1980, %v3086, 0
        %v3148 = vsel %vm1980, %v3087, 0
        %3150 = vmatpush.msra.mxu0 0.0
        %3151 = vmatpush.msra.mxu0 0.0
        %3152 = vmatpush.msra.mxu0 0.0
        %3153 = vmatpush.msra.mxu0 0.0
        %3154 = vmatpush.msra.mxu0 0.0
        %3155 = vmatpush.msra.mxu0 0.0
        %3156 = vmatpush.msra.mxu0 0.0
        %3157 = vmatpush.msra.mxu0 0.0
        %3158 = vmatpush.msra.mxu0 %v3096
        %3159 = vmatpush.msra.mxu0 %v3095
        %3160 = vmatpush.msra.mxu0 %v3094
        %3161 = vmatpush.msra.mxu0 %v3093
        %3162 = vmatpush.msra.mxu0 %v3092
        %3163 = vmatpush.msra.mxu0 %v3091
        %3164 = vmatpush.msra.mxu0 %v3090
        %3165 = vmatpush.msra.mxu0 %v3089
        %3166 = vmatmul.f32.gmra.mxu0 %v3103
        %v3167 = vpop.f32.mrf.mxu0
        %v3168 = vadd.f32 %v3100, %v3167
        %3169 = vmatmul.f32.gmra.mxu0 %v3106
        %v3170 = vpop.f32.mrf.mxu0
        %v3171 = vadd.f32 %v3100, %v3170
        %3172 = vmatmul.f32.gmra.mxu0 %v3109
        %v3173 = vpop.f32.mrf.mxu0
        %v3174 = vadd.f32 %v3100, %v3173
        %3175 = vmatmul.f32.gmra.mxu0 %v3112
        %v3176 = vpop.f32.mrf.mxu0
        %v3177 = vadd.f32 %v3100, %v3176
        %3178 = vmatmul.f32.gmra.mxu0 %v3115
        %v3179 = vpop.f32.mrf.mxu0
        %v3180 = vadd.f32 %v3100, %v3179
        %3181 = vmatmul.f32.gmra.mxu0 %v3118
        %v3182 = vpop.f32.mrf.mxu0
        %v3183 = vadd.f32 %v3100, %v3182
        %3184 = vmatmul.f32.gmra.mxu0 %v3121
        %v3185 = vpop.f32.mrf.mxu0
        %v3186 = vadd.f32 %v3100, %v3185
        %3187 = vmatmul.f32.gmra.mxu0 %v3124
        %v3188 = vpop.f32.mrf.mxu0
        %v3189 = vadd.f32 %v3100, %v3188
        %3190 = vmatmul.f32.gmra.mxu0 %v3127
        %v3191 = vpop.f32.mrf.mxu0
        %v3192 = vadd.f32 %v3100, %v3191
        %3193 = vmatmul.f32.gmra.mxu0 %v3130
        %v3194 = vpop.f32.mrf.mxu0
        %v3195 = vadd.f32 %v3100, %v3194
        %3196 = vmatmul.f32.gmra.mxu0 %v3133
        %v3197 = vpop.f32.mrf.mxu0
        %v3198 = vadd.f32 %v3100, %v3197
        %3199 = vmatmul.f32.gmra.mxu0 %v3136
        %v3200 = vpop.f32.mrf.mxu0
        %v3201 = vadd.f32 %v3100, %v3200
        %3202 = vmatmul.f32.gmra.mxu0 %v3139
        %v3203 = vpop.f32.mrf.mxu0
        %v3204 = vadd.f32 %v3100, %v3203
        %3205 = vmatmul.f32.gmra.mxu0 %v3142
        %v3206 = vpop.f32.mrf.mxu0
        %v3207 = vadd.f32 %v3100, %v3206
        %3208 = vmatmul.f32.gmra.mxu0 %v3145
        %v3209 = vpop.f32.mrf.mxu0
        %v3210 = vadd.f32 %v3100, %v3209
        %3211 = vmatmul.f32.gmra.mxu0 %v3148
        %v3212 = vpop.f32.mrf.mxu0
        %v3213 = vadd.f32 %v3100, %v3212
        %3214 = vdwg.mxu0
        %vm3215 = vcmp.ge.f32.partialorder %v3168, 0.0
        %vm3216 = vcmp.ge.f32.partialorder %v3171, 0.0
        %vm3217 = vcmp.ge.f32.partialorder %v3174, 0.0
        %vm3218 = vcmp.ge.f32.partialorder %v3177, 0.0
        %vm3219 = vcmp.ge.f32.partialorder %v3180, 0.0
        %vm3220 = vcmp.ge.f32.partialorder %v3183, 0.0
        %vm3221 = vcmp.ge.f32.partialorder %v3186, 0.0
        %vm3222 = vcmp.ge.f32.partialorder %v3189, 0.0
        %vm3223 = vcmp.ge.f32.partialorder %v3192, 0.0
        %vm3224 = vcmp.ge.f32.partialorder %v3195, 0.0
        %vm3225 = vcmp.ge.f32.partialorder %v3198, 0.0
        %vm3226 = vcmp.ge.f32.partialorder %v3201, 0.0
        %vm3227 = vcmp.ge.f32.partialorder %v3204, 0.0
        %vm3228 = vcmp.ge.f32.partialorder %v3207, 0.0
        %vm3229 = vcmp.ge.f32.partialorder %v3210, 0.0
        %vm3230 = vcmp.ge.f32.partialorder %v3213, 0.0
        %v3231 = vmul.f32 %v3168, 0.01
        %v3232 = vmul.f32 %v3171, 0.01
        %v3233 = vmul.f32 %v3174, 0.01
        %v3234 = vmul.f32 %v3177, 0.01
        %v3235 = vmul.f32 %v3180, 0.01
        %v3236 = vmul.f32 %v3183, 0.01
        %v3237 = vmul.f32 %v3186, 0.01
        %v3238 = vmul.f32 %v3189, 0.01
        %v3239 = vmul.f32 %v3192, 0.01
        %v3240 = vmul.f32 %v3195, 0.01
        %v3241 = vmul.f32 %v3198, 0.01
        %v3242 = vmul.f32 %v3201, 0.01
        %v3243 = vmul.f32 %v3204, 0.01
        %v3244 = vmul.f32 %v3207, 0.01
        %v3245 = vmul.f32 %v3210, 0.01
        %v3246 = vmul.f32 %v3213, 0.01
        %v3247 = vsel %vm3215, %v3168, %v3231
        %v3248 = vsel %vm3216, %v3171, %v3232
        %v3249 = vsel %vm3217, %v3174, %v3233
        %v3250 = vsel %vm3218, %v3177, %v3234
        %v3251 = vsel %vm3219, %v3180, %v3235
        %v3252 = vsel %vm3220, %v3183, %v3236
        %v3253 = vsel %vm3221, %v3186, %v3237
        %v3254 = vsel %vm3222, %v3189, %v3238
        %v3255 = vsel %vm3223, %v3192, %v3239
        %v3256 = vsel %vm3224, %v3195, %v3240
        %v3257 = vsel %vm3225, %v3198, %v3241
        %v3258 = vsel %vm3226, %v3201, %v3242
        %v3259 = vsel %vm3227, %v3204, %v3243
        %v3260 = vsel %vm3228, %v3207, %v3244
        %v3261 = vsel %vm3229, %v3210, %v3245
        %v3262 = vsel %vm3230, %v3213, %v3246
        %s3263 = scalar_lea.vmem [#allocation5], 64
        %v3264 = vld [vmem:[%s3263] sm:$0xff]
        %v3265 = vld [vmem:[%s3263 + $0x8] sm:$0xff]
        %v3266 = vld [vmem:[%s3263 + $0x10] sm:$0xff]
        %v3267 = vld [vmem:[%s3263 + $0x18] sm:$0xff]
        %v3268 = vld [vmem:[%s3263 + $0x20] sm:$0xff]
        %v3269 = vld [vmem:[%s3263 + $0x28] sm:$0xff]
        %v3270 = vld [vmem:[%s3263 + $0x30] sm:$0xff]
        %v3271 = vld [vmem:[%s3263 + $0x38] sm:$0xff]
        %s3272 = scalar_lea.vmem %s9, 5
        %v3273 = vld [vmem:[%s3272] sm:$0x1]
        %v3275 = vperm.slane %v3273, 0
        %v3278 = vsel %vm1980, %v3247, 0
        %v3281 = vsel %vm1980, %v3248, 0
        %v3284 = vsel %vm1980, %v3249, 0
        %v3287 = vsel %vm1980, %v3250, 0
        %v3290 = vsel %vm1980, %v3251, 0
        %v3293 = vsel %vm1980, %v3252, 0
        %v3296 = vsel %vm1980, %v3253, 0
        %v3299 = vsel %vm1980, %v3254, 0
        %v3302 = vsel %vm1980, %v3255, 0
        %v3305 = vsel %vm1980, %v3256, 0
        %v3308 = vsel %vm1980, %v3257, 0
        %v3311 = vsel %vm1980, %v3258, 0
        %v3314 = vsel %vm1980, %v3259, 0
        %v3317 = vsel %vm1980, %v3260, 0
        %v3320 = vsel %vm1980, %v3261, 0
        %v3323 = vsel %vm1980, %v3262, 0
        %3325 = vmatpush.msra.mxu0 0.0
        %3326 = vmatpush.msra.mxu0 0.0
        %3327 = vmatpush.msra.mxu0 0.0
        %3328 = vmatpush.msra.mxu0 0.0
        %3329 = vmatpush.msra.mxu0 0.0
        %3330 = vmatpush.msra.mxu0 0.0
        %3331 = vmatpush.msra.mxu0 0.0
        %3332 = vmatpush.msra.mxu0 0.0
        %3333 = vmatpush.msra.mxu0 %v3271
        %3334 = vmatpush.msra.mxu0 %v3270
        %3335 = vmatpush.msra.mxu0 %v3269
        %3336 = vmatpush.msra.mxu0 %v3268
        %3337 = vmatpush.msra.mxu0 %v3267
        %3338 = vmatpush.msra.mxu0 %v3266
        %3339 = vmatpush.msra.mxu0 %v3265
        %3340 = vmatpush.msra.mxu0 %v3264
        %3341 = vmatmul.f32.gmra.mxu0 %v3278
        %v3342 = vpop.f32.mrf.mxu0
        %v3343 = vadd.f32 %v3275, %v3342
        %3344 = vmatmul.f32.gmra.mxu0 %v3281
        %v3345 = vpop.f32.mrf.mxu0
        %v3346 = vadd.f32 %v3275, %v3345
        %3347 = vmatmul.f32.gmra.mxu0 %v3284
        %v3348 = vpop.f32.mrf.mxu0
        %v3349 = vadd.f32 %v3275, %v3348
        %3350 = vmatmul.f32.gmra.mxu0 %v3287
        %v3351 = vpop.f32.mrf.mxu0
        %v3352 = vadd.f32 %v3275, %v3351
        %3353 = vmatmul.f32.gmra.mxu0 %v3290
        %v3354 = vpop.f32.mrf.mxu0
        %v3355 = vadd.f32 %v3275, %v3354
        %3356 = vmatmul.f32.gmra.mxu0 %v3293
        %v3357 = vpop.f32.mrf.mxu0
        %v3358 = vadd.f32 %v3275, %v3357
        %3359 = vmatmul.f32.gmra.mxu0 %v3296
        %v3360 = vpop.f32.mrf.mxu0
        %v3361 = vadd.f32 %v3275, %v3360
        %3362 = vmatmul.f32.gmra.mxu0 %v3299
        %v3363 = vpop.f32.mrf.mxu0
        %v3364 = vadd.f32 %v3275, %v3363
        %3365 = vmatmul.f32.gmra.mxu0 %v3302
        %v3366 = vpop.f32.mrf.mxu0
        %v3367 = vadd.f32 %v3275, %v3366
        %3368 = vmatmul.f32.gmra.mxu0 %v3305
        %v3369 = vpop.f32.mrf.mxu0
        %v3370 = vadd.f32 %v3275, %v3369
        %3371 = vmatmul.f32.gmra.mxu0 %v3308
        %v3372 = vpop.f32.mrf.mxu0
        %v3373 = vadd.f32 %v3275, %v3372
        %3374 = vmatmul.f32.gmra.mxu0 %v3311
        %v3375 = vpop.f32.mrf.mxu0
        %v3376 = vadd.f32 %v3275, %v3375
        %3377 = vmatmul.f32.gmra.mxu0 %v3314
        %v3378 = vpop.f32.mrf.mxu0
        %v3379 = vadd.f32 %v3275, %v3378
        %3380 = vmatmul.f32.gmra.mxu0 %v3317
        %v3381 = vpop.f32.mrf.mxu0
        %v3382 = vadd.f32 %v3275, %v3381
        %3383 = vmatmul.f32.gmra.mxu0 %v3320
        %v3384 = vpop.f32.mrf.mxu0
        %v3385 = vadd.f32 %v3275, %v3384
        %3386 = vmatmul.f32.gmra.mxu0 %v3323
        %v3387 = vpop.f32.mrf.mxu0
        %v3388 = vadd.f32 %v3275, %v3387
        %3389 = vdwg.mxu0
        %v3390 = vtanh.pop %v3343
        %v3391 = vtanh.pop %v3346
        %v3392 = vtanh.pop %v3349
        %v3393 = vtanh.pop %v3352
        %v3394 = vtanh.pop %v3355
        %v3395 = vtanh.pop %v3358
        %v3396 = vtanh.pop %v3361
        %v3397 = vtanh.pop %v3364
        %v3398 = vtanh.pop %v3367
        %v3399 = vtanh.pop %v3370
        %v3400 = vtanh.pop %v3373
        %v3401 = vtanh.pop %v3376
        %v3402 = vtanh.pop %v3379
        %v3403 = vtanh.pop %v3382
        %v3404 = vtanh.pop %v3385
        %v3405 = vtanh.pop %v3388
        %v3406 = vmul.f32 %v3390, 1.442695
        %v3407 = vpow.pop %v3406
        %v3408 = vmul.f32 %v3391, 1.442695
        %v3409 = vpow.pop %v3408
        %v3410 = vmul.f32 %v3392, 1.442695
        %v3411 = vpow.pop %v3410
        %v3412 = vmul.f32 %v3393, 1.442695
        %v3413 = vpow.pop %v3412
        %v3414 = vmul.f32 %v3394, 1.442695
        %v3415 = vpow.pop %v3414
        %v3416 = vmul.f32 %v3395, 1.442695
        %v3417 = vpow.pop %v3416
        %v3418 = vmul.f32 %v3396, 1.442695
        %v3419 = vpow.pop %v3418
        %v3420 = vmul.f32 %v3397, 1.442695
        %v3421 = vpow.pop %v3420
        %v3422 = vmul.f32 %v3398, 1.442695
        %v3423 = vpow.pop %v3422
        %v3424 = vmul.f32 %v3399, 1.442695
        %v3425 = vpow.pop %v3424
        %v3426 = vmul.f32 %v3400, 1.442695
        %v3427 = vpow.pop %v3426
        %v3428 = vmul.f32 %v3401, 1.442695
        %v3429 = vpow.pop %v3428
        %v3430 = vmul.f32 %v3402, 1.442695
        %v3431 = vpow.pop %v3430
        %v3432 = vmul.f32 %v3403, 1.442695
        %v3433 = vpow.pop %v3432
        %v3434 = vmul.f32 %v3404, 1.442695
        %v3435 = vpow.pop %v3434
        %v3436 = vmul.f32 %v3405, 1.442695
        %v3437 = vpow.pop %v3436
        %v3438 = vmul.f32 %v1785, %v3407
        %v3439 = vmul.f32 %v1786, %v3409
        %v3440 = vmul.f32 %v1787, %v3411
        %v3441 = vmul.f32 %v1788, %v3413
        %v3442 = vmul.f32 %v1789, %v3415
        %v3443 = vmul.f32 %v1790, %v3417
        %v3444 = vmul.f32 %v1791, %v3419
        %v3445 = vmul.f32 %v1792, %v3421
        %v3446 = vmul.f32 %v1793, %v3423
        %v3447 = vmul.f32 %v1794, %v3425
        %v3448 = vmul.f32 %v1795, %v3427
        %v3449 = vmul.f32 %v1796, %v3429
        %v3450 = vmul.f32 %v1797, %v3431
        %v3451 = vmul.f32 %v1798, %v3433
        %v3452 = vmul.f32 %v1799, %v3435
        %v3453 = vmul.f32 %v1800, %v3437
        %3470 = vrot.lane.b32.xlu0 %v3343, 123
        %v3471 = vpop.permute.xlu0 %3470
        %3472 = vrot.lane.b32.xlu0 %v3346, 123
        %v3473 = vpop.permute.xlu0 %3472
        %3474 = vrot.lane.b32.xlu0 %v3349, 123
        %v3475 = vpop.permute.xlu0 %3474
        %3476 = vrot.lane.b32.xlu0 %v3352, 123
        %v3477 = vpop.permute.xlu0 %3476
        %3478 = vrot.lane.b32.xlu0 %v3355, 123
        %v3479 = vpop.permute.xlu0 %3478
        %3480 = vrot.lane.b32.xlu0 %v3358, 123
        %v3481 = vpop.permute.xlu0 %3480
        %3482 = vrot.lane.b32.xlu0 %v3361, 123
        %v3483 = vpop.permute.xlu0 %3482
        %3484 = vrot.lane.b32.xlu0 %v3364, 123
        %v3485 = vpop.permute.xlu0 %3484
        %3486 = vrot.lane.b32.xlu0 %v3367, 123
        %v3487 = vpop.permute.xlu0 %3486
        %3488 = vrot.lane.b32.xlu0 %v3370, 123
        %v3489 = vpop.permute.xlu0 %3488
        %3490 = vrot.lane.b32.xlu0 %v3373, 123
        %v3491 = vpop.permute.xlu0 %3490
        %3492 = vrot.lane.b32.xlu0 %v3376, 123
        %v3493 = vpop.permute.xlu0 %3492
        %3494 = vrot.lane.b32.xlu0 %v3379, 123
        %v3495 = vpop.permute.xlu0 %3494
        %3496 = vrot.lane.b32.xlu0 %v3382, 123
        %v3497 = vpop.permute.xlu0 %3496
        %3498 = vrot.lane.b32.xlu0 %v3385, 123
        %v3499 = vpop.permute.xlu0 %3498
        %3500 = vrot.lane.b32.xlu0 %v3388, 123
        %v3501 = vpop.permute.xlu0 %3500
        %v3518 = vadd.f32 %v3438, %v3471
        %v3519 = vadd.f32 %v3439, %v3473
        %v3520 = vadd.f32 %v3440, %v3475
        %v3521 = vadd.f32 %v3441, %v3477
        %v3522 = vadd.f32 %v3442, %v3479
        %v3523 = vadd.f32 %v3443, %v3481
        %v3524 = vadd.f32 %v3444, %v3483
        %v3525 = vadd.f32 %v3445, %v3485
        %v3526 = vadd.f32 %v3446, %v3487
        %v3527 = vadd.f32 %v3447, %v3489
        %v3528 = vadd.f32 %v3448, %v3491
        %v3529 = vadd.f32 %v3449, %v3493
        %v3530 = vadd.f32 %v3450, %v3495
        %v3531 = vadd.f32 %v3451, %v3497
        %v3532 = vadd.f32 %v3452, %v3499
        %v3533 = vadd.f32 %v3453, %v3501
        %v3534 = vsel %vm1802, %v3390, 0.0
        %3535 = vadd.xlane.f32.xlu0 %v3534
        %v3536 = vpop.xlane.xlu0 %3535
        %v3537 = vsel %vm1802, %v3391, 0.0
        %3538 = vadd.xlane.f32.xlu0 %v3537
        %v3539 = vpop.xlane.xlu0 %3538
        %v3540 = vsel %vm1802, %v3392, 0.0
        %3541 = vadd.xlane.f32.xlu0 %v3540
        %v3542 = vpop.xlane.xlu0 %3541
        %v3543 = vsel %vm1802, %v3393, 0.0
        %3544 = vadd.xlane.f32.xlu0 %v3543
        %v3545 = vpop.xlane.xlu0 %3544
        %v3546 = vsel %vm1802, %v3394, 0.0
        %3547 = vadd.xlane.f32.xlu0 %v3546
        %v3548 = vpop.xlane.xlu0 %3547
        %v3549 = vsel %vm1802, %v3395, 0.0
        %3550 = vadd.xlane.f32.xlu0 %v3549
        %v3551 = vpop.xlane.xlu0 %3550
        %v3552 = vsel %vm1802, %v3396, 0.0
        %3553 = vadd.xlane.f32.xlu0 %v3552
        %v3554 = vpop.xlane.xlu0 %3553
        %v3555 = vsel %vm1802, %v3397, 0.0
        %3556 = vadd.xlane.f32.xlu0 %v3555
        %v3557 = vpop.xlane.xlu0 %3556
        %v3558 = vsel %vm1802, %v3398, 0.0
        %3559 = vadd.xlane.f32.xlu0 %v3558
        %v3560 = vpop.xlane.xlu0 %3559
        %v3561 = vsel %vm1802, %v3399, 0.0
        %3562 = vadd.xlane.f32.xlu0 %v3561
        %v3563 = vpop.xlane.xlu0 %3562
        %v3564 = vsel %vm1802, %v3400, 0.0
        %3565 = vadd.xlane.f32.xlu0 %v3564
        %v3566 = vpop.xlane.xlu0 %3565
        %v3567 = vsel %vm1802, %v3401, 0.0
        %3568 = vadd.xlane.f32.xlu0 %v3567
        %v3569 = vpop.xlane.xlu0 %3568
        %v3570 = vsel %vm1802, %v3402, 0.0
        %3571 = vadd.xlane.f32.xlu0 %v3570
        %v3572 = vpop.xlane.xlu0 %3571
        %v3573 = vsel %vm1802, %v3403, 0.0
        %3574 = vadd.xlane.f32.xlu0 %v3573
        %v3575 = vpop.xlane.xlu0 %3574
        %v3576 = vsel %vm1802, %v3404, 0.0
        %3577 = vadd.xlane.f32.xlu0 %v3576
        %v3578 = vpop.xlane.xlu0 %3577
        %v3579 = vsel %vm1802, %v3405, 0.0
        %3580 = vadd.xlane.f32.xlu0 %v3579
        %v3581 = vpop.xlane.xlu0 %3580
        %v3582 = vadd.f32 %v2635, %v3536
        %v3583 = vadd.f32 %v2636, %v3539
        %v3584 = vadd.f32 %v2637, %v3542
        %v3585 = vadd.f32 %v2638, %v3545
        %v3586 = vadd.f32 %v2639, %v3548
        %v3587 = vadd.f32 %v2640, %v3551
        %v3588 = vadd.f32 %v2641, %v3554
        %v3589 = vadd.f32 %v2642, %v3557
        %v3590 = vadd.f32 %v2643, %v3560
        %v3591 = vadd.f32 %v2644, %v3563
        %v3592 = vadd.f32 %v2645, %v3566
        %v3593 = vadd.f32 %v2646, %v3569
        %v3594 = vadd.f32 %v2647, %v3572
        %v3595 = vadd.f32 %v2648, %v3575
        %v3596 = vadd.f32 %v2649, %v3578
        %v3597 = vadd.f32 %v2650, %v3581
        %v3598 = vsel %vm1802, %v3518, %v2571
        %v3599 = vsel %vm1802, %v3519, %v2572
        %v3600 = vsel %vm1802, %v3520, %v2573
        %v3601 = vsel %vm1802, %v3521, %v2574
        %v3602 = vsel %vm1802, %v3522, %v2575
        %v3603 = vsel %vm1802, %v3523, %v2576
        %v3604 = vsel %vm1802, %v3524, %v2577
        %v3605 = vsel %vm1802, %v3525, %v2578
        %v3606 = vsel %vm1802, %v3526, %v2579
        %v3607 = vsel %vm1802, %v3527, %v2580
        %v3608 = vsel %vm1802, %v3528, %v2581
        %v3609 = vsel %vm1802, %v3529, %v2582
        %v3610 = vsel %vm1802, %v3530, %v2583
        %v3611 = vsel %vm1802, %v3531, %v2584
        %v3612 = vsel %vm1802, %v3532, %v2585
        %v3613 = vsel %vm1802, %v3533, %v2586
        %v3614 = vld [vmem:[%s11] sm:$0xff]
        %v3615 = vld [vmem:[%s11 + $0x8] sm:$0x3]
        %v3616 = vld [vmem:[%s12] sm:$0x1]
        %v3618 = vperm.slane %v3616, 0
        %vm3620 = vcmask 80896
        %v3622 = vsel %vm3620, %v3598, 0
        %v3625 = vsel %vm3620, %v3599, 0
        %v3628 = vsel %vm3620, %v3600, 0
        %v3631 = vsel %vm3620, %v3601, 0
        %v3634 = vsel %vm3620, %v3602, 0
        %v3637 = vsel %vm3620, %v3603, 0
        %v3640 = vsel %vm3620, %v3604, 0
        %v3643 = vsel %vm3620, %v3605, 0
        %v3646 = vsel %vm3620, %v3606, 0
        %v3649 = vsel %vm3620, %v3607, 0
        %v3652 = vsel %vm3620, %v3608, 0
        %v3655 = vsel %vm3620, %v3609, 0
        %v3658 = vsel %vm3620, %v3610, 0
        %v3661 = vsel %vm3620, %v3611, 0
        %v3664 = vsel %vm3620, %v3612, 0
        %v3667 = vsel %vm3620, %v3613, 0
        %vm3669 = vcmask 1041408
        %v3671 = vsel %vm3669, %v3615, 0
        %3673 = vmatpush.msra.mxu0 0.0
        %3674 = vmatpush.msra.mxu0 0.0
        %3675 = vmatpush.msra.mxu0 0.0
        %3676 = vmatpush.msra.mxu0 0.0
        %3677 = vmatpush.msra.mxu0 0.0
        %3678 = vmatpush.msra.mxu0 0.0
        %3679 = vmatpush.msra.mxu0 0.0
        %3680 = vmatpush.msra.mxu0 0.0
        %3681 = vmatpush.msra.mxu0 0.0
        %3682 = vmatpush.msra.mxu0 0.0
        %3683 = vmatpush.msra.mxu0 0.0
        %3684 = vmatpush.msra.mxu0 0.0
        %3685 = vmatpush.msra.mxu0 0.0
        %3686 = vmatpush.msra.mxu0 0.0
        %3687 = vmatpush.msra.mxu0 %v3671
        %3688 = vmatpush.msra.mxu0 %v3614
        %3689 = vmatmul.f32.gmra.mxu0 %v3622
        %v3690 = vpop.f32.mrf.mxu0
        %v3691 = vadd.f32 %v3618, %v3690
        %3692 = vmatmul.f32.gmra.mxu0 %v3625
        %v3693 = vpop.f32.mrf.mxu0
        %v3694 = vadd.f32 %v3618, %v3693
        %3695 = vmatmul.f32.gmra.mxu0 %v3628
        %v3696 = vpop.f32.mrf.mxu0
        %v3697 = vadd.f32 %v3618, %v3696
        %3698 = vmatmul.f32.gmra.mxu0 %v3631
        %v3699 = vpop.f32.mrf.mxu0
        %v3700 = vadd.f32 %v3618, %v3699
        %3701 = vmatmul.f32.gmra.mxu0 %v3634
        %v3702 = vpop.f32.mrf.mxu0
        %v3703 = vadd.f32 %v3618, %v3702
        %3704 = vmatmul.f32.gmra.mxu0 %v3637
        %v3705 = vpop.f32.mrf.mxu0
        %v3706 = vadd.f32 %v3618, %v3705
        %3707 = vmatmul.f32.gmra.mxu0 %v3640
        %v3708 = vpop.f32.mrf.mxu0
        %v3709 = vadd.f32 %v3618, %v3708
        %3710 = vmatmul.f32.gmra.mxu0 %v3643
        %v3711 = vpop.f32.mrf.mxu0
        %v3712 = vadd.f32 %v3618, %v3711
        %3713 = vmatmul.f32.gmra.mxu0 %v3646
        %v3714 = vpop.f32.mrf.mxu0
        %v3715 = vadd.f32 %v3618, %v3714
        %3716 = vmatmul.f32.gmra.mxu0 %v3649
        %v3717 = vpop.f32.mrf.mxu0
        %v3718 = vadd.f32 %v3618, %v3717
        %3719 = vmatmul.f32.gmra.mxu0 %v3652
        %v3720 = vpop.f32.mrf.mxu0
        %v3721 = vadd.f32 %v3618, %v3720
        %3722 = vmatmul.f32.gmra.mxu0 %v3655
        %v3723 = vpop.f32.mrf.mxu0
        %v3724 = vadd.f32 %v3618, %v3723
        %3725 = vmatmul.f32.gmra.mxu0 %v3658
        %v3726 = vpop.f32.mrf.mxu0
        %v3727 = vadd.f32 %v3618, %v3726
        %3728 = vmatmul.f32.gmra.mxu0 %v3661
        %v3729 = vpop.f32.mrf.mxu0
        %v3730 = vadd.f32 %v3618, %v3729
        %3731 = vmatmul.f32.gmra.mxu0 %v3664
        %v3732 = vpop.f32.mrf.mxu0
        %v3733 = vadd.f32 %v3618, %v3732
        %3734 = vmatmul.f32.gmra.mxu0 %v3667
        %v3735 = vpop.f32.mrf.mxu0
        %v3736 = vadd.f32 %v3618, %v3735
        %3737 = vdwg.mxu0
        %vm3738 = vcmp.ge.f32.partialorder %v3691, 0.0
        %vm3739 = vcmp.ge.f32.partialorder %v3694, 0.0
        %vm3740 = vcmp.ge.f32.partialorder %v3697, 0.0
        %vm3741 = vcmp.ge.f32.partialorder %v3700, 0.0
        %vm3742 = vcmp.ge.f32.partialorder %v3703, 0.0
        %vm3743 = vcmp.ge.f32.partialorder %v3706, 0.0
        %vm3744 = vcmp.ge.f32.partialorder %v3709, 0.0
        %vm3745 = vcmp.ge.f32.partialorder %v3712, 0.0
        %vm3746 = vcmp.ge.f32.partialorder %v3715, 0.0
        %vm3747 = vcmp.ge.f32.partialorder %v3718, 0.0
        %vm3748 = vcmp.ge.f32.partialorder %v3721, 0.0
        %vm3749 = vcmp.ge.f32.partialorder %v3724, 0.0
        %vm3750 = vcmp.ge.f32.partialorder %v3727, 0.0
        %vm3751 = vcmp.ge.f32.partialorder %v3730, 0.0
        %vm3752 = vcmp.ge.f32.partialorder %v3733, 0.0
        %vm3753 = vcmp.ge.f32.partialorder %v3736, 0.0
        %v3754 = vmul.f32 %v3691, 0.9
        %v3755 = vmul.f32 %v3694, 0.9
        %v3756 = vmul.f32 %v3697, 0.9
        %v3757 = vmul.f32 %v3700, 0.9
        %v3758 = vmul.f32 %v3703, 0.9
        %v3759 = vmul.f32 %v3706, 0.9
        %v3760 = vmul.f32 %v3709, 0.9
        %v3761 = vmul.f32 %v3712, 0.9
        %v3762 = vmul.f32 %v3715, 0.9
        %v3763 = vmul.f32 %v3718, 0.9
        %v3764 = vmul.f32 %v3721, 0.9
        %v3765 = vmul.f32 %v3724, 0.9
        %v3766 = vmul.f32 %v3727, 0.9
        %v3767 = vmul.f32 %v3730, 0.9
        %v3768 = vmul.f32 %v3733, 0.9
        %v3769 = vmul.f32 %v3736, 0.9
        %v3770 = vsel %vm3738, %v3691, %v3754
        %v3771 = vsel %vm3739, %v3694, %v3755
        %v3772 = vsel %vm3740, %v3697, %v3756
        %v3773 = vsel %vm3741, %v3700, %v3757
        %v3774 = vsel %vm3742, %v3703, %v3758
        %v3775 = vsel %vm3743, %v3706, %v3759
        %v3776 = vsel %vm3744, %v3709, %v3760
        %v3777 = vsel %vm3745, %v3712, %v3761
        %v3778 = vsel %vm3746, %v3715, %v3762
        %v3779 = vsel %vm3747, %v3718, %v3763
        %v3780 = vsel %vm3748, %v3721, %v3764
        %v3781 = vsel %vm3749, %v3724, %v3765
        %v3782 = vsel %vm3750, %v3727, %v3766
        %v3783 = vsel %vm3751, %v3730, %v3767
        %v3784 = vsel %vm3752, %v3733, %v3768
        %v3785 = vsel %vm3753, %v3736, %v3769
        %s3786 = scalar_lea.vmem %s7, 16
        %v3787 = vld [vmem:[%s3786] sm:$0x1f]
        %v3789 = vsel %vm1802, %v3770, 0
        %v3792 = vsel %vm1802, %v3771, 0
        %v3795 = vsel %vm1802, %v3772, 0
        %v3798 = vsel %vm1802, %v3773, 0
        %v3801 = vsel %vm1802, %v3774, 0
        %v3804 = vsel %vm1802, %v3775, 0
        %v3807 = vsel %vm1802, %v3776, 0
        %v3810 = vsel %vm1802, %v3777, 0
        %v3813 = vsel %vm1802, %v3778, 0
        %v3816 = vsel %vm1802, %v3779, 0
        %v3819 = vsel %vm1802, %v3780, 0
        %v3822 = vsel %vm1802, %v3781, 0
        %v3825 = vsel %vm1802, %v3782, 0
        %v3828 = vsel %vm1802, %v3783, 0
        %v3831 = vsel %vm1802, %v3784, 0
        %v3834 = vsel %vm1802, %v3785, 0
        %v3837 = vsel %vm1851, %v3787, 0
        %3839 = vmatpush.msra.mxu0 0.0
        %3840 = vmatpush.msra.mxu0 0.0
        %3841 = vmatpush.msra.mxu0 0.0
        %3842 = vmatpush.msra.mxu0 0.0
        %3843 = vmatpush.msra.mxu0 0.0
        %3844 = vmatpush.msra.mxu0 0.0
        %3845 = vmatpush.msra.mxu0 0.0
        %3846 = vmatpush.msra.mxu0 0.0
        %3847 = vmatpush.msra.mxu0 0.0
        %3848 = vmatpush.msra.mxu0 0.0
        %3849 = vmatpush.msra.mxu0 0.0
        %3850 = vmatpush.msra.mxu0 0.0
        %3851 = vmatpush.msra.mxu0 0.0
        %3852 = vmatpush.msra.mxu0 0.0
        %3853 = vmatpush.msra.mxu0 0.0
        %3854 = vmatpush.msra.mxu0 %v3837
        %3855 = vmatmul.f32.gmra.mxu0 %v3789
        %v3856 = vpop.f32.mrf.mxu0
        %v3857 = vadd.f32 %v1514, %v3856
        %3858 = vmatmul.f32.gmra.mxu0 %v3792
        %v3859 = vpop.f32.mrf.mxu0
        %v3860 = vadd.f32 %v1517, %v3859
        %3861 = vmatmul.f32.gmra.mxu0 %v3795
        %v3862 = vpop.f32.mrf.mxu0
        %v3863 = vadd.f32 %v1520, %v3862
        %3864 = vmatmul.f32.gmra.mxu0 %v3798
        %v3865 = vpop.f32.mrf.mxu0
        %v3866 = vadd.f32 %v1523, %v3865
        %3867 = vmatmul.f32.gmra.mxu0 %v3801
        %v3868 = vpop.f32.mrf.mxu0
        %v3869 = vadd.f32 %v1526, %v3868
        %3870 = vmatmul.f32.gmra.mxu0 %v3804
        %v3871 = vpop.f32.mrf.mxu0
        %v3872 = vadd.f32 %v1529, %v3871
        %3873 = vmatmul.f32.gmra.mxu0 %v3807
        %v3874 = vpop.f32.mrf.mxu0
        %v3875 = vadd.f32 %v1532, %v3874
        %3876 = vmatmul.f32.gmra.mxu0 %v3810
        %v3877 = vpop.f32.mrf.mxu0
        %v3878 = vadd.f32 %v1535, %v3877
        %3879 = vmatmul.f32.gmra.mxu0 %v3813
        %v3880 = vpop.f32.mrf.mxu0
        %v3881 = vadd.f32 %v1538, %v3880
        %3882 = vmatmul.f32.gmra.mxu0 %v3816
        %v3883 = vpop.f32.mrf.mxu0
        %v3884 = vadd.f32 %v1541, %v3883
        %3885 = vmatmul.f32.gmra.mxu0 %v3819
        %v3886 = vpop.f32.mrf.mxu0
        %v3887 = vadd.f32 %v1544, %v3886
        %3888 = vmatmul.f32.gmra.mxu0 %v3822
        %v3889 = vpop.f32.mrf.mxu0
        %v3890 = vadd.f32 %v1547, %v3889
        %3891 = vmatmul.f32.gmra.mxu0 %v3825
        %v3892 = vpop.f32.mrf.mxu0
        %v3893 = vadd.f32 %v1550, %v3892
        %3894 = vmatmul.f32.gmra.mxu0 %v3828
        %v3895 = vpop.f32.mrf.mxu0
        %v3896 = vadd.f32 %v1553, %v3895
        %3897 = vmatmul.f32.gmra.mxu0 %v3831
        %v3898 = vpop.f32.mrf.mxu0
        %v3899 = vadd.f32 %v1556, %v3898
        %3900 = vmatmul.f32.gmra.mxu0 %v3834
        %v3901 = vpop.f32.mrf.mxu0
        %v3902 = vadd.f32 %v1559, %v3901
        %3903 = vdwg.mxu0
        %vm3904 = vcmp.ge.f32.partialorder %v3857, 0.0
        %vm3905 = vcmp.ge.f32.partialorder %v3860, 0.0
        %vm3906 = vcmp.ge.f32.partialorder %v3863, 0.0
        %vm3907 = vcmp.ge.f32.partialorder %v3866, 0.0
        %vm3908 = vcmp.ge.f32.partialorder %v3869, 0.0
        %vm3909 = vcmp.ge.f32.partialorder %v3872, 0.0
        %vm3910 = vcmp.ge.f32.partialorder %v3875, 0.0
        %vm3911 = vcmp.ge.f32.partialorder %v3878, 0.0
        %vm3912 = vcmp.ge.f32.partialorder %v3881, 0.0
        %vm3913 = vcmp.ge.f32.partialorder %v3884, 0.0
        %vm3914 = vcmp.ge.f32.partialorder %v3887, 0.0
        %vm3915 = vcmp.ge.f32.partialorder %v3890, 0.0
        %vm3916 = vcmp.ge.f32.partialorder %v3893, 0.0
        %vm3917 = vcmp.ge.f32.partialorder %v3896, 0.0
        %vm3918 = vcmp.ge.f32.partialorder %v3899, 0.0
        %vm3919 = vcmp.ge.f32.partialorder %v3902, 0.0
        %v3920 = vmul.f32 %v3857, 0.01
        %v3921 = vmul.f32 %v3860, 0.01
        %v3922 = vmul.f32 %v3863, 0.01
        %v3923 = vmul.f32 %v3866, 0.01
        %v3924 = vmul.f32 %v3869, 0.01
        %v3925 = vmul.f32 %v3872, 0.01
        %v3926 = vmul.f32 %v3875, 0.01
        %v3927 = vmul.f32 %v3878, 0.01
        %v3928 = vmul.f32 %v3881, 0.01
        %v3929 = vmul.f32 %v3884, 0.01
        %v3930 = vmul.f32 %v3887, 0.01
        %v3931 = vmul.f32 %v3890, 0.01
        %v3932 = vmul.f32 %v3893, 0.01
        %v3933 = vmul.f32 %v3896, 0.01
        %v3934 = vmul.f32 %v3899, 0.01
        %v3935 = vmul.f32 %v3902, 0.01
        %v3936 = vsel %vm3904, %v3857, %v3920
        %v3937 = vsel %vm3905, %v3860, %v3921
        %v3938 = vsel %vm3906, %v3863, %v3922
        %v3939 = vsel %vm3907, %v3866, %v3923
        %v3940 = vsel %vm3908, %v3869, %v3924
        %v3941 = vsel %vm3909, %v3872, %v3925
        %v3942 = vsel %vm3910, %v3875, %v3926
        %v3943 = vsel %vm3911, %v3878, %v3927
        %v3944 = vsel %vm3912, %v3881, %v3928
        %v3945 = vsel %vm3913, %v3884, %v3929
        %v3946 = vsel %vm3914, %v3887, %v3930
        %v3947 = vsel %vm3915, %v3890, %v3931
        %v3948 = vsel %vm3916, %v3893, %v3932
        %v3949 = vsel %vm3917, %v3896, %v3933
        %v3950 = vsel %vm3918, %v3899, %v3934
        %v3951 = vsel %vm3919, %v3902, %v3935
        %s3952 = scalar_lea.vmem %s8, 256
        %v3953 = vld [vmem:[%s3952] sm:$0xff]
        %v3954 = vld [vmem:[%s3952 + $0x8] sm:$0xff]
        %v3955 = vld [vmem:[%s3952 + $0x10] sm:$0xff]
        %v3956 = vld [vmem:[%s3952 + $0x18] sm:$0xff]
        %v3957 = vld [vmem:[%s3952 + $0x20] sm:$0xff]
        %v3958 = vld [vmem:[%s3952 + $0x28] sm:$0xff]
        %v3959 = vld [vmem:[%s3952 + $0x30] sm:$0xff]
        %v3960 = vld [vmem:[%s3952 + $0x38] sm:$0xff]
        %s3961 = scalar_lea.vmem %s9, 6
        %v3962 = vld [vmem:[%s3961] sm:$0x1]
        %v3964 = vperm.slane %v3962, 0
        %v3967 = vsel %vm1980, %v3936, 0
        %v3970 = vsel %vm1980, %v3937, 0
        %v3973 = vsel %vm1980, %v3938, 0
        %v3976 = vsel %vm1980, %v3939, 0
        %v3979 = vsel %vm1980, %v3940, 0
        %v3982 = vsel %vm1980, %v3941, 0
        %v3985 = vsel %vm1980, %v3942, 0
        %v3988 = vsel %vm1980, %v3943, 0
        %v3991 = vsel %vm1980, %v3944, 0
        %v3994 = vsel %vm1980, %v3945, 0
        %v3997 = vsel %vm1980, %v3946, 0
        %v4000 = vsel %vm1980, %v3947, 0
        %v4003 = vsel %vm1980, %v3948, 0
        %v4006 = vsel %vm1980, %v3949, 0
        %v4009 = vsel %vm1980, %v3950, 0
        %v4012 = vsel %vm1980, %v3951, 0
        %4014 = vmatpush.msra.mxu0 0.0
        %4015 = vmatpush.msra.mxu0 0.0
        %4016 = vmatpush.msra.mxu0 0.0
        %4017 = vmatpush.msra.mxu0 0.0
        %4018 = vmatpush.msra.mxu0 0.0
        %4019 = vmatpush.msra.mxu0 0.0
        %4020 = vmatpush.msra.mxu0 0.0
        %4021 = vmatpush.msra.mxu0 0.0
        %4022 = vmatpush.msra.mxu0 %v3960
        %4023 = vmatpush.msra.mxu0 %v3959
        %4024 = vmatpush.msra.mxu0 %v3958
        %4025 = vmatpush.msra.mxu0 %v3957
        %4026 = vmatpush.msra.mxu0 %v3956
        %4027 = vmatpush.msra.mxu0 %v3955
        %4028 = vmatpush.msra.mxu0 %v3954
        %4029 = vmatpush.msra.mxu0 %v3953
        %4030 = vmatmul.f32.gmra.mxu0 %v3967
        %v4031 = vpop.f32.mrf.mxu0
        %v4032 = vadd.f32 %v3964, %v4031
        %4033 = vmatmul.f32.gmra.mxu0 %v3970
        %v4034 = vpop.f32.mrf.mxu0
        %v4035 = vadd.f32 %v3964, %v4034
        %4036 = vmatmul.f32.gmra.mxu0 %v3973
        %v4037 = vpop.f32.mrf.mxu0
        %v4038 = vadd.f32 %v3964, %v4037
        %4039 = vmatmul.f32.gmra.mxu0 %v3976
        %v4040 = vpop.f32.mrf.mxu0
        %v4041 = vadd.f32 %v3964, %v4040
        %4042 = vmatmul.f32.gmra.mxu0 %v3979
        %v4043 = vpop.f32.mrf.mxu0
        %v4044 = vadd.f32 %v3964, %v4043
        %4045 = vmatmul.f32.gmra.mxu0 %v3982
        %v4046 = vpop.f32.mrf.mxu0
        %v4047 = vadd.f32 %v3964, %v4046
        %4048 = vmatmul.f32.gmra.mxu0 %v3985
        %v4049 = vpop.f32.mrf.mxu0
        %v4050 = vadd.f32 %v3964, %v4049
        %4051 = vmatmul.f32.gmra.mxu0 %v3988
        %v4052 = vpop.f32.mrf.mxu0
        %v4053 = vadd.f32 %v3964, %v4052
        %4054 = vmatmul.f32.gmra.mxu0 %v3991
        %v4055 = vpop.f32.mrf.mxu0
        %v4056 = vadd.f32 %v3964, %v4055
        %4057 = vmatmul.f32.gmra.mxu0 %v3994
        %v4058 = vpop.f32.mrf.mxu0
        %v4059 = vadd.f32 %v3964, %v4058
        %4060 = vmatmul.f32.gmra.mxu0 %v3997
        %v4061 = vpop.f32.mrf.mxu0
        %v4062 = vadd.f32 %v3964, %v4061
        %4063 = vmatmul.f32.gmra.mxu0 %v4000
        %v4064 = vpop.f32.mrf.mxu0
        %v4065 = vadd.f32 %v3964, %v4064
        %4066 = vmatmul.f32.gmra.mxu0 %v4003
        %v4067 = vpop.f32.mrf.mxu0
        %v4068 = vadd.f32 %v3964, %v4067
        %4069 = vmatmul.f32.gmra.mxu0 %v4006
        %v4070 = vpop.f32.mrf.mxu0
        %v4071 = vadd.f32 %v3964, %v4070
        %4072 = vmatmul.f32.gmra.mxu0 %v4009
        %v4073 = vpop.f32.mrf.mxu0
        %v4074 = vadd.f32 %v3964, %v4073
        %4075 = vmatmul.f32.gmra.mxu0 %v4012
        %v4076 = vpop.f32.mrf.mxu0
        %v4077 = vadd.f32 %v3964, %v4076
        %4078 = vdwg.mxu0
        %vm4079 = vcmp.ge.f32.partialorder %v4032, 0.0
        %vm4080 = vcmp.ge.f32.partialorder %v4035, 0.0
        %vm4081 = vcmp.ge.f32.partialorder %v4038, 0.0
        %vm4082 = vcmp.ge.f32.partialorder %v4041, 0.0
        %vm4083 = vcmp.ge.f32.partialorder %v4044, 0.0
        %vm4084 = vcmp.ge.f32.partialorder %v4047, 0.0
        %vm4085 = vcmp.ge.f32.partialorder %v4050, 0.0
        %vm4086 = vcmp.ge.f32.partialorder %v4053, 0.0
        %vm4087 = vcmp.ge.f32.partialorder %v4056, 0.0
        %vm4088 = vcmp.ge.f32.partialorder %v4059, 0.0
        %vm4089 = vcmp.ge.f32.partialorder %v4062, 0.0
        %vm4090 = vcmp.ge.f32.partialorder %v4065, 0.0
        %vm4091 = vcmp.ge.f32.partialorder %v4068, 0.0
        %vm4092 = vcmp.ge.f32.partialorder %v4071, 0.0
        %vm4093 = vcmp.ge.f32.partialorder %v4074, 0.0
        %vm4094 = vcmp.ge.f32.partialorder %v4077, 0.0
        %v4095 = vmul.f32 %v4032, 0.01
        %v4096 = vmul.f32 %v4035, 0.01
        %v4097 = vmul.f32 %v4038, 0.01
        %v4098 = vmul.f32 %v4041, 0.01
        %v4099 = vmul.f32 %v4044, 0.01
        %v4100 = vmul.f32 %v4047, 0.01
        %v4101 = vmul.f32 %v4050, 0.01
        %v4102 = vmul.f32 %v4053, 0.01
        %v4103 = vmul.f32 %v4056, 0.01
        %v4104 = vmul.f32 %v4059, 0.01
        %v4105 = vmul.f32 %v4062, 0.01
        %v4106 = vmul.f32 %v4065, 0.01
        %v4107 = vmul.f32 %v4068, 0.01
        %v4108 = vmul.f32 %v4071, 0.01
        %v4109 = vmul.f32 %v4074, 0.01
        %v4110 = vmul.f32 %v4077, 0.01
        %v4111 = vsel %vm4079, %v4032, %v4095
        %v4112 = vsel %vm4080, %v4035, %v4096
        %v4113 = vsel %vm4081, %v4038, %v4097
        %v4114 = vsel %vm4082, %v4041, %v4098
        %v4115 = vsel %vm4083, %v4044, %v4099
        %v4116 = vsel %vm4084, %v4047, %v4100
        %v4117 = vsel %vm4085, %v4050, %v4101
        %v4118 = vsel %vm4086, %v4053, %v4102
        %v4119 = vsel %vm4087, %v4056, %v4103
        %v4120 = vsel %vm4088, %v4059, %v4104
        %v4121 = vsel %vm4089, %v4062, %v4105
        %v4122 = vsel %vm4090, %v4065, %v4106
        %v4123 = vsel %vm4091, %v4068, %v4107
        %v4124 = vsel %vm4092, %v4071, %v4108
        %v4125 = vsel %vm4093, %v4074, %v4109
        %v4126 = vsel %vm4094, %v4077, %v4110
        %s4127 = scalar_lea.vmem %s8, 320
        %v4128 = vld [vmem:[%s4127] sm:$0xff]
        %v4129 = vld [vmem:[%s4127 + $0x8] sm:$0xff]
        %v4130 = vld [vmem:[%s4127 + $0x10] sm:$0xff]
        %v4131 = vld [vmem:[%s4127 + $0x18] sm:$0xff]
        %v4132 = vld [vmem:[%s4127 + $0x20] sm:$0xff]
        %v4133 = vld [vmem:[%s4127 + $0x28] sm:$0xff]
        %v4134 = vld [vmem:[%s4127 + $0x30] sm:$0xff]
        %v4135 = vld [vmem:[%s4127 + $0x38] sm:$0xff]
        %s4136 = scalar_lea.vmem %s9, 7
        %v4137 = vld [vmem:[%s4136] sm:$0x1]
        %v4139 = vperm.slane %v4137, 0
        %v4142 = vsel %vm1980, %v4111, 0
        %v4145 = vsel %vm1980, %v4112, 0
        %v4148 = vsel %vm1980, %v4113, 0
        %v4151 = vsel %vm1980, %v4114, 0
        %v4154 = vsel %vm1980, %v4115, 0
        %v4157 = vsel %vm1980, %v4116, 0
        %v4160 = vsel %vm1980, %v4117, 0
        %v4163 = vsel %vm1980, %v4118, 0
        %v4166 = vsel %vm1980, %v4119, 0
        %v4169 = vsel %vm1980, %v4120, 0
        %v4172 = vsel %vm1980, %v4121, 0
        %v4175 = vsel %vm1980, %v4122, 0
        %v4178 = vsel %vm1980, %v4123, 0
        %v4181 = vsel %vm1980, %v4124, 0
        %v4184 = vsel %vm1980, %v4125, 0
        %v4187 = vsel %vm1980, %v4126, 0
        %4189 = vmatpush.msra.mxu0 0.0
        %4190 = vmatpush.msra.mxu0 0.0
        %4191 = vmatpush.msra.mxu0 0.0
        %4192 = vmatpush.msra.mxu0 0.0
        %4193 = vmatpush.msra.mxu0 0.0
        %4194 = vmatpush.msra.mxu0 0.0
        %4195 = vmatpush.msra.mxu0 0.0
        %4196 = vmatpush.msra.mxu0 0.0
        %4197 = vmatpush.msra.mxu0 %v4135
        %4198 = vmatpush.msra.mxu0 %v4134
        %4199 = vmatpush.msra.mxu0 %v4133
        %4200 = vmatpush.msra.mxu0 %v4132
        %4201 = vmatpush.msra.mxu0 %v4131
        %4202 = vmatpush.msra.mxu0 %v4130
        %4203 = vmatpush.msra.mxu0 %v4129
        %4204 = vmatpush.msra.mxu0 %v4128
        %4205 = vmatmul.f32.gmra.mxu0 %v4142
        %v4206 = vpop.f32.mrf.mxu0
        %v4207 = vadd.f32 %v4139, %v4206
        %4208 = vmatmul.f32.gmra.mxu0 %v4145
        %v4209 = vpop.f32.mrf.mxu0
        %v4210 = vadd.f32 %v4139, %v4209
        %4211 = vmatmul.f32.gmra.mxu0 %v4148
        %v4212 = vpop.f32.mrf.mxu0
        %v4213 = vadd.f32 %v4139, %v4212
        %4214 = vmatmul.f32.gmra.mxu0 %v4151
        %v4215 = vpop.f32.mrf.mxu0
        %v4216 = vadd.f32 %v4139, %v4215
        %4217 = vmatmul.f32.gmra.mxu0 %v4154
        %v4218 = vpop.f32.mrf.mxu0
        %v4219 = vadd.f32 %v4139, %v4218
        %4220 = vmatmul.f32.gmra.mxu0 %v4157
        %v4221 = vpop.f32.mrf.mxu0
        %v4222 = vadd.f32 %v4139, %v4221
        %4223 = vmatmul.f32.gmra.mxu0 %v4160
        %v4224 = vpop.f32.mrf.mxu0
        %v4225 = vadd.f32 %v4139, %v4224
        %4226 = vmatmul.f32.gmra.mxu0 %v4163
        %v4227 = vpop.f32.mrf.mxu0
        %v4228 = vadd.f32 %v4139, %v4227
        %4229 = vmatmul.f32.gmra.mxu0 %v4166
        %v4230 = vpop.f32.mrf.mxu0
        %v4231 = vadd.f32 %v4139, %v4230
        %4232 = vmatmul.f32.gmra.mxu0 %v4169
        %v4233 = vpop.f32.mrf.mxu0
        %v4234 = vadd.f32 %v4139, %v4233
        %4235 = vmatmul.f32.gmra.mxu0 %v4172
        %v4236 = vpop.f32.mrf.mxu0
        %v4237 = vadd.f32 %v4139, %v4236
        %4238 = vmatmul.f32.gmra.mxu0 %v4175
        %v4239 = vpop.f32.mrf.mxu0
        %v4240 = vadd.f32 %v4139, %v4239
        %4241 = vmatmul.f32.gmra.mxu0 %v4178
        %v4242 = vpop.f32.mrf.mxu0
        %v4243 = vadd.f32 %v4139, %v4242
        %4244 = vmatmul.f32.gmra.mxu0 %v4181
        %v4245 = vpop.f32.mrf.mxu0
        %v4246 = vadd.f32 %v4139, %v4245
        %4247 = vmatmul.f32.gmra.mxu0 %v4184
        %v4248 = vpop.f32.mrf.mxu0
        %v4249 = vadd.f32 %v4139, %v4248
        %4250 = vmatmul.f32.gmra.mxu0 %v4187
        %v4251 = vpop.f32.mrf.mxu0
        %v4252 = vadd.f32 %v4139, %v4251
        %4253 = vdwg.mxu0
        %vm4254 = vcmp.ge.f32.partialorder %v4207, 0.0
        %vm4255 = vcmp.ge.f32.partialorder %v4210, 0.0
        %vm4256 = vcmp.ge.f32.partialorder %v4213, 0.0
        %vm4257 = vcmp.ge.f32.partialorder %v4216, 0.0
        %vm4258 = vcmp.ge.f32.partialorder %v4219, 0.0
        %vm4259 = vcmp.ge.f32.partialorder %v4222, 0.0
        %vm4260 = vcmp.ge.f32.partialorder %v4225, 0.0
        %vm4261 = vcmp.ge.f32.partialorder %v4228, 0.0
        %vm4262 = vcmp.ge.f32.partialorder %v4231, 0.0
        %vm4263 = vcmp.ge.f32.partialorder %v4234, 0.0
        %vm4264 = vcmp.ge.f32.partialorder %v4237, 0.0
        %vm4265 = vcmp.ge.f32.partialorder %v4240, 0.0
        %vm4266 = vcmp.ge.f32.partialorder %v4243, 0.0
        %vm4267 = vcmp.ge.f32.partialorder %v4246, 0.0
        %vm4268 = vcmp.ge.f32.partialorder %v4249, 0.0
        %vm4269 = vcmp.ge.f32.partialorder %v4252, 0.0
        %v4270 = vmul.f32 %v4207, 0.01
        %v4271 = vmul.f32 %v4210, 0.01
        %v4272 = vmul.f32 %v4213, 0.01
        %v4273 = vmul.f32 %v4216, 0.01
        %v4274 = vmul.f32 %v4219, 0.01
        %v4275 = vmul.f32 %v4222, 0.01
        %v4276 = vmul.f32 %v4225, 0.01
        %v4277 = vmul.f32 %v4228, 0.01
        %v4278 = vmul.f32 %v4231, 0.01
        %v4279 = vmul.f32 %v4234, 0.01
        %v4280 = vmul.f32 %v4237, 0.01
        %v4281 = vmul.f32 %v4240, 0.01
        %v4282 = vmul.f32 %v4243, 0.01
        %v4283 = vmul.f32 %v4246, 0.01
        %v4284 = vmul.f32 %v4249, 0.01
        %v4285 = vmul.f32 %v4252, 0.01
        %v4286 = vsel %vm4254, %v4207, %v4270
        %v4287 = vsel %vm4255, %v4210, %v4271
        %v4288 = vsel %vm4256, %v4213, %v4272
        %v4289 = vsel %vm4257, %v4216, %v4273
        %v4290 = vsel %vm4258, %v4219, %v4274
        %v4291 = vsel %vm4259, %v4222, %v4275
        %v4292 = vsel %vm4260, %v4225, %v4276
        %v4293 = vsel %vm4261, %v4228, %v4277
        %v4294 = vsel %vm4262, %v4231, %v4278
        %v4295 = vsel %vm4263, %v4234, %v4279
        %v4296 = vsel %vm4264, %v4237, %v4280
        %v4297 = vsel %vm4265, %v4240, %v4281
        %v4298 = vsel %vm4266, %v4243, %v4282
        %v4299 = vsel %vm4267, %v4246, %v4283
        %v4300 = vsel %vm4268, %v4249, %v4284
        %v4301 = vsel %vm4269, %v4252, %v4285
        %s4302 = scalar_lea.vmem [#allocation5], 128
        %v4303 = vld [vmem:[%s4302] sm:$0xff]
        %v4304 = vld [vmem:[%s4302 + $0x8] sm:$0xff]
        %v4305 = vld [vmem:[%s4302 + $0x10] sm:$0xff]
        %v4306 = vld [vmem:[%s4302 + $0x18] sm:$0xff]
        %v4307 = vld [vmem:[%s4302 + $0x20] sm:$0xff]
        %v4308 = vld [vmem:[%s4302 + $0x28] sm:$0xff]
        %v4309 = vld [vmem:[%s4302 + $0x30] sm:$0xff]
        %v4310 = vld [vmem:[%s4302 + $0x38] sm:$0xff]
        %s4311 = scalar_lea.vmem %s9, 8
        %v4312 = vld [vmem:[%s4311] sm:$0x1]
        %v4314 = vperm.slane %v4312, 0
        %v4317 = vsel %vm1980, %v4286, 0
        %v4320 = vsel %vm1980, %v4287, 0
        %v4323 = vsel %vm1980, %v4288, 0
        %v4326 = vsel %vm1980, %v4289, 0
        %v4329 = vsel %vm1980, %v4290, 0
        %v4332 = vsel %vm1980, %v4291, 0
        %v4335 = vsel %vm1980, %v4292, 0
        %v4338 = vsel %vm1980, %v4293, 0
        %v4341 = vsel %vm1980, %v4294, 0
        %v4344 = vsel %vm1980, %v4295, 0
        %v4347 = vsel %vm1980, %v4296, 0
        %v4350 = vsel %vm1980, %v4297, 0
        %v4353 = vsel %vm1980, %v4298, 0
        %v4356 = vsel %vm1980, %v4299, 0
        %v4359 = vsel %vm1980, %v4300, 0
        %v4362 = vsel %vm1980, %v4301, 0
        %4364 = vmatpush.msra.mxu0 0.0
        %4365 = vmatpush.msra.mxu0 0.0
        %4366 = vmatpush.msra.mxu0 0.0
        %4367 = vmatpush.msra.mxu0 0.0
        %4368 = vmatpush.msra.mxu0 0.0
        %4369 = vmatpush.msra.mxu0 0.0
        %4370 = vmatpush.msra.mxu0 0.0
        %4371 = vmatpush.msra.mxu0 0.0
        %4372 = vmatpush.msra.mxu0 %v4310
        %4373 = vmatpush.msra.mxu0 %v4309
        %4374 = vmatpush.msra.mxu0 %v4308
        %4375 = vmatpush.msra.mxu0 %v4307
        %4376 = vmatpush.msra.mxu0 %v4306
        %4377 = vmatpush.msra.mxu0 %v4305
        %4378 = vmatpush.msra.mxu0 %v4304
        %4379 = vmatpush.msra.mxu0 %v4303
        %4380 = vmatmul.f32.gmra.mxu0 %v4317
        %v4381 = vpop.f32.mrf.mxu0
        %v4382 = vadd.f32 %v4314, %v4381
        %4383 = vmatmul.f32.gmra.mxu0 %v4320
        %v4384 = vpop.f32.mrf.mxu0
        %v4385 = vadd.f32 %v4314, %v4384
        %4386 = vmatmul.f32.gmra.mxu0 %v4323
        %v4387 = vpop.f32.mrf.mxu0
        %v4388 = vadd.f32 %v4314, %v4387
        %4389 = vmatmul.f32.gmra.mxu0 %v4326
        %v4390 = vpop.f32.mrf.mxu0
        %v4391 = vadd.f32 %v4314, %v4390
        %4392 = vmatmul.f32.gmra.mxu0 %v4329
        %v4393 = vpop.f32.mrf.mxu0
        %v4394 = vadd.f32 %v4314, %v4393
        %4395 = vmatmul.f32.gmra.mxu0 %v4332
        %v4396 = vpop.f32.mrf.mxu0
        %v4397 = vadd.f32 %v4314, %v4396
        %4398 = vmatmul.f32.gmra.mxu0 %v4335
        %v4399 = vpop.f32.mrf.mxu0
        %v4400 = vadd.f32 %v4314, %v4399
        %4401 = vmatmul.f32.gmra.mxu0 %v4338
        %v4402 = vpop.f32.mrf.mxu0
        %v4403 = vadd.f32 %v4314, %v4402
        %4404 = vmatmul.f32.gmra.mxu0 %v4341
        %v4405 = vpop.f32.mrf.mxu0
        %v4406 = vadd.f32 %v4314, %v4405
        %4407 = vmatmul.f32.gmra.mxu0 %v4344
        %v4408 = vpop.f32.mrf.mxu0
        %v4409 = vadd.f32 %v4314, %v4408
        %4410 = vmatmul.f32.gmra.mxu0 %v4347
        %v4411 = vpop.f32.mrf.mxu0
        %v4412 = vadd.f32 %v4314, %v4411
        %4413 = vmatmul.f32.gmra.mxu0 %v4350
        %v4414 = vpop.f32.mrf.mxu0
        %v4415 = vadd.f32 %v4314, %v4414
        %4416 = vmatmul.f32.gmra.mxu0 %v4353
        %v4417 = vpop.f32.mrf.mxu0
        %v4418 = vadd.f32 %v4314, %v4417
        %4419 = vmatmul.f32.gmra.mxu0 %v4356
        %v4420 = vpop.f32.mrf.mxu0
        %v4421 = vadd.f32 %v4314, %v4420
        %4422 = vmatmul.f32.gmra.mxu0 %v4359
        %v4423 = vpop.f32.mrf.mxu0
        %v4424 = vadd.f32 %v4314, %v4423
        %4425 = vmatmul.f32.gmra.mxu0 %v4362
        %v4426 = vpop.f32.mrf.mxu0
        %v4427 = vadd.f32 %v4314, %v4426
        %4428 = vdwg.mxu0
        %v4429 = vtanh.pop %v4382
        %v4430 = vtanh.pop %v4385
        %v4431 = vtanh.pop %v4388
        %v4432 = vtanh.pop %v4391
        %v4433 = vtanh.pop %v4394
        %v4434 = vtanh.pop %v4397
        %v4435 = vtanh.pop %v4400
        %v4436 = vtanh.pop %v4403
        %v4437 = vtanh.pop %v4406
        %v4438 = vtanh.pop %v4409
        %v4439 = vtanh.pop %v4412
        %v4440 = vtanh.pop %v4415
        %v4441 = vtanh.pop %v4418
        %v4442 = vtanh.pop %v4421
        %v4443 = vtanh.pop %v4424
        %v4444 = vtanh.pop %v4427
        %v4445 = vmul.f32 %v4429, 1.442695
        %v4446 = vpow.pop %v4445
        %v4447 = vmul.f32 %v4430, 1.442695
        %v4448 = vpow.pop %v4447
        %v4449 = vmul.f32 %v4431, 1.442695
        %v4450 = vpow.pop %v4449
        %v4451 = vmul.f32 %v4432, 1.442695
        %v4452 = vpow.pop %v4451
        %v4453 = vmul.f32 %v4433, 1.442695
        %v4454 = vpow.pop %v4453
        %v4455 = vmul.f32 %v4434, 1.442695
        %v4456 = vpow.pop %v4455
        %v4457 = vmul.f32 %v4435, 1.442695
        %v4458 = vpow.pop %v4457
        %v4459 = vmul.f32 %v4436, 1.442695
        %v4460 = vpow.pop %v4459
        %v4461 = vmul.f32 %v4437, 1.442695
        %v4462 = vpow.pop %v4461
        %v4463 = vmul.f32 %v4438, 1.442695
        %v4464 = vpow.pop %v4463
        %v4465 = vmul.f32 %v4439, 1.442695
        %v4466 = vpow.pop %v4465
        %v4467 = vmul.f32 %v4440, 1.442695
        %v4468 = vpow.pop %v4467
        %v4469 = vmul.f32 %v4441, 1.442695
        %v4470 = vpow.pop %v4469
        %v4471 = vmul.f32 %v4442, 1.442695
        %v4472 = vpow.pop %v4471
        %v4473 = vmul.f32 %v4443, 1.442695
        %v4474 = vpow.pop %v4473
        %v4475 = vmul.f32 %v4444, 1.442695
        %v4476 = vpow.pop %v4475
        %4493 = vrot.lane.b32.xlu0 %v4446, 5
        %v4494 = vpop.permute.xlu0 %4493
        %4495 = vrot.lane.b32.xlu0 %v4448, 5
        %v4496 = vpop.permute.xlu0 %4495
        %4497 = vrot.lane.b32.xlu0 %v4450, 5
        %v4498 = vpop.permute.xlu0 %4497
        %4499 = vrot.lane.b32.xlu0 %v4452, 5
        %v4500 = vpop.permute.xlu0 %4499
        %4501 = vrot.lane.b32.xlu0 %v4454, 5
        %v4502 = vpop.permute.xlu0 %4501
        %4503 = vrot.lane.b32.xlu0 %v4456, 5
        %v4504 = vpop.permute.xlu0 %4503
        %4505 = vrot.lane.b32.xlu0 %v4458, 5
        %v4506 = vpop.permute.xlu0 %4505
        %4507 = vrot.lane.b32.xlu0 %v4460, 5
        %v4508 = vpop.permute.xlu0 %4507
        %4509 = vrot.lane.b32.xlu0 %v4462, 5
        %v4510 = vpop.permute.xlu0 %4509
        %4511 = vrot.lane.b32.xlu0 %v4464, 5
        %v4512 = vpop.permute.xlu0 %4511
        %4513 = vrot.lane.b32.xlu0 %v4466, 5
        %v4514 = vpop.permute.xlu0 %4513
        %4515 = vrot.lane.b32.xlu0 %v4468, 5
        %v4516 = vpop.permute.xlu0 %4515
        %4517 = vrot.lane.b32.xlu0 %v4470, 5
        %v4518 = vpop.permute.xlu0 %4517
        %4519 = vrot.lane.b32.xlu0 %v4472, 5
        %v4520 = vpop.permute.xlu0 %4519
        %4521 = vrot.lane.b32.xlu0 %v4474, 5
        %v4522 = vpop.permute.xlu0 %4521
        %4523 = vrot.lane.b32.xlu0 %v4476, 5
        %v4524 = vpop.permute.xlu0 %4523
        %v4541 = vmul.f32 %v3770, %v4494
        %v4542 = vmul.f32 %v3771, %v4496
        %v4543 = vmul.f32 %v3772, %v4498
        %v4544 = vmul.f32 %v3773, %v4500
        %v4545 = vmul.f32 %v3774, %v4502
        %v4546 = vmul.f32 %v3775, %v4504
        %v4547 = vmul.f32 %v3776, %v4506
        %v4548 = vmul.f32 %v3777, %v4508
        %v4549 = vmul.f32 %v3778, %v4510
        %v4550 = vmul.f32 %v3779, %v4512
        %v4551 = vmul.f32 %v3780, %v4514
        %v4552 = vmul.f32 %v3781, %v4516
        %v4553 = vmul.f32 %v3782, %v4518
        %v4554 = vmul.f32 %v3783, %v4520
        %v4555 = vmul.f32 %v3784, %v4522
        %v4556 = vmul.f32 %v3785, %v4524
        %v4557 = vadd.f32 %v4541, %v4382
        %v4558 = vadd.f32 %v4542, %v4385
        %v4559 = vadd.f32 %v4543, %v4388
        %v4560 = vadd.f32 %v4544, %v4391
        %v4561 = vadd.f32 %v4545, %v4394
        %v4562 = vadd.f32 %v4546, %v4397
        %v4563 = vadd.f32 %v4547, %v4400
        %v4564 = vadd.f32 %v4548, %v4403
        %v4565 = vadd.f32 %v4549, %v4406
        %v4566 = vadd.f32 %v4550, %v4409
        %v4567 = vadd.f32 %v4551, %v4412
        %v4568 = vadd.f32 %v4552, %v4415
        %v4569 = vadd.f32 %v4553, %v4418
        %v4570 = vadd.f32 %v4554, %v4421
        %v4571 = vadd.f32 %v4555, %v4424
        %v4572 = vadd.f32 %v4556, %v4427
        %v4573 = vsel %vm1802, %v4429, 0.0
        %4574 = vadd.xlane.f32.xlu0 %v4573
        %v4575 = vpop.xlane.xlu0 %4574
        %v4576 = vsel %vm1802, %v4430, 0.0
        %4577 = vadd.xlane.f32.xlu0 %v4576
        %v4578 = vpop.xlane.xlu0 %4577
        %v4579 = vsel %vm1802, %v4431, 0.0
        %4580 = vadd.xlane.f32.xlu0 %v4579
        %v4581 = vpop.xlane.xlu0 %4580
        %v4582 = vsel %vm1802, %v4432, 0.0
        %4583 = vadd.xlane.f32.xlu0 %v4582
        %v4584 = vpop.xlane.xlu0 %4583
        %v4585 = vsel %vm1802, %v4433, 0.0
        %4586 = vadd.xlane.f32.xlu0 %v4585
        %v4587 = vpop.xlane.xlu0 %4586
        %v4588 = vsel %vm1802, %v4434, 0.0
        %4589 = vadd.xlane.f32.xlu0 %v4588
        %v4590 = vpop.xlane.xlu0 %4589
        %v4591 = vsel %vm1802, %v4435, 0.0
        %4592 = vadd.xlane.f32.xlu0 %v4591
        %v4593 = vpop.xlane.xlu0 %4592
        %v4594 = vsel %vm1802, %v4436, 0.0
        %4595 = vadd.xlane.f32.xlu0 %v4594
        %v4596 = vpop.xlane.xlu0 %4595
        %v4597 = vsel %vm1802, %v4437, 0.0
        %4598 = vadd.xlane.f32.xlu0 %v4597
        %v4599 = vpop.xlane.xlu0 %4598
        %v4600 = vsel %vm1802, %v4438, 0.0
        %4601 = vadd.xlane.f32.xlu0 %v4600
        %v4602 = vpop.xlane.xlu0 %4601
        %v4603 = vsel %vm1802, %v4439, 0.0
        %4604 = vadd.xlane.f32.xlu0 %v4603
        %v4605 = vpop.xlane.xlu0 %4604
        %v4606 = vsel %vm1802, %v4440, 0.0
        %4607 = vadd.xlane.f32.xlu0 %v4606
        %v4608 = vpop.xlane.xlu0 %4607
        %v4609 = vsel %vm1802, %v4441, 0.0
        %4610 = vadd.xlane.f32.xlu0 %v4609
        %v4611 = vpop.xlane.xlu0 %4610
        %v4612 = vsel %vm1802, %v4442, 0.0
        %4613 = vadd.xlane.f32.xlu0 %v4612
        %v4614 = vpop.xlane.xlu0 %4613
        %v4615 = vsel %vm1802, %v4443, 0.0
        %4616 = vadd.xlane.f32.xlu0 %v4615
        %v4617 = vpop.xlane.xlu0 %4616
        %v4618 = vsel %vm1802, %v4444, 0.0
        %4619 = vadd.xlane.f32.xlu0 %v4618
        %v4620 = vpop.xlane.xlu0 %4619
        %v4621 = vadd.f32 %v3582, %v4575
        %v4622 = vadd.f32 %v3583, %v4578
        %v4623 = vadd.f32 %v3584, %v4581
        %v4624 = vadd.f32 %v3585, %v4584
        %v4625 = vadd.f32 %v3586, %v4587
        %v4626 = vadd.f32 %v3587, %v4590
        %v4627 = vadd.f32 %v3588, %v4593
        %v4628 = vadd.f32 %v3589, %v4596
        %v4629 = vadd.f32 %v3590, %v4599
        %v4630 = vadd.f32 %v3591, %v4602
        %v4631 = vadd.f32 %v3592, %v4605
        %v4632 = vadd.f32 %v3593, %v4608
        %v4633 = vadd.f32 %v3594, %v4611
        %v4634 = vadd.f32 %v3595, %v4614
        %v4635 = vadd.f32 %v3596, %v4617
        %v4636 = vadd.f32 %v3597, %v4620
        %s4637 = scalar_lea.vmem %s7, 24
        %v4638 = vld [vmem:[%s4637] sm:$0x1f]
        %4655 = vrot.lane.b32.xlu0 %v4557, 123
        %v4656 = vpop.permute.xlu0 %4655
        %4657 = vrot.lane.b32.xlu0 %v4558, 123
        %v4658 = vpop.permute.xlu0 %4657
        %4659 = vrot.lane.b32.xlu0 %v4559, 123
        %v4660 = vpop.permute.xlu0 %4659
        %4661 = vrot.lane.b32.xlu0 %v4560, 123
        %v4662 = vpop.permute.xlu0 %4661
        %4663 = vrot.lane.b32.xlu0 %v4561, 123
        %v4664 = vpop.permute.xlu0 %4663
        %4665 = vrot.lane.b32.xlu0 %v4562, 123
        %v4666 = vpop.permute.xlu0 %4665
        %4667 = vrot.lane.b32.xlu0 %v4563, 123
        %v4668 = vpop.permute.xlu0 %4667
        %4669 = vrot.lane.b32.xlu0 %v4564, 123
        %v4670 = vpop.permute.xlu0 %4669
        %4671 = vrot.lane.b32.xlu0 %v4565, 123
        %v4672 = vpop.permute.xlu0 %4671
        %4673 = vrot.lane.b32.xlu0 %v4566, 123
        %v4674 = vpop.permute.xlu0 %4673
        %4675 = vrot.lane.b32.xlu0 %v4567, 123
        %v4676 = vpop.permute.xlu0 %4675
        %4677 = vrot.lane.b32.xlu0 %v4568, 123
        %v4678 = vpop.permute.xlu0 %4677
        %4679 = vrot.lane.b32.xlu0 %v4569, 123
        %v4680 = vpop.permute.xlu0 %4679
        %4681 = vrot.lane.b32.xlu0 %v4570, 123
        %v4682 = vpop.permute.xlu0 %4681
        %4683 = vrot.lane.b32.xlu0 %v4571, 123
        %v4684 = vpop.permute.xlu0 %4683
        %4685 = vrot.lane.b32.xlu0 %v4572, 123
        %v4686 = vpop.permute.xlu0 %4685
        %4703 = vrot.lane.b32.xlu0 %v1514, 64
        %v4704 = vpop.permute.xlu0 %4703
        %4705 = vrot.lane.b32.xlu0 %v1517, 64
        %v4706 = vpop.permute.xlu0 %4705
        %4707 = vrot.lane.b32.xlu0 %v1520, 64
        %v4708 = vpop.permute.xlu0 %4707
        %4709 = vrot.lane.b32.xlu0 %v1523, 64
        %v4710 = vpop.permute.xlu0 %4709
        %4711 = vrot.lane.b32.xlu0 %v1526, 64
        %v4712 = vpop.permute.xlu0 %4711
        %4713 = vrot.lane.b32.xlu0 %v1529, 64
        %v4714 = vpop.permute.xlu0 %4713
        %4715 = vrot.lane.b32.xlu0 %v1532, 64
        %v4716 = vpop.permute.xlu0 %4715
        %4717 = vrot.lane.b32.xlu0 %v1535, 64
        %v4718 = vpop.permute.xlu0 %4717
        %4719 = vrot.lane.b32.xlu0 %v1538, 64
        %v4720 = vpop.permute.xlu0 %4719
        %4721 = vrot.lane.b32.xlu0 %v1541, 64
        %v4722 = vpop.permute.xlu0 %4721
        %4723 = vrot.lane.b32.xlu0 %v1544, 64
        %v4724 = vpop.permute.xlu0 %4723
        %4725 = vrot.lane.b32.xlu0 %v1547, 64
        %v4726 = vpop.permute.xlu0 %4725
        %4727 = vrot.lane.b32.xlu0 %v1550, 64
        %v4728 = vpop.permute.xlu0 %4727
        %4729 = vrot.lane.b32.xlu0 %v1553, 64
        %v4730 = vpop.permute.xlu0 %4729
        %4731 = vrot.lane.b32.xlu0 %v1556, 64
        %v4732 = vpop.permute.xlu0 %4731
        %4733 = vrot.lane.b32.xlu0 %v1559, 64
        %v4734 = vpop.permute.xlu0 %4733
        %v4751 = vsel %vm1802, %v4656, 0
        %v4753 = vsel %vm1802, %v4658, 0
        %v4755 = vsel %vm1802, %v4660, 0
        %v4757 = vsel %vm1802, %v4662, 0
        %v4759 = vsel %vm1802, %v4664, 0
        %v4761 = vsel %vm1802, %v4666, 0
        %v4763 = vsel %vm1802, %v4668, 0
        %v4765 = vsel %vm1802, %v4670, 0
        %v4767 = vsel %vm1802, %v4672, 0
        %v4769 = vsel %vm1802, %v4674, 0
        %v4771 = vsel %vm1802, %v4676, 0
        %v4773 = vsel %vm1802, %v4678, 0
        %v4775 = vsel %vm1802, %v4680, 0
        %v4777 = vsel %vm1802, %v4682, 0
        %v4779 = vsel %vm1802, %v4684, 0
        %v4781 = vsel %vm1802, %v4686, 0
        %v4784 = vsel %vm1851, %v4638, 0
        %4786 = vmatpush.msra.mxu0 0.0
        %4787 = vmatpush.msra.mxu0 0.0
        %4788 = vmatpush.msra.mxu0 0.0
        %4789 = vmatpush.msra.mxu0 0.0
        %4790 = vmatpush.msra.mxu0 0.0
        %4791 = vmatpush.msra.mxu0 0.0
        %4792 = vmatpush.msra.mxu0 0.0
        %4793 = vmatpush.msra.mxu0 0.0
        %4794 = vmatpush.msra.mxu0 0.0
        %4795 = vmatpush.msra.mxu0 0.0
        %4796 = vmatpush.msra.mxu0 0.0
        %4797 = vmatpush.msra.mxu0 0.0
        %4798 = vmatpush.msra.mxu0 0.0
        %4799 = vmatpush.msra.mxu0 0.0
        %4800 = vmatpush.msra.mxu0 0.0
        %4801 = vmatpush.msra.mxu0 %v4784
        %4802 = vmatmul.f32.gmra.mxu0 %v4751
        %v4803 = vpop.f32.mrf.mxu0
        %v4804 = vadd.f32 %v4704, %v4803
        %4805 = vmatmul.f32.gmra.mxu0 %v4753
        %v4806 = vpop.f32.mrf.mxu0
        %v4807 = vadd.f32 %v4706, %v4806
        %4808 = vmatmul.f32.gmra.mxu0 %v4755
        %v4809 = vpop.f32.mrf.mxu0
        %v4810 = vadd.f32 %v4708, %v4809
        %4811 = vmatmul.f32.gmra.mxu0 %v4757
        %v4812 = vpop.f32.mrf.mxu0
        %v4813 = vadd.f32 %v4710, %v4812
        %4814 = vmatmul.f32.gmra.mxu0 %v4759
        %v4815 = vpop.f32.mrf.mxu0
        %v4816 = vadd.f32 %v4712, %v4815
        %4817 = vmatmul.f32.gmra.mxu0 %v4761
        %v4818 = vpop.f32.mrf.mxu0
        %v4819 = vadd.f32 %v4714, %v4818
        %4820 = vmatmul.f32.gmra.mxu0 %v4763
        %v4821 = vpop.f32.mrf.mxu0
        %v4822 = vadd.f32 %v4716, %v4821
        %4823 = vmatmul.f32.gmra.mxu0 %v4765
        %v4824 = vpop.f32.mrf.mxu0
        %v4825 = vadd.f32 %v4718, %v4824
        %4826 = vmatmul.f32.gmra.mxu0 %v4767
        %v4827 = vpop.f32.mrf.mxu0
        %v4828 = vadd.f32 %v4720, %v4827
        %4829 = vmatmul.f32.gmra.mxu0 %v4769
        %v4830 = vpop.f32.mrf.mxu0
        %v4831 = vadd.f32 %v4722, %v4830
        %4832 = vmatmul.f32.gmra.mxu0 %v4771
        %v4833 = vpop.f32.mrf.mxu0
        %v4834 = vadd.f32 %v4724, %v4833
        %4835 = vmatmul.f32.gmra.mxu0 %v4773
        %v4836 = vpop.f32.mrf.mxu0
        %v4837 = vadd.f32 %v4726, %v4836
        %4838 = vmatmul.f32.gmra.mxu0 %v4775
        %v4839 = vpop.f32.mrf.mxu0
        %v4840 = vadd.f32 %v4728, %v4839
        %4841 = vmatmul.f32.gmra.mxu0 %v4777
        %v4842 = vpop.f32.mrf.mxu0
        %v4843 = vadd.f32 %v4730, %v4842
        %4844 = vmatmul.f32.gmra.mxu0 %v4779
        %v4845 = vpop.f32.mrf.mxu0
        %v4846 = vadd.f32 %v4732, %v4845
        %4847 = vmatmul.f32.gmra.mxu0 %v4781
        %v4848 = vpop.f32.mrf.mxu0
        %v4849 = vadd.f32 %v4734, %v4848
        %4850 = vdwg.mxu0
        %vm4851 = vcmp.ge.f32.partialorder %v4804, 0.0
        %vm4852 = vcmp.ge.f32.partialorder %v4807, 0.0
        %vm4853 = vcmp.ge.f32.partialorder %v4810, 0.0
        %vm4854 = vcmp.ge.f32.partialorder %v4813, 0.0
        %vm4855 = vcmp.ge.f32.partialorder %v4816, 0.0
        %vm4856 = vcmp.ge.f32.partialorder %v4819, 0.0
        %vm4857 = vcmp.ge.f32.partialorder %v4822, 0.0
        %vm4858 = vcmp.ge.f32.partialorder %v4825, 0.0
        %vm4859 = vcmp.ge.f32.partialorder %v4828, 0.0
        %vm4860 = vcmp.ge.f32.partialorder %v4831, 0.0
        %vm4861 = vcmp.ge.f32.partialorder %v4834, 0.0
        %vm4862 = vcmp.ge.f32.partialorder %v4837, 0.0
        %vm4863 = vcmp.ge.f32.partialorder %v4840, 0.0
        %vm4864 = vcmp.ge.f32.partialorder %v4843, 0.0
        %vm4865 = vcmp.ge.f32.partialorder %v4846, 0.0
        %vm4866 = vcmp.ge.f32.partialorder %v4849, 0.0
        %v4867 = vmul.f32 %v4804, 0.01
        %v4868 = vmul.f32 %v4807, 0.01
        %v4869 = vmul.f32 %v4810, 0.01
        %v4870 = vmul.f32 %v4813, 0.01
        %v4871 = vmul.f32 %v4816, 0.01
        %v4872 = vmul.f32 %v4819, 0.01
        %v4873 = vmul.f32 %v4822, 0.01
        %v4874 = vmul.f32 %v4825, 0.01
        %v4875 = vmul.f32 %v4828, 0.01
        %v4876 = vmul.f32 %v4831, 0.01
        %v4877 = vmul.f32 %v4834, 0.01
        %v4878 = vmul.f32 %v4837, 0.01
        %v4879 = vmul.f32 %v4840, 0.01
        %v4880 = vmul.f32 %v4843, 0.01
        %v4881 = vmul.f32 %v4846, 0.01
        %v4882 = vmul.f32 %v4849, 0.01
        %v4883 = vsel %vm4851, %v4804, %v4867
        %v4884 = vsel %vm4852, %v4807, %v4868
        %v4885 = vsel %vm4853, %v4810, %v4869
        %v4886 = vsel %vm4854, %v4813, %v4870
        %v4887 = vsel %vm4855, %v4816, %v4871
        %v4888 = vsel %vm4856, %v4819, %v4872
        %v4889 = vsel %vm4857, %v4822, %v4873
        %v4890 = vsel %vm4858, %v4825, %v4874
        %v4891 = vsel %vm4859, %v4828, %v4875
        %v4892 = vsel %vm4860, %v4831, %v4876
        %v4893 = vsel %vm4861, %v4834, %v4877
        %v4894 = vsel %vm4862, %v4837, %v4878
        %v4895 = vsel %vm4863, %v4840, %v4879
        %v4896 = vsel %vm4864, %v4843, %v4880
        %v4897 = vsel %vm4865, %v4846, %v4881
        %v4898 = vsel %vm4866, %v4849, %v4882
        %s4899 = scalar_lea.vmem %s8, 384
        %v4900 = vld [vmem:[%s4899] sm:$0xff]
        %v4901 = vld [vmem:[%s4899 + $0x8] sm:$0xff]
        %v4902 = vld [vmem:[%s4899 + $0x10] sm:$0xff]
        %v4903 = vld [vmem:[%s4899 + $0x18] sm:$0xff]
        %v4904 = vld [vmem:[%s4899 + $0x20] sm:$0xff]
        %v4905 = vld [vmem:[%s4899 + $0x28] sm:$0xff]
        %v4906 = vld [vmem:[%s4899 + $0x30] sm:$0xff]
        %v4907 = vld [vmem:[%s4899 + $0x38] sm:$0xff]
        %s4908 = scalar_lea.vmem %s9, 9
        %v4909 = vld [vmem:[%s4908] sm:$0x1]
        %v4911 = vperm.slane %v4909, 0
        %v4914 = vsel %vm1980, %v4883, 0
        %v4917 = vsel %vm1980, %v4884, 0
        %v4920 = vsel %vm1980, %v4885, 0
        %v4923 = vsel %vm1980, %v4886, 0
        %v4926 = vsel %vm1980, %v4887, 0
        %v4929 = vsel %vm1980, %v4888, 0
        %v4932 = vsel %vm1980, %v4889, 0
        %v4935 = vsel %vm1980, %v4890, 0
        %v4938 = vsel %vm1980, %v4891, 0
        %v4941 = vsel %vm1980, %v4892, 0
        %v4944 = vsel %vm1980, %v4893, 0
        %v4947 = vsel %vm1980, %v4894, 0
        %v4950 = vsel %vm1980, %v4895, 0
        %v4953 = vsel %vm1980, %v4896, 0
        %v4956 = vsel %vm1980, %v4897, 0
        %v4959 = vsel %vm1980, %v4898, 0
        %4961 = vmatpush.msra.mxu0 0.0
        %4962 = vmatpush.msra.mxu0 0.0
        %4963 = vmatpush.msra.mxu0 0.0
        %4964 = vmatpush.msra.mxu0 0.0
        %4965 = vmatpush.msra.mxu0 0.0
        %4966 = vmatpush.msra.mxu0 0.0
        %4967 = vmatpush.msra.mxu0 0.0
        %4968 = vmatpush.msra.mxu0 0.0
        %4969 = vmatpush.msra.mxu0 %v4907
        %4970 = vmatpush.msra.mxu0 %v4906
        %4971 = vmatpush.msra.mxu0 %v4905
        %4972 = vmatpush.msra.mxu0 %v4904
        %4973 = vmatpush.msra.mxu0 %v4903
        %4974 = vmatpush.msra.mxu0 %v4902
        %4975 = vmatpush.msra.mxu0 %v4901
        %4976 = vmatpush.msra.mxu0 %v4900
        %4977 = vmatmul.f32.gmra.mxu0 %v4914
        %v4978 = vpop.f32.mrf.mxu0
        %v4979 = vadd.f32 %v4911, %v4978
        %4980 = vmatmul.f32.gmra.mxu0 %v4917
        %v4981 = vpop.f32.mrf.mxu0
        %v4982 = vadd.f32 %v4911, %v4981
        %4983 = vmatmul.f32.gmra.mxu0 %v4920
        %v4984 = vpop.f32.mrf.mxu0
        %v4985 = vadd.f32 %v4911, %v4984
        %4986 = vmatmul.f32.gmra.mxu0 %v4923
        %v4987 = vpop.f32.mrf.mxu0
        %v4988 = vadd.f32 %v4911, %v4987
        %4989 = vmatmul.f32.gmra.mxu0 %v4926
        %v4990 = vpop.f32.mrf.mxu0
        %v4991 = vadd.f32 %v4911, %v4990
        %4992 = vmatmul.f32.gmra.mxu0 %v4929
        %v4993 = vpop.f32.mrf.mxu0
        %v4994 = vadd.f32 %v4911, %v4993
        %4995 = vmatmul.f32.gmra.mxu0 %v4932
        %v4996 = vpop.f32.mrf.mxu0
        %v4997 = vadd.f32 %v4911, %v4996
        %4998 = vmatmul.f32.gmra.mxu0 %v4935
        %v4999 = vpop.f32.mrf.mxu0
        %v5000 = vadd.f32 %v4911, %v4999
        %5001 = vmatmul.f32.gmra.mxu0 %v4938
        %v5002 = vpop.f32.mrf.mxu0
        %v5003 = vadd.f32 %v4911, %v5002
        %5004 = vmatmul.f32.gmra.mxu0 %v4941
        %v5005 = vpop.f32.mrf.mxu0
        %v5006 = vadd.f32 %v4911, %v5005
        %5007 = vmatmul.f32.gmra.mxu0 %v4944
        %v5008 = vpop.f32.mrf.mxu0
        %v5009 = vadd.f32 %v4911, %v5008
        %5010 = vmatmul.f32.gmra.mxu0 %v4947
        %v5011 = vpop.f32.mrf.mxu0
        %v5012 = vadd.f32 %v4911, %v5011
        %5013 = vmatmul.f32.gmra.mxu0 %v4950
        %v5014 = vpop.f32.mrf.mxu0
        %v5015 = vadd.f32 %v4911, %v5014
        %5016 = vmatmul.f32.gmra.mxu0 %v4953
        %v5017 = vpop.f32.mrf.mxu0
        %v5018 = vadd.f32 %v4911, %v5017
        %5019 = vmatmul.f32.gmra.mxu0 %v4956
        %v5020 = vpop.f32.mrf.mxu0
        %v5021 = vadd.f32 %v4911, %v5020
        %5022 = vmatmul.f32.gmra.mxu0 %v4959
        %v5023 = vpop.f32.mrf.mxu0
        %v5024 = vadd.f32 %v4911, %v5023
        %5025 = vdwg.mxu0
        %vm5026 = vcmp.ge.f32.partialorder %v4979, 0.0
        %vm5027 = vcmp.ge.f32.partialorder %v4982, 0.0
        %vm5028 = vcmp.ge.f32.partialorder %v4985, 0.0
        %vm5029 = vcmp.ge.f32.partialorder %v4988, 0.0
        %vm5030 = vcmp.ge.f32.partialorder %v4991, 0.0
        %vm5031 = vcmp.ge.f32.partialorder %v4994, 0.0
        %vm5032 = vcmp.ge.f32.partialorder %v4997, 0.0
        %vm5033 = vcmp.ge.f32.partialorder %v5000, 0.0
        %vm5034 = vcmp.ge.f32.partialorder %v5003, 0.0
        %vm5035 = vcmp.ge.f32.partialorder %v5006, 0.0
        %vm5036 = vcmp.ge.f32.partialorder %v5009, 0.0
        %vm5037 = vcmp.ge.f32.partialorder %v5012, 0.0
        %vm5038 = vcmp.ge.f32.partialorder %v5015, 0.0
        %vm5039 = vcmp.ge.f32.partialorder %v5018, 0.0
        %vm5040 = vcmp.ge.f32.partialorder %v5021, 0.0
        %vm5041 = vcmp.ge.f32.partialorder %v5024, 0.0
        %v5042 = vmul.f32 %v4979, 0.01
        %v5043 = vmul.f32 %v4982, 0.01
        %v5044 = vmul.f32 %v4985, 0.01
        %v5045 = vmul.f32 %v4988, 0.01
        %v5046 = vmul.f32 %v4991, 0.01
        %v5047 = vmul.f32 %v4994, 0.01
        %v5048 = vmul.f32 %v4997, 0.01
        %v5049 = vmul.f32 %v5000, 0.01
        %v5050 = vmul.f32 %v5003, 0.01
        %v5051 = vmul.f32 %v5006, 0.01
        %v5052 = vmul.f32 %v5009, 0.01
        %v5053 = vmul.f32 %v5012, 0.01
        %v5054 = vmul.f32 %v5015, 0.01
        %v5055 = vmul.f32 %v5018, 0.01
        %v5056 = vmul.f32 %v5021, 0.01
        %v5057 = vmul.f32 %v5024, 0.01
        %v5058 = vsel %vm5026, %v4979, %v5042
        %v5059 = vsel %vm5027, %v4982, %v5043
        %v5060 = vsel %vm5028, %v4985, %v5044
        %v5061 = vsel %vm5029, %v4988, %v5045
        %v5062 = vsel %vm5030, %v4991, %v5046
        %v5063 = vsel %vm5031, %v4994, %v5047
        %v5064 = vsel %vm5032, %v4997, %v5048
        %v5065 = vsel %vm5033, %v5000, %v5049
        %v5066 = vsel %vm5034, %v5003, %v5050
        %v5067 = vsel %vm5035, %v5006, %v5051
        %v5068 = vsel %vm5036, %v5009, %v5052
        %v5069 = vsel %vm5037, %v5012, %v5053
        %v5070 = vsel %vm5038, %v5015, %v5054
        %v5071 = vsel %vm5039, %v5018, %v5055
        %v5072 = vsel %vm5040, %v5021, %v5056
        %v5073 = vsel %vm5041, %v5024, %v5057
        %s5074 = scalar_lea.vmem %s8, 448
        %v5075 = vld [vmem:[%s5074] sm:$0xff]
        %v5076 = vld [vmem:[%s5074 + $0x8] sm:$0xff]
        %v5077 = vld [vmem:[%s5074 + $0x10] sm:$0xff]
        %v5078 = vld [vmem:[%s5074 + $0x18] sm:$0xff]
        %v5079 = vld [vmem:[%s5074 + $0x20] sm:$0xff]
        %v5080 = vld [vmem:[%s5074 + $0x28] sm:$0xff]
        %v5081 = vld [vmem:[%s5074 + $0x30] sm:$0xff]
        %v5082 = vld [vmem:[%s5074 + $0x38] sm:$0xff]
        %s5083 = scalar_lea.vmem %s9, 10
        %v5084 = vld [vmem:[%s5083] sm:$0x1]
        %v5086 = vperm.slane %v5084, 0
        %v5089 = vsel %vm1980, %v5058, 0
        %v5092 = vsel %vm1980, %v5059, 0
        %v5095 = vsel %vm1980, %v5060, 0
        %v5098 = vsel %vm1980, %v5061, 0
        %v5101 = vsel %vm1980, %v5062, 0
        %v5104 = vsel %vm1980, %v5063, 0
        %v5107 = vsel %vm1980, %v5064, 0
        %v5110 = vsel %vm1980, %v5065, 0
        %v5113 = vsel %vm1980, %v5066, 0
        %v5116 = vsel %vm1980, %v5067, 0
        %v5119 = vsel %vm1980, %v5068, 0
        %v5122 = vsel %vm1980, %v5069, 0
        %v5125 = vsel %vm1980, %v5070, 0
        %v5128 = vsel %vm1980, %v5071, 0
        %v5131 = vsel %vm1980, %v5072, 0
        %v5134 = vsel %vm1980, %v5073, 0
        %5136 = vmatpush.msra.mxu0 0.0
        %5137 = vmatpush.msra.mxu0 0.0
        %5138 = vmatpush.msra.mxu0 0.0
        %5139 = vmatpush.msra.mxu0 0.0
        %5140 = vmatpush.msra.mxu0 0.0
        %5141 = vmatpush.msra.mxu0 0.0
        %5142 = vmatpush.msra.mxu0 0.0
        %5143 = vmatpush.msra.mxu0 0.0
        %5144 = vmatpush.msra.mxu0 %v5082
        %5145 = vmatpush.msra.mxu0 %v5081
        %5146 = vmatpush.msra.mxu0 %v5080
        %5147 = vmatpush.msra.mxu0 %v5079
        %5148 = vmatpush.msra.mxu0 %v5078
        %5149 = vmatpush.msra.mxu0 %v5077
        %5150 = vmatpush.msra.mxu0 %v5076
        %5151 = vmatpush.msra.mxu0 %v5075
        %5152 = vmatmul.f32.gmra.mxu0 %v5089
        %v5153 = vpop.f32.mrf.mxu0
        %v5154 = vadd.f32 %v5086, %v5153
        %5155 = vmatmul.f32.gmra.mxu0 %v5092
        %v5156 = vpop.f32.mrf.mxu0
        %v5157 = vadd.f32 %v5086, %v5156
        %5158 = vmatmul.f32.gmra.mxu0 %v5095
        %v5159 = vpop.f32.mrf.mxu0
        %v5160 = vadd.f32 %v5086, %v5159
        %5161 = vmatmul.f32.gmra.mxu0 %v5098
        %v5162 = vpop.f32.mrf.mxu0
        %v5163 = vadd.f32 %v5086, %v5162
        %5164 = vmatmul.f32.gmra.mxu0 %v5101
        %v5165 = vpop.f32.mrf.mxu0
        %v5166 = vadd.f32 %v5086, %v5165
        %5167 = vmatmul.f32.gmra.mxu0 %v5104
        %v5168 = vpop.f32.mrf.mxu0
        %v5169 = vadd.f32 %v5086, %v5168
        %5170 = vmatmul.f32.gmra.mxu0 %v5107
        %v5171 = vpop.f32.mrf.mxu0
        %v5172 = vadd.f32 %v5086, %v5171
        %5173 = vmatmul.f32.gmra.mxu0 %v5110
        %v5174 = vpop.f32.mrf.mxu0
        %v5175 = vadd.f32 %v5086, %v5174
        %5176 = vmatmul.f32.gmra.mxu0 %v5113
        %v5177 = vpop.f32.mrf.mxu0
        %v5178 = vadd.f32 %v5086, %v5177
        %5179 = vmatmul.f32.gmra.mxu0 %v5116
        %v5180 = vpop.f32.mrf.mxu0
        %v5181 = vadd.f32 %v5086, %v5180
        %5182 = vmatmul.f32.gmra.mxu0 %v5119
        %v5183 = vpop.f32.mrf.mxu0
        %v5184 = vadd.f32 %v5086, %v5183
        %5185 = vmatmul.f32.gmra.mxu0 %v5122
        %v5186 = vpop.f32.mrf.mxu0
        %v5187 = vadd.f32 %v5086, %v5186
        %5188 = vmatmul.f32.gmra.mxu0 %v5125
        %v5189 = vpop.f32.mrf.mxu0
        %v5190 = vadd.f32 %v5086, %v5189
        %5191 = vmatmul.f32.gmra.mxu0 %v5128
        %v5192 = vpop.f32.mrf.mxu0
        %v5193 = vadd.f32 %v5086, %v5192
        %5194 = vmatmul.f32.gmra.mxu0 %v5131
        %v5195 = vpop.f32.mrf.mxu0
        %v5196 = vadd.f32 %v5086, %v5195
        %5197 = vmatmul.f32.gmra.mxu0 %v5134
        %v5198 = vpop.f32.mrf.mxu0
        %v5199 = vadd.f32 %v5086, %v5198
        %5200 = vdwg.mxu0
        %vm5201 = vcmp.ge.f32.partialorder %v5154, 0.0
        %vm5202 = vcmp.ge.f32.partialorder %v5157, 0.0
        %vm5203 = vcmp.ge.f32.partialorder %v5160, 0.0
        %vm5204 = vcmp.ge.f32.partialorder %v5163, 0.0
        %vm5205 = vcmp.ge.f32.partialorder %v5166, 0.0
        %vm5206 = vcmp.ge.f32.partialorder %v5169, 0.0
        %vm5207 = vcmp.ge.f32.partialorder %v5172, 0.0
        %vm5208 = vcmp.ge.f32.partialorder %v5175, 0.0
        %vm5209 = vcmp.ge.f32.partialorder %v5178, 0.0
        %vm5210 = vcmp.ge.f32.partialorder %v5181, 0.0
        %vm5211 = vcmp.ge.f32.partialorder %v5184, 0.0
        %vm5212 = vcmp.ge.f32.partialorder %v5187, 0.0
        %vm5213 = vcmp.ge.f32.partialorder %v5190, 0.0
        %vm5214 = vcmp.ge.f32.partialorder %v5193, 0.0
        %vm5215 = vcmp.ge.f32.partialorder %v5196, 0.0
        %vm5216 = vcmp.ge.f32.partialorder %v5199, 0.0
        %v5217 = vmul.f32 %v5154, 0.01
        %v5218 = vmul.f32 %v5157, 0.01
        %v5219 = vmul.f32 %v5160, 0.01
        %v5220 = vmul.f32 %v5163, 0.01
        %v5221 = vmul.f32 %v5166, 0.01
        %v5222 = vmul.f32 %v5169, 0.01
        %v5223 = vmul.f32 %v5172, 0.01
        %v5224 = vmul.f32 %v5175, 0.01
        %v5225 = vmul.f32 %v5178, 0.01
        %v5226 = vmul.f32 %v5181, 0.01
        %v5227 = vmul.f32 %v5184, 0.01
        %v5228 = vmul.f32 %v5187, 0.01
        %v5229 = vmul.f32 %v5190, 0.01
        %v5230 = vmul.f32 %v5193, 0.01
        %v5231 = vmul.f32 %v5196, 0.01
        %v5232 = vmul.f32 %v5199, 0.01
        %v5233 = vsel %vm5201, %v5154, %v5217
        %v5234 = vsel %vm5202, %v5157, %v5218
        %v5235 = vsel %vm5203, %v5160, %v5219
        %v5236 = vsel %vm5204, %v5163, %v5220
        %v5237 = vsel %vm5205, %v5166, %v5221
        %v5238 = vsel %vm5206, %v5169, %v5222
        %v5239 = vsel %vm5207, %v5172, %v5223
        %v5240 = vsel %vm5208, %v5175, %v5224
        %v5241 = vsel %vm5209, %v5178, %v5225
        %v5242 = vsel %vm5210, %v5181, %v5226
        %v5243 = vsel %vm5211, %v5184, %v5227
        %v5244 = vsel %vm5212, %v5187, %v5228
        %v5245 = vsel %vm5213, %v5190, %v5229
        %v5246 = vsel %vm5214, %v5193, %v5230
        %v5247 = vsel %vm5215, %v5196, %v5231
        %v5248 = vsel %vm5216, %v5199, %v5232
        %s5249 = scalar_lea.vmem [#allocation5], 192
        %v5250 = vld [vmem:[%s5249] sm:$0xff]
        %v5251 = vld [vmem:[%s5249 + $0x8] sm:$0xff]
        %v5252 = vld [vmem:[%s5249 + $0x10] sm:$0xff]
        %v5253 = vld [vmem:[%s5249 + $0x18] sm:$0xff]
        %v5254 = vld [vmem:[%s5249 + $0x20] sm:$0xff]
        %v5255 = vld [vmem:[%s5249 + $0x28] sm:$0xff]
        %v5256 = vld [vmem:[%s5249 + $0x30] sm:$0xff]
        %v5257 = vld [vmem:[%s5249 + $0x38] sm:$0xff]
        %s5258 = scalar_lea.vmem %s9, 11
        %v5259 = vld [vmem:[%s5258] sm:$0x1]
        %v5261 = vperm.slane %v5259, 0
        %v5264 = vsel %vm1980, %v5233, 0
        %v5267 = vsel %vm1980, %v5234, 0
        %v5270 = vsel %vm1980, %v5235, 0
        %v5273 = vsel %vm1980, %v5236, 0
        %v5276 = vsel %vm1980, %v5237, 0
        %v5279 = vsel %vm1980, %v5238, 0
        %v5282 = vsel %vm1980, %v5239, 0
        %v5285 = vsel %vm1980, %v5240, 0
        %v5288 = vsel %vm1980, %v5241, 0
        %v5291 = vsel %vm1980, %v5242, 0
        %v5294 = vsel %vm1980, %v5243, 0
        %v5297 = vsel %vm1980, %v5244, 0
        %v5300 = vsel %vm1980, %v5245, 0
        %v5303 = vsel %vm1980, %v5246, 0
        %v5306 = vsel %vm1980, %v5247, 0
        %v5309 = vsel %vm1980, %v5248, 0
        %5311 = vmatpush.msra.mxu0 0.0
        %5312 = vmatpush.msra.mxu0 0.0
        %5313 = vmatpush.msra.mxu0 0.0
        %5314 = vmatpush.msra.mxu0 0.0
        %5315 = vmatpush.msra.mxu0 0.0
        %5316 = vmatpush.msra.mxu0 0.0
        %5317 = vmatpush.msra.mxu0 0.0
        %5318 = vmatpush.msra.mxu0 0.0
        %5319 = vmatpush.msra.mxu0 %v5257
        %5320 = vmatpush.msra.mxu0 %v5256
        %5321 = vmatpush.msra.mxu0 %v5255
        %5322 = vmatpush.msra.mxu0 %v5254
        %5323 = vmatpush.msra.mxu0 %v5253
        %5324 = vmatpush.msra.mxu0 %v5252
        %5325 = vmatpush.msra.mxu0 %v5251
        %5326 = vmatpush.msra.mxu0 %v5250
        %5327 = vmatmul.f32.gmra.mxu0 %v5264
        %v5328 = vpop.f32.mrf.mxu0
        %v5329 = vadd.f32 %v5261, %v5328
        %5330 = vmatmul.f32.gmra.mxu0 %v5267
        %v5331 = vpop.f32.mrf.mxu0
        %v5332 = vadd.f32 %v5261, %v5331
        %5333 = vmatmul.f32.gmra.mxu0 %v5270
        %v5334 = vpop.f32.mrf.mxu0
        %v5335 = vadd.f32 %v5261, %v5334
        %5336 = vmatmul.f32.gmra.mxu0 %v5273
        %v5337 = vpop.f32.mrf.mxu0
        %v5338 = vadd.f32 %v5261, %v5337
        %5339 = vmatmul.f32.gmra.mxu0 %v5276
        %v5340 = vpop.f32.mrf.mxu0
        %v5341 = vadd.f32 %v5261, %v5340
        %5342 = vmatmul.f32.gmra.mxu0 %v5279
        %v5343 = vpop.f32.mrf.mxu0
        %v5344 = vadd.f32 %v5261, %v5343
        %5345 = vmatmul.f32.gmra.mxu0 %v5282
        %v5346 = vpop.f32.mrf.mxu0
        %v5347 = vadd.f32 %v5261, %v5346
        %5348 = vmatmul.f32.gmra.mxu0 %v5285
        %v5349 = vpop.f32.mrf.mxu0
        %v5350 = vadd.f32 %v5261, %v5349
        %5351 = vmatmul.f32.gmra.mxu0 %v5288
        %v5352 = vpop.f32.mrf.mxu0
        %v5353 = vadd.f32 %v5261, %v5352
        %5354 = vmatmul.f32.gmra.mxu0 %v5291
        %v5355 = vpop.f32.mrf.mxu0
        %v5356 = vadd.f32 %v5261, %v5355
        %5357 = vmatmul.f32.gmra.mxu0 %v5294
        %v5358 = vpop.f32.mrf.mxu0
        %v5359 = vadd.f32 %v5261, %v5358
        %5360 = vmatmul.f32.gmra.mxu0 %v5297
        %v5361 = vpop.f32.mrf.mxu0
        %v5362 = vadd.f32 %v5261, %v5361
        %5363 = vmatmul.f32.gmra.mxu0 %v5300
        %v5364 = vpop.f32.mrf.mxu0
        %v5365 = vadd.f32 %v5261, %v5364
        %5366 = vmatmul.f32.gmra.mxu0 %v5303
        %v5367 = vpop.f32.mrf.mxu0
        %v5368 = vadd.f32 %v5261, %v5367
        %5369 = vmatmul.f32.gmra.mxu0 %v5306
        %v5370 = vpop.f32.mrf.mxu0
        %v5371 = vadd.f32 %v5261, %v5370
        %5372 = vmatmul.f32.gmra.mxu0 %v5309
        %v5373 = vpop.f32.mrf.mxu0
        %v5374 = vadd.f32 %v5261, %v5373
        %5375 = vdwg.mxu0
        %v5376 = vtanh.pop %v5329
        %v5377 = vtanh.pop %v5332
        %v5378 = vtanh.pop %v5335
        %v5379 = vtanh.pop %v5338
        %v5380 = vtanh.pop %v5341
        %v5381 = vtanh.pop %v5344
        %v5382 = vtanh.pop %v5347
        %v5383 = vtanh.pop %v5350
        %v5384 = vtanh.pop %v5353
        %v5385 = vtanh.pop %v5356
        %v5386 = vtanh.pop %v5359
        %v5387 = vtanh.pop %v5362
        %v5388 = vtanh.pop %v5365
        %v5389 = vtanh.pop %v5368
        %v5390 = vtanh.pop %v5371
        %v5391 = vtanh.pop %v5374
        %v5392 = vmul.f32 %v5376, 1.442695
        %v5393 = vpow.pop %v5392
        %v5394 = vmul.f32 %v5377, 1.442695
        %v5395 = vpow.pop %v5394
        %v5396 = vmul.f32 %v5378, 1.442695
        %v5397 = vpow.pop %v5396
        %v5398 = vmul.f32 %v5379, 1.442695
        %v5399 = vpow.pop %v5398
        %v5400 = vmul.f32 %v5380, 1.442695
        %v5401 = vpow.pop %v5400
        %v5402 = vmul.f32 %v5381, 1.442695
        %v5403 = vpow.pop %v5402
        %v5404 = vmul.f32 %v5382, 1.442695
        %v5405 = vpow.pop %v5404
        %v5406 = vmul.f32 %v5383, 1.442695
        %v5407 = vpow.pop %v5406
        %v5408 = vmul.f32 %v5384, 1.442695
        %v5409 = vpow.pop %v5408
        %v5410 = vmul.f32 %v5385, 1.442695
        %v5411 = vpow.pop %v5410
        %v5412 = vmul.f32 %v5386, 1.442695
        %v5413 = vpow.pop %v5412
        %v5414 = vmul.f32 %v5387, 1.442695
        %v5415 = vpow.pop %v5414
        %v5416 = vmul.f32 %v5388, 1.442695
        %v5417 = vpow.pop %v5416
        %v5418 = vmul.f32 %v5389, 1.442695
        %v5419 = vpow.pop %v5418
        %v5420 = vmul.f32 %v5390, 1.442695
        %v5421 = vpow.pop %v5420
        %v5422 = vmul.f32 %v5391, 1.442695
        %v5423 = vpow.pop %v5422
        %v5424 = vmul.f32 %v3770, %v5393
        %v5425 = vmul.f32 %v3771, %v5395
        %v5426 = vmul.f32 %v3772, %v5397
        %v5427 = vmul.f32 %v3773, %v5399
        %v5428 = vmul.f32 %v3774, %v5401
        %v5429 = vmul.f32 %v3775, %v5403
        %v5430 = vmul.f32 %v3776, %v5405
        %v5431 = vmul.f32 %v3777, %v5407
        %v5432 = vmul.f32 %v3778, %v5409
        %v5433 = vmul.f32 %v3779, %v5411
        %v5434 = vmul.f32 %v3780, %v5413
        %v5435 = vmul.f32 %v3781, %v5415
        %v5436 = vmul.f32 %v3782, %v5417
        %v5437 = vmul.f32 %v3783, %v5419
        %v5438 = vmul.f32 %v3784, %v5421
        %v5439 = vmul.f32 %v3785, %v5423
        %5456 = vrot.lane.b32.xlu0 %v5329, 123
        %v5457 = vpop.permute.xlu0 %5456
        %5458 = vrot.lane.b32.xlu0 %v5332, 123
        %v5459 = vpop.permute.xlu0 %5458
        %5460 = vrot.lane.b32.xlu0 %v5335, 123
        %v5461 = vpop.permute.xlu0 %5460
        %5462 = vrot.lane.b32.xlu0 %v5338, 123
        %v5463 = vpop.permute.xlu0 %5462
        %5464 = vrot.lane.b32.xlu0 %v5341, 123
        %v5465 = vpop.permute.xlu0 %5464
        %5466 = vrot.lane.b32.xlu0 %v5344, 123
        %v5467 = vpop.permute.xlu0 %5466
        %5468 = vrot.lane.b32.xlu0 %v5347, 123
        %v5469 = vpop.permute.xlu0 %5468
        %5470 = vrot.lane.b32.xlu0 %v5350, 123
        %v5471 = vpop.permute.xlu0 %5470
        %5472 = vrot.lane.b32.xlu0 %v5353, 123
        %v5473 = vpop.permute.xlu0 %5472
        %5474 = vrot.lane.b32.xlu0 %v5356, 123
        %v5475 = vpop.permute.xlu0 %5474
        %5476 = vrot.lane.b32.xlu0 %v5359, 123
        %v5477 = vpop.permute.xlu0 %5476
        %5478 = vrot.lane.b32.xlu0 %v5362, 123
        %v5479 = vpop.permute.xlu0 %5478
        %5480 = vrot.lane.b32.xlu0 %v5365, 123
        %v5481 = vpop.permute.xlu0 %5480
        %5482 = vrot.lane.b32.xlu0 %v5368, 123
        %v5483 = vpop.permute.xlu0 %5482
        %5484 = vrot.lane.b32.xlu0 %v5371, 123
        %v5485 = vpop.permute.xlu0 %5484
        %5486 = vrot.lane.b32.xlu0 %v5374, 123
        %v5487 = vpop.permute.xlu0 %5486
        %v5504 = vadd.f32 %v5424, %v5457
        %v5505 = vadd.f32 %v5425, %v5459
        %v5506 = vadd.f32 %v5426, %v5461
        %v5507 = vadd.f32 %v5427, %v5463
        %v5508 = vadd.f32 %v5428, %v5465
        %v5509 = vadd.f32 %v5429, %v5467
        %v5510 = vadd.f32 %v5430, %v5469
        %v5511 = vadd.f32 %v5431, %v5471
        %v5512 = vadd.f32 %v5432, %v5473
        %v5513 = vadd.f32 %v5433, %v5475
        %v5514 = vadd.f32 %v5434, %v5477
        %v5515 = vadd.f32 %v5435, %v5479
        %v5516 = vadd.f32 %v5436, %v5481
        %v5517 = vadd.f32 %v5437, %v5483
        %v5518 = vadd.f32 %v5438, %v5485
        %v5519 = vadd.f32 %v5439, %v5487
        %v5520 = vsel %vm1802, %v5376, 0.0
        %5521 = vadd.xlane.f32.xlu0 %v5520
        %v5522 = vpop.xlane.xlu0 %5521
        %v5523 = vsel %vm1802, %v5377, 0.0
        %5524 = vadd.xlane.f32.xlu0 %v5523
        %v5525 = vpop.xlane.xlu0 %5524
        %v5526 = vsel %vm1802, %v5378, 0.0
        %5527 = vadd.xlane.f32.xlu0 %v5526
        %v5528 = vpop.xlane.xlu0 %5527
        %v5529 = vsel %vm1802, %v5379, 0.0
        %5530 = vadd.xlane.f32.xlu0 %v5529
        %v5531 = vpop.xlane.xlu0 %5530
        %v5532 = vsel %vm1802, %v5380, 0.0
        %5533 = vadd.xlane.f32.xlu0 %v5532
        %v5534 = vpop.xlane.xlu0 %5533
        %v5535 = vsel %vm1802, %v5381, 0.0
        %5536 = vadd.xlane.f32.xlu0 %v5535
        %v5537 = vpop.xlane.xlu0 %5536
        %v5538 = vsel %vm1802, %v5382, 0.0
        %5539 = vadd.xlane.f32.xlu0 %v5538
        %v5540 = vpop.xlane.xlu0 %5539
        %v5541 = vsel %vm1802, %v5383, 0.0
        %5542 = vadd.xlane.f32.xlu0 %v5541
        %v5543 = vpop.xlane.xlu0 %5542
        %v5544 = vsel %vm1802, %v5384, 0.0
        %5545 = vadd.xlane.f32.xlu0 %v5544
        %v5546 = vpop.xlane.xlu0 %5545
        %v5547 = vsel %vm1802, %v5385, 0.0
        %5548 = vadd.xlane.f32.xlu0 %v5547
        %v5549 = vpop.xlane.xlu0 %5548
        %v5550 = vsel %vm1802, %v5386, 0.0
        %5551 = vadd.xlane.f32.xlu0 %v5550
        %v5552 = vpop.xlane.xlu0 %5551
        %v5553 = vsel %vm1802, %v5387, 0.0
        %5554 = vadd.xlane.f32.xlu0 %v5553
        %v5555 = vpop.xlane.xlu0 %5554
        %v5556 = vsel %vm1802, %v5388, 0.0
        %5557 = vadd.xlane.f32.xlu0 %v5556
        %v5558 = vpop.xlane.xlu0 %5557
        %v5559 = vsel %vm1802, %v5389, 0.0
        %5560 = vadd.xlane.f32.xlu0 %v5559
        %v5561 = vpop.xlane.xlu0 %5560
        %v5562 = vsel %vm1802, %v5390, 0.0
        %5563 = vadd.xlane.f32.xlu0 %v5562
        %v5564 = vpop.xlane.xlu0 %5563
        %v5565 = vsel %vm1802, %v5391, 0.0
        %5566 = vadd.xlane.f32.xlu0 %v5565
        %v5567 = vpop.xlane.xlu0 %5566
        %v5568 = vadd.f32 %v4621, %v5522
        %v5569 = vadd.f32 %v4622, %v5525
        %v5570 = vadd.f32 %v4623, %v5528
        %v5571 = vadd.f32 %v4624, %v5531
        %v5572 = vadd.f32 %v4625, %v5534
        %v5573 = vadd.f32 %v4626, %v5537
        %v5574 = vadd.f32 %v4627, %v5540
        %v5575 = vadd.f32 %v4628, %v5543
        %v5576 = vadd.f32 %v4629, %v5546
        %v5577 = vadd.f32 %v4630, %v5549
        %v5578 = vadd.f32 %v4631, %v5552
        %v5579 = vadd.f32 %v4632, %v5555
        %v5580 = vadd.f32 %v4633, %v5558
        %v5581 = vadd.f32 %v4634, %v5561
        %v5582 = vadd.f32 %v4635, %v5564
        %v5583 = vadd.f32 %v4636, %v5567
        %v5584 = vsel %vm1802, %v5504, %v4557
        %v5585 = vsel %vm1802, %v5505, %v4558
        %v5586 = vsel %vm1802, %v5506, %v4559
        %v5587 = vsel %vm1802, %v5507, %v4560
        %v5588 = vsel %vm1802, %v5508, %v4561
        %v5589 = vsel %vm1802, %v5509, %v4562
        %v5590 = vsel %vm1802, %v5510, %v4563
        %v5591 = vsel %vm1802, %v5511, %v4564
        %v5592 = vsel %vm1802, %v5512, %v4565
        %v5593 = vsel %vm1802, %v5513, %v4566
        %v5594 = vsel %vm1802, %v5514, %v4567
        %v5595 = vsel %vm1802, %v5515, %v4568
        %v5596 = vsel %vm1802, %v5516, %v4569
        %v5597 = vsel %vm1802, %v5517, %v4570
        %v5598 = vsel %vm1802, %v5518, %v4571
        %v5599 = vsel %vm1802, %v5519, %v4572
        %s5600 = scalar_lea.vmem %s11, 16
        %v5601 = vld [vmem:[%s5600] sm:$0xff]
        %v5602 = vld [vmem:[%s5600 + $0x8] sm:$0x3]
        %s5603 = scalar_lea.vmem %s12, 1
        %v5604 = vld [vmem:[%s5603] sm:$0x1]
        %v5606 = vperm.slane %v5604, 0
        %v5609 = vsel %vm3620, %v5584, 0
        %v5612 = vsel %vm3620, %v5585, 0
        %v5615 = vsel %vm3620, %v5586, 0
        %v5618 = vsel %vm3620, %v5587, 0
        %v5621 = vsel %vm3620, %v5588, 0
        %v5624 = vsel %vm3620, %v5589, 0
        %v5627 = vsel %vm3620, %v5590, 0
        %v5630 = vsel %vm3620, %v5591, 0
        %v5633 = vsel %vm3620, %v5592, 0
        %v5636 = vsel %vm3620, %v5593, 0
        %v5639 = vsel %vm3620, %v5594, 0
        %v5642 = vsel %vm3620, %v5595, 0
        %v5645 = vsel %vm3620, %v5596, 0
        %v5648 = vsel %vm3620, %v5597, 0
        %v5651 = vsel %vm3620, %v5598, 0
        %v5654 = vsel %vm3620, %v5599, 0
        %v5657 = vsel %vm3669, %v5602, 0
        %5659 = vmatpush.msra.mxu0 0.0
        %5660 = vmatpush.msra.mxu0 0.0
        %5661 = vmatpush.msra.mxu0 0.0
        %5662 = vmatpush.msra.mxu0 0.0
        %5663 = vmatpush.msra.mxu0 0.0
        %5664 = vmatpush.msra.mxu0 0.0
        %5665 = vmatpush.msra.mxu0 0.0
        %5666 = vmatpush.msra.mxu0 0.0
        %5667 = vmatpush.msra.mxu0 0.0
        %5668 = vmatpush.msra.mxu0 0.0
        %5669 = vmatpush.msra.mxu0 0.0
        %5670 = vmatpush.msra.mxu0 0.0
        %5671 = vmatpush.msra.mxu0 0.0
        %5672 = vmatpush.msra.mxu0 0.0
        %5673 = vmatpush.msra.mxu0 %v5657
        %5674 = vmatpush.msra.mxu0 %v5601
        %5675 = vmatmul.f32.gmra.mxu0 %v5609
        %v5676 = vpop.f32.mrf.mxu0
        %v5677 = vadd.f32 %v5606, %v5676
        %5678 = vmatmul.f32.gmra.mxu0 %v5612
        %v5679 = vpop.f32.mrf.mxu0
        %v5680 = vadd.f32 %v5606, %v5679
        %5681 = vmatmul.f32.gmra.mxu0 %v5615
        %v5682 = vpop.f32.mrf.mxu0
        %v5683 = vadd.f32 %v5606, %v5682
        %5684 = vmatmul.f32.gmra.mxu0 %v5618
        %v5685 = vpop.f32.mrf.mxu0
        %v5686 = vadd.f32 %v5606, %v5685
        %5687 = vmatmul.f32.gmra.mxu0 %v5621
        %v5688 = vpop.f32.mrf.mxu0
        %v5689 = vadd.f32 %v5606, %v5688
        %5690 = vmatmul.f32.gmra.mxu0 %v5624
        %v5691 = vpop.f32.mrf.mxu0
        %v5692 = vadd.f32 %v5606, %v5691
        %5693 = vmatmul.f32.gmra.mxu0 %v5627
        %v5694 = vpop.f32.mrf.mxu0
        %v5695 = vadd.f32 %v5606, %v5694
        %5696 = vmatmul.f32.gmra.mxu0 %v5630
        %v5697 = vpop.f32.mrf.mxu0
        %v5698 = vadd.f32 %v5606, %v5697
        %5699 = vmatmul.f32.gmra.mxu0 %v5633
        %v5700 = vpop.f32.mrf.mxu0
        %v5701 = vadd.f32 %v5606, %v5700
        %5702 = vmatmul.f32.gmra.mxu0 %v5636
        %v5703 = vpop.f32.mrf.mxu0
        %v5704 = vadd.f32 %v5606, %v5703
        %5705 = vmatmul.f32.gmra.mxu0 %v5639
        %v5706 = vpop.f32.mrf.mxu0
        %v5707 = vadd.f32 %v5606, %v5706
        %5708 = vmatmul.f32.gmra.mxu0 %v5642
        %v5709 = vpop.f32.mrf.mxu0
        %v5710 = vadd.f32 %v5606, %v5709
        %5711 = vmatmul.f32.gmra.mxu0 %v5645
        %v5712 = vpop.f32.mrf.mxu0
        %v5713 = vadd.f32 %v5606, %v5712
        %5714 = vmatmul.f32.gmra.mxu0 %v5648
        %v5715 = vpop.f32.mrf.mxu0
        %v5716 = vadd.f32 %v5606, %v5715
        %5717 = vmatmul.f32.gmra.mxu0 %v5651
        %v5718 = vpop.f32.mrf.mxu0
        %v5719 = vadd.f32 %v5606, %v5718
        %5720 = vmatmul.f32.gmra.mxu0 %v5654
        %v5721 = vpop.f32.mrf.mxu0
        %v5722 = vadd.f32 %v5606, %v5721
        %5723 = vdwg.mxu0
        %vm5724 = vcmp.ge.f32.partialorder %v5677, 0.0
        %vm5725 = vcmp.ge.f32.partialorder %v5680, 0.0
        %vm5726 = vcmp.ge.f32.partialorder %v5683, 0.0
        %vm5727 = vcmp.ge.f32.partialorder %v5686, 0.0
        %vm5728 = vcmp.ge.f32.partialorder %v5689, 0.0
        %vm5729 = vcmp.ge.f32.partialorder %v5692, 0.0
        %vm5730 = vcmp.ge.f32.partialorder %v5695, 0.0
        %vm5731 = vcmp.ge.f32.partialorder %v5698, 0.0
        %vm5732 = vcmp.ge.f32.partialorder %v5701, 0.0
        %vm5733 = vcmp.ge.f32.partialorder %v5704, 0.0
        %vm5734 = vcmp.ge.f32.partialorder %v5707, 0.0
        %vm5735 = vcmp.ge.f32.partialorder %v5710, 0.0
        %vm5736 = vcmp.ge.f32.partialorder %v5713, 0.0
        %vm5737 = vcmp.ge.f32.partialorder %v5716, 0.0
        %vm5738 = vcmp.ge.f32.partialorder %v5719, 0.0
        %vm5739 = vcmp.ge.f32.partialorder %v5722, 0.0
        %v5740 = vmul.f32 %v5677, 0.9
        %v5741 = vmul.f32 %v5680, 0.9
        %v5742 = vmul.f32 %v5683, 0.9
        %v5743 = vmul.f32 %v5686, 0.9
        %v5744 = vmul.f32 %v5689, 0.9
        %v5745 = vmul.f32 %v5692, 0.9
        %v5746 = vmul.f32 %v5695, 0.9
        %v5747 = vmul.f32 %v5698, 0.9
        %v5748 = vmul.f32 %v5701, 0.9
        %v5749 = vmul.f32 %v5704, 0.9
        %v5750 = vmul.f32 %v5707, 0.9
        %v5751 = vmul.f32 %v5710, 0.9
        %v5752 = vmul.f32 %v5713, 0.9
        %v5753 = vmul.f32 %v5716, 0.9
        %v5754 = vmul.f32 %v5719, 0.9
        %v5755 = vmul.f32 %v5722, 0.9
        %v5756 = vsel %vm5724, %v5677, %v5740
        %v5757 = vsel %vm5725, %v5680, %v5741
        %v5758 = vsel %vm5726, %v5683, %v5742
        %v5759 = vsel %vm5727, %v5686, %v5743
        %v5760 = vsel %vm5728, %v5689, %v5744
        %v5761 = vsel %vm5729, %v5692, %v5745
        %v5762 = vsel %vm5730, %v5695, %v5746
        %v5763 = vsel %vm5731, %v5698, %v5747
        %v5764 = vsel %vm5732, %v5701, %v5748
        %v5765 = vsel %vm5733, %v5704, %v5749
        %v5766 = vsel %vm5734, %v5707, %v5750
        %v5767 = vsel %vm5735, %v5710, %v5751
        %v5768 = vsel %vm5736, %v5713, %v5752
        %v5769 = vsel %vm5737, %v5716, %v5753
        %v5770 = vsel %vm5738, %v5719, %v5754
        %v5771 = vsel %vm5739, %v5722, %v5755
        %s5772 = scalar_lea.vmem %s7, 32
        %v5773 = vld [vmem:[%s5772] sm:$0x1f]
        %v5775 = vsel %vm1802, %v5756, 0
        %v5778 = vsel %vm1802, %v5757, 0
        %v5781 = vsel %vm1802, %v5758, 0
        %v5784 = vsel %vm1802, %v5759, 0
        %v5787 = vsel %vm1802, %v5760, 0
        %v5790 = vsel %vm1802, %v5761, 0
        %v5793 = vsel %vm1802, %v5762, 0
        %v5796 = vsel %vm1802, %v5763, 0
        %v5799 = vsel %vm1802, %v5764, 0
        %v5802 = vsel %vm1802, %v5765, 0
        %v5805 = vsel %vm1802, %v5766, 0
        %v5808 = vsel %vm1802, %v5767, 0
        %v5811 = vsel %vm1802, %v5768, 0
        %v5814 = vsel %vm1802, %v5769, 0
        %v5817 = vsel %vm1802, %v5770, 0
        %v5820 = vsel %vm1802, %v5771, 0
        %v5823 = vsel %vm1851, %v5773, 0
        %5825 = vmatpush.msra.mxu0 0.0
        %5826 = vmatpush.msra.mxu0 0.0
        %5827 = vmatpush.msra.mxu0 0.0
        %5828 = vmatpush.msra.mxu0 0.0
        %5829 = vmatpush.msra.mxu0 0.0
        %5830 = vmatpush.msra.mxu0 0.0
        %5831 = vmatpush.msra.mxu0 0.0
        %5832 = vmatpush.msra.mxu0 0.0
        %5833 = vmatpush.msra.mxu0 0.0
        %5834 = vmatpush.msra.mxu0 0.0
        %5835 = vmatpush.msra.mxu0 0.0
        %5836 = vmatpush.msra.mxu0 0.0
        %5837 = vmatpush.msra.mxu0 0.0
        %5838 = vmatpush.msra.mxu0 0.0
        %5839 = vmatpush.msra.mxu0 0.0
        %5840 = vmatpush.msra.mxu0 %v5823
        %5841 = vmatmul.f32.gmra.mxu0 %v5775
        %v5842 = vpop.f32.mrf.mxu0
        %v5843 = vadd.f32 %v1579, %v5842
        %5844 = vmatmul.f32.gmra.mxu0 %v5778
        %v5845 = vpop.f32.mrf.mxu0
        %v5846 = vadd.f32 %v1582, %v5845
        %5847 = vmatmul.f32.gmra.mxu0 %v5781
        %v5848 = vpop.f32.mrf.mxu0
        %v5849 = vadd.f32 %v1585, %v5848
        %5850 = vmatmul.f32.gmra.mxu0 %v5784
        %v5851 = vpop.f32.mrf.mxu0
        %v5852 = vadd.f32 %v1588, %v5851
        %5853 = vmatmul.f32.gmra.mxu0 %v5787
        %v5854 = vpop.f32.mrf.mxu0
        %v5855 = vadd.f32 %v1591, %v5854
        %5856 = vmatmul.f32.gmra.mxu0 %v5790
        %v5857 = vpop.f32.mrf.mxu0
        %v5858 = vadd.f32 %v1594, %v5857
        %5859 = vmatmul.f32.gmra.mxu0 %v5793
        %v5860 = vpop.f32.mrf.mxu0
        %v5861 = vadd.f32 %v1597, %v5860
        %5862 = vmatmul.f32.gmra.mxu0 %v5796
        %v5863 = vpop.f32.mrf.mxu0
        %v5864 = vadd.f32 %v1600, %v5863
        %5865 = vmatmul.f32.gmra.mxu0 %v5799
        %v5866 = vpop.f32.mrf.mxu0
        %v5867 = vadd.f32 %v1603, %v5866
        %5868 = vmatmul.f32.gmra.mxu0 %v5802
        %v5869 = vpop.f32.mrf.mxu0
        %v5870 = vadd.f32 %v1606, %v5869
        %5871 = vmatmul.f32.gmra.mxu0 %v5805
        %v5872 = vpop.f32.mrf.mxu0
        %v5873 = vadd.f32 %v1609, %v5872
        %5874 = vmatmul.f32.gmra.mxu0 %v5808
        %v5875 = vpop.f32.mrf.mxu0
        %v5876 = vadd.f32 %v1612, %v5875
        %5877 = vmatmul.f32.gmra.mxu0 %v5811
        %v5878 = vpop.f32.mrf.mxu0
        %v5879 = vadd.f32 %v1615, %v5878
        %5880 = vmatmul.f32.gmra.mxu0 %v5814
        %v5881 = vpop.f32.mrf.mxu0
        %v5882 = vadd.f32 %v1618, %v5881
        %5883 = vmatmul.f32.gmra.mxu0 %v5817
        %v5884 = vpop.f32.mrf.mxu0
        %v5885 = vadd.f32 %v1621, %v5884
        %5886 = vmatmul.f32.gmra.mxu0 %v5820
        %v5887 = vpop.f32.mrf.mxu0
        %v5888 = vadd.f32 %v1624, %v5887
        %5889 = vdwg.mxu0
        %vm5890 = vcmp.ge.f32.partialorder %v5843, 0.0
        %vm5891 = vcmp.ge.f32.partialorder %v5846, 0.0
        %vm5892 = vcmp.ge.f32.partialorder %v5849, 0.0
        %vm5893 = vcmp.ge.f32.partialorder %v5852, 0.0
        %vm5894 = vcmp.ge.f32.partialorder %v5855, 0.0
        %vm5895 = vcmp.ge.f32.partialorder %v5858, 0.0
        %vm5896 = vcmp.ge.f32.partialorder %v5861, 0.0
        %vm5897 = vcmp.ge.f32.partialorder %v5864, 0.0
        %vm5898 = vcmp.ge.f32.partialorder %v5867, 0.0
        %vm5899 = vcmp.ge.f32.partialorder %v5870, 0.0
        %vm5900 = vcmp.ge.f32.partialorder %v5873, 0.0
        %vm5901 = vcmp.ge.f32.partialorder %v5876, 0.0
        %vm5902 = vcmp.ge.f32.partialorder %v5879, 0.0
        %vm5903 = vcmp.ge.f32.partialorder %v5882, 0.0
        %vm5904 = vcmp.ge.f32.partialorder %v5885, 0.0
        %vm5905 = vcmp.ge.f32.partialorder %v5888, 0.0
        %v5906 = vmul.f32 %v5843, 0.01
        %v5907 = vmul.f32 %v5846, 0.01
        %v5908 = vmul.f32 %v5849, 0.01
        %v5909 = vmul.f32 %v5852, 0.01
        %v5910 = vmul.f32 %v5855, 0.01
        %v5911 = vmul.f32 %v5858, 0.01
        %v5912 = vmul.f32 %v5861, 0.01
        %v5913 = vmul.f32 %v5864, 0.01
        %v5914 = vmul.f32 %v5867, 0.01
        %v5915 = vmul.f32 %v5870, 0.01
        %v5916 = vmul.f32 %v5873, 0.01
        %v5917 = vmul.f32 %v5876, 0.01
        %v5918 = vmul.f32 %v5879, 0.01
        %v5919 = vmul.f32 %v5882, 0.01
        %v5920 = vmul.f32 %v5885, 0.01
        %v5921 = vmul.f32 %v5888, 0.01
        %v5922 = vsel %vm5890, %v5843, %v5906
        %v5923 = vsel %vm5891, %v5846, %v5907
        %v5924 = vsel %vm5892, %v5849, %v5908
        %v5925 = vsel %vm5893, %v5852, %v5909
        %v5926 = vsel %vm5894, %v5855, %v5910
        %v5927 = vsel %vm5895, %v5858, %v5911
        %v5928 = vsel %vm5896, %v5861, %v5912
        %v5929 = vsel %vm5897, %v5864, %v5913
        %v5930 = vsel %vm5898, %v5867, %v5914
        %v5931 = vsel %vm5899, %v5870, %v5915
        %v5932 = vsel %vm5900, %v5873, %v5916
        %v5933 = vsel %vm5901, %v5876, %v5917
        %v5934 = vsel %vm5902, %v5879, %v5918
        %v5935 = vsel %vm5903, %v5882, %v5919
        %v5936 = vsel %vm5904, %v5885, %v5920
        %v5937 = vsel %vm5905, %v5888, %v5921
        %s5938 = scalar_lea.vmem %s8, 512
        %v5939 = vld [vmem:[%s5938] sm:$0xff]
        %v5940 = vld [vmem:[%s5938 + $0x8] sm:$0xff]
        %v5941 = vld [vmem:[%s5938 + $0x10] sm:$0xff]
        %v5942 = vld [vmem:[%s5938 + $0x18] sm:$0xff]
        %v5943 = vld [vmem:[%s5938 + $0x20] sm:$0xff]
        %v5944 = vld [vmem:[%s5938 + $0x28] sm:$0xff]
        %v5945 = vld [vmem:[%s5938 + $0x30] sm:$0xff]
        %v5946 = vld [vmem:[%s5938 + $0x38] sm:$0xff]
        %s5947 = scalar_lea.vmem %s9, 12
        %v5948 = vld [vmem:[%s5947] sm:$0x1]
        %v5950 = vperm.slane %v5948, 0
        %v5953 = vsel %vm1980, %v5922, 0
        %v5956 = vsel %vm1980, %v5923, 0
        %v5959 = vsel %vm1980, %v5924, 0
        %v5962 = vsel %vm1980, %v5925, 0
        %v5965 = vsel %vm1980, %v5926, 0
        %v5968 = vsel %vm1980, %v5927, 0
        %v5971 = vsel %vm1980, %v5928, 0
        %v5974 = vsel %vm1980, %v5929, 0
        %v5977 = vsel %vm1980, %v5930, 0
        %v5980 = vsel %vm1980, %v5931, 0
        %v5983 = vsel %vm1980, %v5932, 0
        %v5986 = vsel %vm1980, %v5933, 0
        %v5989 = vsel %vm1980, %v5934, 0
        %v5992 = vsel %vm1980, %v5935, 0
        %v5995 = vsel %vm1980, %v5936, 0
        %v5998 = vsel %vm1980, %v5937, 0
        %6000 = vmatpush.msra.mxu0 0.0
        %6001 = vmatpush.msra.mxu0 0.0
        %6002 = vmatpush.msra.mxu0 0.0
        %6003 = vmatpush.msra.mxu0 0.0
        %6004 = vmatpush.msra.mxu0 0.0
        %6005 = vmatpush.msra.mxu0 0.0
        %6006 = vmatpush.msra.mxu0 0.0
        %6007 = vmatpush.msra.mxu0 0.0
        %6008 = vmatpush.msra.mxu0 %v5946
        %6009 = vmatpush.msra.mxu0 %v5945
        %6010 = vmatpush.msra.mxu0 %v5944
        %6011 = vmatpush.msra.mxu0 %v5943
        %6012 = vmatpush.msra.mxu0 %v5942
        %6013 = vmatpush.msra.mxu0 %v5941
        %6014 = vmatpush.msra.mxu0 %v5940
        %6015 = vmatpush.msra.mxu0 %v5939
        %6016 = vmatmul.f32.gmra.mxu0 %v5953
        %v6017 = vpop.f32.mrf.mxu0
        %v6018 = vadd.f32 %v5950, %v6017
        %6019 = vmatmul.f32.gmra.mxu0 %v5956
        %v6020 = vpop.f32.mrf.mxu0
        %v6021 = vadd.f32 %v5950, %v6020
        %6022 = vmatmul.f32.gmra.mxu0 %v5959
        %v6023 = vpop.f32.mrf.mxu0
        %v6024 = vadd.f32 %v5950, %v6023
        %6025 = vmatmul.f32.gmra.mxu0 %v5962
        %v6026 = vpop.f32.mrf.mxu0
        %v6027 = vadd.f32 %v5950, %v6026
        %6028 = vmatmul.f32.gmra.mxu0 %v5965
        %v6029 = vpop.f32.mrf.mxu0
        %v6030 = vadd.f32 %v5950, %v6029
        %6031 = vmatmul.f32.gmra.mxu0 %v5968
        %v6032 = vpop.f32.mrf.mxu0
        %v6033 = vadd.f32 %v5950, %v6032
        %6034 = vmatmul.f32.gmra.mxu0 %v5971
        %v6035 = vpop.f32.mrf.mxu0
        %v6036 = vadd.f32 %v5950, %v6035
        %6037 = vmatmul.f32.gmra.mxu0 %v5974
        %v6038 = vpop.f32.mrf.mxu0
        %v6039 = vadd.f32 %v5950, %v6038
        %6040 = vmatmul.f32.gmra.mxu0 %v5977
        %v6041 = vpop.f32.mrf.mxu0
        %v6042 = vadd.f32 %v5950, %v6041
        %6043 = vmatmul.f32.gmra.mxu0 %v5980
        %v6044 = vpop.f32.mrf.mxu0
        %v6045 = vadd.f32 %v5950, %v6044
        %6046 = vmatmul.f32.gmra.mxu0 %v5983
        %v6047 = vpop.f32.mrf.mxu0
        %v6048 = vadd.f32 %v5950, %v6047
        %6049 = vmatmul.f32.gmra.mxu0 %v5986
        %v6050 = vpop.f32.mrf.mxu0
        %v6051 = vadd.f32 %v5950, %v6050
        %6052 = vmatmul.f32.gmra.mxu0 %v5989
        %v6053 = vpop.f32.mrf.mxu0
        %v6054 = vadd.f32 %v5950, %v6053
        %6055 = vmatmul.f32.gmra.mxu0 %v5992
        %v6056 = vpop.f32.mrf.mxu0
        %v6057 = vadd.f32 %v5950, %v6056
        %6058 = vmatmul.f32.gmra.mxu0 %v5995
        %v6059 = vpop.f32.mrf.mxu0
        %v6060 = vadd.f32 %v5950, %v6059
        %6061 = vmatmul.f32.gmra.mxu0 %v5998
        %v6062 = vpop.f32.mrf.mxu0
        %v6063 = vadd.f32 %v5950, %v6062
        %6064 = vdwg.mxu0
        %vm6065 = vcmp.ge.f32.partialorder %v6018, 0.0
        %vm6066 = vcmp.ge.f32.partialorder %v6021, 0.0
        %vm6067 = vcmp.ge.f32.partialorder %v6024, 0.0
        %vm6068 = vcmp.ge.f32.partialorder %v6027, 0.0
        %vm6069 = vcmp.ge.f32.partialorder %v6030, 0.0
        %vm6070 = vcmp.ge.f32.partialorder %v6033, 0.0
        %vm6071 = vcmp.ge.f32.partialorder %v6036, 0.0
        %vm6072 = vcmp.ge.f32.partialorder %v6039, 0.0
        %vm6073 = vcmp.ge.f32.partialorder %v6042, 0.0
        %vm6074 = vcmp.ge.f32.partialorder %v6045, 0.0
        %vm6075 = vcmp.ge.f32.partialorder %v6048, 0.0
        %vm6076 = vcmp.ge.f32.partialorder %v6051, 0.0
        %vm6077 = vcmp.ge.f32.partialorder %v6054, 0.0
        %vm6078 = vcmp.ge.f32.partialorder %v6057, 0.0
        %vm6079 = vcmp.ge.f32.partialorder %v6060, 0.0
        %vm6080 = vcmp.ge.f32.partialorder %v6063, 0.0
        %v6081 = vmul.f32 %v6018, 0.01
        %v6082 = vmul.f32 %v6021, 0.01
        %v6083 = vmul.f32 %v6024, 0.01
        %v6084 = vmul.f32 %v6027, 0.01
        %v6085 = vmul.f32 %v6030, 0.01
        %v6086 = vmul.f32 %v6033, 0.01
        %v6087 = vmul.f32 %v6036, 0.01
        %v6088 = vmul.f32 %v6039, 0.01
        %v6089 = vmul.f32 %v6042, 0.01
        %v6090 = vmul.f32 %v6045, 0.01
        %v6091 = vmul.f32 %v6048, 0.01
        %v6092 = vmul.f32 %v6051, 0.01
        %v6093 = vmul.f32 %v6054, 0.01
        %v6094 = vmul.f32 %v6057, 0.01
        %v6095 = vmul.f32 %v6060, 0.01
        %v6096 = vmul.f32 %v6063, 0.01
        %v6097 = vsel %vm6065, %v6018, %v6081
        %v6098 = vsel %vm6066, %v6021, %v6082
        %v6099 = vsel %vm6067, %v6024, %v6083
        %v6100 = vsel %vm6068, %v6027, %v6084
        %v6101 = vsel %vm6069, %v6030, %v6085
        %v6102 = vsel %vm6070, %v6033, %v6086
        %v6103 = vsel %vm6071, %v6036, %v6087
        %v6104 = vsel %vm6072, %v6039, %v6088
        %v6105 = vsel %vm6073, %v6042, %v6089
        %v6106 = vsel %vm6074, %v6045, %v6090
        %v6107 = vsel %vm6075, %v6048, %v6091
        %v6108 = vsel %vm6076, %v6051, %v6092
        %v6109 = vsel %vm6077, %v6054, %v6093
        %v6110 = vsel %vm6078, %v6057, %v6094
        %v6111 = vsel %vm6079, %v6060, %v6095
        %v6112 = vsel %vm6080, %v6063, %v6096
        %s6113 = scalar_lea.vmem %s8, 576
        %v6114 = vld [vmem:[%s6113] sm:$0xff]
        %v6115 = vld [vmem:[%s6113 + $0x8] sm:$0xff]
        %v6116 = vld [vmem:[%s6113 + $0x10] sm:$0xff]
        %v6117 = vld [vmem:[%s6113 + $0x18] sm:$0xff]
        %v6118 = vld [vmem:[%s6113 + $0x20] sm:$0xff]
        %v6119 = vld [vmem:[%s6113 + $0x28] sm:$0xff]
        %v6120 = vld [vmem:[%s6113 + $0x30] sm:$0xff]
        %v6121 = vld [vmem:[%s6113 + $0x38] sm:$0xff]
        %s6122 = scalar_lea.vmem %s9, 13
        %v6123 = vld [vmem:[%s6122] sm:$0x1]
        %v6125 = vperm.slane %v6123, 0
        %v6128 = vsel %vm1980, %v6097, 0
        %v6131 = vsel %vm1980, %v6098, 0
        %v6134 = vsel %vm1980, %v6099, 0
        %v6137 = vsel %vm1980, %v6100, 0
        %v6140 = vsel %vm1980, %v6101, 0
        %v6143 = vsel %vm1980, %v6102, 0
        %v6146 = vsel %vm1980, %v6103, 0
        %v6149 = vsel %vm1980, %v6104, 0
        %v6152 = vsel %vm1980, %v6105, 0
        %v6155 = vsel %vm1980, %v6106, 0
        %v6158 = vsel %vm1980, %v6107, 0
        %v6161 = vsel %vm1980, %v6108, 0
        %v6164 = vsel %vm1980, %v6109, 0
        %v6167 = vsel %vm1980, %v6110, 0
        %v6170 = vsel %vm1980, %v6111, 0
        %v6173 = vsel %vm1980, %v6112, 0
        %6175 = vmatpush.msra.mxu0 0.0
        %6176 = vmatpush.msra.mxu0 0.0
        %6177 = vmatpush.msra.mxu0 0.0
        %6178 = vmatpush.msra.mxu0 0.0
        %6179 = vmatpush.msra.mxu0 0.0
        %6180 = vmatpush.msra.mxu0 0.0
        %6181 = vmatpush.msra.mxu0 0.0
        %6182 = vmatpush.msra.mxu0 0.0
        %6183 = vmatpush.msra.mxu0 %v6121
        %6184 = vmatpush.msra.mxu0 %v6120
        %6185 = vmatpush.msra.mxu0 %v6119
        %6186 = vmatpush.msra.mxu0 %v6118
        %6187 = vmatpush.msra.mxu0 %v6117
        %6188 = vmatpush.msra.mxu0 %v6116
        %6189 = vmatpush.msra.mxu0 %v6115
        %6190 = vmatpush.msra.mxu0 %v6114
        %6191 = vmatmul.f32.gmra.mxu0 %v6128
        %v6192 = vpop.f32.mrf.mxu0
        %v6193 = vadd.f32 %v6125, %v6192
        %6194 = vmatmul.f32.gmra.mxu0 %v6131
        %v6195 = vpop.f32.mrf.mxu0
        %v6196 = vadd.f32 %v6125, %v6195
        %6197 = vmatmul.f32.gmra.mxu0 %v6134
        %v6198 = vpop.f32.mrf.mxu0
        %v6199 = vadd.f32 %v6125, %v6198
        %6200 = vmatmul.f32.gmra.mxu0 %v6137
        %v6201 = vpop.f32.mrf.mxu0
        %v6202 = vadd.f32 %v6125, %v6201
        %6203 = vmatmul.f32.gmra.mxu0 %v6140
        %v6204 = vpop.f32.mrf.mxu0
        %v6205 = vadd.f32 %v6125, %v6204
        %6206 = vmatmul.f32.gmra.mxu0 %v6143
        %v6207 = vpop.f32.mrf.mxu0
        %v6208 = vadd.f32 %v6125, %v6207
        %6209 = vmatmul.f32.gmra.mxu0 %v6146
        %v6210 = vpop.f32.mrf.mxu0
        %v6211 = vadd.f32 %v6125, %v6210
        %6212 = vmatmul.f32.gmra.mxu0 %v6149
        %v6213 = vpop.f32.mrf.mxu0
        %v6214 = vadd.f32 %v6125, %v6213
        %6215 = vmatmul.f32.gmra.mxu0 %v6152
        %v6216 = vpop.f32.mrf.mxu0
        %v6217 = vadd.f32 %v6125, %v6216
        %6218 = vmatmul.f32.gmra.mxu0 %v6155
        %v6219 = vpop.f32.mrf.mxu0
        %v6220 = vadd.f32 %v6125, %v6219
        %6221 = vmatmul.f32.gmra.mxu0 %v6158
        %v6222 = vpop.f32.mrf.mxu0
        %v6223 = vadd.f32 %v6125, %v6222
        %6224 = vmatmul.f32.gmra.mxu0 %v6161
        %v6225 = vpop.f32.mrf.mxu0
        %v6226 = vadd.f32 %v6125, %v6225
        %6227 = vmatmul.f32.gmra.mxu0 %v6164
        %v6228 = vpop.f32.mrf.mxu0
        %v6229 = vadd.f32 %v6125, %v6228
        %6230 = vmatmul.f32.gmra.mxu0 %v6167
        %v6231 = vpop.f32.mrf.mxu0
        %v6232 = vadd.f32 %v6125, %v6231
        %6233 = vmatmul.f32.gmra.mxu0 %v6170
        %v6234 = vpop.f32.mrf.mxu0
        %v6235 = vadd.f32 %v6125, %v6234
        %6236 = vmatmul.f32.gmra.mxu0 %v6173
        %v6237 = vpop.f32.mrf.mxu0
        %v6238 = vadd.f32 %v6125, %v6237
        %6239 = vdwg.mxu0
        %vm6240 = vcmp.ge.f32.partialorder %v6193, 0.0
        %vm6241 = vcmp.ge.f32.partialorder %v6196, 0.0
        %vm6242 = vcmp.ge.f32.partialorder %v6199, 0.0
        %vm6243 = vcmp.ge.f32.partialorder %v6202, 0.0
        %vm6244 = vcmp.ge.f32.partialorder %v6205, 0.0
        %vm6245 = vcmp.ge.f32.partialorder %v6208, 0.0
        %vm6246 = vcmp.ge.f32.partialorder %v6211, 0.0
        %vm6247 = vcmp.ge.f32.partialorder %v6214, 0.0
        %vm6248 = vcmp.ge.f32.partialorder %v6217, 0.0
        %vm6249 = vcmp.ge.f32.partialorder %v6220, 0.0
        %vm6250 = vcmp.ge.f32.partialorder %v6223, 0.0
        %vm6251 = vcmp.ge.f32.partialorder %v6226, 0.0
        %vm6252 = vcmp.ge.f32.partialorder %v6229, 0.0
        %vm6253 = vcmp.ge.f32.partialorder %v6232, 0.0
        %vm6254 = vcmp.ge.f32.partialorder %v6235, 0.0
        %vm6255 = vcmp.ge.f32.partialorder %v6238, 0.0
        %v6256 = vmul.f32 %v6193, 0.01
        %v6257 = vmul.f32 %v6196, 0.01
        %v6258 = vmul.f32 %v6199, 0.01
        %v6259 = vmul.f32 %v6202, 0.01
        %v6260 = vmul.f32 %v6205, 0.01
        %v6261 = vmul.f32 %v6208, 0.01
        %v6262 = vmul.f32 %v6211, 0.01
        %v6263 = vmul.f32 %v6214, 0.01
        %v6264 = vmul.f32 %v6217, 0.01
        %v6265 = vmul.f32 %v6220, 0.01
        %v6266 = vmul.f32 %v6223, 0.01
        %v6267 = vmul.f32 %v6226, 0.01
        %v6268 = vmul.f32 %v6229, 0.01
        %v6269 = vmul.f32 %v6232, 0.01
        %v6270 = vmul.f32 %v6235, 0.01
        %v6271 = vmul.f32 %v6238, 0.01
        %v6272 = vsel %vm6240, %v6193, %v6256
        %v6273 = vsel %vm6241, %v6196, %v6257
        %v6274 = vsel %vm6242, %v6199, %v6258
        %v6275 = vsel %vm6243, %v6202, %v6259
        %v6276 = vsel %vm6244, %v6205, %v6260
        %v6277 = vsel %vm6245, %v6208, %v6261
        %v6278 = vsel %vm6246, %v6211, %v6262
        %v6279 = vsel %vm6247, %v6214, %v6263
        %v6280 = vsel %vm6248, %v6217, %v6264
        %v6281 = vsel %vm6249, %v6220, %v6265
        %v6282 = vsel %vm6250, %v6223, %v6266
        %v6283 = vsel %vm6251, %v6226, %v6267
        %v6284 = vsel %vm6252, %v6229, %v6268
        %v6285 = vsel %vm6253, %v6232, %v6269
        %v6286 = vsel %vm6254, %v6235, %v6270
        %v6287 = vsel %vm6255, %v6238, %v6271
        %s6288 = scalar_lea.vmem [#allocation5], 256
        %v6289 = vld [vmem:[%s6288] sm:$0xff]
        %v6290 = vld [vmem:[%s6288 + $0x8] sm:$0xff]
        %v6291 = vld [vmem:[%s6288 + $0x10] sm:$0xff]
        %v6292 = vld [vmem:[%s6288 + $0x18] sm:$0xff]
        %v6293 = vld [vmem:[%s6288 + $0x20] sm:$0xff]
        %v6294 = vld [vmem:[%s6288 + $0x28] sm:$0xff]
        %v6295 = vld [vmem:[%s6288 + $0x30] sm:$0xff]
        %v6296 = vld [vmem:[%s6288 + $0x38] sm:$0xff]
        %s6297 = scalar_lea.vmem %s9, 14
        %v6298 = vld [vmem:[%s6297] sm:$0x1]
        %v6300 = vperm.slane %v6298, 0
        %v6303 = vsel %vm1980, %v6272, 0
        %v6306 = vsel %vm1980, %v6273, 0
        %v6309 = vsel %vm1980, %v6274, 0
        %v6312 = vsel %vm1980, %v6275, 0
        %v6315 = vsel %vm1980, %v6276, 0
        %v6318 = vsel %vm1980, %v6277, 0
        %v6321 = vsel %vm1980, %v6278, 0
        %v6324 = vsel %vm1980, %v6279, 0
        %v6327 = vsel %vm1980, %v6280, 0
        %v6330 = vsel %vm1980, %v6281, 0
        %v6333 = vsel %vm1980, %v6282, 0
        %v6336 = vsel %vm1980, %v6283, 0
        %v6339 = vsel %vm1980, %v6284, 0
        %v6342 = vsel %vm1980, %v6285, 0
        %v6345 = vsel %vm1980, %v6286, 0
        %v6348 = vsel %vm1980, %v6287, 0
        %6350 = vmatpush.msra.mxu0 0.0
        %6351 = vmatpush.msra.mxu0 0.0
        %6352 = vmatpush.msra.mxu0 0.0
        %6353 = vmatpush.msra.mxu0 0.0
        %6354 = vmatpush.msra.mxu0 0.0
        %6355 = vmatpush.msra.mxu0 0.0
        %6356 = vmatpush.msra.mxu0 0.0
        %6357 = vmatpush.msra.mxu0 0.0
        %6358 = vmatpush.msra.mxu0 %v6296
        %6359 = vmatpush.msra.mxu0 %v6295
        %6360 = vmatpush.msra.mxu0 %v6294
        %6361 = vmatpush.msra.mxu0 %v6293
        %6362 = vmatpush.msra.mxu0 %v6292
        %6363 = vmatpush.msra.mxu0 %v6291
        %6364 = vmatpush.msra.mxu0 %v6290
        %6365 = vmatpush.msra.mxu0 %v6289
        %6366 = vmatmul.f32.gmra.mxu0 %v6303
        %v6367 = vpop.f32.mrf.mxu0
        %v6368 = vadd.f32 %v6300, %v6367
        %6369 = vmatmul.f32.gmra.mxu0 %v6306
        %v6370 = vpop.f32.mrf.mxu0
        %v6371 = vadd.f32 %v6300, %v6370
        %6372 = vmatmul.f32.gmra.mxu0 %v6309
        %v6373 = vpop.f32.mrf.mxu0
        %v6374 = vadd.f32 %v6300, %v6373
        %6375 = vmatmul.f32.gmra.mxu0 %v6312
        %v6376 = vpop.f32.mrf.mxu0
        %v6377 = vadd.f32 %v6300, %v6376
        %6378 = vmatmul.f32.gmra.mxu0 %v6315
        %v6379 = vpop.f32.mrf.mxu0
        %v6380 = vadd.f32 %v6300, %v6379
        %6381 = vmatmul.f32.gmra.mxu0 %v6318
        %v6382 = vpop.f32.mrf.mxu0
        %v6383 = vadd.f32 %v6300, %v6382
        %6384 = vmatmul.f32.gmra.mxu0 %v6321
        %v6385 = vpop.f32.mrf.mxu0
        %v6386 = vadd.f32 %v6300, %v6385
        %6387 = vmatmul.f32.gmra.mxu0 %v6324
        %v6388 = vpop.f32.mrf.mxu0
        %v6389 = vadd.f32 %v6300, %v6388
        %6390 = vmatmul.f32.gmra.mxu0 %v6327
        %v6391 = vpop.f32.mrf.mxu0
        %v6392 = vadd.f32 %v6300, %v6391
        %6393 = vmatmul.f32.gmra.mxu0 %v6330
        %v6394 = vpop.f32.mrf.mxu0
        %v6395 = vadd.f32 %v6300, %v6394
        %6396 = vmatmul.f32.gmra.mxu0 %v6333
        %v6397 = vpop.f32.mrf.mxu0
        %v6398 = vadd.f32 %v6300, %v6397
        %6399 = vmatmul.f32.gmra.mxu0 %v6336
        %v6400 = vpop.f32.mrf.mxu0
        %v6401 = vadd.f32 %v6300, %v6400
        %6402 = vmatmul.f32.gmra.mxu0 %v6339
        %v6403 = vpop.f32.mrf.mxu0
        %v6404 = vadd.f32 %v6300, %v6403
        %6405 = vmatmul.f32.gmra.mxu0 %v6342
        %v6406 = vpop.f32.mrf.mxu0
        %v6407 = vadd.f32 %v6300, %v6406
        %6408 = vmatmul.f32.gmra.mxu0 %v6345
        %v6409 = vpop.f32.mrf.mxu0
        %v6410 = vadd.f32 %v6300, %v6409
        %6411 = vmatmul.f32.gmra.mxu0 %v6348
        %v6412 = vpop.f32.mrf.mxu0
        %v6413 = vadd.f32 %v6300, %v6412
        %6414 = vdwg.mxu0
        %v6415 = vtanh.pop %v6368
        %v6416 = vtanh.pop %v6371
        %v6417 = vtanh.pop %v6374
        %v6418 = vtanh.pop %v6377
        %v6419 = vtanh.pop %v6380
        %v6420 = vtanh.pop %v6383
        %v6421 = vtanh.pop %v6386
        %v6422 = vtanh.pop %v6389
        %v6423 = vtanh.pop %v6392
        %v6424 = vtanh.pop %v6395
        %v6425 = vtanh.pop %v6398
        %v6426 = vtanh.pop %v6401
        %v6427 = vtanh.pop %v6404
        %v6428 = vtanh.pop %v6407
        %v6429 = vtanh.pop %v6410
        %v6430 = vtanh.pop %v6413
        %v6431 = vmul.f32 %v6415, 1.442695
        %v6432 = vpow.pop %v6431
        %v6433 = vmul.f32 %v6416, 1.442695
        %v6434 = vpow.pop %v6433
        %v6435 = vmul.f32 %v6417, 1.442695
        %v6436 = vpow.pop %v6435
        %v6437 = vmul.f32 %v6418, 1.442695
        %v6438 = vpow.pop %v6437
        %v6439 = vmul.f32 %v6419, 1.442695
        %v6440 = vpow.pop %v6439
        %v6441 = vmul.f32 %v6420, 1.442695
        %v6442 = vpow.pop %v6441
        %v6443 = vmul.f32 %v6421, 1.442695
        %v6444 = vpow.pop %v6443
        %v6445 = vmul.f32 %v6422, 1.442695
        %v6446 = vpow.pop %v6445
        %v6447 = vmul.f32 %v6423, 1.442695
        %v6448 = vpow.pop %v6447
        %v6449 = vmul.f32 %v6424, 1.442695
        %v6450 = vpow.pop %v6449
        %v6451 = vmul.f32 %v6425, 1.442695
        %v6452 = vpow.pop %v6451
        %v6453 = vmul.f32 %v6426, 1.442695
        %v6454 = vpow.pop %v6453
        %v6455 = vmul.f32 %v6427, 1.442695
        %v6456 = vpow.pop %v6455
        %v6457 = vmul.f32 %v6428, 1.442695
        %v6458 = vpow.pop %v6457
        %v6459 = vmul.f32 %v6429, 1.442695
        %v6460 = vpow.pop %v6459
        %v6461 = vmul.f32 %v6430, 1.442695
        %v6462 = vpow.pop %v6461
        %6479 = vrot.lane.b32.xlu0 %v6432, 5
        %v6480 = vpop.permute.xlu0 %6479
        %6481 = vrot.lane.b32.xlu0 %v6434, 5
        %v6482 = vpop.permute.xlu0 %6481
        %6483 = vrot.lane.b32.xlu0 %v6436, 5
        %v6484 = vpop.permute.xlu0 %6483
        %6485 = vrot.lane.b32.xlu0 %v6438, 5
        %v6486 = vpop.permute.xlu0 %6485
        %6487 = vrot.lane.b32.xlu0 %v6440, 5
        %v6488 = vpop.permute.xlu0 %6487
        %6489 = vrot.lane.b32.xlu0 %v6442, 5
        %v6490 = vpop.permute.xlu0 %6489
        %6491 = vrot.lane.b32.xlu0 %v6444, 5
        %v6492 = vpop.permute.xlu0 %6491
        %6493 = vrot.lane.b32.xlu0 %v6446, 5
        %v6494 = vpop.permute.xlu0 %6493
        %6495 = vrot.lane.b32.xlu0 %v6448, 5
        %v6496 = vpop.permute.xlu0 %6495
        %6497 = vrot.lane.b32.xlu0 %v6450, 5
        %v6498 = vpop.permute.xlu0 %6497
        %6499 = vrot.lane.b32.xlu0 %v6452, 5
        %v6500 = vpop.permute.xlu0 %6499
        %6501 = vrot.lane.b32.xlu0 %v6454, 5
        %v6502 = vpop.permute.xlu0 %6501
        %6503 = vrot.lane.b32.xlu0 %v6456, 5
        %v6504 = vpop.permute.xlu0 %6503
        %6505 = vrot.lane.b32.xlu0 %v6458, 5
        %v6506 = vpop.permute.xlu0 %6505
        %6507 = vrot.lane.b32.xlu0 %v6460, 5
        %v6508 = vpop.permute.xlu0 %6507
        %6509 = vrot.lane.b32.xlu0 %v6462, 5
        %v6510 = vpop.permute.xlu0 %6509
        %v6527 = vmul.f32 %v5756, %v6480
        %v6528 = vmul.f32 %v5757, %v6482
        %v6529 = vmul.f32 %v5758, %v6484
        %v6530 = vmul.f32 %v5759, %v6486
        %v6531 = vmul.f32 %v5760, %v6488
        %v6532 = vmul.f32 %v5761, %v6490
        %v6533 = vmul.f32 %v5762, %v6492
        %v6534 = vmul.f32 %v5763, %v6494
        %v6535 = vmul.f32 %v5764, %v6496
        %v6536 = vmul.f32 %v5765, %v6498
        %v6537 = vmul.f32 %v5766, %v6500
        %v6538 = vmul.f32 %v5767, %v6502
        %v6539 = vmul.f32 %v5768, %v6504
        %v6540 = vmul.f32 %v5769, %v6506
        %v6541 = vmul.f32 %v5770, %v6508
        %v6542 = vmul.f32 %v5771, %v6510
        %v6543 = vadd.f32 %v6527, %v6368
        %v6544 = vadd.f32 %v6528, %v6371
        %v6545 = vadd.f32 %v6529, %v6374
        %v6546 = vadd.f32 %v6530, %v6377
        %v6547 = vadd.f32 %v6531, %v6380
        %v6548 = vadd.f32 %v6532, %v6383
        %v6549 = vadd.f32 %v6533, %v6386
        %v6550 = vadd.f32 %v6534, %v6389
        %v6551 = vadd.f32 %v6535, %v6392
        %v6552 = vadd.f32 %v6536, %v6395
        %v6553 = vadd.f32 %v6537, %v6398
        %v6554 = vadd.f32 %v6538, %v6401
        %v6555 = vadd.f32 %v6539, %v6404
        %v6556 = vadd.f32 %v6540, %v6407
        %v6557 = vadd.f32 %v6541, %v6410
        %v6558 = vadd.f32 %v6542, %v6413
        %v6559 = vsel %vm1802, %v6415, 0.0
        %6560 = vadd.xlane.f32.xlu0 %v6559
        %v6561 = vpop.xlane.xlu0 %6560
        %v6562 = vsel %vm1802, %v6416, 0.0
        %6563 = vadd.xlane.f32.xlu0 %v6562
        %v6564 = vpop.xlane.xlu0 %6563
        %v6565 = vsel %vm1802, %v6417, 0.0
        %6566 = vadd.xlane.f32.xlu0 %v6565
        %v6567 = vpop.xlane.xlu0 %6566
        %v6568 = vsel %vm1802, %v6418, 0.0
        %6569 = vadd.xlane.f32.xlu0 %v6568
        %v6570 = vpop.xlane.xlu0 %6569
        %v6571 = vsel %vm1802, %v6419, 0.0
        %6572 = vadd.xlane.f32.xlu0 %v6571
        %v6573 = vpop.xlane.xlu0 %6572
        %v6574 = vsel %vm1802, %v6420, 0.0
        %6575 = vadd.xlane.f32.xlu0 %v6574
        %v6576 = vpop.xlane.xlu0 %6575
        %v6577 = vsel %vm1802, %v6421, 0.0
        %6578 = vadd.xlane.f32.xlu0 %v6577
        %v6579 = vpop.xlane.xlu0 %6578
        %v6580 = vsel %vm1802, %v6422, 0.0
        %6581 = vadd.xlane.f32.xlu0 %v6580
        %v6582 = vpop.xlane.xlu0 %6581
        %v6583 = vsel %vm1802, %v6423, 0.0
        %6584 = vadd.xlane.f32.xlu0 %v6583
        %v6585 = vpop.xlane.xlu0 %6584
        %v6586 = vsel %vm1802, %v6424, 0.0
        %6587 = vadd.xlane.f32.xlu0 %v6586
        %v6588 = vpop.xlane.xlu0 %6587
        %v6589 = vsel %vm1802, %v6425, 0.0
        %6590 = vadd.xlane.f32.xlu0 %v6589
        %v6591 = vpop.xlane.xlu0 %6590
        %v6592 = vsel %vm1802, %v6426, 0.0
        %6593 = vadd.xlane.f32.xlu0 %v6592
        %v6594 = vpop.xlane.xlu0 %6593
        %v6595 = vsel %vm1802, %v6427, 0.0
        %6596 = vadd.xlane.f32.xlu0 %v6595
        %v6597 = vpop.xlane.xlu0 %6596
        %v6598 = vsel %vm1802, %v6428, 0.0
        %6599 = vadd.xlane.f32.xlu0 %v6598
        %v6600 = vpop.xlane.xlu0 %6599
        %v6601 = vsel %vm1802, %v6429, 0.0
        %6602 = vadd.xlane.f32.xlu0 %v6601
        %v6603 = vpop.xlane.xlu0 %6602
        %v6604 = vsel %vm1802, %v6430, 0.0
        %6605 = vadd.xlane.f32.xlu0 %v6604
        %v6606 = vpop.xlane.xlu0 %6605
        %v6607 = vadd.f32 %v5568, %v6561
        %v6608 = vadd.f32 %v5569, %v6564
        %v6609 = vadd.f32 %v5570, %v6567
        %v6610 = vadd.f32 %v5571, %v6570
        %v6611 = vadd.f32 %v5572, %v6573
        %v6612 = vadd.f32 %v5573, %v6576
        %v6613 = vadd.f32 %v5574, %v6579
        %v6614 = vadd.f32 %v5575, %v6582
        %v6615 = vadd.f32 %v5576, %v6585
        %v6616 = vadd.f32 %v5577, %v6588
        %v6617 = vadd.f32 %v5578, %v6591
        %v6618 = vadd.f32 %v5579, %v6594
        %v6619 = vadd.f32 %v5580, %v6597
        %v6620 = vadd.f32 %v5581, %v6600
        %v6621 = vadd.f32 %v5582, %v6603
        %v6622 = vadd.f32 %v5583, %v6606
        %s6623 = scalar_lea.vmem %s7, 40
        %v6624 = vld [vmem:[%s6623] sm:$0x1f]
        %6641 = vrot.lane.b32.xlu0 %v6543, 123
        %v6642 = vpop.permute.xlu0 %6641
        %6643 = vrot.lane.b32.xlu0 %v6544, 123
        %v6644 = vpop.permute.xlu0 %6643
        %6645 = vrot.lane.b32.xlu0 %v6545, 123
        %v6646 = vpop.permute.xlu0 %6645
        %6647 = vrot.lane.b32.xlu0 %v6546, 123
        %v6648 = vpop.permute.xlu0 %6647
        %6649 = vrot.lane.b32.xlu0 %v6547, 123
        %v6650 = vpop.permute.xlu0 %6649
        %6651 = vrot.lane.b32.xlu0 %v6548, 123
        %v6652 = vpop.permute.xlu0 %6651
        %6653 = vrot.lane.b32.xlu0 %v6549, 123
        %v6654 = vpop.permute.xlu0 %6653
        %6655 = vrot.lane.b32.xlu0 %v6550, 123
        %v6656 = vpop.permute.xlu0 %6655
        %6657 = vrot.lane.b32.xlu0 %v6551, 123
        %v6658 = vpop.permute.xlu0 %6657
        %6659 = vrot.lane.b32.xlu0 %v6552, 123
        %v6660 = vpop.permute.xlu0 %6659
        %6661 = vrot.lane.b32.xlu0 %v6553, 123
        %v6662 = vpop.permute.xlu0 %6661
        %6663 = vrot.lane.b32.xlu0 %v6554, 123
        %v6664 = vpop.permute.xlu0 %6663
        %6665 = vrot.lane.b32.xlu0 %v6555, 123
        %v6666 = vpop.permute.xlu0 %6665
        %6667 = vrot.lane.b32.xlu0 %v6556, 123
        %v6668 = vpop.permute.xlu0 %6667
        %6669 = vrot.lane.b32.xlu0 %v6557, 123
        %v6670 = vpop.permute.xlu0 %6669
        %6671 = vrot.lane.b32.xlu0 %v6558, 123
        %v6672 = vpop.permute.xlu0 %6671
        %6689 = vrot.lane.b32.xlu0 %v1579, 64
        %v6690 = vpop.permute.xlu0 %6689
        %6691 = vrot.lane.b32.xlu0 %v1582, 64
        %v6692 = vpop.permute.xlu0 %6691
        %6693 = vrot.lane.b32.xlu0 %v1585, 64
        %v6694 = vpop.permute.xlu0 %6693
        %6695 = vrot.lane.b32.xlu0 %v1588, 64
        %v6696 = vpop.permute.xlu0 %6695
        %6697 = vrot.lane.b32.xlu0 %v1591, 64
        %v6698 = vpop.permute.xlu0 %6697
        %6699 = vrot.lane.b32.xlu0 %v1594, 64
        %v6700 = vpop.permute.xlu0 %6699
        %6701 = vrot.lane.b32.xlu0 %v1597, 64
        %v6702 = vpop.permute.xlu0 %6701
        %6703 = vrot.lane.b32.xlu0 %v1600, 64
        %v6704 = vpop.permute.xlu0 %6703
        %6705 = vrot.lane.b32.xlu0 %v1603, 64
        %v6706 = vpop.permute.xlu0 %6705
        %6707 = vrot.lane.b32.xlu0 %v1606, 64
        %v6708 = vpop.permute.xlu0 %6707
        %6709 = vrot.lane.b32.xlu0 %v1609, 64
        %v6710 = vpop.permute.xlu0 %6709
        %6711 = vrot.lane.b32.xlu0 %v1612, 64
        %v6712 = vpop.permute.xlu0 %6711
        %6713 = vrot.lane.b32.xlu0 %v1615, 64
        %v6714 = vpop.permute.xlu0 %6713
        %6715 = vrot.lane.b32.xlu0 %v1618, 64
        %v6716 = vpop.permute.xlu0 %6715
        %6717 = vrot.lane.b32.xlu0 %v1621, 64
        %v6718 = vpop.permute.xlu0 %6717
        %6719 = vrot.lane.b32.xlu0 %v1624, 64
        %v6720 = vpop.permute.xlu0 %6719
        %v6737 = vsel %vm1802, %v6642, 0
        %v6739 = vsel %vm1802, %v6644, 0
        %v6741 = vsel %vm1802, %v6646, 0
        %v6743 = vsel %vm1802, %v6648, 0
        %v6745 = vsel %vm1802, %v6650, 0
        %v6747 = vsel %vm1802, %v6652, 0
        %v6749 = vsel %vm1802, %v6654, 0
        %v6751 = vsel %vm1802, %v6656, 0
        %v6753 = vsel %vm1802, %v6658, 0
        %v6755 = vsel %vm1802, %v6660, 0
        %v6757 = vsel %vm1802, %v6662, 0
        %v6759 = vsel %vm1802, %v6664, 0
        %v6761 = vsel %vm1802, %v6666, 0
        %v6763 = vsel %vm1802, %v6668, 0
        %v6765 = vsel %vm1802, %v6670, 0
        %v6767 = vsel %vm1802, %v6672, 0
        %v6770 = vsel %vm1851, %v6624, 0
        %6772 = vmatpush.msra.mxu0 0.0
        %6773 = vmatpush.msra.mxu0 0.0
        %6774 = vmatpush.msra.mxu0 0.0
        %6775 = vmatpush.msra.mxu0 0.0
        %6776 = vmatpush.msra.mxu0 0.0
        %6777 = vmatpush.msra.mxu0 0.0
        %6778 = vmatpush.msra.mxu0 0.0
        %6779 = vmatpush.msra.mxu0 0.0
        %6780 = vmatpush.msra.mxu0 0.0
        %6781 = vmatpush.msra.mxu0 0.0
        %6782 = vmatpush.msra.mxu0 0.0
        %6783 = vmatpush.msra.mxu0 0.0
        %6784 = vmatpush.msra.mxu0 0.0
        %6785 = vmatpush.msra.mxu0 0.0
        %6786 = vmatpush.msra.mxu0 0.0
        %6787 = vmatpush.msra.mxu0 %v6770
        %6788 = vmatmul.f32.gmra.mxu0 %v6737
        %v6789 = vpop.f32.mrf.mxu0
        %v6790 = vadd.f32 %v6690, %v6789
        %6791 = vmatmul.f32.gmra.mxu0 %v6739
        %v6792 = vpop.f32.mrf.mxu0
        %v6793 = vadd.f32 %v6692, %v6792
        %6794 = vmatmul.f32.gmra.mxu0 %v6741
        %v6795 = vpop.f32.mrf.mxu0
        %v6796 = vadd.f32 %v6694, %v6795
        %6797 = vmatmul.f32.gmra.mxu0 %v6743
        %v6798 = vpop.f32.mrf.mxu0
        %v6799 = vadd.f32 %v6696, %v6798
        %6800 = vmatmul.f32.gmra.mxu0 %v6745
        %v6801 = vpop.f32.mrf.mxu0
        %v6802 = vadd.f32 %v6698, %v6801
        %6803 = vmatmul.f32.gmra.mxu0 %v6747
        %v6804 = vpop.f32.mrf.mxu0
        %v6805 = vadd.f32 %v6700, %v6804
        %6806 = vmatmul.f32.gmra.mxu0 %v6749
        %v6807 = vpop.f32.mrf.mxu0
        %v6808 = vadd.f32 %v6702, %v6807
        %6809 = vmatmul.f32.gmra.mxu0 %v6751
        %v6810 = vpop.f32.mrf.mxu0
        %v6811 = vadd.f32 %v6704, %v6810
        %6812 = vmatmul.f32.gmra.mxu0 %v6753
        %v6813 = vpop.f32.mrf.mxu0
        %v6814 = vadd.f32 %v6706, %v6813
        %6815 = vmatmul.f32.gmra.mxu0 %v6755
        %v6816 = vpop.f32.mrf.mxu0
        %v6817 = vadd.f32 %v6708, %v6816
        %6818 = vmatmul.f32.gmra.mxu0 %v6757
        %v6819 = vpop.f32.mrf.mxu0
        %v6820 = vadd.f32 %v6710, %v6819
        %6821 = vmatmul.f32.gmra.mxu0 %v6759
        %v6822 = vpop.f32.mrf.mxu0
        %v6823 = vadd.f32 %v6712, %v6822
        %6824 = vmatmul.f32.gmra.mxu0 %v6761
        %v6825 = vpop.f32.mrf.mxu0
        %v6826 = vadd.f32 %v6714, %v6825
        %6827 = vmatmul.f32.gmra.mxu0 %v6763
        %v6828 = vpop.f32.mrf.mxu0
        %v6829 = vadd.f32 %v6716, %v6828
        %6830 = vmatmul.f32.gmra.mxu0 %v6765
        %v6831 = vpop.f32.mrf.mxu0
        %v6832 = vadd.f32 %v6718, %v6831
        %6833 = vmatmul.f32.gmra.mxu0 %v6767
        %v6834 = vpop.f32.mrf.mxu0
        %v6835 = vadd.f32 %v6720, %v6834
        %6836 = vdwg.mxu0
        %vm6837 = vcmp.ge.f32.partialorder %v6790, 0.0
        %vm6838 = vcmp.ge.f32.partialorder %v6793, 0.0
        %vm6839 = vcmp.ge.f32.partialorder %v6796, 0.0
        %vm6840 = vcmp.ge.f32.partialorder %v6799, 0.0
        %vm6841 = vcmp.ge.f32.partialorder %v6802, 0.0
        %vm6842 = vcmp.ge.f32.partialorder %v6805, 0.0
        %vm6843 = vcmp.ge.f32.partialorder %v6808, 0.0
        %vm6844 = vcmp.ge.f32.partialorder %v6811, 0.0
        %vm6845 = vcmp.ge.f32.partialorder %v6814, 0.0
        %vm6846 = vcmp.ge.f32.partialorder %v6817, 0.0
        %vm6847 = vcmp.ge.f32.partialorder %v6820, 0.0
        %vm6848 = vcmp.ge.f32.partialorder %v6823, 0.0
        %vm6849 = vcmp.ge.f32.partialorder %v6826, 0.0
        %vm6850 = vcmp.ge.f32.partialorder %v6829, 0.0
        %vm6851 = vcmp.ge.f32.partialorder %v6832, 0.0
        %vm6852 = vcmp.ge.f32.partialorder %v6835, 0.0
        %v6853 = vmul.f32 %v6790, 0.01
        %v6854 = vmul.f32 %v6793, 0.01
        %v6855 = vmul.f32 %v6796, 0.01
        %v6856 = vmul.f32 %v6799, 0.01
        %v6857 = vmul.f32 %v6802, 0.01
        %v6858 = vmul.f32 %v6805, 0.01
        %v6859 = vmul.f32 %v6808, 0.01
        %v6860 = vmul.f32 %v6811, 0.01
        %v6861 = vmul.f32 %v6814, 0.01
        %v6862 = vmul.f32 %v6817, 0.01
        %v6863 = vmul.f32 %v6820, 0.01
        %v6864 = vmul.f32 %v6823, 0.01
        %v6865 = vmul.f32 %v6826, 0.01
        %v6866 = vmul.f32 %v6829, 0.01
        %v6867 = vmul.f32 %v6832, 0.01
        %v6868 = vmul.f32 %v6835, 0.01
        %v6869 = vsel %vm6837, %v6790, %v6853
        %v6870 = vsel %vm6838, %v6793, %v6854
        %v6871 = vsel %vm6839, %v6796, %v6855
        %v6872 = vsel %vm6840, %v6799, %v6856
        %v6873 = vsel %vm6841, %v6802, %v6857
        %v6874 = vsel %vm6842, %v6805, %v6858
        %v6875 = vsel %vm6843, %v6808, %v6859
        %v6876 = vsel %vm6844, %v6811, %v6860
        %v6877 = vsel %vm6845, %v6814, %v6861
        %v6878 = vsel %vm6846, %v6817, %v6862
        %v6879 = vsel %vm6847, %v6820, %v6863
        %v6880 = vsel %vm6848, %v6823, %v6864
        %v6881 = vsel %vm6849, %v6826, %v6865
        %v6882 = vsel %vm6850, %v6829, %v6866
        %v6883 = vsel %vm6851, %v6832, %v6867
        %v6884 = vsel %vm6852, %v6835, %v6868
        %s6885 = scalar_lea.vmem %s8, 640
        %v6886 = vld [vmem:[%s6885] sm:$0xff]
        %v6887 = vld [vmem:[%s6885 + $0x8] sm:$0xff]
        %v6888 = vld [vmem:[%s6885 + $0x10] sm:$0xff]
        %v6889 = vld [vmem:[%s6885 + $0x18] sm:$0xff]
        %v6890 = vld [vmem:[%s6885 + $0x20] sm:$0xff]
        %v6891 = vld [vmem:[%s6885 + $0x28] sm:$0xff]
        %v6892 = vld [vmem:[%s6885 + $0x30] sm:$0xff]
        %v6893 = vld [vmem:[%s6885 + $0x38] sm:$0xff]
        %s6894 = scalar_lea.vmem %s9, 15
        %v6895 = vld [vmem:[%s6894] sm:$0x1]
        %v6897 = vperm.slane %v6895, 0
        %v6900 = vsel %vm1980, %v6869, 0
        %v6903 = vsel %vm1980, %v6870, 0
        %v6906 = vsel %vm1980, %v6871, 0
        %v6909 = vsel %vm1980, %v6872, 0
        %v6912 = vsel %vm1980, %v6873, 0
        %v6915 = vsel %vm1980, %v6874, 0
        %v6918 = vsel %vm1980, %v6875, 0
        %v6921 = vsel %vm1980, %v6876, 0
        %v6924 = vsel %vm1980, %v6877, 0
        %v6927 = vsel %vm1980, %v6878, 0
        %v6930 = vsel %vm1980, %v6879, 0
        %v6933 = vsel %vm1980, %v6880, 0
        %v6936 = vsel %vm1980, %v6881, 0
        %v6939 = vsel %vm1980, %v6882, 0
        %v6942 = vsel %vm1980, %v6883, 0
        %v6945 = vsel %vm1980, %v6884, 0
        %6947 = vmatpush.msra.mxu0 0.0
        %6948 = vmatpush.msra.mxu0 0.0
        %6949 = vmatpush.msra.mxu0 0.0
        %6950 = vmatpush.msra.mxu0 0.0
        %6951 = vmatpush.msra.mxu0 0.0
        %6952 = vmatpush.msra.mxu0 0.0
        %6953 = vmatpush.msra.mxu0 0.0
        %6954 = vmatpush.msra.mxu0 0.0
        %6955 = vmatpush.msra.mxu0 %v6893
        %6956 = vmatpush.msra.mxu0 %v6892
        %6957 = vmatpush.msra.mxu0 %v6891
        %6958 = vmatpush.msra.mxu0 %v6890
        %6959 = vmatpush.msra.mxu0 %v6889
        %6960 = vmatpush.msra.mxu0 %v6888
        %6961 = vmatpush.msra.mxu0 %v6887
        %6962 = vmatpush.msra.mxu0 %v6886
        %6963 = vmatmul.f32.gmra.mxu0 %v6900
        %v6964 = vpop.f32.mrf.mxu0
        %v6965 = vadd.f32 %v6897, %v6964
        %6966 = vmatmul.f32.gmra.mxu0 %v6903
        %v6967 = vpop.f32.mrf.mxu0
        %v6968 = vadd.f32 %v6897, %v6967
        %6969 = vmatmul.f32.gmra.mxu0 %v6906
        %v6970 = vpop.f32.mrf.mxu0
        %v6971 = vadd.f32 %v6897, %v6970
        %6972 = vmatmul.f32.gmra.mxu0 %v6909
        %v6973 = vpop.f32.mrf.mxu0
        %v6974 = vadd.f32 %v6897, %v6973
        %6975 = vmatmul.f32.gmra.mxu0 %v6912
        %v6976 = vpop.f32.mrf.mxu0
        %v6977 = vadd.f32 %v6897, %v6976
        %6978 = vmatmul.f32.gmra.mxu0 %v6915
        %v6979 = vpop.f32.mrf.mxu0
        %v6980 = vadd.f32 %v6897, %v6979
        %6981 = vmatmul.f32.gmra.mxu0 %v6918
        %v6982 = vpop.f32.mrf.mxu0
        %v6983 = vadd.f32 %v6897, %v6982
        %6984 = vmatmul.f32.gmra.mxu0 %v6921
        %v6985 = vpop.f32.mrf.mxu0
        %v6986 = vadd.f32 %v6897, %v6985
        %6987 = vmatmul.f32.gmra.mxu0 %v6924
        %v6988 = vpop.f32.mrf.mxu0
        %v6989 = vadd.f32 %v6897, %v6988
        %6990 = vmatmul.f32.gmra.mxu0 %v6927
        %v6991 = vpop.f32.mrf.mxu0
        %v6992 = vadd.f32 %v6897, %v6991
        %6993 = vmatmul.f32.gmra.mxu0 %v6930
        %v6994 = vpop.f32.mrf.mxu0
        %v6995 = vadd.f32 %v6897, %v6994
        %6996 = vmatmul.f32.gmra.mxu0 %v6933
        %v6997 = vpop.f32.mrf.mxu0
        %v6998 = vadd.f32 %v6897, %v6997
        %6999 = vmatmul.f32.gmra.mxu0 %v6936
        %v7000 = vpop.f32.mrf.mxu0
        %v7001 = vadd.f32 %v6897, %v7000
        %7002 = vmatmul.f32.gmra.mxu0 %v6939
        %v7003 = vpop.f32.mrf.mxu0
        %v7004 = vadd.f32 %v6897, %v7003
        %7005 = vmatmul.f32.gmra.mxu0 %v6942
        %v7006 = vpop.f32.mrf.mxu0
        %v7007 = vadd.f32 %v6897, %v7006
        %7008 = vmatmul.f32.gmra.mxu0 %v6945
        %v7009 = vpop.f32.mrf.mxu0
        %v7010 = vadd.f32 %v6897, %v7009
        %7011 = vdwg.mxu0
        %vm7012 = vcmp.ge.f32.partialorder %v6965, 0.0
        %vm7013 = vcmp.ge.f32.partialorder %v6968, 0.0
        %vm7014 = vcmp.ge.f32.partialorder %v6971, 0.0
        %vm7015 = vcmp.ge.f32.partialorder %v6974, 0.0
        %vm7016 = vcmp.ge.f32.partialorder %v6977, 0.0
        %vm7017 = vcmp.ge.f32.partialorder %v6980, 0.0
        %vm7018 = vcmp.ge.f32.partialorder %v6983, 0.0
        %vm7019 = vcmp.ge.f32.partialorder %v6986, 0.0
        %vm7020 = vcmp.ge.f32.partialorder %v6989, 0.0
        %vm7021 = vcmp.ge.f32.partialorder %v6992, 0.0
        %vm7022 = vcmp.ge.f32.partialorder %v6995, 0.0
        %vm7023 = vcmp.ge.f32.partialorder %v6998, 0.0
        %vm7024 = vcmp.ge.f32.partialorder %v7001, 0.0
        %vm7025 = vcmp.ge.f32.partialorder %v7004, 0.0
        %vm7026 = vcmp.ge.f32.partialorder %v7007, 0.0
        %vm7027 = vcmp.ge.f32.partialorder %v7010, 0.0
        %v7028 = vmul.f32 %v6965, 0.01
        %v7029 = vmul.f32 %v6968, 0.01
        %v7030 = vmul.f32 %v6971, 0.01
        %v7031 = vmul.f32 %v6974, 0.01
        %v7032 = vmul.f32 %v6977, 0.01
        %v7033 = vmul.f32 %v6980, 0.01
        %v7034 = vmul.f32 %v6983, 0.01
        %v7035 = vmul.f32 %v6986, 0.01
        %v7036 = vmul.f32 %v6989, 0.01
        %v7037 = vmul.f32 %v6992, 0.01
        %v7038 = vmul.f32 %v6995, 0.01
        %v7039 = vmul.f32 %v6998, 0.01
        %v7040 = vmul.f32 %v7001, 0.01
        %v7041 = vmul.f32 %v7004, 0.01
        %v7042 = vmul.f32 %v7007, 0.01
        %v7043 = vmul.f32 %v7010, 0.01
        %v7044 = vsel %vm7012, %v6965, %v7028
        %v7045 = vsel %vm7013, %v6968, %v7029
        %v7046 = vsel %vm7014, %v6971, %v7030
        %v7047 = vsel %vm7015, %v6974, %v7031
        %v7048 = vsel %vm7016, %v6977, %v7032
        %v7049 = vsel %vm7017, %v6980, %v7033
        %v7050 = vsel %vm7018, %v6983, %v7034
        %v7051 = vsel %vm7019, %v6986, %v7035
        %v7052 = vsel %vm7020, %v6989, %v7036
        %v7053 = vsel %vm7021, %v6992, %v7037
        %v7054 = vsel %vm7022, %v6995, %v7038
        %v7055 = vsel %vm7023, %v6998, %v7039
        %v7056 = vsel %vm7024, %v7001, %v7040
        %v7057 = vsel %vm7025, %v7004, %v7041
        %v7058 = vsel %vm7026, %v7007, %v7042
        %v7059 = vsel %vm7027, %v7010, %v7043
        %s7060 = scalar_lea.vmem %s8, 704
        %v7061 = vld [vmem:[%s7060] sm:$0xff]
        %v7062 = vld [vmem:[%s7060 + $0x8] sm:$0xff]
        %v7063 = vld [vmem:[%s7060 + $0x10] sm:$0xff]
        %v7064 = vld [vmem:[%s7060 + $0x18] sm:$0xff]
        %v7065 = vld [vmem:[%s7060 + $0x20] sm:$0xff]
        %v7066 = vld [vmem:[%s7060 + $0x28] sm:$0xff]
        %v7067 = vld [vmem:[%s7060 + $0x30] sm:$0xff]
        %v7068 = vld [vmem:[%s7060 + $0x38] sm:$0xff]
        %s7069 = scalar_lea.vmem %s9, 16
        %v7070 = vld [vmem:[%s7069] sm:$0x1]
        %v7072 = vperm.slane %v7070, 0
        %v7075 = vsel %vm1980, %v7044, 0
        %v7078 = vsel %vm1980, %v7045, 0
        %v7081 = vsel %vm1980, %v7046, 0
        %v7084 = vsel %vm1980, %v7047, 0
        %v7087 = vsel %vm1980, %v7048, 0
        %v7090 = vsel %vm1980, %v7049, 0
        %v7093 = vsel %vm1980, %v7050, 0
        %v7096 = vsel %vm1980, %v7051, 0
        %v7099 = vsel %vm1980, %v7052, 0
        %v7102 = vsel %vm1980, %v7053, 0
        %v7105 = vsel %vm1980, %v7054, 0
        %v7108 = vsel %vm1980, %v7055, 0
        %v7111 = vsel %vm1980, %v7056, 0
        %v7114 = vsel %vm1980, %v7057, 0
        %v7117 = vsel %vm1980, %v7058, 0
        %v7120 = vsel %vm1980, %v7059, 0
        %7122 = vmatpush.msra.mxu0 0.0
        %7123 = vmatpush.msra.mxu0 0.0
        %7124 = vmatpush.msra.mxu0 0.0
        %7125 = vmatpush.msra.mxu0 0.0
        %7126 = vmatpush.msra.mxu0 0.0
        %7127 = vmatpush.msra.mxu0 0.0
        %7128 = vmatpush.msra.mxu0 0.0
        %7129 = vmatpush.msra.mxu0 0.0
        %7130 = vmatpush.msra.mxu0 %v7068
        %7131 = vmatpush.msra.mxu0 %v7067
        %7132 = vmatpush.msra.mxu0 %v7066
        %7133 = vmatpush.msra.mxu0 %v7065
        %7134 = vmatpush.msra.mxu0 %v7064
        %7135 = vmatpush.msra.mxu0 %v7063
        %7136 = vmatpush.msra.mxu0 %v7062
        %7137 = vmatpush.msra.mxu0 %v7061
        %7138 = vmatmul.f32.gmra.mxu0 %v7075
        %v7139 = vpop.f32.mrf.mxu0
        %v7140 = vadd.f32 %v7072, %v7139
        %7141 = vmatmul.f32.gmra.mxu0 %v7078
        %v7142 = vpop.f32.mrf.mxu0
        %v7143 = vadd.f32 %v7072, %v7142
        %7144 = vmatmul.f32.gmra.mxu0 %v7081
        %v7145 = vpop.f32.mrf.mxu0
        %v7146 = vadd.f32 %v7072, %v7145
        %7147 = vmatmul.f32.gmra.mxu0 %v7084
        %v7148 = vpop.f32.mrf.mxu0
        %v7149 = vadd.f32 %v7072, %v7148
        %7150 = vmatmul.f32.gmra.mxu0 %v7087
        %v7151 = vpop.f32.mrf.mxu0
        %v7152 = vadd.f32 %v7072, %v7151
        %7153 = vmatmul.f32.gmra.mxu0 %v7090
        %v7154 = vpop.f32.mrf.mxu0
        %v7155 = vadd.f32 %v7072, %v7154
        %7156 = vmatmul.f32.gmra.mxu0 %v7093
        %v7157 = vpop.f32.mrf.mxu0
        %v7158 = vadd.f32 %v7072, %v7157
        %7159 = vmatmul.f32.gmra.mxu0 %v7096
        %v7160 = vpop.f32.mrf.mxu0
        %v7161 = vadd.f32 %v7072, %v7160
        %7162 = vmatmul.f32.gmra.mxu0 %v7099
        %v7163 = vpop.f32.mrf.mxu0
        %v7164 = vadd.f32 %v7072, %v7163
        %7165 = vmatmul.f32.gmra.mxu0 %v7102
        %v7166 = vpop.f32.mrf.mxu0
        %v7167 = vadd.f32 %v7072, %v7166
        %7168 = vmatmul.f32.gmra.mxu0 %v7105
        %v7169 = vpop.f32.mrf.mxu0
        %v7170 = vadd.f32 %v7072, %v7169
        %7171 = vmatmul.f32.gmra.mxu0 %v7108
        %v7172 = vpop.f32.mrf.mxu0
        %v7173 = vadd.f32 %v7072, %v7172
        %7174 = vmatmul.f32.gmra.mxu0 %v7111
        %v7175 = vpop.f32.mrf.mxu0
        %v7176 = vadd.f32 %v7072, %v7175
        %7177 = vmatmul.f32.gmra.mxu0 %v7114
        %v7178 = vpop.f32.mrf.mxu0
        %v7179 = vadd.f32 %v7072, %v7178
        %7180 = vmatmul.f32.gmra.mxu0 %v7117
        %v7181 = vpop.f32.mrf.mxu0
        %v7182 = vadd.f32 %v7072, %v7181
        %7183 = vmatmul.f32.gmra.mxu0 %v7120
        %v7184 = vpop.f32.mrf.mxu0
        %v7185 = vadd.f32 %v7072, %v7184
        %7186 = vdwg.mxu0
        %vm7187 = vcmp.ge.f32.partialorder %v7140, 0.0
        %vm7188 = vcmp.ge.f32.partialorder %v7143, 0.0
        %vm7189 = vcmp.ge.f32.partialorder %v7146, 0.0
        %vm7190 = vcmp.ge.f32.partialorder %v7149, 0.0
        %vm7191 = vcmp.ge.f32.partialorder %v7152, 0.0
        %vm7192 = vcmp.ge.f32.partialorder %v7155, 0.0
        %vm7193 = vcmp.ge.f32.partialorder %v7158, 0.0
        %vm7194 = vcmp.ge.f32.partialorder %v7161, 0.0
        %vm7195 = vcmp.ge.f32.partialorder %v7164, 0.0
        %vm7196 = vcmp.ge.f32.partialorder %v7167, 0.0
        %vm7197 = vcmp.ge.f32.partialorder %v7170, 0.0
        %vm7198 = vcmp.ge.f32.partialorder %v7173, 0.0
        %vm7199 = vcmp.ge.f32.partialorder %v7176, 0.0
        %vm7200 = vcmp.ge.f32.partialorder %v7179, 0.0
        %vm7201 = vcmp.ge.f32.partialorder %v7182, 0.0
        %vm7202 = vcmp.ge.f32.partialorder %v7185, 0.0
        %v7203 = vmul.f32 %v7140, 0.01
        %v7204 = vmul.f32 %v7143, 0.01
        %v7205 = vmul.f32 %v7146, 0.01
        %v7206 = vmul.f32 %v7149, 0.01
        %v7207 = vmul.f32 %v7152, 0.01
        %v7208 = vmul.f32 %v7155, 0.01
        %v7209 = vmul.f32 %v7158, 0.01
        %v7210 = vmul.f32 %v7161, 0.01
        %v7211 = vmul.f32 %v7164, 0.01
        %v7212 = vmul.f32 %v7167, 0.01
        %v7213 = vmul.f32 %v7170, 0.01
        %v7214 = vmul.f32 %v7173, 0.01
        %v7215 = vmul.f32 %v7176, 0.01
        %v7216 = vmul.f32 %v7179, 0.01
        %v7217 = vmul.f32 %v7182, 0.01
        %v7218 = vmul.f32 %v7185, 0.01
        %v7219 = vsel %vm7187, %v7140, %v7203
        %v7220 = vsel %vm7188, %v7143, %v7204
        %v7221 = vsel %vm7189, %v7146, %v7205
        %v7222 = vsel %vm7190, %v7149, %v7206
        %v7223 = vsel %vm7191, %v7152, %v7207
        %v7224 = vsel %vm7192, %v7155, %v7208
        %v7225 = vsel %vm7193, %v7158, %v7209
        %v7226 = vsel %vm7194, %v7161, %v7210
        %v7227 = vsel %vm7195, %v7164, %v7211
        %v7228 = vsel %vm7196, %v7167, %v7212
        %v7229 = vsel %vm7197, %v7170, %v7213
        %v7230 = vsel %vm7198, %v7173, %v7214
        %v7231 = vsel %vm7199, %v7176, %v7215
        %v7232 = vsel %vm7200, %v7179, %v7216
        %v7233 = vsel %vm7201, %v7182, %v7217
        %v7234 = vsel %vm7202, %v7185, %v7218
        %s7235 = scalar_lea.vmem [#allocation5], 320
        %v7236 = vld [vmem:[%s7235] sm:$0xff]
        %v7237 = vld [vmem:[%s7235 + $0x8] sm:$0xff]
        %v7238 = vld [vmem:[%s7235 + $0x10] sm:$0xff]
        %v7239 = vld [vmem:[%s7235 + $0x18] sm:$0xff]
        %v7240 = vld [vmem:[%s7235 + $0x20] sm:$0xff]
        %v7241 = vld [vmem:[%s7235 + $0x28] sm:$0xff]
        %v7242 = vld [vmem:[%s7235 + $0x30] sm:$0xff]
        %v7243 = vld [vmem:[%s7235 + $0x38] sm:$0xff]
        %s7244 = scalar_lea.vmem %s9, 17
        %v7245 = vld [vmem:[%s7244] sm:$0x1]
        %v7247 = vperm.slane %v7245, 0
        %v7250 = vsel %vm1980, %v7219, 0
        %v7253 = vsel %vm1980, %v7220, 0
        %v7256 = vsel %vm1980, %v7221, 0
        %v7259 = vsel %vm1980, %v7222, 0
        %v7262 = vsel %vm1980, %v7223, 0
        %v7265 = vsel %vm1980, %v7224, 0
        %v7268 = vsel %vm1980, %v7225, 0
        %v7271 = vsel %vm1980, %v7226, 0
        %v7274 = vsel %vm1980, %v7227, 0
        %v7277 = vsel %vm1980, %v7228, 0
        %v7280 = vsel %vm1980, %v7229, 0
        %v7283 = vsel %vm1980, %v7230, 0
        %v7286 = vsel %vm1980, %v7231, 0
        %v7289 = vsel %vm1980, %v7232, 0
        %v7292 = vsel %vm1980, %v7233, 0
        %v7295 = vsel %vm1980, %v7234, 0
        %7297 = vmatpush.msra.mxu0 0.0
        %7298 = vmatpush.msra.mxu0 0.0
        %7299 = vmatpush.msra.mxu0 0.0
        %7300 = vmatpush.msra.mxu0 0.0
        %7301 = vmatpush.msra.mxu0 0.0
        %7302 = vmatpush.msra.mxu0 0.0
        %7303 = vmatpush.msra.mxu0 0.0
        %7304 = vmatpush.msra.mxu0 0.0
        %7305 = vmatpush.msra.mxu0 %v7243
        %7306 = vmatpush.msra.mxu0 %v7242
        %7307 = vmatpush.msra.mxu0 %v7241
        %7308 = vmatpush.msra.mxu0 %v7240
        %7309 = vmatpush.msra.mxu0 %v7239
        %7310 = vmatpush.msra.mxu0 %v7238
        %7311 = vmatpush.msra.mxu0 %v7237
        %7312 = vmatpush.msra.mxu0 %v7236
        %7313 = vmatmul.f32.gmra.mxu0 %v7250
        %v7314 = vpop.f32.mrf.mxu0
        %v7315 = vadd.f32 %v7247, %v7314
        %7316 = vmatmul.f32.gmra.mxu0 %v7253
        %v7317 = vpop.f32.mrf.mxu0
        %v7318 = vadd.f32 %v7247, %v7317
        %7319 = vmatmul.f32.gmra.mxu0 %v7256
        %v7320 = vpop.f32.mrf.mxu0
        %v7321 = vadd.f32 %v7247, %v7320
        %7322 = vmatmul.f32.gmra.mxu0 %v7259
        %v7323 = vpop.f32.mrf.mxu0
        %v7324 = vadd.f32 %v7247, %v7323
        %7325 = vmatmul.f32.gmra.mxu0 %v7262
        %v7326 = vpop.f32.mrf.mxu0
        %v7327 = vadd.f32 %v7247, %v7326
        %7328 = vmatmul.f32.gmra.mxu0 %v7265
        %v7329 = vpop.f32.mrf.mxu0
        %v7330 = vadd.f32 %v7247, %v7329
        %7331 = vmatmul.f32.gmra.mxu0 %v7268
        %v7332 = vpop.f32.mrf.mxu0
        %v7333 = vadd.f32 %v7247, %v7332
        %7334 = vmatmul.f32.gmra.mxu0 %v7271
        %v7335 = vpop.f32.mrf.mxu0
        %v7336 = vadd.f32 %v7247, %v7335
        %7337 = vmatmul.f32.gmra.mxu0 %v7274
        %v7338 = vpop.f32.mrf.mxu0
        %v7339 = vadd.f32 %v7247, %v7338
        %7340 = vmatmul.f32.gmra.mxu0 %v7277
        %v7341 = vpop.f32.mrf.mxu0
        %v7342 = vadd.f32 %v7247, %v7341
        %7343 = vmatmul.f32.gmra.mxu0 %v7280
        %v7344 = vpop.f32.mrf.mxu0
        %v7345 = vadd.f32 %v7247, %v7344
        %7346 = vmatmul.f32.gmra.mxu0 %v7283
        %v7347 = vpop.f32.mrf.mxu0
        %v7348 = vadd.f32 %v7247, %v7347
        %7349 = vmatmul.f32.gmra.mxu0 %v7286
        %v7350 = vpop.f32.mrf.mxu0
        %v7351 = vadd.f32 %v7247, %v7350
        %7352 = vmatmul.f32.gmra.mxu0 %v7289
        %v7353 = vpop.f32.mrf.mxu0
        %v7354 = vadd.f32 %v7247, %v7353
        %7355 = vmatmul.f32.gmra.mxu0 %v7292
        %v7356 = vpop.f32.mrf.mxu0
        %v7357 = vadd.f32 %v7247, %v7356
        %7358 = vmatmul.f32.gmra.mxu0 %v7295
        %v7359 = vpop.f32.mrf.mxu0
        %v7360 = vadd.f32 %v7247, %v7359
        %7361 = vdwg.mxu0
        %v7362 = vtanh.pop %v7315
        %v7363 = vtanh.pop %v7318
        %v7364 = vtanh.pop %v7321
        %v7365 = vtanh.pop %v7324
        %v7366 = vtanh.pop %v7327
        %v7367 = vtanh.pop %v7330
        %v7368 = vtanh.pop %v7333
        %v7369 = vtanh.pop %v7336
        %v7370 = vtanh.pop %v7339
        %v7371 = vtanh.pop %v7342
        %v7372 = vtanh.pop %v7345
        %v7373 = vtanh.pop %v7348
        %v7374 = vtanh.pop %v7351
        %v7375 = vtanh.pop %v7354
        %v7376 = vtanh.pop %v7357
        %v7377 = vtanh.pop %v7360
        %v7378 = vmul.f32 %v7362, 1.442695
        %v7379 = vpow.pop %v7378
        %v7380 = vmul.f32 %v7363, 1.442695
        %v7381 = vpow.pop %v7380
        %v7382 = vmul.f32 %v7364, 1.442695
        %v7383 = vpow.pop %v7382
        %v7384 = vmul.f32 %v7365, 1.442695
        %v7385 = vpow.pop %v7384
        %v7386 = vmul.f32 %v7366, 1.442695
        %v7387 = vpow.pop %v7386
        %v7388 = vmul.f32 %v7367, 1.442695
        %v7389 = vpow.pop %v7388
        %v7390 = vmul.f32 %v7368, 1.442695
        %v7391 = vpow.pop %v7390
        %v7392 = vmul.f32 %v7369, 1.442695
        %v7393 = vpow.pop %v7392
        %v7394 = vmul.f32 %v7370, 1.442695
        %v7395 = vpow.pop %v7394
        %v7396 = vmul.f32 %v7371, 1.442695
        %v7397 = vpow.pop %v7396
        %v7398 = vmul.f32 %v7372, 1.442695
        %v7399 = vpow.pop %v7398
        %v7400 = vmul.f32 %v7373, 1.442695
        %v7401 = vpow.pop %v7400
        %v7402 = vmul.f32 %v7374, 1.442695
        %v7403 = vpow.pop %v7402
        %v7404 = vmul.f32 %v7375, 1.442695
        %v7405 = vpow.pop %v7404
        %v7406 = vmul.f32 %v7376, 1.442695
        %v7407 = vpow.pop %v7406
        %v7408 = vmul.f32 %v7377, 1.442695
        %v7409 = vpow.pop %v7408
        %v7410 = vmul.f32 %v5756, %v7379
        %v7411 = vmul.f32 %v5757, %v7381
        %v7412 = vmul.f32 %v5758, %v7383
        %v7413 = vmul.f32 %v5759, %v7385
        %v7414 = vmul.f32 %v5760, %v7387
        %v7415 = vmul.f32 %v5761, %v7389
        %v7416 = vmul.f32 %v5762, %v7391
        %v7417 = vmul.f32 %v5763, %v7393
        %v7418 = vmul.f32 %v5764, %v7395
        %v7419 = vmul.f32 %v5765, %v7397
        %v7420 = vmul.f32 %v5766, %v7399
        %v7421 = vmul.f32 %v5767, %v7401
        %v7422 = vmul.f32 %v5768, %v7403
        %v7423 = vmul.f32 %v5769, %v7405
        %v7424 = vmul.f32 %v5770, %v7407
        %v7425 = vmul.f32 %v5771, %v7409
        %7442 = vrot.lane.b32.xlu0 %v7315, 123
        %v7443 = vpop.permute.xlu0 %7442
        %7444 = vrot.lane.b32.xlu0 %v7318, 123
        %v7445 = vpop.permute.xlu0 %7444
        %7446 = vrot.lane.b32.xlu0 %v7321, 123
        %v7447 = vpop.permute.xlu0 %7446
        %7448 = vrot.lane.b32.xlu0 %v7324, 123
        %v7449 = vpop.permute.xlu0 %7448
        %7450 = vrot.lane.b32.xlu0 %v7327, 123
        %v7451 = vpop.permute.xlu0 %7450
        %7452 = vrot.lane.b32.xlu0 %v7330, 123
        %v7453 = vpop.permute.xlu0 %7452
        %7454 = vrot.lane.b32.xlu0 %v7333, 123
        %v7455 = vpop.permute.xlu0 %7454
        %7456 = vrot.lane.b32.xlu0 %v7336, 123
        %v7457 = vpop.permute.xlu0 %7456
        %7458 = vrot.lane.b32.xlu0 %v7339, 123
        %v7459 = vpop.permute.xlu0 %7458
        %7460 = vrot.lane.b32.xlu0 %v7342, 123
        %v7461 = vpop.permute.xlu0 %7460
        %7462 = vrot.lane.b32.xlu0 %v7345, 123
        %v7463 = vpop.permute.xlu0 %7462
        %7464 = vrot.lane.b32.xlu0 %v7348, 123
        %v7465 = vpop.permute.xlu0 %7464
        %7466 = vrot.lane.b32.xlu0 %v7351, 123
        %v7467 = vpop.permute.xlu0 %7466
        %7468 = vrot.lane.b32.xlu0 %v7354, 123
        %v7469 = vpop.permute.xlu0 %7468
        %7470 = vrot.lane.b32.xlu0 %v7357, 123
        %v7471 = vpop.permute.xlu0 %7470
        %7472 = vrot.lane.b32.xlu0 %v7360, 123
        %v7473 = vpop.permute.xlu0 %7472
        %v7490 = vadd.f32 %v7410, %v7443
        %v7491 = vadd.f32 %v7411, %v7445
        %v7492 = vadd.f32 %v7412, %v7447
        %v7493 = vadd.f32 %v7413, %v7449
        %v7494 = vadd.f32 %v7414, %v7451
        %v7495 = vadd.f32 %v7415, %v7453
        %v7496 = vadd.f32 %v7416, %v7455
        %v7497 = vadd.f32 %v7417, %v7457
        %v7498 = vadd.f32 %v7418, %v7459
        %v7499 = vadd.f32 %v7419, %v7461
        %v7500 = vadd.f32 %v7420, %v7463
        %v7501 = vadd.f32 %v7421, %v7465
        %v7502 = vadd.f32 %v7422, %v7467
        %v7503 = vadd.f32 %v7423, %v7469
        %v7504 = vadd.f32 %v7424, %v7471
        %v7505 = vadd.f32 %v7425, %v7473
        %v7506 = vsel %vm1802, %v7362, 0.0
        %7507 = vadd.xlane.f32.xlu0 %v7506
        %v7508 = vpop.xlane.xlu0 %7507
        %v7509 = vsel %vm1802, %v7363, 0.0
        %7510 = vadd.xlane.f32.xlu0 %v7509
        %v7511 = vpop.xlane.xlu0 %7510
        %v7512 = vsel %vm1802, %v7364, 0.0
        %7513 = vadd.xlane.f32.xlu0 %v7512
        %v7514 = vpop.xlane.xlu0 %7513
        %v7515 = vsel %vm1802, %v7365, 0.0
        %7516 = vadd.xlane.f32.xlu0 %v7515
        %v7517 = vpop.xlane.xlu0 %7516
        %v7518 = vsel %vm1802, %v7366, 0.0
        %7519 = vadd.xlane.f32.xlu0 %v7518
        %v7520 = vpop.xlane.xlu0 %7519
        %v7521 = vsel %vm1802, %v7367, 0.0
        %7522 = vadd.xlane.f32.xlu0 %v7521
        %v7523 = vpop.xlane.xlu0 %7522
        %v7524 = vsel %vm1802, %v7368, 0.0
        %7525 = vadd.xlane.f32.xlu0 %v7524
        %v7526 = vpop.xlane.xlu0 %7525
        %v7527 = vsel %vm1802, %v7369, 0.0
        %7528 = vadd.xlane.f32.xlu0 %v7527
        %v7529 = vpop.xlane.xlu0 %7528
        %v7530 = vsel %vm1802, %v7370, 0.0
        %7531 = vadd.xlane.f32.xlu0 %v7530
        %v7532 = vpop.xlane.xlu0 %7531
        %v7533 = vsel %vm1802, %v7371, 0.0
        %7534 = vadd.xlane.f32.xlu0 %v7533
        %v7535 = vpop.xlane.xlu0 %7534
        %v7536 = vsel %vm1802, %v7372, 0.0
        %7537 = vadd.xlane.f32.xlu0 %v7536
        %v7538 = vpop.xlane.xlu0 %7537
        %v7539 = vsel %vm1802, %v7373, 0.0
        %7540 = vadd.xlane.f32.xlu0 %v7539
        %v7541 = vpop.xlane.xlu0 %7540
        %v7542 = vsel %vm1802, %v7374, 0.0
        %7543 = vadd.xlane.f32.xlu0 %v7542
        %v7544 = vpop.xlane.xlu0 %7543
        %v7545 = vsel %vm1802, %v7375, 0.0
        %7546 = vadd.xlane.f32.xlu0 %v7545
        %v7547 = vpop.xlane.xlu0 %7546
        %v7548 = vsel %vm1802, %v7376, 0.0
        %7549 = vadd.xlane.f32.xlu0 %v7548
        %v7550 = vpop.xlane.xlu0 %7549
        %v7551 = vsel %vm1802, %v7377, 0.0
        %7552 = vadd.xlane.f32.xlu0 %v7551
        %v7553 = vpop.xlane.xlu0 %7552
        %v7554 = vadd.f32 %v6607, %v7508
        %v7555 = vadd.f32 %v6608, %v7511
        %v7556 = vadd.f32 %v6609, %v7514
        %v7557 = vadd.f32 %v6610, %v7517
        %v7558 = vadd.f32 %v6611, %v7520
        %v7559 = vadd.f32 %v6612, %v7523
        %v7560 = vadd.f32 %v6613, %v7526
        %v7561 = vadd.f32 %v6614, %v7529
        %v7562 = vadd.f32 %v6615, %v7532
        %v7563 = vadd.f32 %v6616, %v7535
        %v7564 = vadd.f32 %v6617, %v7538
        %v7565 = vadd.f32 %v6618, %v7541
        %v7566 = vadd.f32 %v6619, %v7544
        %v7567 = vadd.f32 %v6620, %v7547
        %v7568 = vadd.f32 %v6621, %v7550
        %v7569 = vadd.f32 %v6622, %v7553
        %v7570 = vsel %vm1802, %v7490, %v6543
        %v7571 = vsel %vm1802, %v7491, %v6544
        %v7572 = vsel %vm1802, %v7492, %v6545
        %v7573 = vsel %vm1802, %v7493, %v6546
        %v7574 = vsel %vm1802, %v7494, %v6547
        %v7575 = vsel %vm1802, %v7495, %v6548
        %v7576 = vsel %vm1802, %v7496, %v6549
        %v7577 = vsel %vm1802, %v7497, %v6550
        %v7578 = vsel %vm1802, %v7498, %v6551
        %v7579 = vsel %vm1802, %v7499, %v6552
        %v7580 = vsel %vm1802, %v7500, %v6553
        %v7581 = vsel %vm1802, %v7501, %v6554
        %v7582 = vsel %vm1802, %v7502, %v6555
        %v7583 = vsel %vm1802, %v7503, %v6556
        %v7584 = vsel %vm1802, %v7504, %v6557
        %v7585 = vsel %vm1802, %v7505, %v6558
        %s7586 = scalar_lea.vmem %s11, 32
        %v7587 = vld [vmem:[%s7586] sm:$0xff]
        %v7588 = vld [vmem:[%s7586 + $0x8] sm:$0x3]
        %s7589 = scalar_lea.vmem %s12, 2
        %v7590 = vld [vmem:[%s7589] sm:$0x1]
        %v7592 = vperm.slane %v7590, 0
        %v7595 = vsel %vm3620, %v7570, 0
        %v7598 = vsel %vm3620, %v7571, 0
        %v7601 = vsel %vm3620, %v7572, 0
        %v7604 = vsel %vm3620, %v7573, 0
        %v7607 = vsel %vm3620, %v7574, 0
        %v7610 = vsel %vm3620, %v7575, 0
        %v7613 = vsel %vm3620, %v7576, 0
        %v7616 = vsel %vm3620, %v7577, 0
        %v7619 = vsel %vm3620, %v7578, 0
        %v7622 = vsel %vm3620, %v7579, 0
        %v7625 = vsel %vm3620, %v7580, 0
        %v7628 = vsel %vm3620, %v7581, 0
        %v7631 = vsel %vm3620, %v7582, 0
        %v7634 = vsel %vm3620, %v7583, 0
        %v7637 = vsel %vm3620, %v7584, 0
        %v7640 = vsel %vm3620, %v7585, 0
        %v7643 = vsel %vm3669, %v7588, 0
        %7645 = vmatpush.msra.mxu0 0.0
        %7646 = vmatpush.msra.mxu0 0.0
        %7647 = vmatpush.msra.mxu0 0.0
        %7648 = vmatpush.msra.mxu0 0.0
        %7649 = vmatpush.msra.mxu0 0.0
        %7650 = vmatpush.msra.mxu0 0.0
        %7651 = vmatpush.msra.mxu0 0.0
        %7652 = vmatpush.msra.mxu0 0.0
        %7653 = vmatpush.msra.mxu0 0.0
        %7654 = vmatpush.msra.mxu0 0.0
        %7655 = vmatpush.msra.mxu0 0.0
        %7656 = vmatpush.msra.mxu0 0.0
        %7657 = vmatpush.msra.mxu0 0.0
        %7658 = vmatpush.msra.mxu0 0.0
        %7659 = vmatpush.msra.mxu0 %v7643
        %7660 = vmatpush.msra.mxu0 %v7587
        %7661 = vmatmul.f32.gmra.mxu0 %v7595
        %v7662 = vpop.f32.mrf.mxu0
        %v7663 = vadd.f32 %v7592, %v7662
        %7664 = vmatmul.f32.gmra.mxu0 %v7598
        %v7665 = vpop.f32.mrf.mxu0
        %v7666 = vadd.f32 %v7592, %v7665
        %7667 = vmatmul.f32.gmra.mxu0 %v7601
        %v7668 = vpop.f32.mrf.mxu0
        %v7669 = vadd.f32 %v7592, %v7668
        %7670 = vmatmul.f32.gmra.mxu0 %v7604
        %v7671 = vpop.f32.mrf.mxu0
        %v7672 = vadd.f32 %v7592, %v7671
        %7673 = vmatmul.f32.gmra.mxu0 %v7607
        %v7674 = vpop.f32.mrf.mxu0
        %v7675 = vadd.f32 %v7592, %v7674
        %7676 = vmatmul.f32.gmra.mxu0 %v7610
        %v7677 = vpop.f32.mrf.mxu0
        %v7678 = vadd.f32 %v7592, %v7677
        %7679 = vmatmul.f32.gmra.mxu0 %v7613
        %v7680 = vpop.f32.mrf.mxu0
        %v7681 = vadd.f32 %v7592, %v7680
        %7682 = vmatmul.f32.gmra.mxu0 %v7616
        %v7683 = vpop.f32.mrf.mxu0
        %v7684 = vadd.f32 %v7592, %v7683
        %7685 = vmatmul.f32.gmra.mxu0 %v7619
        %v7686 = vpop.f32.mrf.mxu0
        %v7687 = vadd.f32 %v7592, %v7686
        %7688 = vmatmul.f32.gmra.mxu0 %v7622
        %v7689 = vpop.f32.mrf.mxu0
        %v7690 = vadd.f32 %v7592, %v7689
        %7691 = vmatmul.f32.gmra.mxu0 %v7625
        %v7692 = vpop.f32.mrf.mxu0
        %v7693 = vadd.f32 %v7592, %v7692
        %7694 = vmatmul.f32.gmra.mxu0 %v7628
        %v7695 = vpop.f32.mrf.mxu0
        %v7696 = vadd.f32 %v7592, %v7695
        %7697 = vmatmul.f32.gmra.mxu0 %v7631
        %v7698 = vpop.f32.mrf.mxu0
        %v7699 = vadd.f32 %v7592, %v7698
        %7700 = vmatmul.f32.gmra.mxu0 %v7634
        %v7701 = vpop.f32.mrf.mxu0
        %v7702 = vadd.f32 %v7592, %v7701
        %7703 = vmatmul.f32.gmra.mxu0 %v7637
        %v7704 = vpop.f32.mrf.mxu0
        %v7705 = vadd.f32 %v7592, %v7704
        %7706 = vmatmul.f32.gmra.mxu0 %v7640
        %v7707 = vpop.f32.mrf.mxu0
        %v7708 = vadd.f32 %v7592, %v7707
        %7709 = vdwg.mxu0
        %vm7710 = vcmp.ge.f32.partialorder %v7663, 0.0
        %vm7711 = vcmp.ge.f32.partialorder %v7666, 0.0
        %vm7712 = vcmp.ge.f32.partialorder %v7669, 0.0
        %vm7713 = vcmp.ge.f32.partialorder %v7672, 0.0
        %vm7714 = vcmp.ge.f32.partialorder %v7675, 0.0
        %vm7715 = vcmp.ge.f32.partialorder %v7678, 0.0
        %vm7716 = vcmp.ge.f32.partialorder %v7681, 0.0
        %vm7717 = vcmp.ge.f32.partialorder %v7684, 0.0
        %vm7718 = vcmp.ge.f32.partialorder %v7687, 0.0
        %vm7719 = vcmp.ge.f32.partialorder %v7690, 0.0
        %vm7720 = vcmp.ge.f32.partialorder %v7693, 0.0
        %vm7721 = vcmp.ge.f32.partialorder %v7696, 0.0
        %vm7722 = vcmp.ge.f32.partialorder %v7699, 0.0
        %vm7723 = vcmp.ge.f32.partialorder %v7702, 0.0
        %vm7724 = vcmp.ge.f32.partialorder %v7705, 0.0
        %vm7725 = vcmp.ge.f32.partialorder %v7708, 0.0
        %v7726 = vmul.f32 %v7663, 0.9
        %v7727 = vmul.f32 %v7666, 0.9
        %v7728 = vmul.f32 %v7669, 0.9
        %v7729 = vmul.f32 %v7672, 0.9
        %v7730 = vmul.f32 %v7675, 0.9
        %v7731 = vmul.f32 %v7678, 0.9
        %v7732 = vmul.f32 %v7681, 0.9
        %v7733 = vmul.f32 %v7684, 0.9
        %v7734 = vmul.f32 %v7687, 0.9
        %v7735 = vmul.f32 %v7690, 0.9
        %v7736 = vmul.f32 %v7693, 0.9
        %v7737 = vmul.f32 %v7696, 0.9
        %v7738 = vmul.f32 %v7699, 0.9
        %v7739 = vmul.f32 %v7702, 0.9
        %v7740 = vmul.f32 %v7705, 0.9
        %v7741 = vmul.f32 %v7708, 0.9
        %v7742 = vsel %vm7710, %v7663, %v7726
        %v7743 = vsel %vm7711, %v7666, %v7727
        %v7744 = vsel %vm7712, %v7669, %v7728
        %v7745 = vsel %vm7713, %v7672, %v7729
        %v7746 = vsel %vm7714, %v7675, %v7730
        %v7747 = vsel %vm7715, %v7678, %v7731
        %v7748 = vsel %vm7716, %v7681, %v7732
        %v7749 = vsel %vm7717, %v7684, %v7733
        %v7750 = vsel %vm7718, %v7687, %v7734
        %v7751 = vsel %vm7719, %v7690, %v7735
        %v7752 = vsel %vm7720, %v7693, %v7736
        %v7753 = vsel %vm7721, %v7696, %v7737
        %v7754 = vsel %vm7722, %v7699, %v7738
        %v7755 = vsel %vm7723, %v7702, %v7739
        %v7756 = vsel %vm7724, %v7705, %v7740
        %v7757 = vsel %vm7725, %v7708, %v7741
        %s7758 = scalar_lea.vmem %s7, 48
        %v7759 = vld [vmem:[%s7758] sm:$0x1f]
        %v7761 = vsel %vm1802, %v7742, 0
        %v7764 = vsel %vm1802, %v7743, 0
        %v7767 = vsel %vm1802, %v7744, 0
        %v7770 = vsel %vm1802, %v7745, 0
        %v7773 = vsel %vm1802, %v7746, 0
        %v7776 = vsel %vm1802, %v7747, 0
        %v7779 = vsel %vm1802, %v7748, 0
        %v7782 = vsel %vm1802, %v7749, 0
        %v7785 = vsel %vm1802, %v7750, 0
        %v7788 = vsel %vm1802, %v7751, 0
        %v7791 = vsel %vm1802, %v7752, 0
        %v7794 = vsel %vm1802, %v7753, 0
        %v7797 = vsel %vm1802, %v7754, 0
        %v7800 = vsel %vm1802, %v7755, 0
        %v7803 = vsel %vm1802, %v7756, 0
        %v7806 = vsel %vm1802, %v7757, 0
        %v7809 = vsel %vm1851, %v7759, 0
        %7811 = vmatpush.msra.mxu0 0.0
        %7812 = vmatpush.msra.mxu0 0.0
        %7813 = vmatpush.msra.mxu0 0.0
        %7814 = vmatpush.msra.mxu0 0.0
        %7815 = vmatpush.msra.mxu0 0.0
        %7816 = vmatpush.msra.mxu0 0.0
        %7817 = vmatpush.msra.mxu0 0.0
        %7818 = vmatpush.msra.mxu0 0.0
        %7819 = vmatpush.msra.mxu0 0.0
        %7820 = vmatpush.msra.mxu0 0.0
        %7821 = vmatpush.msra.mxu0 0.0
        %7822 = vmatpush.msra.mxu0 0.0
        %7823 = vmatpush.msra.mxu0 0.0
        %7824 = vmatpush.msra.mxu0 0.0
        %7825 = vmatpush.msra.mxu0 0.0
        %7826 = vmatpush.msra.mxu0 %v7809
        %7827 = vmatmul.f32.gmra.mxu0 %v7761
        %v7828 = vpop.f32.mrf.mxu0
        %v7829 = vadd.f32 %v1644, %v7828
        %7830 = vmatmul.f32.gmra.mxu0 %v7764
        %v7831 = vpop.f32.mrf.mxu0
        %v7832 = vadd.f32 %v1647, %v7831
        %7833 = vmatmul.f32.gmra.mxu0 %v7767
        %v7834 = vpop.f32.mrf.mxu0
        %v7835 = vadd.f32 %v1650, %v7834
        %7836 = vmatmul.f32.gmra.mxu0 %v7770
        %v7837 = vpop.f32.mrf.mxu0
        %v7838 = vadd.f32 %v1653, %v7837
        %7839 = vmatmul.f32.gmra.mxu0 %v7773
        %v7840 = vpop.f32.mrf.mxu0
        %v7841 = vadd.f32 %v1656, %v7840
        %7842 = vmatmul.f32.gmra.mxu0 %v7776
        %v7843 = vpop.f32.mrf.mxu0
        %v7844 = vadd.f32 %v1659, %v7843
        %7845 = vmatmul.f32.gmra.mxu0 %v7779
        %v7846 = vpop.f32.mrf.mxu0
        %v7847 = vadd.f32 %v1662, %v7846
        %7848 = vmatmul.f32.gmra.mxu0 %v7782
        %v7849 = vpop.f32.mrf.mxu0
        %v7850 = vadd.f32 %v1665, %v7849
        %7851 = vmatmul.f32.gmra.mxu0 %v7785
        %v7852 = vpop.f32.mrf.mxu0
        %v7853 = vadd.f32 %v1668, %v7852
        %7854 = vmatmul.f32.gmra.mxu0 %v7788
        %v7855 = vpop.f32.mrf.mxu0
        %v7856 = vadd.f32 %v1671, %v7855
        %7857 = vmatmul.f32.gmra.mxu0 %v7791
        %v7858 = vpop.f32.mrf.mxu0
        %v7859 = vadd.f32 %v1674, %v7858
        %7860 = vmatmul.f32.gmra.mxu0 %v7794
        %v7861 = vpop.f32.mrf.mxu0
        %v7862 = vadd.f32 %v1677, %v7861
        %7863 = vmatmul.f32.gmra.mxu0 %v7797
        %v7864 = vpop.f32.mrf.mxu0
        %v7865 = vadd.f32 %v1680, %v7864
        %7866 = vmatmul.f32.gmra.mxu0 %v7800
        %v7867 = vpop.f32.mrf.mxu0
        %v7868 = vadd.f32 %v1683, %v7867
        %7869 = vmatmul.f32.gmra.mxu0 %v7803
        %v7870 = vpop.f32.mrf.mxu0
        %v7871 = vadd.f32 %v1686, %v7870
        %7872 = vmatmul.f32.gmra.mxu0 %v7806
        %v7873 = vpop.f32.mrf.mxu0
        %v7874 = vadd.f32 %v1689, %v7873
        %7875 = vdwg.mxu0
        %vm7876 = vcmp.ge.f32.partialorder %v7829, 0.0
        %vm7877 = vcmp.ge.f32.partialorder %v7832, 0.0
        %vm7878 = vcmp.ge.f32.partialorder %v7835, 0.0
        %vm7879 = vcmp.ge.f32.partialorder %v7838, 0.0
        %vm7880 = vcmp.ge.f32.partialorder %v7841, 0.0
        %vm7881 = vcmp.ge.f32.partialorder %v7844, 0.0
        %vm7882 = vcmp.ge.f32.partialorder %v7847, 0.0
        %vm7883 = vcmp.ge.f32.partialorder %v7850, 0.0
        %vm7884 = vcmp.ge.f32.partialorder %v7853, 0.0
        %vm7885 = vcmp.ge.f32.partialorder %v7856, 0.0
        %vm7886 = vcmp.ge.f32.partialorder %v7859, 0.0
        %vm7887 = vcmp.ge.f32.partialorder %v7862, 0.0
        %vm7888 = vcmp.ge.f32.partialorder %v7865, 0.0
        %vm7889 = vcmp.ge.f32.partialorder %v7868, 0.0
        %vm7890 = vcmp.ge.f32.partialorder %v7871, 0.0
        %vm7891 = vcmp.ge.f32.partialorder %v7874, 0.0
        %v7892 = vmul.f32 %v7829, 0.01
        %v7893 = vmul.f32 %v7832, 0.01
        %v7894 = vmul.f32 %v7835, 0.01
        %v7895 = vmul.f32 %v7838, 0.01
        %v7896 = vmul.f32 %v7841, 0.01
        %v7897 = vmul.f32 %v7844, 0.01
        %v7898 = vmul.f32 %v7847, 0.01
        %v7899 = vmul.f32 %v7850, 0.01
        %v7900 = vmul.f32 %v7853, 0.01
        %v7901 = vmul.f32 %v7856, 0.01
        %v7902 = vmul.f32 %v7859, 0.01
        %v7903 = vmul.f32 %v7862, 0.01
        %v7904 = vmul.f32 %v7865, 0.01
        %v7905 = vmul.f32 %v7868, 0.01
        %v7906 = vmul.f32 %v7871, 0.01
        %v7907 = vmul.f32 %v7874, 0.01
        %v7908 = vsel %vm7876, %v7829, %v7892
        %v7909 = vsel %vm7877, %v7832, %v7893
        %v7910 = vsel %vm7878, %v7835, %v7894
        %v7911 = vsel %vm7879, %v7838, %v7895
        %v7912 = vsel %vm7880, %v7841, %v7896
        %v7913 = vsel %vm7881, %v7844, %v7897
        %v7914 = vsel %vm7882, %v7847, %v7898
        %v7915 = vsel %vm7883, %v7850, %v7899
        %v7916 = vsel %vm7884, %v7853, %v7900
        %v7917 = vsel %vm7885, %v7856, %v7901
        %v7918 = vsel %vm7886, %v7859, %v7902
        %v7919 = vsel %vm7887, %v7862, %v7903
        %v7920 = vsel %vm7888, %v7865, %v7904
        %v7921 = vsel %vm7889, %v7868, %v7905
        %v7922 = vsel %vm7890, %v7871, %v7906
        %v7923 = vsel %vm7891, %v7874, %v7907
        %s7924 = scalar_lea.vmem %s8, 768
        %v7925 = vld [vmem:[%s7924] sm:$0xff]
        %v7926 = vld [vmem:[%s7924 + $0x8] sm:$0xff]
        %v7927 = vld [vmem:[%s7924 + $0x10] sm:$0xff]
        %v7928 = vld [vmem:[%s7924 + $0x18] sm:$0xff]
        %v7929 = vld [vmem:[%s7924 + $0x20] sm:$0xff]
        %v7930 = vld [vmem:[%s7924 + $0x28] sm:$0xff]
        %v7931 = vld [vmem:[%s7924 + $0x30] sm:$0xff]
        %v7932 = vld [vmem:[%s7924 + $0x38] sm:$0xff]
        %s7933 = scalar_lea.vmem %s9, 18
        %v7934 = vld [vmem:[%s7933] sm:$0x1]
        %v7936 = vperm.slane %v7934, 0
        %v7939 = vsel %vm1980, %v7908, 0
        %v7942 = vsel %vm1980, %v7909, 0
        %v7945 = vsel %vm1980, %v7910, 0
        %v7948 = vsel %vm1980, %v7911, 0
        %v7951 = vsel %vm1980, %v7912, 0
        %v7954 = vsel %vm1980, %v7913, 0
        %v7957 = vsel %vm1980, %v7914, 0
        %v7960 = vsel %vm1980, %v7915, 0
        %v7963 = vsel %vm1980, %v7916, 0
        %v7966 = vsel %vm1980, %v7917, 0
        %v7969 = vsel %vm1980, %v7918, 0
        %v7972 = vsel %vm1980, %v7919, 0
        %v7975 = vsel %vm1980, %v7920, 0
        %v7978 = vsel %vm1980, %v7921, 0
        %v7981 = vsel %vm1980, %v7922, 0
        %v7984 = vsel %vm1980, %v7923, 0
        %7986 = vmatpush.msra.mxu0 0.0
        %7987 = vmatpush.msra.mxu0 0.0
        %7988 = vmatpush.msra.mxu0 0.0
        %7989 = vmatpush.msra.mxu0 0.0
        %7990 = vmatpush.msra.mxu0 0.0
        %7991 = vmatpush.msra.mxu0 0.0
        %7992 = vmatpush.msra.mxu0 0.0
        %7993 = vmatpush.msra.mxu0 0.0
        %7994 = vmatpush.msra.mxu0 %v7932
        %7995 = vmatpush.msra.mxu0 %v7931
        %7996 = vmatpush.msra.mxu0 %v7930
        %7997 = vmatpush.msra.mxu0 %v7929
        %7998 = vmatpush.msra.mxu0 %v7928
        %7999 = vmatpush.msra.mxu0 %v7927
        %8000 = vmatpush.msra.mxu0 %v7926
        %8001 = vmatpush.msra.mxu0 %v7925
        %8002 = vmatmul.f32.gmra.mxu0 %v7939
        %v8003 = vpop.f32.mrf.mxu0
        %v8004 = vadd.f32 %v7936, %v8003
        %8005 = vmatmul.f32.gmra.mxu0 %v7942
        %v8006 = vpop.f32.mrf.mxu0
        %v8007 = vadd.f32 %v7936, %v8006
        %8008 = vmatmul.f32.gmra.mxu0 %v7945
        %v8009 = vpop.f32.mrf.mxu0
        %v8010 = vadd.f32 %v7936, %v8009
        %8011 = vmatmul.f32.gmra.mxu0 %v7948
        %v8012 = vpop.f32.mrf.mxu0
        %v8013 = vadd.f32 %v7936, %v8012
        %8014 = vmatmul.f32.gmra.mxu0 %v7951
        %v8015 = vpop.f32.mrf.mxu0
        %v8016 = vadd.f32 %v7936, %v8015
        %8017 = vmatmul.f32.gmra.mxu0 %v7954
        %v8018 = vpop.f32.mrf.mxu0
        %v8019 = vadd.f32 %v7936, %v8018
        %8020 = vmatmul.f32.gmra.mxu0 %v7957
        %v8021 = vpop.f32.mrf.mxu0
        %v8022 = vadd.f32 %v7936, %v8021
        %8023 = vmatmul.f32.gmra.mxu0 %v7960
        %v8024 = vpop.f32.mrf.mxu0
        %v8025 = vadd.f32 %v7936, %v8024
        %8026 = vmatmul.f32.gmra.mxu0 %v7963
        %v8027 = vpop.f32.mrf.mxu0
        %v8028 = vadd.f32 %v7936, %v8027
        %8029 = vmatmul.f32.gmra.mxu0 %v7966
        %v8030 = vpop.f32.mrf.mxu0
        %v8031 = vadd.f32 %v7936, %v8030
        %8032 = vmatmul.f32.gmra.mxu0 %v7969
        %v8033 = vpop.f32.mrf.mxu0
        %v8034 = vadd.f32 %v7936, %v8033
        %8035 = vmatmul.f32.gmra.mxu0 %v7972
        %v8036 = vpop.f32.mrf.mxu0
        %v8037 = vadd.f32 %v7936, %v8036
        %8038 = vmatmul.f32.gmra.mxu0 %v7975
        %v8039 = vpop.f32.mrf.mxu0
        %v8040 = vadd.f32 %v7936, %v8039
        %8041 = vmatmul.f32.gmra.mxu0 %v7978
        %v8042 = vpop.f32.mrf.mxu0
        %v8043 = vadd.f32 %v7936, %v8042
        %8044 = vmatmul.f32.gmra.mxu0 %v7981
        %v8045 = vpop.f32.mrf.mxu0
        %v8046 = vadd.f32 %v7936, %v8045
        %8047 = vmatmul.f32.gmra.mxu0 %v7984
        %v8048 = vpop.f32.mrf.mxu0
        %v8049 = vadd.f32 %v7936, %v8048
        %8050 = vdwg.mxu0
        %vm8051 = vcmp.ge.f32.partialorder %v8004, 0.0
        %vm8052 = vcmp.ge.f32.partialorder %v8007, 0.0
        %vm8053 = vcmp.ge.f32.partialorder %v8010, 0.0
        %vm8054 = vcmp.ge.f32.partialorder %v8013, 0.0
        %vm8055 = vcmp.ge.f32.partialorder %v8016, 0.0
        %vm8056 = vcmp.ge.f32.partialorder %v8019, 0.0
        %vm8057 = vcmp.ge.f32.partialorder %v8022, 0.0
        %vm8058 = vcmp.ge.f32.partialorder %v8025, 0.0
        %vm8059 = vcmp.ge.f32.partialorder %v8028, 0.0
        %vm8060 = vcmp.ge.f32.partialorder %v8031, 0.0
        %vm8061 = vcmp.ge.f32.partialorder %v8034, 0.0
        %vm8062 = vcmp.ge.f32.partialorder %v8037, 0.0
        %vm8063 = vcmp.ge.f32.partialorder %v8040, 0.0
        %vm8064 = vcmp.ge.f32.partialorder %v8043, 0.0
        %vm8065 = vcmp.ge.f32.partialorder %v8046, 0.0
        %vm8066 = vcmp.ge.f32.partialorder %v8049, 0.0
        %v8067 = vmul.f32 %v8004, 0.01
        %v8068 = vmul.f32 %v8007, 0.01
        %v8069 = vmul.f32 %v8010, 0.01
        %v8070 = vmul.f32 %v8013, 0.01
        %v8071 = vmul.f32 %v8016, 0.01
        %v8072 = vmul.f32 %v8019, 0.01
        %v8073 = vmul.f32 %v8022, 0.01
        %v8074 = vmul.f32 %v8025, 0.01
        %v8075 = vmul.f32 %v8028, 0.01
        %v8076 = vmul.f32 %v8031, 0.01
        %v8077 = vmul.f32 %v8034, 0.01
        %v8078 = vmul.f32 %v8037, 0.01
        %v8079 = vmul.f32 %v8040, 0.01
        %v8080 = vmul.f32 %v8043, 0.01
        %v8081 = vmul.f32 %v8046, 0.01
        %v8082 = vmul.f32 %v8049, 0.01
        %v8083 = vsel %vm8051, %v8004, %v8067
        %v8084 = vsel %vm8052, %v8007, %v8068
        %v8085 = vsel %vm8053, %v8010, %v8069
        %v8086 = vsel %vm8054, %v8013, %v8070
        %v8087 = vsel %vm8055, %v8016, %v8071
        %v8088 = vsel %vm8056, %v8019, %v8072
        %v8089 = vsel %vm8057, %v8022, %v8073
        %v8090 = vsel %vm8058, %v8025, %v8074
        %v8091 = vsel %vm8059, %v8028, %v8075
        %v8092 = vsel %vm8060, %v8031, %v8076
        %v8093 = vsel %vm8061, %v8034, %v8077
        %v8094 = vsel %vm8062, %v8037, %v8078
        %v8095 = vsel %vm8063, %v8040, %v8079
        %v8096 = vsel %vm8064, %v8043, %v8080
        %v8097 = vsel %vm8065, %v8046, %v8081
        %v8098 = vsel %vm8066, %v8049, %v8082
        %s8099 = scalar_lea.vmem %s8, 832
        %v8100 = vld [vmem:[%s8099] sm:$0xff]
        %v8101 = vld [vmem:[%s8099 + $0x8] sm:$0xff]
        %v8102 = vld [vmem:[%s8099 + $0x10] sm:$0xff]
        %v8103 = vld [vmem:[%s8099 + $0x18] sm:$0xff]
        %v8104 = vld [vmem:[%s8099 + $0x20] sm:$0xff]
        %v8105 = vld [vmem:[%s8099 + $0x28] sm:$0xff]
        %v8106 = vld [vmem:[%s8099 + $0x30] sm:$0xff]
        %v8107 = vld [vmem:[%s8099 + $0x38] sm:$0xff]
        %s8108 = scalar_lea.vmem %s9, 19
        %v8109 = vld [vmem:[%s8108] sm:$0x1]
        %v8111 = vperm.slane %v8109, 0
        %v8114 = vsel %vm1980, %v8083, 0
        %v8117 = vsel %vm1980, %v8084, 0
        %v8120 = vsel %vm1980, %v8085, 0
        %v8123 = vsel %vm1980, %v8086, 0
        %v8126 = vsel %vm1980, %v8087, 0
        %v8129 = vsel %vm1980, %v8088, 0
        %v8132 = vsel %vm1980, %v8089, 0
        %v8135 = vsel %vm1980, %v8090, 0
        %v8138 = vsel %vm1980, %v8091, 0
        %v8141 = vsel %vm1980, %v8092, 0
        %v8144 = vsel %vm1980, %v8093, 0
        %v8147 = vsel %vm1980, %v8094, 0
        %v8150 = vsel %vm1980, %v8095, 0
        %v8153 = vsel %vm1980, %v8096, 0
        %v8156 = vsel %vm1980, %v8097, 0
        %v8159 = vsel %vm1980, %v8098, 0
        %8161 = vmatpush.msra.mxu0 0.0
        %8162 = vmatpush.msra.mxu0 0.0
        %8163 = vmatpush.msra.mxu0 0.0
        %8164 = vmatpush.msra.mxu0 0.0
        %8165 = vmatpush.msra.mxu0 0.0
        %8166 = vmatpush.msra.mxu0 0.0
        %8167 = vmatpush.msra.mxu0 0.0
        %8168 = vmatpush.msra.mxu0 0.0
        %8169 = vmatpush.msra.mxu0 %v8107
        %8170 = vmatpush.msra.mxu0 %v8106
        %8171 = vmatpush.msra.mxu0 %v8105
        %8172 = vmatpush.msra.mxu0 %v8104
        %8173 = vmatpush.msra.mxu0 %v8103
        %8174 = vmatpush.msra.mxu0 %v8102
        %8175 = vmatpush.msra.mxu0 %v8101
        %8176 = vmatpush.msra.mxu0 %v8100
        %8177 = vmatmul.f32.gmra.mxu0 %v8114
        %v8178 = vpop.f32.mrf.mxu0
        %v8179 = vadd.f32 %v8111, %v8178
        %8180 = vmatmul.f32.gmra.mxu0 %v8117
        %v8181 = vpop.f32.mrf.mxu0
        %v8182 = vadd.f32 %v8111, %v8181
        %8183 = vmatmul.f32.gmra.mxu0 %v8120
        %v8184 = vpop.f32.mrf.mxu0
        %v8185 = vadd.f32 %v8111, %v8184
        %8186 = vmatmul.f32.gmra.mxu0 %v8123
        %v8187 = vpop.f32.mrf.mxu0
        %v8188 = vadd.f32 %v8111, %v8187
        %8189 = vmatmul.f32.gmra.mxu0 %v8126
        %v8190 = vpop.f32.mrf.mxu0
        %v8191 = vadd.f32 %v8111, %v8190
        %8192 = vmatmul.f32.gmra.mxu0 %v8129
        %v8193 = vpop.f32.mrf.mxu0
        %v8194 = vadd.f32 %v8111, %v8193
        %8195 = vmatmul.f32.gmra.mxu0 %v8132
        %v8196 = vpop.f32.mrf.mxu0
        %v8197 = vadd.f32 %v8111, %v8196
        %8198 = vmatmul.f32.gmra.mxu0 %v8135
        %v8199 = vpop.f32.mrf.mxu0
        %v8200 = vadd.f32 %v8111, %v8199
        %8201 = vmatmul.f32.gmra.mxu0 %v8138
        %v8202 = vpop.f32.mrf.mxu0
        %v8203 = vadd.f32 %v8111, %v8202
        %8204 = vmatmul.f32.gmra.mxu0 %v8141
        %v8205 = vpop.f32.mrf.mxu0
        %v8206 = vadd.f32 %v8111, %v8205
        %8207 = vmatmul.f32.gmra.mxu0 %v8144
        %v8208 = vpop.f32.mrf.mxu0
        %v8209 = vadd.f32 %v8111, %v8208
        %8210 = vmatmul.f32.gmra.mxu0 %v8147
        %v8211 = vpop.f32.mrf.mxu0
        %v8212 = vadd.f32 %v8111, %v8211
        %8213 = vmatmul.f32.gmra.mxu0 %v8150
        %v8214 = vpop.f32.mrf.mxu0
        %v8215 = vadd.f32 %v8111, %v8214
        %8216 = vmatmul.f32.gmra.mxu0 %v8153
        %v8217 = vpop.f32.mrf.mxu0
        %v8218 = vadd.f32 %v8111, %v8217
        %8219 = vmatmul.f32.gmra.mxu0 %v8156
        %v8220 = vpop.f32.mrf.mxu0
        %v8221 = vadd.f32 %v8111, %v8220
        %8222 = vmatmul.f32.gmra.mxu0 %v8159
        %v8223 = vpop.f32.mrf.mxu0
        %v8224 = vadd.f32 %v8111, %v8223
        %8225 = vdwg.mxu0
        %vm8226 = vcmp.ge.f32.partialorder %v8179, 0.0
        %vm8227 = vcmp.ge.f32.partialorder %v8182, 0.0
        %vm8228 = vcmp.ge.f32.partialorder %v8185, 0.0
        %vm8229 = vcmp.ge.f32.partialorder %v8188, 0.0
        %vm8230 = vcmp.ge.f32.partialorder %v8191, 0.0
        %vm8231 = vcmp.ge.f32.partialorder %v8194, 0.0
        %vm8232 = vcmp.ge.f32.partialorder %v8197, 0.0
        %vm8233 = vcmp.ge.f32.partialorder %v8200, 0.0
        %vm8234 = vcmp.ge.f32.partialorder %v8203, 0.0
        %vm8235 = vcmp.ge.f32.partialorder %v8206, 0.0
        %vm8236 = vcmp.ge.f32.partialorder %v8209, 0.0
        %vm8237 = vcmp.ge.f32.partialorder %v8212, 0.0
        %vm8238 = vcmp.ge.f32.partialorder %v8215, 0.0
        %vm8239 = vcmp.ge.f32.partialorder %v8218, 0.0
        %vm8240 = vcmp.ge.f32.partialorder %v8221, 0.0
        %vm8241 = vcmp.ge.f32.partialorder %v8224, 0.0
        %v8242 = vmul.f32 %v8179, 0.01
        %v8243 = vmul.f32 %v8182, 0.01
        %v8244 = vmul.f32 %v8185, 0.01
        %v8245 = vmul.f32 %v8188, 0.01
        %v8246 = vmul.f32 %v8191, 0.01
        %v8247 = vmul.f32 %v8194, 0.01
        %v8248 = vmul.f32 %v8197, 0.01
        %v8249 = vmul.f32 %v8200, 0.01
        %v8250 = vmul.f32 %v8203, 0.01
        %v8251 = vmul.f32 %v8206, 0.01
        %v8252 = vmul.f32 %v8209, 0.01
        %v8253 = vmul.f32 %v8212, 0.01
        %v8254 = vmul.f32 %v8215, 0.01
        %v8255 = vmul.f32 %v8218, 0.01
        %v8256 = vmul.f32 %v8221, 0.01
        %v8257 = vmul.f32 %v8224, 0.01
        %v8258 = vsel %vm8226, %v8179, %v8242
        %v8259 = vsel %vm8227, %v8182, %v8243
        %v8260 = vsel %vm8228, %v8185, %v8244
        %v8261 = vsel %vm8229, %v8188, %v8245
        %v8262 = vsel %vm8230, %v8191, %v8246
        %v8263 = vsel %vm8231, %v8194, %v8247
        %v8264 = vsel %vm8232, %v8197, %v8248
        %v8265 = vsel %vm8233, %v8200, %v8249
        %v8266 = vsel %vm8234, %v8203, %v8250
        %v8267 = vsel %vm8235, %v8206, %v8251
        %v8268 = vsel %vm8236, %v8209, %v8252
        %v8269 = vsel %vm8237, %v8212, %v8253
        %v8270 = vsel %vm8238, %v8215, %v8254
        %v8271 = vsel %vm8239, %v8218, %v8255
        %v8272 = vsel %vm8240, %v8221, %v8256
        %v8273 = vsel %vm8241, %v8224, %v8257
        %s8274 = scalar_lea.vmem [#allocation5], 384
        %v8275 = vld [vmem:[%s8274] sm:$0xff]
        %v8276 = vld [vmem:[%s8274 + $0x8] sm:$0xff]
        %v8277 = vld [vmem:[%s8274 + $0x10] sm:$0xff]
        %v8278 = vld [vmem:[%s8274 + $0x18] sm:$0xff]
        %v8279 = vld [vmem:[%s8274 + $0x20] sm:$0xff]
        %v8280 = vld [vmem:[%s8274 + $0x28] sm:$0xff]
        %v8281 = vld [vmem:[%s8274 + $0x30] sm:$0xff]
        %v8282 = vld [vmem:[%s8274 + $0x38] sm:$0xff]
        %s8283 = scalar_lea.vmem %s9, 20
        %v8284 = vld [vmem:[%s8283] sm:$0x1]
        %v8286 = vperm.slane %v8284, 0
        %v8289 = vsel %vm1980, %v8258, 0
        %v8292 = vsel %vm1980, %v8259, 0
        %v8295 = vsel %vm1980, %v8260, 0
        %v8298 = vsel %vm1980, %v8261, 0
        %v8301 = vsel %vm1980, %v8262, 0
        %v8304 = vsel %vm1980, %v8263, 0
        %v8307 = vsel %vm1980, %v8264, 0
        %v8310 = vsel %vm1980, %v8265, 0
        %v8313 = vsel %vm1980, %v8266, 0
        %v8316 = vsel %vm1980, %v8267, 0
        %v8319 = vsel %vm1980, %v8268, 0
        %v8322 = vsel %vm1980, %v8269, 0
        %v8325 = vsel %vm1980, %v8270, 0
        %v8328 = vsel %vm1980, %v8271, 0
        %v8331 = vsel %vm1980, %v8272, 0
        %v8334 = vsel %vm1980, %v8273, 0
        %8336 = vmatpush.msra.mxu0 0.0
        %8337 = vmatpush.msra.mxu0 0.0
        %8338 = vmatpush.msra.mxu0 0.0
        %8339 = vmatpush.msra.mxu0 0.0
        %8340 = vmatpush.msra.mxu0 0.0
        %8341 = vmatpush.msra.mxu0 0.0
        %8342 = vmatpush.msra.mxu0 0.0
        %8343 = vmatpush.msra.mxu0 0.0
        %8344 = vmatpush.msra.mxu0 %v8282
        %8345 = vmatpush.msra.mxu0 %v8281
        %8346 = vmatpush.msra.mxu0 %v8280
        %8347 = vmatpush.msra.mxu0 %v8279
        %8348 = vmatpush.msra.mxu0 %v8278
        %8349 = vmatpush.msra.mxu0 %v8277
        %8350 = vmatpush.msra.mxu0 %v8276
        %8351 = vmatpush.msra.mxu0 %v8275
        %8352 = vmatmul.f32.gmra.mxu0 %v8289
        %v8353 = vpop.f32.mrf.mxu0
        %v8354 = vadd.f32 %v8286, %v8353
        %8355 = vmatmul.f32.gmra.mxu0 %v8292
        %v8356 = vpop.f32.mrf.mxu0
        %v8357 = vadd.f32 %v8286, %v8356
        %8358 = vmatmul.f32.gmra.mxu0 %v8295
        %v8359 = vpop.f32.mrf.mxu0
        %v8360 = vadd.f32 %v8286, %v8359
        %8361 = vmatmul.f32.gmra.mxu0 %v8298
        %v8362 = vpop.f32.mrf.mxu0
        %v8363 = vadd.f32 %v8286, %v8362
        %8364 = vmatmul.f32.gmra.mxu0 %v8301
        %v8365 = vpop.f32.mrf.mxu0
        %v8366 = vadd.f32 %v8286, %v8365
        %8367 = vmatmul.f32.gmra.mxu0 %v8304
        %v8368 = vpop.f32.mrf.mxu0
        %v8369 = vadd.f32 %v8286, %v8368
        %8370 = vmatmul.f32.gmra.mxu0 %v8307
        %v8371 = vpop.f32.mrf.mxu0
        %v8372 = vadd.f32 %v8286, %v8371
        %8373 = vmatmul.f32.gmra.mxu0 %v8310
        %v8374 = vpop.f32.mrf.mxu0
        %v8375 = vadd.f32 %v8286, %v8374
        %8376 = vmatmul.f32.gmra.mxu0 %v8313
        %v8377 = vpop.f32.mrf.mxu0
        %v8378 = vadd.f32 %v8286, %v8377
        %8379 = vmatmul.f32.gmra.mxu0 %v8316
        %v8380 = vpop.f32.mrf.mxu0
        %v8381 = vadd.f32 %v8286, %v8380
        %8382 = vmatmul.f32.gmra.mxu0 %v8319
        %v8383 = vpop.f32.mrf.mxu0
        %v8384 = vadd.f32 %v8286, %v8383
        %8385 = vmatmul.f32.gmra.mxu0 %v8322
        %v8386 = vpop.f32.mrf.mxu0
        %v8387 = vadd.f32 %v8286, %v8386
        %8388 = vmatmul.f32.gmra.mxu0 %v8325
        %v8389 = vpop.f32.mrf.mxu0
        %v8390 = vadd.f32 %v8286, %v8389
        %8391 = vmatmul.f32.gmra.mxu0 %v8328
        %v8392 = vpop.f32.mrf.mxu0
        %v8393 = vadd.f32 %v8286, %v8392
        %8394 = vmatmul.f32.gmra.mxu0 %v8331
        %v8395 = vpop.f32.mrf.mxu0
        %v8396 = vadd.f32 %v8286, %v8395
        %8397 = vmatmul.f32.gmra.mxu0 %v8334
        %v8398 = vpop.f32.mrf.mxu0
        %v8399 = vadd.f32 %v8286, %v8398
        %8400 = vdwg.mxu0
        %v8401 = vtanh.pop %v8354
        %v8402 = vtanh.pop %v8357
        %v8403 = vtanh.pop %v8360
        %v8404 = vtanh.pop %v8363
        %v8405 = vtanh.pop %v8366
        %v8406 = vtanh.pop %v8369
        %v8407 = vtanh.pop %v8372
        %v8408 = vtanh.pop %v8375
        %v8409 = vtanh.pop %v8378
        %v8410 = vtanh.pop %v8381
        %v8411 = vtanh.pop %v8384
        %v8412 = vtanh.pop %v8387
        %v8413 = vtanh.pop %v8390
        %v8414 = vtanh.pop %v8393
        %v8415 = vtanh.pop %v8396
        %v8416 = vtanh.pop %v8399
        %v8417 = vmul.f32 %v8401, 1.442695
        %v8418 = vpow.pop %v8417
        %v8419 = vmul.f32 %v8402, 1.442695
        %v8420 = vpow.pop %v8419
        %v8421 = vmul.f32 %v8403, 1.442695
        %v8422 = vpow.pop %v8421
        %v8423 = vmul.f32 %v8404, 1.442695
        %v8424 = vpow.pop %v8423
        %v8425 = vmul.f32 %v8405, 1.442695
        %v8426 = vpow.pop %v8425
        %v8427 = vmul.f32 %v8406, 1.442695
        %v8428 = vpow.pop %v8427
        %v8429 = vmul.f32 %v8407, 1.442695
        %v8430 = vpow.pop %v8429
        %v8431 = vmul.f32 %v8408, 1.442695
        %v8432 = vpow.pop %v8431
        %v8433 = vmul.f32 %v8409, 1.442695
        %v8434 = vpow.pop %v8433
        %v8435 = vmul.f32 %v8410, 1.442695
        %v8436 = vpow.pop %v8435
        %v8437 = vmul.f32 %v8411, 1.442695
        %v8438 = vpow.pop %v8437
        %v8439 = vmul.f32 %v8412, 1.442695
        %v8440 = vpow.pop %v8439
        %v8441 = vmul.f32 %v8413, 1.442695
        %v8442 = vpow.pop %v8441
        %v8443 = vmul.f32 %v8414, 1.442695
        %v8444 = vpow.pop %v8443
        %v8445 = vmul.f32 %v8415, 1.442695
        %v8446 = vpow.pop %v8445
        %v8447 = vmul.f32 %v8416, 1.442695
        %v8448 = vpow.pop %v8447
        %8465 = vrot.lane.b32.xlu0 %v8418, 5
        %v8466 = vpop.permute.xlu0 %8465
        %8467 = vrot.lane.b32.xlu0 %v8420, 5
        %v8468 = vpop.permute.xlu0 %8467
        %8469 = vrot.lane.b32.xlu0 %v8422, 5
        %v8470 = vpop.permute.xlu0 %8469
        %8471 = vrot.lane.b32.xlu0 %v8424, 5
        %v8472 = vpop.permute.xlu0 %8471
        %8473 = vrot.lane.b32.xlu0 %v8426, 5
        %v8474 = vpop.permute.xlu0 %8473
        %8475 = vrot.lane.b32.xlu0 %v8428, 5
        %v8476 = vpop.permute.xlu0 %8475
        %8477 = vrot.lane.b32.xlu0 %v8430, 5
        %v8478 = vpop.permute.xlu0 %8477
        %8479 = vrot.lane.b32.xlu0 %v8432, 5
        %v8480 = vpop.permute.xlu0 %8479
        %8481 = vrot.lane.b32.xlu0 %v8434, 5
        %v8482 = vpop.permute.xlu0 %8481
        %8483 = vrot.lane.b32.xlu0 %v8436, 5
        %v8484 = vpop.permute.xlu0 %8483
        %8485 = vrot.lane.b32.xlu0 %v8438, 5
        %v8486 = vpop.permute.xlu0 %8485
        %8487 = vrot.lane.b32.xlu0 %v8440, 5
        %v8488 = vpop.permute.xlu0 %8487
        %8489 = vrot.lane.b32.xlu0 %v8442, 5
        %v8490 = vpop.permute.xlu0 %8489
        %8491 = vrot.lane.b32.xlu0 %v8444, 5
        %v8492 = vpop.permute.xlu0 %8491
        %8493 = vrot.lane.b32.xlu0 %v8446, 5
        %v8494 = vpop.permute.xlu0 %8493
        %8495 = vrot.lane.b32.xlu0 %v8448, 5
        %v8496 = vpop.permute.xlu0 %8495
        %v8513 = vmul.f32 %v7742, %v8466
        %v8514 = vmul.f32 %v7743, %v8468
        %v8515 = vmul.f32 %v7744, %v8470
        %v8516 = vmul.f32 %v7745, %v8472
        %v8517 = vmul.f32 %v7746, %v8474
        %v8518 = vmul.f32 %v7747, %v8476
        %v8519 = vmul.f32 %v7748, %v8478
        %v8520 = vmul.f32 %v7749, %v8480
        %v8521 = vmul.f32 %v7750, %v8482
        %v8522 = vmul.f32 %v7751, %v8484
        %v8523 = vmul.f32 %v7752, %v8486
        %v8524 = vmul.f32 %v7753, %v8488
        %v8525 = vmul.f32 %v7754, %v8490
        %v8526 = vmul.f32 %v7755, %v8492
        %v8527 = vmul.f32 %v7756, %v8494
        %v8528 = vmul.f32 %v7757, %v8496
        %v8529 = vadd.f32 %v8513, %v8354
        %v8530 = vadd.f32 %v8514, %v8357
        %v8531 = vadd.f32 %v8515, %v8360
        %v8532 = vadd.f32 %v8516, %v8363
        %v8533 = vadd.f32 %v8517, %v8366
        %v8534 = vadd.f32 %v8518, %v8369
        %v8535 = vadd.f32 %v8519, %v8372
        %v8536 = vadd.f32 %v8520, %v8375
        %v8537 = vadd.f32 %v8521, %v8378
        %v8538 = vadd.f32 %v8522, %v8381
        %v8539 = vadd.f32 %v8523, %v8384
        %v8540 = vadd.f32 %v8524, %v8387
        %v8541 = vadd.f32 %v8525, %v8390
        %v8542 = vadd.f32 %v8526, %v8393
        %v8543 = vadd.f32 %v8527, %v8396
        %v8544 = vadd.f32 %v8528, %v8399
        %v8545 = vsel %vm1802, %v8401, 0.0
        %8546 = vadd.xlane.f32.xlu0 %v8545
        %v8547 = vpop.xlane.xlu0 %8546
        %v8548 = vsel %vm1802, %v8402, 0.0
        %8549 = vadd.xlane.f32.xlu0 %v8548
        %v8550 = vpop.xlane.xlu0 %8549
        %v8551 = vsel %vm1802, %v8403, 0.0
        %8552 = vadd.xlane.f32.xlu0 %v8551
        %v8553 = vpop.xlane.xlu0 %8552
        %v8554 = vsel %vm1802, %v8404, 0.0
        %8555 = vadd.xlane.f32.xlu0 %v8554
        %v8556 = vpop.xlane.xlu0 %8555
        %v8557 = vsel %vm1802, %v8405, 0.0
        %8558 = vadd.xlane.f32.xlu0 %v8557
        %v8559 = vpop.xlane.xlu0 %8558
        %v8560 = vsel %vm1802, %v8406, 0.0
        %8561 = vadd.xlane.f32.xlu0 %v8560
        %v8562 = vpop.xlane.xlu0 %8561
        %v8563 = vsel %vm1802, %v8407, 0.0
        %8564 = vadd.xlane.f32.xlu0 %v8563
        %v8565 = vpop.xlane.xlu0 %8564
        %v8566 = vsel %vm1802, %v8408, 0.0
        %8567 = vadd.xlane.f32.xlu0 %v8566
        %v8568 = vpop.xlane.xlu0 %8567
        %v8569 = vsel %vm1802, %v8409, 0.0
        %8570 = vadd.xlane.f32.xlu0 %v8569
        %v8571 = vpop.xlane.xlu0 %8570
        %v8572 = vsel %vm1802, %v8410, 0.0
        %8573 = vadd.xlane.f32.xlu0 %v8572
        %v8574 = vpop.xlane.xlu0 %8573
        %v8575 = vsel %vm1802, %v8411, 0.0
        %8576 = vadd.xlane.f32.xlu0 %v8575
        %v8577 = vpop.xlane.xlu0 %8576
        %v8578 = vsel %vm1802, %v8412, 0.0
        %8579 = vadd.xlane.f32.xlu0 %v8578
        %v8580 = vpop.xlane.xlu0 %8579
        %v8581 = vsel %vm1802, %v8413, 0.0
        %8582 = vadd.xlane.f32.xlu0 %v8581
        %v8583 = vpop.xlane.xlu0 %8582
        %v8584 = vsel %vm1802, %v8414, 0.0
        %8585 = vadd.xlane.f32.xlu0 %v8584
        %v8586 = vpop.xlane.xlu0 %8585
        %v8587 = vsel %vm1802, %v8415, 0.0
        %8588 = vadd.xlane.f32.xlu0 %v8587
        %v8589 = vpop.xlane.xlu0 %8588
        %v8590 = vsel %vm1802, %v8416, 0.0
        %8591 = vadd.xlane.f32.xlu0 %v8590
        %v8592 = vpop.xlane.xlu0 %8591
        %v8593 = vadd.f32 %v7554, %v8547
        %v8594 = vadd.f32 %v7555, %v8550
        %v8595 = vadd.f32 %v7556, %v8553
        %v8596 = vadd.f32 %v7557, %v8556
        %v8597 = vadd.f32 %v7558, %v8559
        %v8598 = vadd.f32 %v7559, %v8562
        %v8599 = vadd.f32 %v7560, %v8565
        %v8600 = vadd.f32 %v7561, %v8568
        %v8601 = vadd.f32 %v7562, %v8571
        %v8602 = vadd.f32 %v7563, %v8574
        %v8603 = vadd.f32 %v7564, %v8577
        %v8604 = vadd.f32 %v7565, %v8580
        %v8605 = vadd.f32 %v7566, %v8583
        %v8606 = vadd.f32 %v7567, %v8586
        %v8607 = vadd.f32 %v7568, %v8589
        %v8608 = vadd.f32 %v7569, %v8592
        %s8609 = scalar_lea.vmem %s7, 56
        %v8610 = vld [vmem:[%s8609] sm:$0x1f]
        %8627 = vrot.lane.b32.xlu0 %v8529, 123
        %v8628 = vpop.permute.xlu0 %8627
        %8629 = vrot.lane.b32.xlu0 %v8530, 123
        %v8630 = vpop.permute.xlu0 %8629
        %8631 = vrot.lane.b32.xlu0 %v8531, 123
        %v8632 = vpop.permute.xlu0 %8631
        %8633 = vrot.lane.b32.xlu0 %v8532, 123
        %v8634 = vpop.permute.xlu0 %8633
        %8635 = vrot.lane.b32.xlu0 %v8533, 123
        %v8636 = vpop.permute.xlu0 %8635
        %8637 = vrot.lane.b32.xlu0 %v8534, 123
        %v8638 = vpop.permute.xlu0 %8637
        %8639 = vrot.lane.b32.xlu0 %v8535, 123
        %v8640 = vpop.permute.xlu0 %8639
        %8641 = vrot.lane.b32.xlu0 %v8536, 123
        %v8642 = vpop.permute.xlu0 %8641
        %8643 = vrot.lane.b32.xlu0 %v8537, 123
        %v8644 = vpop.permute.xlu0 %8643
        %8645 = vrot.lane.b32.xlu0 %v8538, 123
        %v8646 = vpop.permute.xlu0 %8645
        %8647 = vrot.lane.b32.xlu0 %v8539, 123
        %v8648 = vpop.permute.xlu0 %8647
        %8649 = vrot.lane.b32.xlu0 %v8540, 123
        %v8650 = vpop.permute.xlu0 %8649
        %8651 = vrot.lane.b32.xlu0 %v8541, 123
        %v8652 = vpop.permute.xlu0 %8651
        %8653 = vrot.lane.b32.xlu0 %v8542, 123
        %v8654 = vpop.permute.xlu0 %8653
        %8655 = vrot.lane.b32.xlu0 %v8543, 123
        %v8656 = vpop.permute.xlu0 %8655
        %8657 = vrot.lane.b32.xlu0 %v8544, 123
        %v8658 = vpop.permute.xlu0 %8657
        %8675 = vrot.lane.b32.xlu0 %v1644, 64
        %v8676 = vpop.permute.xlu0 %8675
        %8677 = vrot.lane.b32.xlu0 %v1647, 64
        %v8678 = vpop.permute.xlu0 %8677
        %8679 = vrot.lane.b32.xlu0 %v1650, 64
        %v8680 = vpop.permute.xlu0 %8679
        %8681 = vrot.lane.b32.xlu0 %v1653, 64
        %v8682 = vpop.permute.xlu0 %8681
        %8683 = vrot.lane.b32.xlu0 %v1656, 64
        %v8684 = vpop.permute.xlu0 %8683
        %8685 = vrot.lane.b32.xlu0 %v1659, 64
        %v8686 = vpop.permute.xlu0 %8685
        %8687 = vrot.lane.b32.xlu0 %v1662, 64
        %v8688 = vpop.permute.xlu0 %8687
        %8689 = vrot.lane.b32.xlu0 %v1665, 64
        %v8690 = vpop.permute.xlu0 %8689
        %8691 = vrot.lane.b32.xlu0 %v1668, 64
        %v8692 = vpop.permute.xlu0 %8691
        %8693 = vrot.lane.b32.xlu0 %v1671, 64
        %v8694 = vpop.permute.xlu0 %8693
        %8695 = vrot.lane.b32.xlu0 %v1674, 64
        %v8696 = vpop.permute.xlu0 %8695
        %8697 = vrot.lane.b32.xlu0 %v1677, 64
        %v8698 = vpop.permute.xlu0 %8697
        %8699 = vrot.lane.b32.xlu0 %v1680, 64
        %v8700 = vpop.permute.xlu0 %8699
        %8701 = vrot.lane.b32.xlu0 %v1683, 64
        %v8702 = vpop.permute.xlu0 %8701
        %8703 = vrot.lane.b32.xlu0 %v1686, 64
        %v8704 = vpop.permute.xlu0 %8703
        %8705 = vrot.lane.b32.xlu0 %v1689, 64
        %v8706 = vpop.permute.xlu0 %8705
        %v8723 = vsel %vm1802, %v8628, 0
        %v8725 = vsel %vm1802, %v8630, 0
        %v8727 = vsel %vm1802, %v8632, 0
        %v8729 = vsel %vm1802, %v8634, 0
        %v8731 = vsel %vm1802, %v8636, 0
        %v8733 = vsel %vm1802, %v8638, 0
        %v8735 = vsel %vm1802, %v8640, 0
        %v8737 = vsel %vm1802, %v8642, 0
        %v8739 = vsel %vm1802, %v8644, 0
        %v8741 = vsel %vm1802, %v8646, 0
        %v8743 = vsel %vm1802, %v8648, 0
        %v8745 = vsel %vm1802, %v8650, 0
        %v8747 = vsel %vm1802, %v8652, 0
        %v8749 = vsel %vm1802, %v8654, 0
        %v8751 = vsel %vm1802, %v8656, 0
        %v8753 = vsel %vm1802, %v8658, 0
        %v8756 = vsel %vm1851, %v8610, 0
        %8758 = vmatpush.msra.mxu0 0.0
        %8759 = vmatpush.msra.mxu0 0.0
        %8760 = vmatpush.msra.mxu0 0.0
        %8761 = vmatpush.msra.mxu0 0.0
        %8762 = vmatpush.msra.mxu0 0.0
        %8763 = vmatpush.msra.mxu0 0.0
        %8764 = vmatpush.msra.mxu0 0.0
        %8765 = vmatpush.msra.mxu0 0.0
        %8766 = vmatpush.msra.mxu0 0.0
        %8767 = vmatpush.msra.mxu0 0.0
        %8768 = vmatpush.msra.mxu0 0.0
        %8769 = vmatpush.msra.mxu0 0.0
        %8770 = vmatpush.msra.mxu0 0.0
        %8771 = vmatpush.msra.mxu0 0.0
        %8772 = vmatpush.msra.mxu0 0.0
        %8773 = vmatpush.msra.mxu0 %v8756
        %8774 = vmatmul.f32.gmra.mxu0 %v8723
        %v8775 = vpop.f32.mrf.mxu0
        %v8776 = vadd.f32 %v8676, %v8775
        %8777 = vmatmul.f32.gmra.mxu0 %v8725
        %v8778 = vpop.f32.mrf.mxu0
        %v8779 = vadd.f32 %v8678, %v8778
        %8780 = vmatmul.f32.gmra.mxu0 %v8727
        %v8781 = vpop.f32.mrf.mxu0
        %v8782 = vadd.f32 %v8680, %v8781
        %8783 = vmatmul.f32.gmra.mxu0 %v8729
        %v8784 = vpop.f32.mrf.mxu0
        %v8785 = vadd.f32 %v8682, %v8784
        %8786 = vmatmul.f32.gmra.mxu0 %v8731
        %v8787 = vpop.f32.mrf.mxu0
        %v8788 = vadd.f32 %v8684, %v8787
        %8789 = vmatmul.f32.gmra.mxu0 %v8733
        %v8790 = vpop.f32.mrf.mxu0
        %v8791 = vadd.f32 %v8686, %v8790
        %8792 = vmatmul.f32.gmra.mxu0 %v8735
        %v8793 = vpop.f32.mrf.mxu0
        %v8794 = vadd.f32 %v8688, %v8793
        %8795 = vmatmul.f32.gmra.mxu0 %v8737
        %v8796 = vpop.f32.mrf.mxu0
        %v8797 = vadd.f32 %v8690, %v8796
        %8798 = vmatmul.f32.gmra.mxu0 %v8739
        %v8799 = vpop.f32.mrf.mxu0
        %v8800 = vadd.f32 %v8692, %v8799
        %8801 = vmatmul.f32.gmra.mxu0 %v8741
        %v8802 = vpop.f32.mrf.mxu0
        %v8803 = vadd.f32 %v8694, %v8802
        %8804 = vmatmul.f32.gmra.mxu0 %v8743
        %v8805 = vpop.f32.mrf.mxu0
        %v8806 = vadd.f32 %v8696, %v8805
        %8807 = vmatmul.f32.gmra.mxu0 %v8745
        %v8808 = vpop.f32.mrf.mxu0
        %v8809 = vadd.f32 %v8698, %v8808
        %8810 = vmatmul.f32.gmra.mxu0 %v8747
        %v8811 = vpop.f32.mrf.mxu0
        %v8812 = vadd.f32 %v8700, %v8811
        %8813 = vmatmul.f32.gmra.mxu0 %v8749
        %v8814 = vpop.f32.mrf.mxu0
        %v8815 = vadd.f32 %v8702, %v8814
        %8816 = vmatmul.f32.gmra.mxu0 %v8751
        %v8817 = vpop.f32.mrf.mxu0
        %v8818 = vadd.f32 %v8704, %v8817
        %8819 = vmatmul.f32.gmra.mxu0 %v8753
        %v8820 = vpop.f32.mrf.mxu0
        %v8821 = vadd.f32 %v8706, %v8820
        %8822 = vdwg.mxu0
        %vm8823 = vcmp.ge.f32.partialorder %v8776, 0.0
        %vm8824 = vcmp.ge.f32.partialorder %v8779, 0.0
        %vm8825 = vcmp.ge.f32.partialorder %v8782, 0.0
        %vm8826 = vcmp.ge.f32.partialorder %v8785, 0.0
        %vm8827 = vcmp.ge.f32.partialorder %v8788, 0.0
        %vm8828 = vcmp.ge.f32.partialorder %v8791, 0.0
        %vm8829 = vcmp.ge.f32.partialorder %v8794, 0.0
        %vm8830 = vcmp.ge.f32.partialorder %v8797, 0.0
        %vm8831 = vcmp.ge.f32.partialorder %v8800, 0.0
        %vm8832 = vcmp.ge.f32.partialorder %v8803, 0.0
        %vm8833 = vcmp.ge.f32.partialorder %v8806, 0.0
        %vm8834 = vcmp.ge.f32.partialorder %v8809, 0.0
        %vm8835 = vcmp.ge.f32.partialorder %v8812, 0.0
        %vm8836 = vcmp.ge.f32.partialorder %v8815, 0.0
        %vm8837 = vcmp.ge.f32.partialorder %v8818, 0.0
        %vm8838 = vcmp.ge.f32.partialorder %v8821, 0.0
        %v8839 = vmul.f32 %v8776, 0.01
        %v8840 = vmul.f32 %v8779, 0.01
        %v8841 = vmul.f32 %v8782, 0.01
        %v8842 = vmul.f32 %v8785, 0.01
        %v8843 = vmul.f32 %v8788, 0.01
        %v8844 = vmul.f32 %v8791, 0.01
        %v8845 = vmul.f32 %v8794, 0.01
        %v8846 = vmul.f32 %v8797, 0.01
        %v8847 = vmul.f32 %v8800, 0.01
        %v8848 = vmul.f32 %v8803, 0.01
        %v8849 = vmul.f32 %v8806, 0.01
        %v8850 = vmul.f32 %v8809, 0.01
        %v8851 = vmul.f32 %v8812, 0.01
        %v8852 = vmul.f32 %v8815, 0.01
        %v8853 = vmul.f32 %v8818, 0.01
        %v8854 = vmul.f32 %v8821, 0.01
        %v8855 = vsel %vm8823, %v8776, %v8839
        %v8856 = vsel %vm8824, %v8779, %v8840
        %v8857 = vsel %vm8825, %v8782, %v8841
        %v8858 = vsel %vm8826, %v8785, %v8842
        %v8859 = vsel %vm8827, %v8788, %v8843
        %v8860 = vsel %vm8828, %v8791, %v8844
        %v8861 = vsel %vm8829, %v8794, %v8845
        %v8862 = vsel %vm8830, %v8797, %v8846
        %v8863 = vsel %vm8831, %v8800, %v8847
        %v8864 = vsel %vm8832, %v8803, %v8848
        %v8865 = vsel %vm8833, %v8806, %v8849
        %v8866 = vsel %vm8834, %v8809, %v8850
        %v8867 = vsel %vm8835, %v8812, %v8851
        %v8868 = vsel %vm8836, %v8815, %v8852
        %v8869 = vsel %vm8837, %v8818, %v8853
        %v8870 = vsel %vm8838, %v8821, %v8854
        %s8871 = scalar_lea.vmem %s8, 896
        %v8872 = vld [vmem:[%s8871] sm:$0xff]
        %v8873 = vld [vmem:[%s8871 + $0x8] sm:$0xff]
        %v8874 = vld [vmem:[%s8871 + $0x10] sm:$0xff]
        %v8875 = vld [vmem:[%s8871 + $0x18] sm:$0xff]
        %v8876 = vld [vmem:[%s8871 + $0x20] sm:$0xff]
        %v8877 = vld [vmem:[%s8871 + $0x28] sm:$0xff]
        %v8878 = vld [vmem:[%s8871 + $0x30] sm:$0xff]
        %v8879 = vld [vmem:[%s8871 + $0x38] sm:$0xff]
        %s8880 = scalar_lea.vmem %s9, 21
        %v8881 = vld [vmem:[%s8880] sm:$0x1]
        %v8883 = vperm.slane %v8881, 0
        %v8886 = vsel %vm1980, %v8855, 0
        %v8889 = vsel %vm1980, %v8856, 0
        %v8892 = vsel %vm1980, %v8857, 0
        %v8895 = vsel %vm1980, %v8858, 0
        %v8898 = vsel %vm1980, %v8859, 0
        %v8901 = vsel %vm1980, %v8860, 0
        %v8904 = vsel %vm1980, %v8861, 0
        %v8907 = vsel %vm1980, %v8862, 0
        %v8910 = vsel %vm1980, %v8863, 0
        %v8913 = vsel %vm1980, %v8864, 0
        %v8916 = vsel %vm1980, %v8865, 0
        %v8919 = vsel %vm1980, %v8866, 0
        %v8922 = vsel %vm1980, %v8867, 0
        %v8925 = vsel %vm1980, %v8868, 0
        %v8928 = vsel %vm1980, %v8869, 0
        %v8931 = vsel %vm1980, %v8870, 0
        %8933 = vmatpush.msra.mxu0 0.0
        %8934 = vmatpush.msra.mxu0 0.0
        %8935 = vmatpush.msra.mxu0 0.0
        %8936 = vmatpush.msra.mxu0 0.0
        %8937 = vmatpush.msra.mxu0 0.0
        %8938 = vmatpush.msra.mxu0 0.0
        %8939 = vmatpush.msra.mxu0 0.0
        %8940 = vmatpush.msra.mxu0 0.0
        %8941 = vmatpush.msra.mxu0 %v8879
        %8942 = vmatpush.msra.mxu0 %v8878
        %8943 = vmatpush.msra.mxu0 %v8877
        %8944 = vmatpush.msra.mxu0 %v8876
        %8945 = vmatpush.msra.mxu0 %v8875
        %8946 = vmatpush.msra.mxu0 %v8874
        %8947 = vmatpush.msra.mxu0 %v8873
        %8948 = vmatpush.msra.mxu0 %v8872
        %8949 = vmatmul.f32.gmra.mxu0 %v8886
        %v8950 = vpop.f32.mrf.mxu0
        %v8951 = vadd.f32 %v8883, %v8950
        %8952 = vmatmul.f32.gmra.mxu0 %v8889
        %v8953 = vpop.f32.mrf.mxu0
        %v8954 = vadd.f32 %v8883, %v8953
        %8955 = vmatmul.f32.gmra.mxu0 %v8892
        %v8956 = vpop.f32.mrf.mxu0
        %v8957 = vadd.f32 %v8883, %v8956
        %8958 = vmatmul.f32.gmra.mxu0 %v8895
        %v8959 = vpop.f32.mrf.mxu0
        %v8960 = vadd.f32 %v8883, %v8959
        %8961 = vmatmul.f32.gmra.mxu0 %v8898
        %v8962 = vpop.f32.mrf.mxu0
        %v8963 = vadd.f32 %v8883, %v8962
        %8964 = vmatmul.f32.gmra.mxu0 %v8901
        %v8965 = vpop.f32.mrf.mxu0
        %v8966 = vadd.f32 %v8883, %v8965
        %8967 = vmatmul.f32.gmra.mxu0 %v8904
        %v8968 = vpop.f32.mrf.mxu0
        %v8969 = vadd.f32 %v8883, %v8968
        %8970 = vmatmul.f32.gmra.mxu0 %v8907
        %v8971 = vpop.f32.mrf.mxu0
        %v8972 = vadd.f32 %v8883, %v8971
        %8973 = vmatmul.f32.gmra.mxu0 %v8910
        %v8974 = vpop.f32.mrf.mxu0
        %v8975 = vadd.f32 %v8883, %v8974
        %8976 = vmatmul.f32.gmra.mxu0 %v8913
        %v8977 = vpop.f32.mrf.mxu0
        %v8978 = vadd.f32 %v8883, %v8977
        %8979 = vmatmul.f32.gmra.mxu0 %v8916
        %v8980 = vpop.f32.mrf.mxu0
        %v8981 = vadd.f32 %v8883, %v8980
        %8982 = vmatmul.f32.gmra.mxu0 %v8919
        %v8983 = vpop.f32.mrf.mxu0
        %v8984 = vadd.f32 %v8883, %v8983
        %8985 = vmatmul.f32.gmra.mxu0 %v8922
        %v8986 = vpop.f32.mrf.mxu0
        %v8987 = vadd.f32 %v8883, %v8986
        %8988 = vmatmul.f32.gmra.mxu0 %v8925
        %v8989 = vpop.f32.mrf.mxu0
        %v8990 = vadd.f32 %v8883, %v8989
        %8991 = vmatmul.f32.gmra.mxu0 %v8928
        %v8992 = vpop.f32.mrf.mxu0
        %v8993 = vadd.f32 %v8883, %v8992
        %8994 = vmatmul.f32.gmra.mxu0 %v8931
        %v8995 = vpop.f32.mrf.mxu0
        %v8996 = vadd.f32 %v8883, %v8995
        %8997 = vdwg.mxu0
        %vm8998 = vcmp.ge.f32.partialorder %v8951, 0.0
        %vm8999 = vcmp.ge.f32.partialorder %v8954, 0.0
        %vm9000 = vcmp.ge.f32.partialorder %v8957, 0.0
        %vm9001 = vcmp.ge.f32.partialorder %v8960, 0.0
        %vm9002 = vcmp.ge.f32.partialorder %v8963, 0.0
        %vm9003 = vcmp.ge.f32.partialorder %v8966, 0.0
        %vm9004 = vcmp.ge.f32.partialorder %v8969, 0.0
        %vm9005 = vcmp.ge.f32.partialorder %v8972, 0.0
        %vm9006 = vcmp.ge.f32.partialorder %v8975, 0.0
        %vm9007 = vcmp.ge.f32.partialorder %v8978, 0.0
        %vm9008 = vcmp.ge.f32.partialorder %v8981, 0.0
        %vm9009 = vcmp.ge.f32.partialorder %v8984, 0.0
        %vm9010 = vcmp.ge.f32.partialorder %v8987, 0.0
        %vm9011 = vcmp.ge.f32.partialorder %v8990, 0.0
        %vm9012 = vcmp.ge.f32.partialorder %v8993, 0.0
        %vm9013 = vcmp.ge.f32.partialorder %v8996, 0.0
        %v9014 = vmul.f32 %v8951, 0.01
        %v9015 = vmul.f32 %v8954, 0.01
        %v9016 = vmul.f32 %v8957, 0.01
        %v9017 = vmul.f32 %v8960, 0.01
        %v9018 = vmul.f32 %v8963, 0.01
        %v9019 = vmul.f32 %v8966, 0.01
        %v9020 = vmul.f32 %v8969, 0.01
        %v9021 = vmul.f32 %v8972, 0.01
        %v9022 = vmul.f32 %v8975, 0.01
        %v9023 = vmul.f32 %v8978, 0.01
        %v9024 = vmul.f32 %v8981, 0.01
        %v9025 = vmul.f32 %v8984, 0.01
        %v9026 = vmul.f32 %v8987, 0.01
        %v9027 = vmul.f32 %v8990, 0.01
        %v9028 = vmul.f32 %v8993, 0.01
        %v9029 = vmul.f32 %v8996, 0.01
        %v9030 = vsel %vm8998, %v8951, %v9014
        %v9031 = vsel %vm8999, %v8954, %v9015
        %v9032 = vsel %vm9000, %v8957, %v9016
        %v9033 = vsel %vm9001, %v8960, %v9017
        %v9034 = vsel %vm9002, %v8963, %v9018
        %v9035 = vsel %vm9003, %v8966, %v9019
        %v9036 = vsel %vm9004, %v8969, %v9020
        %v9037 = vsel %vm9005, %v8972, %v9021
        %v9038 = vsel %vm9006, %v8975, %v9022
        %v9039 = vsel %vm9007, %v8978, %v9023
        %v9040 = vsel %vm9008, %v8981, %v9024
        %v9041 = vsel %vm9009, %v8984, %v9025
        %v9042 = vsel %vm9010, %v8987, %v9026
        %v9043 = vsel %vm9011, %v8990, %v9027
        %v9044 = vsel %vm9012, %v8993, %v9028
        %v9045 = vsel %vm9013, %v8996, %v9029
        %s9046 = scalar_lea.vmem %s8, 960
        %v9047 = vld [vmem:[%s9046] sm:$0xff]
        %v9048 = vld [vmem:[%s9046 + $0x8] sm:$0xff]
        %v9049 = vld [vmem:[%s9046 + $0x10] sm:$0xff]
        %v9050 = vld [vmem:[%s9046 + $0x18] sm:$0xff]
        %v9051 = vld [vmem:[%s9046 + $0x20] sm:$0xff]
        %v9052 = vld [vmem:[%s9046 + $0x28] sm:$0xff]
        %v9053 = vld [vmem:[%s9046 + $0x30] sm:$0xff]
        %v9054 = vld [vmem:[%s9046 + $0x38] sm:$0xff]
        %s9055 = scalar_lea.vmem %s9, 22
        %v9056 = vld [vmem:[%s9055] sm:$0x1]
        %v9058 = vperm.slane %v9056, 0
        %v9061 = vsel %vm1980, %v9030, 0
        %v9064 = vsel %vm1980, %v9031, 0
        %v9067 = vsel %vm1980, %v9032, 0
        %v9070 = vsel %vm1980, %v9033, 0
        %v9073 = vsel %vm1980, %v9034, 0
        %v9076 = vsel %vm1980, %v9035, 0
        %v9079 = vsel %vm1980, %v9036, 0
        %v9082 = vsel %vm1980, %v9037, 0
        %v9085 = vsel %vm1980, %v9038, 0
        %v9088 = vsel %vm1980, %v9039, 0
        %v9091 = vsel %vm1980, %v9040, 0
        %v9094 = vsel %vm1980, %v9041, 0
        %v9097 = vsel %vm1980, %v9042, 0
        %v9100 = vsel %vm1980, %v9043, 0
        %v9103 = vsel %vm1980, %v9044, 0
        %v9106 = vsel %vm1980, %v9045, 0
        %9108 = vmatpush.msra.mxu0 0.0
        %9109 = vmatpush.msra.mxu0 0.0
        %9110 = vmatpush.msra.mxu0 0.0
        %9111 = vmatpush.msra.mxu0 0.0
        %9112 = vmatpush.msra.mxu0 0.0
        %9113 = vmatpush.msra.mxu0 0.0
        %9114 = vmatpush.msra.mxu0 0.0
        %9115 = vmatpush.msra.mxu0 0.0
        %9116 = vmatpush.msra.mxu0 %v9054
        %9117 = vmatpush.msra.mxu0 %v9053
        %9118 = vmatpush.msra.mxu0 %v9052
        %9119 = vmatpush.msra.mxu0 %v9051
        %9120 = vmatpush.msra.mxu0 %v9050
        %9121 = vmatpush.msra.mxu0 %v9049
        %9122 = vmatpush.msra.mxu0 %v9048
        %9123 = vmatpush.msra.mxu0 %v9047
        %9124 = vmatmul.f32.gmra.mxu0 %v9061
        %v9125 = vpop.f32.mrf.mxu0
        %v9126 = vadd.f32 %v9058, %v9125
        %9127 = vmatmul.f32.gmra.mxu0 %v9064
        %v9128 = vpop.f32.mrf.mxu0
        %v9129 = vadd.f32 %v9058, %v9128
        %9130 = vmatmul.f32.gmra.mxu0 %v9067
        %v9131 = vpop.f32.mrf.mxu0
        %v9132 = vadd.f32 %v9058, %v9131
        %9133 = vmatmul.f32.gmra.mxu0 %v9070
        %v9134 = vpop.f32.mrf.mxu0
        %v9135 = vadd.f32 %v9058, %v9134
        %9136 = vmatmul.f32.gmra.mxu0 %v9073
        %v9137 = vpop.f32.mrf.mxu0
        %v9138 = vadd.f32 %v9058, %v9137
        %9139 = vmatmul.f32.gmra.mxu0 %v9076
        %v9140 = vpop.f32.mrf.mxu0
        %v9141 = vadd.f32 %v9058, %v9140
        %9142 = vmatmul.f32.gmra.mxu0 %v9079
        %v9143 = vpop.f32.mrf.mxu0
        %v9144 = vadd.f32 %v9058, %v9143
        %9145 = vmatmul.f32.gmra.mxu0 %v9082
        %v9146 = vpop.f32.mrf.mxu0
        %v9147 = vadd.f32 %v9058, %v9146
        %9148 = vmatmul.f32.gmra.mxu0 %v9085
        %v9149 = vpop.f32.mrf.mxu0
        %v9150 = vadd.f32 %v9058, %v9149
        %9151 = vmatmul.f32.gmra.mxu0 %v9088
        %v9152 = vpop.f32.mrf.mxu0
        %v9153 = vadd.f32 %v9058, %v9152
        %9154 = vmatmul.f32.gmra.mxu0 %v9091
        %v9155 = vpop.f32.mrf.mxu0
        %v9156 = vadd.f32 %v9058, %v9155
        %9157 = vmatmul.f32.gmra.mxu0 %v9094
        %v9158 = vpop.f32.mrf.mxu0
        %v9159 = vadd.f32 %v9058, %v9158
        %9160 = vmatmul.f32.gmra.mxu0 %v9097
        %v9161 = vpop.f32.mrf.mxu0
        %v9162 = vadd.f32 %v9058, %v9161
        %9163 = vmatmul.f32.gmra.mxu0 %v9100
        %v9164 = vpop.f32.mrf.mxu0
        %v9165 = vadd.f32 %v9058, %v9164
        %9166 = vmatmul.f32.gmra.mxu0 %v9103
        %v9167 = vpop.f32.mrf.mxu0
        %v9168 = vadd.f32 %v9058, %v9167
        %9169 = vmatmul.f32.gmra.mxu0 %v9106
        %v9170 = vpop.f32.mrf.mxu0
        %v9171 = vadd.f32 %v9058, %v9170
        %9172 = vdwg.mxu0
        %vm9173 = vcmp.ge.f32.partialorder %v9126, 0.0
        %vm9174 = vcmp.ge.f32.partialorder %v9129, 0.0
        %vm9175 = vcmp.ge.f32.partialorder %v9132, 0.0
        %vm9176 = vcmp.ge.f32.partialorder %v9135, 0.0
        %vm9177 = vcmp.ge.f32.partialorder %v9138, 0.0
        %vm9178 = vcmp.ge.f32.partialorder %v9141, 0.0
        %vm9179 = vcmp.ge.f32.partialorder %v9144, 0.0
        %vm9180 = vcmp.ge.f32.partialorder %v9147, 0.0
        %vm9181 = vcmp.ge.f32.partialorder %v9150, 0.0
        %vm9182 = vcmp.ge.f32.partialorder %v9153, 0.0
        %vm9183 = vcmp.ge.f32.partialorder %v9156, 0.0
        %vm9184 = vcmp.ge.f32.partialorder %v9159, 0.0
        %vm9185 = vcmp.ge.f32.partialorder %v9162, 0.0
        %vm9186 = vcmp.ge.f32.partialorder %v9165, 0.0
        %vm9187 = vcmp.ge.f32.partialorder %v9168, 0.0
        %vm9188 = vcmp.ge.f32.partialorder %v9171, 0.0
        %v9189 = vmul.f32 %v9126, 0.01
        %v9190 = vmul.f32 %v9129, 0.01
        %v9191 = vmul.f32 %v9132, 0.01
        %v9192 = vmul.f32 %v9135, 0.01
        %v9193 = vmul.f32 %v9138, 0.01
        %v9194 = vmul.f32 %v9141, 0.01
        %v9195 = vmul.f32 %v9144, 0.01
        %v9196 = vmul.f32 %v9147, 0.01
        %v9197 = vmul.f32 %v9150, 0.01
        %v9198 = vmul.f32 %v9153, 0.01
        %v9199 = vmul.f32 %v9156, 0.01
        %v9200 = vmul.f32 %v9159, 0.01
        %v9201 = vmul.f32 %v9162, 0.01
        %v9202 = vmul.f32 %v9165, 0.01
        %v9203 = vmul.f32 %v9168, 0.01
        %v9204 = vmul.f32 %v9171, 0.01
        %v9205 = vsel %vm9173, %v9126, %v9189
        %v9206 = vsel %vm9174, %v9129, %v9190
        %v9207 = vsel %vm9175, %v9132, %v9191
        %v9208 = vsel %vm9176, %v9135, %v9192
        %v9209 = vsel %vm9177, %v9138, %v9193
        %v9210 = vsel %vm9178, %v9141, %v9194
        %v9211 = vsel %vm9179, %v9144, %v9195
        %v9212 = vsel %vm9180, %v9147, %v9196
        %v9213 = vsel %vm9181, %v9150, %v9197
        %v9214 = vsel %vm9182, %v9153, %v9198
        %v9215 = vsel %vm9183, %v9156, %v9199
        %v9216 = vsel %vm9184, %v9159, %v9200
        %v9217 = vsel %vm9185, %v9162, %v9201
        %v9218 = vsel %vm9186, %v9165, %v9202
        %v9219 = vsel %vm9187, %v9168, %v9203
        %v9220 = vsel %vm9188, %v9171, %v9204
        %s9221 = scalar_lea.vmem [#allocation5], 448
        %v9222 = vld [vmem:[%s9221] sm:$0xff]
        %v9223 = vld [vmem:[%s9221 + $0x8] sm:$0xff]
        %v9224 = vld [vmem:[%s9221 + $0x10] sm:$0xff]
        %v9225 = vld [vmem:[%s9221 + $0x18] sm:$0xff]
        %v9226 = vld [vmem:[%s9221 + $0x20] sm:$0xff]
        %v9227 = vld [vmem:[%s9221 + $0x28] sm:$0xff]
        %v9228 = vld [vmem:[%s9221 + $0x30] sm:$0xff]
        %v9229 = vld [vmem:[%s9221 + $0x38] sm:$0xff]
        %s9230 = scalar_lea.vmem %s9, 23
        %v9231 = vld [vmem:[%s9230] sm:$0x1]
        %v9233 = vperm.slane %v9231, 0
        %v9236 = vsel %vm1980, %v9205, 0
        %v9239 = vsel %vm1980, %v9206, 0
        %v9242 = vsel %vm1980, %v9207, 0
        %v9245 = vsel %vm1980, %v9208, 0
        %v9248 = vsel %vm1980, %v9209, 0
        %v9251 = vsel %vm1980, %v9210, 0
        %v9254 = vsel %vm1980, %v9211, 0
        %v9257 = vsel %vm1980, %v9212, 0
        %v9260 = vsel %vm1980, %v9213, 0
        %v9263 = vsel %vm1980, %v9214, 0
        %v9266 = vsel %vm1980, %v9215, 0
        %v9269 = vsel %vm1980, %v9216, 0
        %v9272 = vsel %vm1980, %v9217, 0
        %v9275 = vsel %vm1980, %v9218, 0
        %v9278 = vsel %vm1980, %v9219, 0
        %v9281 = vsel %vm1980, %v9220, 0
        %9283 = vmatpush.msra.mxu0 0.0
        %9284 = vmatpush.msra.mxu0 0.0
        %9285 = vmatpush.msra.mxu0 0.0
        %9286 = vmatpush.msra.mxu0 0.0
        %9287 = vmatpush.msra.mxu0 0.0
        %9288 = vmatpush.msra.mxu0 0.0
        %9289 = vmatpush.msra.mxu0 0.0
        %9290 = vmatpush.msra.mxu0 0.0
        %9291 = vmatpush.msra.mxu0 %v9229
        %9292 = vmatpush.msra.mxu0 %v9228
        %9293 = vmatpush.msra.mxu0 %v9227
        %9294 = vmatpush.msra.mxu0 %v9226
        %9295 = vmatpush.msra.mxu0 %v9225
        %9296 = vmatpush.msra.mxu0 %v9224
        %9297 = vmatpush.msra.mxu0 %v9223
        %9298 = vmatpush.msra.mxu0 %v9222
        %9299 = vmatmul.f32.gmra.mxu0 %v9236
        %v9300 = vpop.f32.mrf.mxu0
        %v9301 = vadd.f32 %v9233, %v9300
        %9302 = vmatmul.f32.gmra.mxu0 %v9239
        %v9303 = vpop.f32.mrf.mxu0
        %v9304 = vadd.f32 %v9233, %v9303
        %9305 = vmatmul.f32.gmra.mxu0 %v9242
        %v9306 = vpop.f32.mrf.mxu0
        %v9307 = vadd.f32 %v9233, %v9306
        %9308 = vmatmul.f32.gmra.mxu0 %v9245
        %v9309 = vpop.f32.mrf.mxu0
        %v9310 = vadd.f32 %v9233, %v9309
        %9311 = vmatmul.f32.gmra.mxu0 %v9248
        %v9312 = vpop.f32.mrf.mxu0
        %v9313 = vadd.f32 %v9233, %v9312
        %9314 = vmatmul.f32.gmra.mxu0 %v9251
        %v9315 = vpop.f32.mrf.mxu0
        %v9316 = vadd.f32 %v9233, %v9315
        %9317 = vmatmul.f32.gmra.mxu0 %v9254
        %v9318 = vpop.f32.mrf.mxu0
        %v9319 = vadd.f32 %v9233, %v9318
        %9320 = vmatmul.f32.gmra.mxu0 %v9257
        %v9321 = vpop.f32.mrf.mxu0
        %v9322 = vadd.f32 %v9233, %v9321
        %9323 = vmatmul.f32.gmra.mxu0 %v9260
        %v9324 = vpop.f32.mrf.mxu0
        %v9325 = vadd.f32 %v9233, %v9324
        %9326 = vmatmul.f32.gmra.mxu0 %v9263
        %v9327 = vpop.f32.mrf.mxu0
        %v9328 = vadd.f32 %v9233, %v9327
        %9329 = vmatmul.f32.gmra.mxu0 %v9266
        %v9330 = vpop.f32.mrf.mxu0
        %v9331 = vadd.f32 %v9233, %v9330
        %9332 = vmatmul.f32.gmra.mxu0 %v9269
        %v9333 = vpop.f32.mrf.mxu0
        %v9334 = vadd.f32 %v9233, %v9333
        %9335 = vmatmul.f32.gmra.mxu0 %v9272
        %v9336 = vpop.f32.mrf.mxu0
        %v9337 = vadd.f32 %v9233, %v9336
        %9338 = vmatmul.f32.gmra.mxu0 %v9275
        %v9339 = vpop.f32.mrf.mxu0
        %v9340 = vadd.f32 %v9233, %v9339
        %9341 = vmatmul.f32.gmra.mxu0 %v9278
        %v9342 = vpop.f32.mrf.mxu0
        %v9343 = vadd.f32 %v9233, %v9342
        %9344 = vmatmul.f32.gmra.mxu0 %v9281
        %v9345 = vpop.f32.mrf.mxu0
        %v9346 = vadd.f32 %v9233, %v9345
        %9347 = vdwg.mxu0
        %v9348 = vtanh.pop %v9301
        %v9349 = vtanh.pop %v9304
        %v9350 = vtanh.pop %v9307
        %v9351 = vtanh.pop %v9310
        %v9352 = vtanh.pop %v9313
        %v9353 = vtanh.pop %v9316
        %v9354 = vtanh.pop %v9319
        %v9355 = vtanh.pop %v9322
        %v9356 = vtanh.pop %v9325
        %v9357 = vtanh.pop %v9328
        %v9358 = vtanh.pop %v9331
        %v9359 = vtanh.pop %v9334
        %v9360 = vtanh.pop %v9337
        %v9361 = vtanh.pop %v9340
        %v9362 = vtanh.pop %v9343
        %v9363 = vtanh.pop %v9346
        %v9364 = vmul.f32 %v9348, 1.442695
        %v9365 = vpow.pop %v9364
        %v9366 = vmul.f32 %v9349, 1.442695
        %v9367 = vpow.pop %v9366
        %v9368 = vmul.f32 %v9350, 1.442695
        %v9369 = vpow.pop %v9368
        %v9370 = vmul.f32 %v9351, 1.442695
        %v9371 = vpow.pop %v9370
        %v9372 = vmul.f32 %v9352, 1.442695
        %v9373 = vpow.pop %v9372
        %v9374 = vmul.f32 %v9353, 1.442695
        %v9375 = vpow.pop %v9374
        %v9376 = vmul.f32 %v9354, 1.442695
        %v9377 = vpow.pop %v9376
        %v9378 = vmul.f32 %v9355, 1.442695
        %v9379 = vpow.pop %v9378
        %v9380 = vmul.f32 %v9356, 1.442695
        %v9381 = vpow.pop %v9380
        %v9382 = vmul.f32 %v9357, 1.442695
        %v9383 = vpow.pop %v9382
        %v9384 = vmul.f32 %v9358, 1.442695
        %v9385 = vpow.pop %v9384
        %v9386 = vmul.f32 %v9359, 1.442695
        %v9387 = vpow.pop %v9386
        %v9388 = vmul.f32 %v9360, 1.442695
        %v9389 = vpow.pop %v9388
        %v9390 = vmul.f32 %v9361, 1.442695
        %v9391 = vpow.pop %v9390
        %v9392 = vmul.f32 %v9362, 1.442695
        %v9393 = vpow.pop %v9392
        %v9394 = vmul.f32 %v9363, 1.442695
        %v9395 = vpow.pop %v9394
        %v9396 = vmul.f32 %v7742, %v9365
        %v9397 = vmul.f32 %v7743, %v9367
        %v9398 = vmul.f32 %v7744, %v9369
        %v9399 = vmul.f32 %v7745, %v9371
        %v9400 = vmul.f32 %v7746, %v9373
        %v9401 = vmul.f32 %v7747, %v9375
        %v9402 = vmul.f32 %v7748, %v9377
        %v9403 = vmul.f32 %v7749, %v9379
        %v9404 = vmul.f32 %v7750, %v9381
        %v9405 = vmul.f32 %v7751, %v9383
        %v9406 = vmul.f32 %v7752, %v9385
        %v9407 = vmul.f32 %v7753, %v9387
        %v9408 = vmul.f32 %v7754, %v9389
        %v9409 = vmul.f32 %v7755, %v9391
        %v9410 = vmul.f32 %v7756, %v9393
        %v9411 = vmul.f32 %v7757, %v9395
        %9428 = vrot.lane.b32.xlu0 %v9301, 123
        %v9429 = vpop.permute.xlu0 %9428
        %9430 = vrot.lane.b32.xlu0 %v9304, 123
        %v9431 = vpop.permute.xlu0 %9430
        %9432 = vrot.lane.b32.xlu0 %v9307, 123
        %v9433 = vpop.permute.xlu0 %9432
        %9434 = vrot.lane.b32.xlu0 %v9310, 123
        %v9435 = vpop.permute.xlu0 %9434
        %9436 = vrot.lane.b32.xlu0 %v9313, 123
        %v9437 = vpop.permute.xlu0 %9436
        %9438 = vrot.lane.b32.xlu0 %v9316, 123
        %v9439 = vpop.permute.xlu0 %9438
        %9440 = vrot.lane.b32.xlu0 %v9319, 123
        %v9441 = vpop.permute.xlu0 %9440
        %9442 = vrot.lane.b32.xlu0 %v9322, 123
        %v9443 = vpop.permute.xlu0 %9442
        %9444 = vrot.lane.b32.xlu0 %v9325, 123
        %v9445 = vpop.permute.xlu0 %9444
        %9446 = vrot.lane.b32.xlu0 %v9328, 123
        %v9447 = vpop.permute.xlu0 %9446
        %9448 = vrot.lane.b32.xlu0 %v9331, 123
        %v9449 = vpop.permute.xlu0 %9448
        %9450 = vrot.lane.b32.xlu0 %v9334, 123
        %v9451 = vpop.permute.xlu0 %9450
        %9452 = vrot.lane.b32.xlu0 %v9337, 123
        %v9453 = vpop.permute.xlu0 %9452
        %9454 = vrot.lane.b32.xlu0 %v9340, 123
        %v9455 = vpop.permute.xlu0 %9454
        %9456 = vrot.lane.b32.xlu0 %v9343, 123
        %v9457 = vpop.permute.xlu0 %9456
        %9458 = vrot.lane.b32.xlu0 %v9346, 123
        %v9459 = vpop.permute.xlu0 %9458
        %v9476 = vadd.f32 %v9396, %v9429
        %v9477 = vadd.f32 %v9397, %v9431
        %v9478 = vadd.f32 %v9398, %v9433
        %v9479 = vadd.f32 %v9399, %v9435
        %v9480 = vadd.f32 %v9400, %v9437
        %v9481 = vadd.f32 %v9401, %v9439
        %v9482 = vadd.f32 %v9402, %v9441
        %v9483 = vadd.f32 %v9403, %v9443
        %v9484 = vadd.f32 %v9404, %v9445
        %v9485 = vadd.f32 %v9405, %v9447
        %v9486 = vadd.f32 %v9406, %v9449
        %v9487 = vadd.f32 %v9407, %v9451
        %v9488 = vadd.f32 %v9408, %v9453
        %v9489 = vadd.f32 %v9409, %v9455
        %v9490 = vadd.f32 %v9410, %v9457
        %v9491 = vadd.f32 %v9411, %v9459
        %v9492 = vsel %vm1802, %v9348, 0.0
        %9493 = vadd.xlane.f32.xlu0 %v9492
        %v9494 = vpop.xlane.xlu0 %9493
        %v9495 = vsel %vm1802, %v9349, 0.0
        %9496 = vadd.xlane.f32.xlu0 %v9495
        %v9497 = vpop.xlane.xlu0 %9496
        %v9498 = vsel %vm1802, %v9350, 0.0
        %9499 = vadd.xlane.f32.xlu0 %v9498
        %v9500 = vpop.xlane.xlu0 %9499
        %v9501 = vsel %vm1802, %v9351, 0.0
        %9502 = vadd.xlane.f32.xlu0 %v9501
        %v9503 = vpop.xlane.xlu0 %9502
        %v9504 = vsel %vm1802, %v9352, 0.0
        %9505 = vadd.xlane.f32.xlu0 %v9504
        %v9506 = vpop.xlane.xlu0 %9505
        %v9507 = vsel %vm1802, %v9353, 0.0
        %9508 = vadd.xlane.f32.xlu0 %v9507
        %v9509 = vpop.xlane.xlu0 %9508
        %v9510 = vsel %vm1802, %v9354, 0.0
        %9511 = vadd.xlane.f32.xlu0 %v9510
        %v9512 = vpop.xlane.xlu0 %9511
        %v9513 = vsel %vm1802, %v9355, 0.0
        %9514 = vadd.xlane.f32.xlu0 %v9513
        %v9515 = vpop.xlane.xlu0 %9514
        %v9516 = vsel %vm1802, %v9356, 0.0
        %9517 = vadd.xlane.f32.xlu0 %v9516
        %v9518 = vpop.xlane.xlu0 %9517
        %v9519 = vsel %vm1802, %v9357, 0.0
        %9520 = vadd.xlane.f32.xlu0 %v9519
        %v9521 = vpop.xlane.xlu0 %9520
        %v9522 = vsel %vm1802, %v9358, 0.0
        %9523 = vadd.xlane.f32.xlu0 %v9522
        %v9524 = vpop.xlane.xlu0 %9523
        %v9525 = vsel %vm1802, %v9359, 0.0
        %9526 = vadd.xlane.f32.xlu0 %v9525
        %v9527 = vpop.xlane.xlu0 %9526
        %v9528 = vsel %vm1802, %v9360, 0.0
        %9529 = vadd.xlane.f32.xlu0 %v9528
        %v9530 = vpop.xlane.xlu0 %9529
        %v9531 = vsel %vm1802, %v9361, 0.0
        %9532 = vadd.xlane.f32.xlu0 %v9531
        %v9533 = vpop.xlane.xlu0 %9532
        %v9534 = vsel %vm1802, %v9362, 0.0
        %9535 = vadd.xlane.f32.xlu0 %v9534
        %v9536 = vpop.xlane.xlu0 %9535
        %v9537 = vsel %vm1802, %v9363, 0.0
        %9538 = vadd.xlane.f32.xlu0 %v9537
        %v9539 = vpop.xlane.xlu0 %9538
        %v9540 = vadd.f32 %v8593, %v9494
        %v9541 = vadd.f32 %v8594, %v9497
        %v9542 = vadd.f32 %v8595, %v9500
        %v9543 = vadd.f32 %v8596, %v9503
        %v9544 = vadd.f32 %v8597, %v9506
        %v9545 = vadd.f32 %v8598, %v9509
        %v9546 = vadd.f32 %v8599, %v9512
        %v9547 = vadd.f32 %v8600, %v9515
        %v9548 = vadd.f32 %v8601, %v9518
        %v9549 = vadd.f32 %v8602, %v9521
        %v9550 = vadd.f32 %v8603, %v9524
        %v9551 = vadd.f32 %v8604, %v9527
        %v9552 = vadd.f32 %v8605, %v9530
        %v9553 = vadd.f32 %v8606, %v9533
        %v9554 = vadd.f32 %v8607, %v9536
        %v9555 = vadd.f32 %v8608, %v9539
        %v9556 = vsel %vm1802, %v9476, %v8529
        %v9557 = vsel %vm1802, %v9477, %v8530
        %v9558 = vsel %vm1802, %v9478, %v8531
        %v9559 = vsel %vm1802, %v9479, %v8532
        %v9560 = vsel %vm1802, %v9480, %v8533
        %v9561 = vsel %vm1802, %v9481, %v8534
        %v9562 = vsel %vm1802, %v9482, %v8535
        %v9563 = vsel %vm1802, %v9483, %v8536
        %v9564 = vsel %vm1802, %v9484, %v8537
        %v9565 = vsel %vm1802, %v9485, %v8538
        %v9566 = vsel %vm1802, %v9486, %v8539
        %v9567 = vsel %vm1802, %v9487, %v8540
        %v9568 = vsel %vm1802, %v9488, %v8541
        %v9569 = vsel %vm1802, %v9489, %v8542
        %v9570 = vsel %vm1802, %v9490, %v8543
        %v9571 = vsel %vm1802, %v9491, %v8544
        %s9572 = scalar_lea.vmem %s11, 48
        %v9573 = vld [vmem:[%s9572] sm:$0xff]
        %v9574 = vld [vmem:[%s9572 + $0x8] sm:$0x3]
        %s9575 = scalar_lea.vmem %s12, 3
        %v9576 = vld [vmem:[%s9575] sm:$0x1]
        %v9578 = vperm.slane %v9576, 0
        %v9581 = vsel %vm3620, %v9556, 0
        %v9584 = vsel %vm3620, %v9557, 0
        %v9587 = vsel %vm3620, %v9558, 0
        %v9590 = vsel %vm3620, %v9559, 0
        %v9593 = vsel %vm3620, %v9560, 0
        %v9596 = vsel %vm3620, %v9561, 0
        %v9599 = vsel %vm3620, %v9562, 0
        %v9602 = vsel %vm3620, %v9563, 0
        %v9605 = vsel %vm3620, %v9564, 0
        %v9608 = vsel %vm3620, %v9565, 0
        %v9611 = vsel %vm3620, %v9566, 0
        %v9614 = vsel %vm3620, %v9567, 0
        %v9617 = vsel %vm3620, %v9568, 0
        %v9620 = vsel %vm3620, %v9569, 0
        %v9623 = vsel %vm3620, %v9570, 0
        %v9626 = vsel %vm3620, %v9571, 0
        %v9629 = vsel %vm3669, %v9574, 0
        %9631 = vmatpush.msra.mxu0 0.0
        %9632 = vmatpush.msra.mxu0 0.0
        %9633 = vmatpush.msra.mxu0 0.0
        %9634 = vmatpush.msra.mxu0 0.0
        %9635 = vmatpush.msra.mxu0 0.0
        %9636 = vmatpush.msra.mxu0 0.0
        %9637 = vmatpush.msra.mxu0 0.0
        %9638 = vmatpush.msra.mxu0 0.0
        %9639 = vmatpush.msra.mxu0 0.0
        %9640 = vmatpush.msra.mxu0 0.0
        %9641 = vmatpush.msra.mxu0 0.0
        %9642 = vmatpush.msra.mxu0 0.0
        %9643 = vmatpush.msra.mxu0 0.0
        %9644 = vmatpush.msra.mxu0 0.0
        %9645 = vmatpush.msra.mxu0 %v9629
        %9646 = vmatpush.msra.mxu0 %v9573
        %9647 = vmatmul.f32.gmra.mxu0 %v9581
        %v9648 = vpop.f32.mrf.mxu0
        %v9649 = vadd.f32 %v9578, %v9648
        %9650 = vmatmul.f32.gmra.mxu0 %v9584
        %v9651 = vpop.f32.mrf.mxu0
        %v9652 = vadd.f32 %v9578, %v9651
        %9653 = vmatmul.f32.gmra.mxu0 %v9587
        %v9654 = vpop.f32.mrf.mxu0
        %v9655 = vadd.f32 %v9578, %v9654
        %9656 = vmatmul.f32.gmra.mxu0 %v9590
        %v9657 = vpop.f32.mrf.mxu0
        %v9658 = vadd.f32 %v9578, %v9657
        %9659 = vmatmul.f32.gmra.mxu0 %v9593
        %v9660 = vpop.f32.mrf.mxu0
        %v9661 = vadd.f32 %v9578, %v9660
        %9662 = vmatmul.f32.gmra.mxu0 %v9596
        %v9663 = vpop.f32.mrf.mxu0
        %v9664 = vadd.f32 %v9578, %v9663
        %9665 = vmatmul.f32.gmra.mxu0 %v9599
        %v9666 = vpop.f32.mrf.mxu0
        %v9667 = vadd.f32 %v9578, %v9666
        %9668 = vmatmul.f32.gmra.mxu0 %v9602
        %v9669 = vpop.f32.mrf.mxu0
        %v9670 = vadd.f32 %v9578, %v9669
        %9671 = vmatmul.f32.gmra.mxu0 %v9605
        %v9672 = vpop.f32.mrf.mxu0
        %v9673 = vadd.f32 %v9578, %v9672
        %9674 = vmatmul.f32.gmra.mxu0 %v9608
        %v9675 = vpop.f32.mrf.mxu0
        %v9676 = vadd.f32 %v9578, %v9675
        %9677 = vmatmul.f32.gmra.mxu0 %v9611
        %v9678 = vpop.f32.mrf.mxu0
        %v9679 = vadd.f32 %v9578, %v9678
        %9680 = vmatmul.f32.gmra.mxu0 %v9614
        %v9681 = vpop.f32.mrf.mxu0
        %v9682 = vadd.f32 %v9578, %v9681
        %9683 = vmatmul.f32.gmra.mxu0 %v9617
        %v9684 = vpop.f32.mrf.mxu0
        %v9685 = vadd.f32 %v9578, %v9684
        %9686 = vmatmul.f32.gmra.mxu0 %v9620
        %v9687 = vpop.f32.mrf.mxu0
        %v9688 = vadd.f32 %v9578, %v9687
        %9689 = vmatmul.f32.gmra.mxu0 %v9623
        %v9690 = vpop.f32.mrf.mxu0
        %v9691 = vadd.f32 %v9578, %v9690
        %9692 = vmatmul.f32.gmra.mxu0 %v9626
        %v9693 = vpop.f32.mrf.mxu0
        %v9694 = vadd.f32 %v9578, %v9693
        %9695 = vdwg.mxu0
        %9696 = vst.msk [vmem:[%s592] sm:$0xff] %vm3620, %v9649
        %9697 = vst.msk [vmem:[%s592 + $0x8] sm:$0xff] %vm3620, %v9652
        %9698 = vst.msk [vmem:[%s592 + $0x10] sm:$0xff] %vm3620, %v9655
        %9699 = vst.msk [vmem:[%s592 + $0x18] sm:$0xff] %vm3620, %v9658
        %9700 = vst.msk [vmem:[%s592 + $0x20] sm:$0xff] %vm3620, %v9661
        %9701 = vst.msk [vmem:[%s592 + $0x28] sm:$0xff] %vm3620, %v9664
        %9702 = vst.msk [vmem:[%s592 + $0x30] sm:$0xff] %vm3620, %v9667
        %9703 = vst.msk [vmem:[%s592 + $0x38] sm:$0xff] %vm3620, %v9670
        %9704 = vst.msk [vmem:[%s592 + $0x40] sm:$0xff] %vm3620, %v9673
        %9705 = vst.msk [vmem:[%s592 + $0x48] sm:$0xff] %vm3620, %v9676
        %9706 = vst.msk [vmem:[%s592 + $0x50] sm:$0xff] %vm3620, %v9679
        %9707 = vst.msk [vmem:[%s592 + $0x58] sm:$0xff] %vm3620, %v9682
        %9708 = vst.msk [vmem:[%s592 + $0x60] sm:$0xff] %vm3620, %v9685
        %9709 = vst.msk [vmem:[%s592 + $0x68] sm:$0xff] %vm3620, %v9688
        %9710 = vst.msk [vmem:[%s592 + $0x70] sm:$0xff] %vm3620, %v9691
        %9711 = vst.msk [vmem:[%s592 + $0x78] sm:$0xff] %vm3620, %v9694
        %vm9712 = vcmask 7168
        %9713 = vst.msk [vmem:[%s598] sm:$0xff] %vm9712, %v9540
        %9714 = vst.msk [vmem:[%s598 + $0x8] sm:$0xff] %vm9712, %v9541
        %9715 = vst.msk [vmem:[%s598 + $0x10] sm:$0xff] %vm9712, %v9542
        %9716 = vst.msk [vmem:[%s598 + $0x18] sm:$0xff] %vm9712, %v9543
        %9717 = vst.msk [vmem:[%s598 + $0x20] sm:$0xff] %vm9712, %v9544
        %9718 = vst.msk [vmem:[%s598 + $0x28] sm:$0xff] %vm9712, %v9545
        %9719 = vst.msk [vmem:[%s598 + $0x30] sm:$0xff] %vm9712, %v9546
        %9720 = vst.msk [vmem:[%s598 + $0x38] sm:$0xff] %vm9712, %v9547
        %9721 = vst.msk [vmem:[%s598 + $0x40] sm:$0xff] %vm9712, %v9548
        %9722 = vst.msk [vmem:[%s598 + $0x48] sm:$0xff] %vm9712, %v9549
        %9723 = vst.msk [vmem:[%s598 + $0x50] sm:$0xff] %vm9712, %v9550
        %9724 = vst.msk [vmem:[%s598 + $0x58] sm:$0xff] %vm9712, %v9551
        %9725 = vst.msk [vmem:[%s598 + $0x60] sm:$0xff] %vm9712, %v9552
        %9726 = vst.msk [vmem:[%s598 + $0x68] sm:$0xff] %vm9712, %v9553
        %9727 = vst.msk [vmem:[%s598 + $0x70] sm:$0xff] %vm9712, %v9554
        %9728 = vst.msk [vmem:[%s598 + $0x78] sm:$0xff] %vm9712, %v9555
        %s9729 = smul.u32 16, %s32
        %p9730 = scmp.lt.s32.totalorder %s9729, 31
        %s9731 = scalar_select %p9730, %s9729, 31
        %s9732 = smul.addr %s9731, 8
        %s9733 = scalar_lea.vmem %s15, %s9732
        %s9734 = smul.u32 16, %s32
        %p9735 = scmp.lt.s32.totalorder %s9734, 31
        %s9736 = scalar_select %p9735, %s9734, 31
        %s9737 = smul.addr %s9736, 8
        %s9738 = scalar_lea.vmem %s16, %s9737
        // Predicated region
        $region89: #{tpu_custom_call.1} parent=79 // pred_check
          %p9739 = pneg %p375
        $region90: #{tpu_custom_call.1} parent=79 // pred_check_branch
          %9741 = sbr.rel (%p9739) target = $region92
        $region91: #{tpu_custom_call.1} parent=79 // pred_region
          %s9742 = smul.u32 16, %s32
        $region92: #{tpu_custom_call.1} parent=79 // pred_fallthru
          _
        // Predicated region
        $region93: #{tpu_custom_call.1} parent=79 // pred_check
          %p9743 = pneg %p401
        $region94: #{tpu_custom_call.1} parent=79 // pred_check_branch
          %9745 = sbr.rel (%p9743) target = $region96
        $region95: #{tpu_custom_call.1} parent=79 // pred_region
          %s9746 = smul.u32 16, %s32
        $region96: #{tpu_custom_call.1} parent=79 // pred_fallthru
          _
      $region80: #{tpu_custom_call.1} parent=5 // pred_fallthru
        _
      %p9747 = scmp.le.s32.totalorder 2, %s27
      // Predicated region
      $region97: #{tpu_custom_call.1} parent=5 // pred_check
        %p9748 = pneg %p9747
      $region98: #{tpu_custom_call.1} parent=5 // pred_check_branch
        %9750 = sbr.rel (%p9748) target = $region100
      $region99: #{tpu_custom_call.1} parent=5 // pred_region
        %s9751 = ssub.s32 %s27, 2
        // Predicated region
        $region101: #{tpu_custom_call.1} parent=99 // pred_check
          %p9752 = pneg %p381
        $region102: #{tpu_custom_call.1} parent=99 // pred_check_branch
          %9754 = sbr.rel (%p9752) target = $region104
        $region103: #{tpu_custom_call.1} parent=99 // pred_region
          %s9755 = smul.u32 16, %s33
          %p9756 = scmp.lt.s32.totalorder %s9755, 31
          %s9757 = scalar_select %p9756, %s9755, 31
          %s9758 = smul.addr %s9757, 8
          %s9759 = scalar_lea.vmem %s15, %s9758
        $region104: #{tpu_custom_call.1} parent=99 // pred_fallthru
          _
        // Predicated region
        $region105: #{tpu_custom_call.1} parent=99 // pred_check
          %p9760 = pneg %p407
        $region106: #{tpu_custom_call.1} parent=99 // pred_check_branch
          %9762 = sbr.rel (%p9760) target = $region108
        $region107: #{tpu_custom_call.1} parent=99 // pred_region
          %s9763 = smul.u32 16, %s33
          %p9764 = scmp.lt.s32.totalorder %s9763, 31
          %s9765 = scalar_select %p9764, %s9763, 31
          %s9766 = smul.addr %s9765, 8
          %s9767 = scalar_lea.vmem %s16, %s9766
        $region108: #{tpu_custom_call.1} parent=99 // pred_fallthru
          _
      $region100: #{tpu_custom_call.1} parent=5 // pred_fallthru
        _
    $region6: #{tpu_custom_call.1} parent=1 // loop_footer
      %s31 = sadd.s32 1, %s27
    $region7: #{tpu_custom_call.1} parent=1 // loop_footer_branch
      %26 = sbr.rel target = $region3
    $region8: #{tpu_custom_call.1} parent=1 // loop_exit
      _
    %9768 = vsyncpa [#allocation4], 1
    %s9769 = scalar_lea.sflag [#allocation4], 1
    %9770 = vsyncpa %s9769, 1
    %9771 = vsyncpa [#allocation6], 1

</llo_original>
